<compile_context>
chip_gen: v5e
topology: v5e:2x2
jax: 0.10.0
libtpu: 0.0.40
codegen_flags: <defaults>
</compile_context>

<pallas_src>
import functools

import numpy as np
import jax
import jax.numpy as jnp
from jax import lax
from jax.experimental import pallas as pl
from jax.experimental.pallas import tpu as pltpu

HIGHEST = jax.lax.Precision.HIGHEST


def _round_up(x, m):
    return (x + m - 1) // m * m


# ----------------------------- Pallas kernel ---------------------------------
def _decoder_kernel(num_pixels,
                    h0_ref, xwx_ref, feats_ref, embp_ref,
                    whf_ref, bhf_ref, vv_ref, bv_ref,
                    wgz_ref, wfc_ref, bfc_ref,
                    preds_ref, alphas_ref):
    B, Ppad, E = feats_ref.shape
    H = h0_ref.shape[1]
    T_dec = embp_ref.shape[0]

    feats = feats_ref[...]            # (B, Ppad, E)  zero-padded pixels
    xwx = xwx_ref[...]                # (B, Ppad, E)  precomputed feats @ Wx + bwx
    whf = whf_ref[...]                # (H, 2E+3H)    fused [Wh | Wfb | Whh]
    bhf = bhf_ref[...]                # (1, 2E+3H)
    vv = vv_ref[...]                  # (1, E)
    bv = bv_ref[...]                  # (1, 1)
    wgz = wgz_ref[...]                # (E, 3H)       gated-context half of W_ih
    wfc = wfc_ref[...]                # (H, V)
    bfc = bfc_ref[...]                # (1, V)

    # Additive score mask for padded pixels, built once (static python check at trace time).
    if num_pixels < Ppad:
        pix_idx = lax.broadcasted_iota(jnp.int32, (1, Ppad), 1)
        score_bias = jnp.where(pix_idx < num_pixels, 0.0, -1e30).astype(jnp.float32)
    else:
        score_bias = None

    def step(t, h):
        # one fused MXU push for all three h-projections, lane-aligned slices
        hp = jnp.dot(h, whf, preferred_element_type=jnp.float32) + bhf   # (B, 2E+3H)
        h_wh = hp[:, 0:E]                          # attention Wh(h) + bwh
        gate = jax.nn.sigmoid(hp[:, E:2 * E])      # f_beta gate
        gh = hp[:, 2 * E:]                         # GRU hidden gates (+ b_hh)

        # ---- Bahdanau attention (x_wx hoisted out of the loop) ----
        lam = jnp.tanh(xwx + h_wh[:, None, :])                         # (B, Ppad, E)
        scores = jnp.sum(lam * vv[None], axis=-1) + bv                 # (B, Ppad)
        if score_bias is not None:
            scores = scores + score_bias
        m = jnp.max(scores, axis=-1, keepdims=True)
        ex = jnp.exp(scores - m)
        denom = jnp.sum(ex, axis=-1, keepdims=True)
        alphas = ex * pl.reciprocal(denom, approx=True)                # softmax over pixels
        z = jnp.sum(alphas[:, :, None] * feats, axis=1)                # (B, E) context (VPU+XLU)

        # ---- gated context + GRU cell (emb @ W_ih[E:] + b_ih precomputed per step) ----
        gz = gate * z
        gi = jnp.dot(gz, wgz, preferred_element_type=jnp.float32) + embp_ref[t]
        r = jax.nn.sigmoid(gi[:, 0:H] + gh[:, 0:H])
        u = jax.nn.sigmoid(gi[:, H:2 * H] + gh[:, H:2 * H])
        n = jnp.tanh(gi[:, 2 * H:] + r * gh[:, 2 * H:])
        h_new = (1.0 - u) * n + u * h

        logits = jnp.dot(h_new, wfc, preferred_element_type=jnp.float32) + bfc
        preds_ref[t] = logits                                          # (B, V)
        alphas_ref[t] = alphas                                         # (B, Ppad)
        return h_new

    lax.fori_loop(0, T_dec, step, h0_ref[...])


# ------------------------------- wrapper --------------------------------------
def decoder_rnn_forward(params, features, captions, lengths, *, max_steps=50):
    B, P, E = features.shape
    T_dec = int(captions.shape[1]) - 1
    H = params["wh_t"].shape[0]
    V = params["wfc_t"].shape[1]
    P_pad = _round_up(P, 128)

    # --- one-time precompute in plain XLA (time-invariant pieces hoisted) -----
    feats_pad = jnp.pad(features, ((0, 0), (0, P_pad - P), (0, 0)))
    xwx = (jnp.einsum("bpe,ef->bpf", feats_pad, params["wx_t"], precision=HIGHEST)
           + params["bwx"][None])                                        # (B, Ppad, E)
    h0 = (jnp.dot(jnp.mean(features, axis=1), params["winit_t"], precision=HIGHEST)
          + params["binit"])                                             # (B, H)
    emb_tm = jnp.transpose(params["embedding"][captions[:, :T_dec]], (1, 0, 2))  # (T, B, Em)
    wih_gz = params["wih_t"][:E]                                         # (E, 3H)
    wih_emb = params["wih_t"][E:]                                        # (Em, 3H)
    emb_proj = (jnp.einsum("tbe,eh->tbh", emb_tm, wih_emb, precision=HIGHEST)
                + params["bih"][None])                                   # (T, B, 3H) incl. b_ih
    # fuse the three h-projections so the kernel issues one dot per step
    wh_fused = jnp.concatenate([params["wh_t"], params["wfb_t"], params["whh_t"]], axis=1)
    bh_fused = jnp.concatenate([params["bwh"], params["bfb"], params["bhh"]], axis=1)

    kernel = functools.partial(_decoder_kernel, P)
    vmem = pl.BlockSpec(memory_space=pltpu.MemorySpace.VMEM)
    preds_k, alphas_k = pl.pallas_call(
        kernel,
        out_shape=[jax.ShapeDtypeStruct((T_dec, B, V), jnp.float32),
                   jax.ShapeDtypeStruct((T_dec, B, P_pad), jnp.float32)],
        in_specs=[vmem] * 11,
        out_specs=[vmem, vmem],
    )(h0, xwx, feats_pad, emb_proj, wh_fused, bh_fused,
      params["vv"], params["bv"], wih_gz, params["wfc_t"], params["bfc"])
    # TODO(synk): for large production batches on v7x, add a leading batch-block grid axis
    # marked "parallel" (per-block hidden state) so both TensorCores are used; moot at B=4.

    # shrinking-batch semantics of the module: at step t the first
    # b = #(decode_len >= t) rows are written, for t in range(max(decode_len)).
    decode_lengths = lengths - 1
    max_dl = jnp.max(decode_lengths)
    t_idx = jnp.arange(T_dec)
    step_alive = ((t_idx[None, :] <= decode_lengths[:, None])
                  & (t_idx[None, :] < max_dl))                           # (B, T_dec)
    preds_bt = jnp.where(step_alive[:, :, None], jnp.transpose(preds_k, (1, 0, 2)), 0.0)
    alphas_bt = jnp.where(step_alive[:, :, None],
                          jnp.transpose(alphas_k[:, :, :P], (1, 0, 2)), 0.0)

    preds = jnp.zeros((B, max_steps, V), jnp.float32).at[:, :T_dec].set(preds_bt)
    alphas = jnp.zeros((B, max_steps, P), jnp.float32).at[:, :T_dec].set(alphas_bt)
    return preds, alphas, decode_lengths


# ------------------------- deterministic parameters ----------------------------
def init_params(key, *, embed_size, vocab_size, hidden_size, encoder_size):
    keys = jax.random.split(key, 10)

    def linear(k, fan_in, fan_out):
        k1, k2 = jax.random.split(k)
        bound = 1.0 / np.sqrt(fan_in)
        w = jax.random.uniform(k1, (fan_out, fan_in), jnp.float32, -bound, bound)
        b = jax.random.uniform(k2, (fan_out,), jnp.float32, -bound, bound)
        return w, b

    w_init, b_init = linear(keys[0], encoder_size, hidden_size)
    w_fb, b_fb = linear(keys[1], hidden_size, encoder_size)
    w_fc, b_fc = linear(keys[2], hidden_size, vocab_size)
    w_x, b_x = linear(keys[3], encoder_size, encoder_size)
    w_h, b_h = linear(keys[4], hidden_size, encoder_size)
    w_v, b_v = linear(keys[5], encoder_size, 1)
    embedding = jax.random.normal(keys[6], (vocab_size, embed_size), jnp.float32)
    gb = 1.0 / np.sqrt(hidden_size)
    w_ih = jax.random.uniform(keys[7], (3 * hidden_size, encoder_size + embed_size),
                              jnp.float32, -gb, gb)
    w_hh = jax.random.uniform(keys[8], (3 * hidden_size, hidden_size), jnp.float32, -gb, gb)
    kb1, kb2 = jax.random.split(keys[9])
    b_ih = jax.random.uniform(kb1, (3 * hidden_size,), jnp.float32, -gb, gb)
    b_hh = jax.random.uniform(kb2, (3 * hidden_size,), jnp.float32, -gb, gb)

    return dict(
        winit_t=w_init.T, binit=b_init.reshape(1, -1),
        wfb_t=w_fb.T, bfb=b_fb.reshape(1, -1),
        wfc_t=w_fc.T, bfc=b_fc.reshape(1, -1),
        wx_t=w_x.T, bwx=b_x.reshape(1, -1),
        wh_t=w_h.T, bwh=b_h.reshape(1, -1),
        vv=w_v, bv=b_v.reshape(1, 1),
        embedding=embedding,
        wih_t=w_ih.T, bih=b_ih.reshape(1, -1),
        whh_t=w_hh.T, bhh=b_hh.reshape(1, -1),
    )


# ---------------------- literal pure-JAX reference (PyTorch semantics) ---------
def reference_forward(params, features, captions, lengths_np, *, max_steps=50):
    B, P, E = features.shape
    H = params["wh_t"].shape[0]
    V = params["wfc_t"].shape[1]
    dot = functools.partial(jnp.dot, precision=HIGHEST)
    emb = params["embedding"][captions]
    h = dot(jnp.mean(features, axis=1), params["winit_t"]) + params["binit"]
    preds = jnp.zeros((B, max_steps, V), jnp.float32)
    alphas = jnp.zeros((B, max_steps, P), jnp.float32)
    dl = lengths_np - 1
    for t in range(int(dl.max())):
        b = int(np.sum(dl >= t))
        fb, hb = features[:b], h[:b]
        x_wx = dot(fb, params["wx_t"]) + params["bwx"]
        h_wh = (dot(hb, params["wh_t"]) + params["bwh"])[:, None, :]
        lam = jnp.tanh(x_wx + h_wh)
        sc = dot(lam, params["vv"].T) + params["bv"]
        sc = sc - jnp.max(sc, axis=1, keepdims=True)
        al = jnp.exp(sc) / jnp.sum(jnp.exp(sc), axis=1, keepdims=True)   # (b, P, 1)
        z = jnp.sum(al * fb, axis=1)
        gate = jax.nn.sigmoid(dot(hb, params["wfb_t"]) + params["bfb"])
        x_in = jnp.concatenate([gate * z, emb[:b, t]], axis=1)
        gi = dot(x_in, params["wih_t"]) + params["bih"]
        gh = dot(hb, params["whh_t"]) + params["bhh"]
        r = jax.nn.sigmoid(gi[:, :H] + gh[:, :H])
        u = jax.nn.sigmoid(gi[:, H:2 * H] + gh[:, H:2 * H])
        n = jnp.tanh(gi[:, 2 * H:] + r * gh[:, 2 * H:])
        h = (1.0 - u) * n + u * hb
        x = dot(h, params["wfc_t"]) + params["bfc"]
        preds = preds.at[:b, t, :].set(x)
        alphas = alphas.at[:b, t, :].set(al[..., 0])
    return preds, alphas, dl


if __name__ == "__main__":
    # small-but-consistent shapes: num_pixels=196 (14*14) and max_steps=50 as in the module.
    B, P, E = 4, 196, 256            # batch, pixels, encoder_size
    H, Em, Vv, T = 128, 128, 256, 8  # hidden_size, embed_size, vocab_size, caption length

    key = jax.random.PRNGKey(0)
    kp, kf, kc = jax.random.split(key, 3)
    params = init_params(kp, embed_size=Em, vocab_size=Vv, hidden_size=H, encoder_size=E)
    features = jax.random.normal(kf, (B, P, E), jnp.float32)
    captions = jax.random.randint(kc, (B, T), 0, Vv, dtype=jnp.int32)
    lengths = jnp.array([8, 7, 6, 5], dtype=jnp.int32)   # sorted descending (module contract)

    fwd = jax.jit(functools.partial(decoder_rnn_forward, max_steps=50))
    preds, alphas, dlens = fwd(params, features, captions, lengths)
    preds = jax.block_until_ready(preds)
    alphas = jax.block_until_ready(alphas)

    ref_preds, ref_alphas, _ = reference_forward(params, features, np.array(captions),
                                                 np.array(lengths))
    np.testing.assert_allclose(np.array(preds), np.array(ref_preds), atol=2e-2, rtol=2e-2)
    np.testing.assert_allclose(np.array(alphas), np.array(ref_alphas), atol=2e-2, rtol=2e-2)
    print("KERNEL_OK")
</pallas_src>

<mosaic_0001>
module attributes {stable_mosaic.version = 11 : i64} {
  func.func @_decoder_kernel(%arg0: memref<4x128xf32, #tpu.memory_space<vmem>>, %arg1: memref<4x256x256xf32, #tpu.memory_space<vmem>>, %arg2: memref<4x256x256xf32, #tpu.memory_space<vmem>>, %arg3: memref<7x4x384xf32, #tpu.memory_space<vmem>>, %arg4: memref<128x896xf32, #tpu.memory_space<vmem>>, %arg5: memref<1x896xf32, #tpu.memory_space<vmem>>, %arg6: memref<1x256xf32, #tpu.memory_space<vmem>>, %arg7: memref<1x1xf32, #tpu.memory_space<vmem>>, %arg8: memref<256x384xf32, #tpu.memory_space<vmem>>, %arg9: memref<128x256xf32, #tpu.memory_space<vmem>>, %arg10: memref<1x256xf32, #tpu.memory_space<vmem>>, %arg11: memref<7x4x256xf32, #tpu.memory_space<vmem>>, %arg12: memref<7x4x256xf32, #tpu.memory_space<vmem>>) attributes {dimension_semantics = [], scalar_prefetch = 0 : i64, scratch_operands = 0 : i64, tpu.core_type = #tpu.core_type<tc>} {
    %c0 = arith.constant 0 : index
    %c0_0 = arith.constant 0 : index
    %c0_1 = arith.constant 0 : index
    %0 = vector.load %arg2[%c0, %c0_0, %c0_1] : memref<4x256x256xf32, #tpu.memory_space<vmem>>, vector<4x256x256xf32>
    %c0_2 = arith.constant 0 : index
    %c0_3 = arith.constant 0 : index
    %c0_4 = arith.constant 0 : index
    %1 = vector.load %arg1[%c0_2, %c0_3, %c0_4] : memref<4x256x256xf32, #tpu.memory_space<vmem>>, vector<4x256x256xf32>
    %c0_5 = arith.constant 0 : index
    %c0_6 = arith.constant 0 : index
    %2 = vector.load %arg4[%c0_5, %c0_6] : memref<128x896xf32, #tpu.memory_space<vmem>>, vector<128x896xf32>
    %c0_7 = arith.constant 0 : index
    %c0_8 = arith.constant 0 : index
    %3 = vector.load %arg5[%c0_7, %c0_8] : memref<1x896xf32, #tpu.memory_space<vmem>>, vector<1x896xf32>
    %c0_9 = arith.constant 0 : index
    %c0_10 = arith.constant 0 : index
    %4 = vector.load %arg6[%c0_9, %c0_10] : memref<1x256xf32, #tpu.memory_space<vmem>>, vector<1x256xf32>
    %c0_11 = arith.constant 0 : index
    %c0_12 = arith.constant 0 : index
    %5 = vector.load %arg7[%c0_11, %c0_12] : memref<1x1xf32, #tpu.memory_space<vmem>>, vector<1x1xf32>
    %c0_13 = arith.constant 0 : index
    %c0_14 = arith.constant 0 : index
    %6 = vector.load %arg8[%c0_13, %c0_14] : memref<256x384xf32, #tpu.memory_space<vmem>>, vector<256x384xf32>
    %c0_15 = arith.constant 0 : index
    %c0_16 = arith.constant 0 : index
    %7 = vector.load %arg9[%c0_15, %c0_16] : memref<128x256xf32, #tpu.memory_space<vmem>>, vector<128x256xf32>
    %c0_17 = arith.constant 0 : index
    %c0_18 = arith.constant 0 : index
    %8 = vector.load %arg10[%c0_17, %c0_18] : memref<1x256xf32, #tpu.memory_space<vmem>>, vector<1x256xf32>
    %9 = tpu.iota {dimensions = array<i32: 1>} : vector<1x256xi32>
    %c196_i32 = arith.constant 196 : i32
    %10 = vector.broadcast %c196_i32 : i32 to vector<1x256xi32>
    %11 = arith.cmpi slt, %9, %10 : vector<1x256xi32>
    %cst = arith.constant 0.000000e+00 : f32
    %cst_19 = arith.constant -1.000000e+30 : f32
    %12 = vector.broadcast %cst : f32 to vector<1x256xf32>
    %13 = vector.broadcast %cst_19 : f32 to vector<1x256xf32>
    %14 = arith.select %11, %12, %13 : vector<1x256xi1>, vector<1x256xf32>
    %c0_20 = arith.constant 0 : index
    %c0_21 = arith.constant 0 : index
    %15 = vector.load %arg0[%c0_20, %c0_21] : memref<4x128xf32, #tpu.memory_space<vmem>>, vector<4x128xf32>
    %c0_i32 = arith.constant 0 : i32
    %c7_i32 = arith.constant 7 : i32
    %16 = arith.addi %c0_i32, %c7_i32 : i32
    %c1_i32 = arith.constant 1 : i32
    %17 = scf.for %arg13 = %c0_i32 to %16 step %c1_i32 iter_args(%arg14 = %15) -> (vector<4x128xf32>)  : i32 {
      %cst_23 = arith.constant dense<0.000000e+00> : vector<4x896xf32>
      %18 = tpu.matmul %arg14, %2, %cst_23 {dimension_numbers = #tpu.dot_dimension_numbers<[1], [0], [0], [1], [0, 0, 1, 1], [], []>} : vector<4x128xf32>, vector<128x896xf32>, vector<4x896xf32> -> vector<4x896xf32>
      %19 = vector.broadcast %3 : vector<1x896xf32> to vector<4x896xf32>
      %20 = arith.addf %18, %19 : vector<4x896xf32>
      %21 = vector.extract_strided_slice %20 {offsets = [0, 0], sizes = [4, 256], strides = [1, 1]} : vector<4x896xf32> to vector<4x256xf32>
      %22 = vector.extract_strided_slice %20 {offsets = [0, 256], sizes = [4, 256], strides = [1, 1]} : vector<4x896xf32> to vector<4x256xf32>
      %23 = arith.negf %22 : vector<4x256xf32>
      %24 = math.exp %23 : vector<4x256xf32>
      %cst_24 = arith.constant 1.000000e+00 : f32
      %25 = vector.broadcast %cst_24 : f32 to vector<4x256xf32>
      %26 = arith.addf %25, %24 : vector<4x256xf32>
      %27 = arith.divf %25, %26 : vector<4x256xf32>
      %28 = vector.extract_strided_slice %20 {offsets = [0, 512], sizes = [4, 384], strides = [1, 1]} : vector<4x896xf32> to vector<4x384xf32>
      %29 = vector.shape_cast %21 : vector<4x256xf32> to vector<4x1x256xf32>
      %30 = vector.broadcast %29 : vector<4x1x256xf32> to vector<4x256x256xf32>
      %31 = arith.addf %1, %30 : vector<4x256x256xf32>
      %32 = math.tanh %31 : vector<4x256x256xf32>
      %33 = vector.shape_cast %4 : vector<1x256xf32> to vector<1x1x256xf32>
      %34 = vector.broadcast %33 : vector<1x1x256xf32> to vector<4x256x256xf32>
      %35 = arith.mulf %32, %34 : vector<4x256x256xf32>
      %cst_25 = arith.constant dense<0.000000e+00> : vector<4x256xf32>
      %36 = vector.multi_reduction <add>, %35, %cst_25 [2] : vector<4x256x256xf32> to vector<4x256xf32>
      %37 = vector.broadcast %5 : vector<1x1xf32> to vector<4x256xf32>
      %38 = arith.addf %36, %37 : vector<4x256xf32>
      %39 = vector.broadcast %14 : vector<1x256xf32> to vector<4x256xf32>
      %40 = arith.addf %38, %39 : vector<4x256xf32>
      %cst_26 = arith.constant dense<0xFF800000> : vector<4xf32>
      %41 = vector.multi_reduction <maximumf>, %40, %cst_26 [1] : vector<4x256xf32> to vector<4xf32>
      %42 = vector.shape_cast %41 : vector<4xf32> to vector<4x1xf32>
      %43 = vector.broadcast %42 : vector<4x1xf32> to vector<4x256xf32>
      %44 = arith.subf %40, %43 : vector<4x256xf32>
      %45 = math.exp %44 : vector<4x256xf32>
      %cst_27 = arith.constant dense<0.000000e+00> : vector<4xf32>
      %46 = vector.multi_reduction <add>, %45, %cst_27 [1] : vector<4x256xf32> to vector<4xf32>
      %47 = vector.shape_cast %46 : vector<4xf32> to vector<4x1xf32>
      %48 = tpu.reciprocal %47 {approx = true} : vector<4x1xf32> -> vector<4x1xf32>
      %49 = vector.broadcast %48 : vector<4x1xf32> to vector<4x256xf32>
      %50 = arith.mulf %45, %49 : vector<4x256xf32>
      %51 = vector.shape_cast %50 : vector<4x256xf32> to vector<4x256x1xf32>
      %52 = vector.broadcast %51 : vector<4x256x1xf32> to vector<4x256x256xf32>
      %53 = arith.mulf %52, %0 : vector<4x256x256xf32>
      %cst_28 = arith.constant dense<0.000000e+00> : vector<4x256xf32>
      %54 = vector.multi_reduction <add>, %53, %cst_28 [1] : vector<4x256x256xf32> to vector<4x256xf32>
      %55 = arith.mulf %27, %54 : vector<4x256xf32>
      %cst_29 = arith.constant dense<0.000000e+00> : vector<4x384xf32>
      %56 = tpu.matmul %55, %6, %cst_29 {dimension_numbers = #tpu.dot_dimension_numbers<[1], [0], [0], [1], [0, 0, 1, 1], [], []>} : vector<4x256xf32>, vector<256x384xf32>, vector<4x384xf32> -> vector<4x384xf32>
      %57 = arith.index_cast %arg13 : i32 to index
      %c0_30 = arith.constant 0 : index
      %c0_31 = arith.constant 0 : index
      %58 = vector.load %arg3[%57, %c0_30, %c0_31] : memref<7x4x384xf32, #tpu.memory_space<vmem>>, vector<1x4x384xf32>
      %59 = vector.shape_cast %58 : vector<1x4x384xf32> to vector<4x384xf32>
      %60 = arith.addf %56, %59 : vector<4x384xf32>
      %61 = vector.extract_strided_slice %60 {offsets = [0, 0], sizes = [4, 128], strides = [1, 1]} : vector<4x384xf32> to vector<4x128xf32>
      %62 = vector.extract_strided_slice %28 {offsets = [0, 0], sizes = [4, 128], strides = [1, 1]} : vector<4x384xf32> to vector<4x128xf32>
      %63 = arith.addf %61, %62 : vector<4x128xf32>
      %64 = arith.negf %63 : vector<4x128xf32>
      %65 = math.exp %64 : vector<4x128xf32>
      %cst_32 = arith.constant 1.000000e+00 : f32
      %66 = vector.broadcast %cst_32 : f32 to vector<4x128xf32>
      %67 = arith.addf %66, %65 : vector<4x128xf32>
      %68 = arith.divf %66, %67 : vector<4x128xf32>
      %69 = vector.extract_strided_slice %60 {offsets = [0, 128], sizes = [4, 128], strides = [1, 1]} : vector<4x384xf32> to vector<4x128xf32>
      %70 = vector.extract_strided_slice %28 {offsets = [0, 128], sizes = [4, 128], strides = [1, 1]} : vector<4x384xf32> to vector<4x128xf32>
      %71 = arith.addf %69, %70 : vector<4x128xf32>
      %72 = arith.negf %71 : vector<4x128xf32>
      %73 = math.exp %72 : vector<4x128xf32>
      %cst_33 = arith.constant 1.000000e+00 : f32
      %74 = vector.broadcast %cst_33 : f32 to vector<4x128xf32>
      %75 = arith.addf %74, %73 : vector<4x128xf32>
      %76 = arith.divf %74, %75 : vector<4x128xf32>
      %77 = vector.extract_strided_slice %60 {offsets = [0, 256], sizes = [4, 128], strides = [1, 1]} : vector<4x384xf32> to vector<4x128xf32>
      %78 = vector.extract_strided_slice %28 {offsets = [0, 256], sizes = [4, 128], strides = [1, 1]} : vector<4x384xf32> to vector<4x128xf32>
      %79 = arith.mulf %68, %78 : vector<4x128xf32>
      %80 = arith.addf %77, %79 : vector<4x128xf32>
      %81 = math.tanh %80 : vector<4x128xf32>
      %cst_34 = arith.constant 1.000000e+00 : f32
      %82 = vector.broadcast %cst_34 : f32 to vector<4x128xf32>
      %83 = arith.subf %82, %76 : vector<4x128xf32>
      %84 = arith.mulf %83, %81 : vector<4x128xf32>
      %85 = arith.mulf %76, %arg14 : vector<4x128xf32>
      %86 = arith.addf %84, %85 : vector<4x128xf32>
      %cst_35 = arith.constant dense<0.000000e+00> : vector<4x256xf32>
      %87 = tpu.matmul %86, %7, %cst_35 {dimension_numbers = #tpu.dot_dimension_numbers<[1], [0], [0], [1], [0, 0, 1, 1], [], []>} : vector<4x128xf32>, vector<128x256xf32>, vector<4x256xf32> -> vector<4x256xf32>
      %88 = vector.broadcast %8 : vector<1x256xf32> to vector<4x256xf32>
      %89 = arith.addf %87, %88 : vector<4x256xf32>
      %90 = arith.index_cast %arg13 : i32 to index
      %c0_36 = arith.constant 0 : index
      %c0_37 = arith.constant 0 : index
      %91 = vector.load %arg11[%90, %c0_36, %c0_37] : memref<7x4x256xf32, #tpu.memory_space<vmem>>, vector<1x4x256xf32>
      %92 = vector.shape_cast %91 : vector<1x4x256xf32> to vector<4x256xf32>
      %93 = vector.shape_cast %89 : vector<4x256xf32> to vector<1x4x256xf32>
      tpu.vector_store %arg11[%90, %c0_36, %c0_37], %93 {strides = array<i32>} : memref<7x4x256xf32, #tpu.memory_space<vmem>>, vector<1x4x256xf32>,
      %94 = arith.index_cast %arg13 : i32 to index
      %c0_38 = arith.constant 0 : index
      %c0_39 = arith.constant 0 : index
      %95 = vector.load %arg12[%94, %c0_38, %c0_39] : memref<7x4x256xf32, #tpu.memory_space<vmem>>, vector<1x4x256xf32>
      %96 = vector.shape_cast %95 : vector<1x4x256xf32> to vector<4x256xf32>
      %97 = vector.shape_cast %50 : vector<4x256xf32> to vector<1x4x256xf32>
      tpu.vector_store %arg12[%94, %c0_38, %c0_39], %97 {strides = array<i32>} : memref<7x4x256xf32, #tpu.memory_space<vmem>>, vector<1x4x256xf32>,
      scf.yield %86 : vector<4x128xf32>
    }
    %c7_i32_22 = arith.constant 7 : i32
    return
  }
}

</mosaic_0001>

<llo_original>
// kernel: decoder_rnn_forward.1
$region0: #{decoder_rnn_forward.1}
  #allocation0 [shape = 'u32[]', space=smem, size = 0x4, offset = 0x4, fixed_abs, tag = 'smem constant byte address 0x4 - core index']
  #allocation1 [shape = 'u32[72,128]{1,0:T(1,128)}', space=vmem, size = 0x9000, scoped, tag = 'internal scratch']
  #allocation2 [shape = 'f32[1,1]{1,0:T(1,128)S(1)}', space=vmem, size = 0x200, scoped, tag = 'scoped memory for decoder_rnn_forward.1']
  %s0 = inlined_call_operand.vmem [shape: f32[4,128], index: 0, kind: input, shape index: {}]
  %s1 = inlined_call_operand.vmem [shape: f32[4,256,256], index: 1, kind: input, shape index: {}]
  %s2 = inlined_call_operand.vmem [shape: f32[4,256,256], index: 2, kind: input, shape index: {}]
  %s3 = inlined_call_operand.vmem [shape: f32[7,4,384], index: 3, kind: input, shape index: {}]
  %s4 = inlined_call_operand.vmem [shape: f32[128,896], index: 4, kind: input, shape index: {}]
  %s5 = inlined_call_operand.vmem [shape: f32[1,896], index: 5, kind: input, shape index: {}]
  %s6 = inlined_call_operand.vmem [shape: f32[1,256], index: 6, kind: input, shape index: {}]
  %s7 = inlined_call_operand.<no memory space> [shape: f32[1,1], index: 7, kind: input, shape index: {}]
  %s8 = inlined_call_operand.vmem [shape: f32[256,384], index: 8, kind: input, shape index: {}]
  %s9 = inlined_call_operand.vmem [shape: f32[128,256], index: 9, kind: input, shape index: {}]
  %s10 = inlined_call_operand.vmem [shape: f32[1,256], index: 10, kind: input, shape index: {}]
  %s11 = inlined_call_operand.vmem [shape: f32[7,4,256], index: 11, kind: output, shape index: {0}]
  %s12 = inlined_call_operand.vmem [shape: f32[7,4,256], index: 12, kind: output, shape index: {1}]
  %13 = xla_tuple %s11, %s12
  %s14 = sld [smem:[#allocation0]]
  $region69: #{decoder_rnn_forward.1} parent=0
    _
  %s16 = ssub.s32 1, %s14
  %s17 = scalar_select 0, %s16, %s14
  %v18 = vstv %s7
  %19 = vst [vmem:[#allocation2] sm:$0x1] %v18
  // Predicated region
  $region2: #{decoder_rnn_forward.1} parent=0 // pred_check
    _
  $region3: #{decoder_rnn_forward.1} parent=0 // pred_check_branch
    %21 = sbr.rel (0) target = $region5
  $region4: #{decoder_rnn_forward.1} parent=0 // pred_region
    _
  $region5: #{decoder_rnn_forward.1} parent=0 // pred_fallthru
    _
  // Predicated region
  $region6: #{decoder_rnn_forward.1} parent=0 // pred_check
    _
  $region7: #{decoder_rnn_forward.1} parent=0 // pred_check_branch
    %23 = sbr.rel (0) target = $region9
  $region8: #{decoder_rnn_forward.1} parent=0 // pred_region
    _
  $region9: #{decoder_rnn_forward.1} parent=0 // pred_fallthru
    _
  // Predicated region
  $region10: #{decoder_rnn_forward.1} parent=0 // pred_check
    _
  $region11: #{decoder_rnn_forward.1} parent=0 // pred_check_branch
    %25 = sbr.rel (0) target = $region13
  $region12: #{decoder_rnn_forward.1} parent=0 // pred_region
    _
  $region13: #{decoder_rnn_forward.1} parent=0 // pred_fallthru
    _
  // Predicated region
  $region14: #{decoder_rnn_forward.1} parent=0 // pred_check
    _
  $region15: #{decoder_rnn_forward.1} parent=0 // pred_check_branch
    %27 = sbr.rel (0) target = $region17
  $region16: #{decoder_rnn_forward.1} parent=0 // pred_region
    _
  $region17: #{decoder_rnn_forward.1} parent=0 // pred_fallthru
    _
  // Predicated region
  $region18: #{decoder_rnn_forward.1} parent=0 // pred_check
    _
  $region19: #{decoder_rnn_forward.1} parent=0 // pred_check_branch
    %29 = sbr.rel (0) target = $region21
  $region20: #{decoder_rnn_forward.1} parent=0 // pred_region
    _
  $region21: #{decoder_rnn_forward.1} parent=0 // pred_fallthru
    _
  // Predicated region
  $region22: #{decoder_rnn_forward.1} parent=0 // pred_check
    _
  $region23: #{decoder_rnn_forward.1} parent=0 // pred_check_branch
    %31 = sbr.rel (0) target = $region25
  $region24: #{decoder_rnn_forward.1} parent=0 // pred_region
    _
  $region25: #{decoder_rnn_forward.1} parent=0 // pred_fallthru
    _
  // Predicated region
  $region26: #{decoder_rnn_forward.1} parent=0 // pred_check
    _
  $region27: #{decoder_rnn_forward.1} parent=0 // pred_check_branch
    %33 = sbr.rel (0) target = $region29
  $region28: #{decoder_rnn_forward.1} parent=0 // pred_region
    _
  $region29: #{decoder_rnn_forward.1} parent=0 // pred_fallthru
    _
  // Predicated region
  $region30: #{decoder_rnn_forward.1} parent=0 // pred_check
    _
  $region31: #{decoder_rnn_forward.1} parent=0 // pred_check_branch
    %35 = sbr.rel (0) target = $region33
  $region32: #{decoder_rnn_forward.1} parent=0 // pred_region
    _
  $region33: #{decoder_rnn_forward.1} parent=0 // pred_fallthru
    _
  // Predicated region
  $region34: #{decoder_rnn_forward.1} parent=0 // pred_check
    _
  $region35: #{decoder_rnn_forward.1} parent=0 // pred_check_branch
    %37 = sbr.rel (0) target = $region37
  $region36: #{decoder_rnn_forward.1} parent=0 // pred_region
    _
  $region37: #{decoder_rnn_forward.1} parent=0 // pred_fallthru
    _
  // Predicated region
  $region38: #{decoder_rnn_forward.1} parent=0 // pred_check
    _
  $region39: #{decoder_rnn_forward.1} parent=0 // pred_check_branch
    %39 = sbr.rel (0) target = $region41
  $region40: #{decoder_rnn_forward.1} parent=0 // pred_region
    _
  $region41: #{decoder_rnn_forward.1} parent=0 // pred_fallthru
    _
  // Predicated region
  $region42: #{decoder_rnn_forward.1} parent=0 // pred_check
    _
  $region43: #{decoder_rnn_forward.1} parent=0 // pred_check_branch
    %41 = sbr.rel (0) target = $region45
  $region44: #{decoder_rnn_forward.1} parent=0 // pred_region
    _
  $region45: #{decoder_rnn_forward.1} parent=0 // pred_fallthru
    _
  %v42 = vld [vmem:[%s2] sm:$0xff]
  %v43 = vld [vmem:[%s2 + $0x8] sm:$0xff]
  %v44 = vld [vmem:[%s2 + $0x10] sm:$0xff]
  %v45 = vld [vmem:[%s2 + $0x18] sm:$0xff]
  %v46 = vld [vmem:[%s2 + $0x20] sm:$0xff]
  %v47 = vld [vmem:[%s2 + $0x28] sm:$0xff]
  %v48 = vld [vmem:[%s2 + $0x30] sm:$0xff]
  %v49 = vld [vmem:[%s2 + $0x38] sm:$0xff]
  %v50 = vld [vmem:[%s2 + $0x40] sm:$0xff]
  %v51 = vld [vmem:[%s2 + $0x48] sm:$0xff]
  %v52 = vld [vmem:[%s2 + $0x50] sm:$0xff]
  %v53 = vld [vmem:[%s2 + $0x58] sm:$0xff]
  %v54 = vld [vmem:[%s2 + $0x60] sm:$0xff]
  %v55 = vld [vmem:[%s2 + $0x68] sm:$0xff]
  %v56 = vld [vmem:[%s2 + $0x70] sm:$0xff]
  %v57 = vld [vmem:[%s2 + $0x78] sm:$0xff]
  %v58 = vld [vmem:[%s2 + $0x80] sm:$0xff]
  %v59 = vld [vmem:[%s2 + $0x88] sm:$0xff]
  %v60 = vld [vmem:[%s2 + $0x90] sm:$0xff]
  %v61 = vld [vmem:[%s2 + $0x98] sm:$0xff]
  %v62 = vld [vmem:[%s2 + $0xa0] sm:$0xff]
  %v63 = vld [vmem:[%s2 + $0xa8] sm:$0xff]
  %v64 = vld [vmem:[%s2 + $0xb0] sm:$0xff]
  %v65 = vld [vmem:[%s2 + $0xb8] sm:$0xff]
  %v66 = vld [vmem:[%s2 + $0xc0] sm:$0xff]
  %v67 = vld [vmem:[%s2 + $0xc8] sm:$0xff]
  %v68 = vld [vmem:[%s2 + $0xd0] sm:$0xff]
  %v69 = vld [vmem:[%s2 + $0xd8] sm:$0xff]
  %v70 = vld [vmem:[%s2 + $0xe0] sm:$0xff]
  %v71 = vld [vmem:[%s2 + $0xe8] sm:$0xff]
  %v72 = vld [vmem:[%s2 + $0xf0] sm:$0xff]
  %v73 = vld [vmem:[%s2 + $0xf8] sm:$0xff]
  %v74 = vld [vmem:[%s2 + $0x100] sm:$0xff]
  %v75 = vld [vmem:[%s2 + $0x108] sm:$0xff]
  %v76 = vld [vmem:[%s2 + $0x110] sm:$0xff]
  %v77 = vld [vmem:[%s2 + $0x118] sm:$0xff]
  %v78 = vld [vmem:[%s2 + $0x120] sm:$0xff]
  %v79 = vld [vmem:[%s2 + $0x128] sm:$0xff]
  %v80 = vld [vmem:[%s2 + $0x130] sm:$0xff]
  %v81 = vld [vmem:[%s2 + $0x138] sm:$0xff]
  %v82 = vld [vmem:[%s2 + $0x140] sm:$0xff]
  %v83 = vld [vmem:[%s2 + $0x148] sm:$0xff]
  %v84 = vld [vmem:[%s2 + $0x150] sm:$0xff]
  %v85 = vld [vmem:[%s2 + $0x158] sm:$0xff]
  %v86 = vld [vmem:[%s2 + $0x160] sm:$0xff]
  %v87 = vld [vmem:[%s2 + $0x168] sm:$0xff]
  %v88 = vld [vmem:[%s2 + $0x170] sm:$0xff]
  %v89 = vld [vmem:[%s2 + $0x178] sm:$0xff]
  %v90 = vld [vmem:[%s2 + $0x180] sm:$0xff]
  %v91 = vld [vmem:[%s2 + $0x188] sm:$0xff]
  %v92 = vld [vmem:[%s2 + $0x190] sm:$0xff]
  %v93 = vld [vmem:[%s2 + $0x198] sm:$0xff]
  %v94 = vld [vmem:[%s2 + $0x1a0] sm:$0xff]
  %v95 = vld [vmem:[%s2 + $0x1a8] sm:$0xff]
  %v96 = vld [vmem:[%s2 + $0x1b0] sm:$0xff]
  %v97 = vld [vmem:[%s2 + $0x1b8] sm:$0xff]
  %v98 = vld [vmem:[%s2 + $0x1c0] sm:$0xff]
  %v99 = vld [vmem:[%s2 + $0x1c8] sm:$0xff]
  %v100 = vld [vmem:[%s2 + $0x1d0] sm:$0xff]
  %v101 = vld [vmem:[%s2 + $0x1d8] sm:$0xff]
  %v102 = vld [vmem:[%s2 + $0x1e0] sm:$0xff]
  %v103 = vld [vmem:[%s2 + $0x1e8] sm:$0xff]
  %v104 = vld [vmem:[%s2 + $0x1f0] sm:$0xff]
  %v105 = vld [vmem:[%s2 + $0x1f8] sm:$0xff]
  %v106 = vld [vmem:[%s2 + $0x200] sm:$0xff]
  %v107 = vld [vmem:[%s2 + $0x208] sm:$0xff]
  %v108 = vld [vmem:[%s2 + $0x210] sm:$0xff]
  %v109 = vld [vmem:[%s2 + $0x218] sm:$0xff]
  %v110 = vld [vmem:[%s2 + $0x220] sm:$0xff]
  %v111 = vld [vmem:[%s2 + $0x228] sm:$0xff]
  %v112 = vld [vmem:[%s2 + $0x230] sm:$0xff]
  %v113 = vld [vmem:[%s2 + $0x238] sm:$0xff]
  %v114 = vld [vmem:[%s2 + $0x240] sm:$0xff]
  %v115 = vld [vmem:[%s2 + $0x248] sm:$0xff]
  %v116 = vld [vmem:[%s2 + $0x250] sm:$0xff]
  %v117 = vld [vmem:[%s2 + $0x258] sm:$0xff]
  %v118 = vld [vmem:[%s2 + $0x260] sm:$0xff]
  %v119 = vld [vmem:[%s2 + $0x268] sm:$0xff]
  %v120 = vld [vmem:[%s2 + $0x270] sm:$0xff]
  %v121 = vld [vmem:[%s2 + $0x278] sm:$0xff]
  %v122 = vld [vmem:[%s2 + $0x280] sm:$0xff]
  %v123 = vld [vmem:[%s2 + $0x288] sm:$0xff]
  %v124 = vld [vmem:[%s2 + $0x290] sm:$0xff]
  %v125 = vld [vmem:[%s2 + $0x298] sm:$0xff]
  %v126 = vld [vmem:[%s2 + $0x2a0] sm:$0xff]
  %v127 = vld [vmem:[%s2 + $0x2a8] sm:$0xff]
  %v128 = vld [vmem:[%s2 + $0x2b0] sm:$0xff]
  %v129 = vld [vmem:[%s2 + $0x2b8] sm:$0xff]
  %v130 = vld [vmem:[%s2 + $0x2c0] sm:$0xff]
  %v131 = vld [vmem:[%s2 + $0x2c8] sm:$0xff]
  %v132 = vld [vmem:[%s2 + $0x2d0] sm:$0xff]
  %v133 = vld [vmem:[%s2 + $0x2d8] sm:$0xff]
  %v134 = vld [vmem:[%s2 + $0x2e0] sm:$0xff]
  %v135 = vld [vmem:[%s2 + $0x2e8] sm:$0xff]
  %v136 = vld [vmem:[%s2 + $0x2f0] sm:$0xff]
  %v137 = vld [vmem:[%s2 + $0x2f8] sm:$0xff]
  %v138 = vld [vmem:[%s2 + $0x300] sm:$0xff]
  %v139 = vld [vmem:[%s2 + $0x308] sm:$0xff]
  %v140 = vld [vmem:[%s2 + $0x310] sm:$0xff]
  %v141 = vld [vmem:[%s2 + $0x318] sm:$0xff]
  %v142 = vld [vmem:[%s2 + $0x320] sm:$0xff]
  %v143 = vld [vmem:[%s2 + $0x328] sm:$0xff]
  %v144 = vld [vmem:[%s2 + $0x330] sm:$0xff]
  %v145 = vld [vmem:[%s2 + $0x338] sm:$0xff]
  %v146 = vld [vmem:[%s2 + $0x340] sm:$0xff]
  %v147 = vld [vmem:[%s2 + $0x348] sm:$0xff]
  %v148 = vld [vmem:[%s2 + $0x350] sm:$0xff]
  %v149 = vld [vmem:[%s2 + $0x358] sm:$0xff]
  %v150 = vld [vmem:[%s2 + $0x360] sm:$0xff]
  %v151 = vld [vmem:[%s2 + $0x368] sm:$0xff]
  %v152 = vld [vmem:[%s2 + $0x370] sm:$0xff]
  %v153 = vld [vmem:[%s2 + $0x378] sm:$0xff]
  %v154 = vld [vmem:[%s2 + $0x380] sm:$0xff]
  %v155 = vld [vmem:[%s2 + $0x388] sm:$0xff]
  %v156 = vld [vmem:[%s2 + $0x390] sm:$0xff]
  %v157 = vld [vmem:[%s2 + $0x398] sm:$0xff]
  %v158 = vld [vmem:[%s2 + $0x3a0] sm:$0xff]
  %v159 = vld [vmem:[%s2 + $0x3a8] sm:$0xff]
  %v160 = vld [vmem:[%s2 + $0x3b0] sm:$0xff]
  %v161 = vld [vmem:[%s2 + $0x3b8] sm:$0xff]
  %v162 = vld [vmem:[%s2 + $0x3c0] sm:$0xff]
  %v163 = vld [vmem:[%s2 + $0x3c8] sm:$0xff]
  %v164 = vld [vmem:[%s2 + $0x3d0] sm:$0xff]
  %v165 = vld [vmem:[%s2 + $0x3d8] sm:$0xff]
  %v166 = vld [vmem:[%s2 + $0x3e0] sm:$0xff]
  %v167 = vld [vmem:[%s2 + $0x3e8] sm:$0xff]
  %v168 = vld [vmem:[%s2 + $0x3f0] sm:$0xff]
  %v169 = vld [vmem:[%s2 + $0x3f8] sm:$0xff]
  %v170 = vld [vmem:[%s2 + $0x400] sm:$0xff]
  %v171 = vld [vmem:[%s2 + $0x408] sm:$0xff]
  %v172 = vld [vmem:[%s2 + $0x410] sm:$0xff]
  %v173 = vld [vmem:[%s2 + $0x418] sm:$0xff]
  %v174 = vld [vmem:[%s2 + $0x420] sm:$0xff]
  %v175 = vld [vmem:[%s2 + $0x428] sm:$0xff]
  %v176 = vld [vmem:[%s2 + $0x430] sm:$0xff]
  %v177 = vld [vmem:[%s2 + $0x438] sm:$0xff]
  %v178 = vld [vmem:[%s2 + $0x440] sm:$0xff]
  %v179 = vld [vmem:[%s2 + $0x448] sm:$0xff]
  %v180 = vld [vmem:[%s2 + $0x450] sm:$0xff]
  %v181 = vld [vmem:[%s2 + $0x458] sm:$0xff]
  %v182 = vld [vmem:[%s2 + $0x460] sm:$0xff]
  %v183 = vld [vmem:[%s2 + $0x468] sm:$0xff]
  %v184 = vld [vmem:[%s2 + $0x470] sm:$0xff]
  %v185 = vld [vmem:[%s2 + $0x478] sm:$0xff]
  %v186 = vld [vmem:[%s2 + $0x480] sm:$0xff]
  %v187 = vld [vmem:[%s2 + $0x488] sm:$0xff]
  %v188 = vld [vmem:[%s2 + $0x490] sm:$0xff]
  %v189 = vld [vmem:[%s2 + $0x498] sm:$0xff]
  %v190 = vld [vmem:[%s2 + $0x4a0] sm:$0xff]
  %v191 = vld [vmem:[%s2 + $0x4a8] sm:$0xff]
  %v192 = vld [vmem:[%s2 + $0x4b0] sm:$0xff]
  %v193 = vld [vmem:[%s2 + $0x4b8] sm:$0xff]
  %v194 = vld [vmem:[%s2 + $0x4c0] sm:$0xff]
  %v195 = vld [vmem:[%s2 + $0x4c8] sm:$0xff]
  %v196 = vld [vmem:[%s2 + $0x4d0] sm:$0xff]
  %v197 = vld [vmem:[%s2 + $0x4d8] sm:$0xff]
  %v198 = vld [vmem:[%s2 + $0x4e0] sm:$0xff]
  %v199 = vld [vmem:[%s2 + $0x4e8] sm:$0xff]
  %v200 = vld [vmem:[%s2 + $0x4f0] sm:$0xff]
  %v201 = vld [vmem:[%s2 + $0x4f8] sm:$0xff]
  %v202 = vld [vmem:[%s2 + $0x500] sm:$0xff]
  %v203 = vld [vmem:[%s2 + $0x508] sm:$0xff]
  %v204 = vld [vmem:[%s2 + $0x510] sm:$0xff]
  %v205 = vld [vmem:[%s2 + $0x518] sm:$0xff]
  %v206 = vld [vmem:[%s2 + $0x520] sm:$0xff]
  %v207 = vld [vmem:[%s2 + $0x528] sm:$0xff]
  %v208 = vld [vmem:[%s2 + $0x530] sm:$0xff]
  %v209 = vld [vmem:[%s2 + $0x538] sm:$0xff]
  %v210 = vld [vmem:[%s2 + $0x540] sm:$0xff]
  %v211 = vld [vmem:[%s2 + $0x548] sm:$0xff]
  %v212 = vld [vmem:[%s2 + $0x550] sm:$0xff]
  %v213 = vld [vmem:[%s2 + $0x558] sm:$0xff]
  %v214 = vld [vmem:[%s2 + $0x560] sm:$0xff]
  %v215 = vld [vmem:[%s2 + $0x568] sm:$0xff]
  %v216 = vld [vmem:[%s2 + $0x570] sm:$0xff]
  %v217 = vld [vmem:[%s2 + $0x578] sm:$0xff]
  %v218 = vld [vmem:[%s2 + $0x580] sm:$0xff]
  %v219 = vld [vmem:[%s2 + $0x588] sm:$0xff]
  %v220 = vld [vmem:[%s2 + $0x590] sm:$0xff]
  %v221 = vld [vmem:[%s2 + $0x598] sm:$0xff]
  %v222 = vld [vmem:[%s2 + $0x5a0] sm:$0xff]
  %v223 = vld [vmem:[%s2 + $0x5a8] sm:$0xff]
  %v224 = vld [vmem:[%s2 + $0x5b0] sm:$0xff]
  %v225 = vld [vmem:[%s2 + $0x5b8] sm:$0xff]
  %v226 = vld [vmem:[%s2 + $0x5c0] sm:$0xff]
  %v227 = vld [vmem:[%s2 + $0x5c8] sm:$0xff]
  %v228 = vld [vmem:[%s2 + $0x5d0] sm:$0xff]
  %v229 = vld [vmem:[%s2 + $0x5d8] sm:$0xff]
  %v230 = vld [vmem:[%s2 + $0x5e0] sm:$0xff]
  %v231 = vld [vmem:[%s2 + $0x5e8] sm:$0xff]
  %v232 = vld [vmem:[%s2 + $0x5f0] sm:$0xff]
  %v233 = vld [vmem:[%s2 + $0x5f8] sm:$0xff]
  %v234 = vld [vmem:[%s2 + $0x600] sm:$0xff]
  %v235 = vld [vmem:[%s2 + $0x608] sm:$0xff]
  %v236 = vld [vmem:[%s2 + $0x610] sm:$0xff]
  %v237 = vld [vmem:[%s2 + $0x618] sm:$0xff]
  %v238 = vld [vmem:[%s2 + $0x620] sm:$0xff]
  %v239 = vld [vmem:[%s2 + $0x628] sm:$0xff]
  %v240 = vld [vmem:[%s2 + $0x630] sm:$0xff]
  %v241 = vld [vmem:[%s2 + $0x638] sm:$0xff]
  %v242 = vld [vmem:[%s2 + $0x640] sm:$0xff]
  %v243 = vld [vmem:[%s2 + $0x648] sm:$0xff]
  %v244 = vld [vmem:[%s2 + $0x650] sm:$0xff]
  %v245 = vld [vmem:[%s2 + $0x658] sm:$0xff]
  %v246 = vld [vmem:[%s2 + $0x660] sm:$0xff]
  %v247 = vld [vmem:[%s2 + $0x668] sm:$0xff]
  %v248 = vld [vmem:[%s2 + $0x670] sm:$0xff]
  %v249 = vld [vmem:[%s2 + $0x678] sm:$0xff]
  %v250 = vld [vmem:[%s2 + $0x680] sm:$0xff]
  %v251 = vld [vmem:[%s2 + $0x688] sm:$0xff]
  %v252 = vld [vmem:[%s2 + $0x690] sm:$0xff]
  %v253 = vld [vmem:[%s2 + $0x698] sm:$0xff]
  %v254 = vld [vmem:[%s2 + $0x6a0] sm:$0xff]
  %v255 = vld [vmem:[%s2 + $0x6a8] sm:$0xff]
  %v256 = vld [vmem:[%s2 + $0x6b0] sm:$0xff]
  %v257 = vld [vmem:[%s2 + $0x6b8] sm:$0xff]
  %v258 = vld [vmem:[%s2 + $0x6c0] sm:$0xff]
  %v259 = vld [vmem:[%s2 + $0x6c8] sm:$0xff]
  %v260 = vld [vmem:[%s2 + $0x6d0] sm:$0xff]
  %v261 = vld [vmem:[%s2 + $0x6d8] sm:$0xff]
  %v262 = vld [vmem:[%s2 + $0x6e0] sm:$0xff]
  %v263 = vld [vmem:[%s2 + $0x6e8] sm:$0xff]
  %v264 = vld [vmem:[%s2 + $0x6f0] sm:$0xff]
  %v265 = vld [vmem:[%s2 + $0x6f8] sm:$0xff]
  %v266 = vld [vmem:[%s2 + $0x700] sm:$0xff]
  %v267 = vld [vmem:[%s2 + $0x708] sm:$0xff]
  %v268 = vld [vmem:[%s2 + $0x710] sm:$0xff]
  %v269 = vld [vmem:[%s2 + $0x718] sm:$0xff]
  %v270 = vld [vmem:[%s2 + $0x720] sm:$0xff]
  %v271 = vld [vmem:[%s2 + $0x728] sm:$0xff]
  %v272 = vld [vmem:[%s2 + $0x730] sm:$0xff]
  %v273 = vld [vmem:[%s2 + $0x738] sm:$0xff]
  %v274 = vld [vmem:[%s2 + $0x740] sm:$0xff]
  %v275 = vld [vmem:[%s2 + $0x748] sm:$0xff]
  %v276 = vld [vmem:[%s2 + $0x750] sm:$0xff]
  %v277 = vld [vmem:[%s2 + $0x758] sm:$0xff]
  %v278 = vld [vmem:[%s2 + $0x760] sm:$0xff]
  %v279 = vld [vmem:[%s2 + $0x768] sm:$0xff]
  %v280 = vld [vmem:[%s2 + $0x770] sm:$0xff]
  %v281 = vld [vmem:[%s2 + $0x778] sm:$0xff]
  %v282 = vld [vmem:[%s2 + $0x780] sm:$0xff]
  %v283 = vld [vmem:[%s2 + $0x788] sm:$0xff]
  %v284 = vld [vmem:[%s2 + $0x790] sm:$0xff]
  %v285 = vld [vmem:[%s2 + $0x798] sm:$0xff]
  %v286 = vld [vmem:[%s2 + $0x7a0] sm:$0xff]
  %v287 = vld [vmem:[%s2 + $0x7a8] sm:$0xff]
  %v288 = vld [vmem:[%s2 + $0x7b0] sm:$0xff]
  %v289 = vld [vmem:[%s2 + $0x7b8] sm:$0xff]
  %v290 = vld [vmem:[%s2 + $0x7c0] sm:$0xff]
  %v291 = vld [vmem:[%s2 + $0x7c8] sm:$0xff]
  %v292 = vld [vmem:[%s2 + $0x7d0] sm:$0xff]
  %v293 = vld [vmem:[%s2 + $0x7d8] sm:$0xff]
  %v294 = vld [vmem:[%s2 + $0x7e0] sm:$0xff]
  %v295 = vld [vmem:[%s2 + $0x7e8] sm:$0xff]
  %v296 = vld [vmem:[%s2 + $0x7f0] sm:$0xff]
  %v297 = vld [vmem:[%s2 + $0x7f8] sm:$0xff]
  %v298 = vld [vmem:[%s1] sm:$0xff]
  %v299 = vld [vmem:[%s1 + $0x8] sm:$0xff]
  %v300 = vld [vmem:[%s1 + $0x10] sm:$0xff]
  %v301 = vld [vmem:[%s1 + $0x18] sm:$0xff]
  %v302 = vld [vmem:[%s1 + $0x20] sm:$0xff]
  %v303 = vld [vmem:[%s1 + $0x28] sm:$0xff]
  %v304 = vld [vmem:[%s1 + $0x30] sm:$0xff]
  %v305 = vld [vmem:[%s1 + $0x38] sm:$0xff]
  %v306 = vld [vmem:[%s1 + $0x40] sm:$0xff]
  %v307 = vld [vmem:[%s1 + $0x48] sm:$0xff]
  %v308 = vld [vmem:[%s1 + $0x50] sm:$0xff]
  %v309 = vld [vmem:[%s1 + $0x58] sm:$0xff]
  %v310 = vld [vmem:[%s1 + $0x60] sm:$0xff]
  %v311 = vld [vmem:[%s1 + $0x68] sm:$0xff]
  %v312 = vld [vmem:[%s1 + $0x70] sm:$0xff]
  %v313 = vld [vmem:[%s1 + $0x78] sm:$0xff]
  %v314 = vld [vmem:[%s1 + $0x80] sm:$0xff]
  %v315 = vld [vmem:[%s1 + $0x88] sm:$0xff]
  %v316 = vld [vmem:[%s1 + $0x90] sm:$0xff]
  %v317 = vld [vmem:[%s1 + $0x98] sm:$0xff]
  %v318 = vld [vmem:[%s1 + $0xa0] sm:$0xff]
  %v319 = vld [vmem:[%s1 + $0xa8] sm:$0xff]
  %v320 = vld [vmem:[%s1 + $0xb0] sm:$0xff]
  %v321 = vld [vmem:[%s1 + $0xb8] sm:$0xff]
  %v322 = vld [vmem:[%s1 + $0xc0] sm:$0xff]
  %v323 = vld [vmem:[%s1 + $0xc8] sm:$0xff]
  %v324 = vld [vmem:[%s1 + $0xd0] sm:$0xff]
  %v325 = vld [vmem:[%s1 + $0xd8] sm:$0xff]
  %v326 = vld [vmem:[%s1 + $0xe0] sm:$0xff]
  %v327 = vld [vmem:[%s1 + $0xe8] sm:$0xff]
  %v328 = vld [vmem:[%s1 + $0xf0] sm:$0xff]
  %v329 = vld [vmem:[%s1 + $0xf8] sm:$0xff]
  %v330 = vld [vmem:[%s1 + $0x100] sm:$0xff]
  %v331 = vld [vmem:[%s1 + $0x108] sm:$0xff]
  %v332 = vld [vmem:[%s1 + $0x110] sm:$0xff]
  %v333 = vld [vmem:[%s1 + $0x118] sm:$0xff]
  %v334 = vld [vmem:[%s1 + $0x120] sm:$0xff]
  %v335 = vld [vmem:[%s1 + $0x128] sm:$0xff]
  %v336 = vld [vmem:[%s1 + $0x130] sm:$0xff]
  %v337 = vld [vmem:[%s1 + $0x138] sm:$0xff]
  %v338 = vld [vmem:[%s1 + $0x140] sm:$0xff]
  %v339 = vld [vmem:[%s1 + $0x148] sm:$0xff]
  %v340 = vld [vmem:[%s1 + $0x150] sm:$0xff]
  %v341 = vld [vmem:[%s1 + $0x158] sm:$0xff]
  %v342 = vld [vmem:[%s1 + $0x160] sm:$0xff]
  %v343 = vld [vmem:[%s1 + $0x168] sm:$0xff]
  %v344 = vld [vmem:[%s1 + $0x170] sm:$0xff]
  %v345 = vld [vmem:[%s1 + $0x178] sm:$0xff]
  %v346 = vld [vmem:[%s1 + $0x180] sm:$0xff]
  %v347 = vld [vmem:[%s1 + $0x188] sm:$0xff]
  %v348 = vld [vmem:[%s1 + $0x190] sm:$0xff]
  %v349 = vld [vmem:[%s1 + $0x198] sm:$0xff]
  %v350 = vld [vmem:[%s1 + $0x1a0] sm:$0xff]
  %v351 = vld [vmem:[%s1 + $0x1a8] sm:$0xff]
  %v352 = vld [vmem:[%s1 + $0x1b0] sm:$0xff]
  %v353 = vld [vmem:[%s1 + $0x1b8] sm:$0xff]
  %v354 = vld [vmem:[%s1 + $0x1c0] sm:$0xff]
  %v355 = vld [vmem:[%s1 + $0x1c8] sm:$0xff]
  %v356 = vld [vmem:[%s1 + $0x1d0] sm:$0xff]
  %v357 = vld [vmem:[%s1 + $0x1d8] sm:$0xff]
  %v358 = vld [vmem:[%s1 + $0x1e0] sm:$0xff]
  %v359 = vld [vmem:[%s1 + $0x1e8] sm:$0xff]
  %v360 = vld [vmem:[%s1 + $0x1f0] sm:$0xff]
  %v361 = vld [vmem:[%s1 + $0x1f8] sm:$0xff]
  %v362 = vld [vmem:[%s1 + $0x200] sm:$0xff]
  %v363 = vld [vmem:[%s1 + $0x208] sm:$0xff]
  %v364 = vld [vmem:[%s1 + $0x210] sm:$0xff]
  %v365 = vld [vmem:[%s1 + $0x218] sm:$0xff]
  %v366 = vld [vmem:[%s1 + $0x220] sm:$0xff]
  %v367 = vld [vmem:[%s1 + $0x228] sm:$0xff]
  %v368 = vld [vmem:[%s1 + $0x230] sm:$0xff]
  %v369 = vld [vmem:[%s1 + $0x238] sm:$0xff]
  %v370 = vld [vmem:[%s1 + $0x240] sm:$0xff]
  %v371 = vld [vmem:[%s1 + $0x248] sm:$0xff]
  %v372 = vld [vmem:[%s1 + $0x250] sm:$0xff]
  %v373 = vld [vmem:[%s1 + $0x258] sm:$0xff]
  %v374 = vld [vmem:[%s1 + $0x260] sm:$0xff]
  %v375 = vld [vmem:[%s1 + $0x268] sm:$0xff]
  %v376 = vld [vmem:[%s1 + $0x270] sm:$0xff]
  %v377 = vld [vmem:[%s1 + $0x278] sm:$0xff]
  %v378 = vld [vmem:[%s1 + $0x280] sm:$0xff]
  %v379 = vld [vmem:[%s1 + $0x288] sm:$0xff]
  %v380 = vld [vmem:[%s1 + $0x290] sm:$0xff]
  %v381 = vld [vmem:[%s1 + $0x298] sm:$0xff]
  %v382 = vld [vmem:[%s1 + $0x2a0] sm:$0xff]
  %v383 = vld [vmem:[%s1 + $0x2a8] sm:$0xff]
  %v384 = vld [vmem:[%s1 + $0x2b0] sm:$0xff]
  %v385 = vld [vmem:[%s1 + $0x2b8] sm:$0xff]
  %v386 = vld [vmem:[%s1 + $0x2c0] sm:$0xff]
  %v387 = vld [vmem:[%s1 + $0x2c8] sm:$0xff]
  %v388 = vld [vmem:[%s1 + $0x2d0] sm:$0xff]
  %v389 = vld [vmem:[%s1 + $0x2d8] sm:$0xff]
  %v390 = vld [vmem:[%s1 + $0x2e0] sm:$0xff]
  %v391 = vld [vmem:[%s1 + $0x2e8] sm:$0xff]
  %v392 = vld [vmem:[%s1 + $0x2f0] sm:$0xff]
  %v393 = vld [vmem:[%s1 + $0x2f8] sm:$0xff]
  %v394 = vld [vmem:[%s1 + $0x300] sm:$0xff]
  %v395 = vld [vmem:[%s1 + $0x308] sm:$0xff]
  %v396 = vld [vmem:[%s1 + $0x310] sm:$0xff]
  %v397 = vld [vmem:[%s1 + $0x318] sm:$0xff]
  %v398 = vld [vmem:[%s1 + $0x320] sm:$0xff]
  %v399 = vld [vmem:[%s1 + $0x328] sm:$0xff]
  %v400 = vld [vmem:[%s1 + $0x330] sm:$0xff]
  %v401 = vld [vmem:[%s1 + $0x338] sm:$0xff]
  %v402 = vld [vmem:[%s1 + $0x340] sm:$0xff]
  %v403 = vld [vmem:[%s1 + $0x348] sm:$0xff]
  %v404 = vld [vmem:[%s1 + $0x350] sm:$0xff]
  %v405 = vld [vmem:[%s1 + $0x358] sm:$0xff]
  %v406 = vld [vmem:[%s1 + $0x360] sm:$0xff]
  %v407 = vld [vmem:[%s1 + $0x368] sm:$0xff]
  %v408 = vld [vmem:[%s1 + $0x370] sm:$0xff]
  %v409 = vld [vmem:[%s1 + $0x378] sm:$0xff]
  %v410 = vld [vmem:[%s1 + $0x380] sm:$0xff]
  %v411 = vld [vmem:[%s1 + $0x388] sm:$0xff]
  %v412 = vld [vmem:[%s1 + $0x390] sm:$0xff]
  %v413 = vld [vmem:[%s1 + $0x398] sm:$0xff]
  %v414 = vld [vmem:[%s1 + $0x3a0] sm:$0xff]
  %v415 = vld [vmem:[%s1 + $0x3a8] sm:$0xff]
  %v416 = vld [vmem:[%s1 + $0x3b0] sm:$0xff]
  %v417 = vld [vmem:[%s1 + $0x3b8] sm:$0xff]
  %v418 = vld [vmem:[%s1 + $0x3c0] sm:$0xff]
  %v419 = vld [vmem:[%s1 + $0x3c8] sm:$0xff]
  %v420 = vld [vmem:[%s1 + $0x3d0] sm:$0xff]
  %v421 = vld [vmem:[%s1 + $0x3d8] sm:$0xff]
  %v422 = vld [vmem:[%s1 + $0x3e0] sm:$0xff]
  %v423 = vld [vmem:[%s1 + $0x3e8] sm:$0xff]
  %v424 = vld [vmem:[%s1 + $0x3f0] sm:$0xff]
  %v425 = vld [vmem:[%s1 + $0x3f8] sm:$0xff]
  %v426 = vld [vmem:[%s1 + $0x400] sm:$0xff]
  %v427 = vld [vmem:[%s1 + $0x408] sm:$0xff]
  %v428 = vld [vmem:[%s1 + $0x410] sm:$0xff]
  %v429 = vld [vmem:[%s1 + $0x418] sm:$0xff]
  %v430 = vld [vmem:[%s1 + $0x420] sm:$0xff]
  %v431 = vld [vmem:[%s1 + $0x428] sm:$0xff]
  %v432 = vld [vmem:[%s1 + $0x430] sm:$0xff]
  %v433 = vld [vmem:[%s1 + $0x438] sm:$0xff]
  %v434 = vld [vmem:[%s1 + $0x440] sm:$0xff]
  %v435 = vld [vmem:[%s1 + $0x448] sm:$0xff]
  %v436 = vld [vmem:[%s1 + $0x450] sm:$0xff]
  %v437 = vld [vmem:[%s1 + $0x458] sm:$0xff]
  %v438 = vld [vmem:[%s1 + $0x460] sm:$0xff]
  %v439 = vld [vmem:[%s1 + $0x468] sm:$0xff]
  %v440 = vld [vmem:[%s1 + $0x470] sm:$0xff]
  %v441 = vld [vmem:[%s1 + $0x478] sm:$0xff]
  %v442 = vld [vmem:[%s1 + $0x480] sm:$0xff]
  %v443 = vld [vmem:[%s1 + $0x488] sm:$0xff]
  %v444 = vld [vmem:[%s1 + $0x490] sm:$0xff]
  %v445 = vld [vmem:[%s1 + $0x498] sm:$0xff]
  %v446 = vld [vmem:[%s1 + $0x4a0] sm:$0xff]
  %v447 = vld [vmem:[%s1 + $0x4a8] sm:$0xff]
  %v448 = vld [vmem:[%s1 + $0x4b0] sm:$0xff]
  %v449 = vld [vmem:[%s1 + $0x4b8] sm:$0xff]
  %v450 = vld [vmem:[%s1 + $0x4c0] sm:$0xff]
  %v451 = vld [vmem:[%s1 + $0x4c8] sm:$0xff]
  %v452 = vld [vmem:[%s1 + $0x4d0] sm:$0xff]
  %v453 = vld [vmem:[%s1 + $0x4d8] sm:$0xff]
  %v454 = vld [vmem:[%s1 + $0x4e0] sm:$0xff]
  %v455 = vld [vmem:[%s1 + $0x4e8] sm:$0xff]
  %v456 = vld [vmem:[%s1 + $0x4f0] sm:$0xff]
  %v457 = vld [vmem:[%s1 + $0x4f8] sm:$0xff]
  %v458 = vld [vmem:[%s1 + $0x500] sm:$0xff]
  %v459 = vld [vmem:[%s1 + $0x508] sm:$0xff]
  %v460 = vld [vmem:[%s1 + $0x510] sm:$0xff]
  %v461 = vld [vmem:[%s1 + $0x518] sm:$0xff]
  %v462 = vld [vmem:[%s1 + $0x520] sm:$0xff]
  %v463 = vld [vmem:[%s1 + $0x528] sm:$0xff]
  %v464 = vld [vmem:[%s1 + $0x530] sm:$0xff]
  %v465 = vld [vmem:[%s1 + $0x538] sm:$0xff]
  %v466 = vld [vmem:[%s1 + $0x540] sm:$0xff]
  %v467 = vld [vmem:[%s1 + $0x548] sm:$0xff]
  %v468 = vld [vmem:[%s1 + $0x550] sm:$0xff]
  %v469 = vld [vmem:[%s1 + $0x558] sm:$0xff]
  %v470 = vld [vmem:[%s1 + $0x560] sm:$0xff]
  %v471 = vld [vmem:[%s1 + $0x568] sm:$0xff]
  %v472 = vld [vmem:[%s1 + $0x570] sm:$0xff]
  %v473 = vld [vmem:[%s1 + $0x578] sm:$0xff]
  %v474 = vld [vmem:[%s1 + $0x580] sm:$0xff]
  %v475 = vld [vmem:[%s1 + $0x588] sm:$0xff]
  %v476 = vld [vmem:[%s1 + $0x590] sm:$0xff]
  %v477 = vld [vmem:[%s1 + $0x598] sm:$0xff]
  %v478 = vld [vmem:[%s1 + $0x5a0] sm:$0xff]
  %v479 = vld [vmem:[%s1 + $0x5a8] sm:$0xff]
  %v480 = vld [vmem:[%s1 + $0x5b0] sm:$0xff]
  %v481 = vld [vmem:[%s1 + $0x5b8] sm:$0xff]
  %v482 = vld [vmem:[%s1 + $0x5c0] sm:$0xff]
  %v483 = vld [vmem:[%s1 + $0x5c8] sm:$0xff]
  %v484 = vld [vmem:[%s1 + $0x5d0] sm:$0xff]
  %v485 = vld [vmem:[%s1 + $0x5d8] sm:$0xff]
  %v486 = vld [vmem:[%s1 + $0x5e0] sm:$0xff]
  %v487 = vld [vmem:[%s1 + $0x5e8] sm:$0xff]
  %v488 = vld [vmem:[%s1 + $0x5f0] sm:$0xff]
  %v489 = vld [vmem:[%s1 + $0x5f8] sm:$0xff]
  %v490 = vld [vmem:[%s1 + $0x600] sm:$0xff]
  %v491 = vld [vmem:[%s1 + $0x608] sm:$0xff]
  %v492 = vld [vmem:[%s1 + $0x610] sm:$0xff]
  %v493 = vld [vmem:[%s1 + $0x618] sm:$0xff]
  %v494 = vld [vmem:[%s1 + $0x620] sm:$0xff]
  %v495 = vld [vmem:[%s1 + $0x628] sm:$0xff]
  %v496 = vld [vmem:[%s1 + $0x630] sm:$0xff]
  %v497 = vld [vmem:[%s1 + $0x638] sm:$0xff]
  %v498 = vld [vmem:[%s1 + $0x640] sm:$0xff]
  %v499 = vld [vmem:[%s1 + $0x648] sm:$0xff]
  %v500 = vld [vmem:[%s1 + $0x650] sm:$0xff]
  %v501 = vld [vmem:[%s1 + $0x658] sm:$0xff]
  %v502 = vld [vmem:[%s1 + $0x660] sm:$0xff]
  %v503 = vld [vmem:[%s1 + $0x668] sm:$0xff]
  %v504 = vld [vmem:[%s1 + $0x670] sm:$0xff]
  %v505 = vld [vmem:[%s1 + $0x678] sm:$0xff]
  %v506 = vld [vmem:[%s1 + $0x680] sm:$0xff]
  %v507 = vld [vmem:[%s1 + $0x688] sm:$0xff]
  %v508 = vld [vmem:[%s1 + $0x690] sm:$0xff]
  %v509 = vld [vmem:[%s1 + $0x698] sm:$0xff]
  %v510 = vld [vmem:[%s1 + $0x6a0] sm:$0xff]
  %v511 = vld [vmem:[%s1 + $0x6a8] sm:$0xff]
  %v512 = vld [vmem:[%s1 + $0x6b0] sm:$0xff]
  %v513 = vld [vmem:[%s1 + $0x6b8] sm:$0xff]
  %v514 = vld [vmem:[%s1 + $0x6c0] sm:$0xff]
  %v515 = vld [vmem:[%s1 + $0x6c8] sm:$0xff]
  %v516 = vld [vmem:[%s1 + $0x6d0] sm:$0xff]
  %v517 = vld [vmem:[%s1 + $0x6d8] sm:$0xff]
  %v518 = vld [vmem:[%s1 + $0x6e0] sm:$0xff]
  %v519 = vld [vmem:[%s1 + $0x6e8] sm:$0xff]
  %v520 = vld [vmem:[%s1 + $0x6f0] sm:$0xff]
  %v521 = vld [vmem:[%s1 + $0x6f8] sm:$0xff]
  %v522 = vld [vmem:[%s1 + $0x700] sm:$0xff]
  %v523 = vld [vmem:[%s1 + $0x708] sm:$0xff]
  %v524 = vld [vmem:[%s1 + $0x710] sm:$0xff]
  %v525 = vld [vmem:[%s1 + $0x718] sm:$0xff]
  %v526 = vld [vmem:[%s1 + $0x720] sm:$0xff]
  %v527 = vld [vmem:[%s1 + $0x728] sm:$0xff]
  %v528 = vld [vmem:[%s1 + $0x730] sm:$0xff]
  %v529 = vld [vmem:[%s1 + $0x738] sm:$0xff]
  %v530 = vld [vmem:[%s1 + $0x740] sm:$0xff]
  %v531 = vld [vmem:[%s1 + $0x748] sm:$0xff]
  %v532 = vld [vmem:[%s1 + $0x750] sm:$0xff]
  %v533 = vld [vmem:[%s1 + $0x758] sm:$0xff]
  %v534 = vld [vmem:[%s1 + $0x760] sm:$0xff]
  %v535 = vld [vmem:[%s1 + $0x768] sm:$0xff]
  %v536 = vld [vmem:[%s1 + $0x770] sm:$0xff]
  %v537 = vld [vmem:[%s1 + $0x778] sm:$0xff]
  %v538 = vld [vmem:[%s1 + $0x780] sm:$0xff]
  %v539 = vld [vmem:[%s1 + $0x788] sm:$0xff]
  %v540 = vld [vmem:[%s1 + $0x790] sm:$0xff]
  %v541 = vld [vmem:[%s1 + $0x798] sm:$0xff]
  %v542 = vld [vmem:[%s1 + $0x7a0] sm:$0xff]
  %v543 = vld [vmem:[%s1 + $0x7a8] sm:$0xff]
  %v544 = vld [vmem:[%s1 + $0x7b0] sm:$0xff]
  %v545 = vld [vmem:[%s1 + $0x7b8] sm:$0xff]
  %v546 = vld [vmem:[%s1 + $0x7c0] sm:$0xff]
  %v547 = vld [vmem:[%s1 + $0x7c8] sm:$0xff]
  %v548 = vld [vmem:[%s1 + $0x7d0] sm:$0xff]
  %v549 = vld [vmem:[%s1 + $0x7d8] sm:$0xff]
  %v550 = vld [vmem:[%s1 + $0x7e0] sm:$0xff]
  %v551 = vld [vmem:[%s1 + $0x7e8] sm:$0xff]
  %v552 = vld [vmem:[%s1 + $0x7f0] sm:$0xff]
  %v553 = vld [vmem:[%s1 + $0x7f8] sm:$0xff]
  %v554 = vld [vmem:[%s4] sm:$0xff]
  %v555 = vld [vmem:[%s4 + $0x8] sm:$0xff]
  %v556 = vld [vmem:[%s4 + $0x10] sm:$0xff]
  %v557 = vld [vmem:[%s4 + $0x18] sm:$0xff]
  %v558 = vld [vmem:[%s4 + $0x20] sm:$0xff]
  %v559 = vld [vmem:[%s4 + $0x28] sm:$0xff]
  %v560 = vld [vmem:[%s4 + $0x30] sm:$0xff]
  %v561 = vld [vmem:[%s4 + $0x38] sm:$0xff]
  %v562 = vld [vmem:[%s4 + $0x40] sm:$0xff]
  %v563 = vld [vmem:[%s4 + $0x48] sm:$0xff]
  %v564 = vld [vmem:[%s4 + $0x50] sm:$0xff]
  %v565 = vld [vmem:[%s4 + $0x58] sm:$0xff]
  %v566 = vld [vmem:[%s4 + $0x60] sm:$0xff]
  %v567 = vld [vmem:[%s4 + $0x68] sm:$0xff]
  %v568 = vld [vmem:[%s4 + $0x70] sm:$0xff]
  %v569 = vld [vmem:[%s4 + $0x78] sm:$0xff]
  %v570 = vld [vmem:[%s4 + $0x80] sm:$0xff]
  %v571 = vld [vmem:[%s4 + $0x88] sm:$0xff]
  %v572 = vld [vmem:[%s4 + $0x90] sm:$0xff]
  %v573 = vld [vmem:[%s4 + $0x98] sm:$0xff]
  %v574 = vld [vmem:[%s4 + $0xa0] sm:$0xff]
  %v575 = vld [vmem:[%s4 + $0xa8] sm:$0xff]
  %v576 = vld [vmem:[%s4 + $0xb0] sm:$0xff]
  %v577 = vld [vmem:[%s4 + $0xb8] sm:$0xff]
  %v578 = vld [vmem:[%s4 + $0xc0] sm:$0xff]
  %v579 = vld [vmem:[%s4 + $0xc8] sm:$0xff]
  %v580 = vld [vmem:[%s4 + $0xd0] sm:$0xff]
  %v581 = vld [vmem:[%s4 + $0xd8] sm:$0xff]
  %v582 = vld [vmem:[%s4 + $0xe0] sm:$0xff]
  %v583 = vld [vmem:[%s4 + $0xe8] sm:$0xff]
  %v584 = vld [vmem:[%s4 + $0xf0] sm:$0xff]
  %v585 = vld [vmem:[%s4 + $0xf8] sm:$0xff]
  %v586 = vld [vmem:[%s4 + $0x100] sm:$0xff]
  %v587 = vld [vmem:[%s4 + $0x108] sm:$0xff]
  %v588 = vld [vmem:[%s4 + $0x110] sm:$0xff]
  %v589 = vld [vmem:[%s4 + $0x118] sm:$0xff]
  %v590 = vld [vmem:[%s4 + $0x120] sm:$0xff]
  %v591 = vld [vmem:[%s4 + $0x128] sm:$0xff]
  %v592 = vld [vmem:[%s4 + $0x130] sm:$0xff]
  %v593 = vld [vmem:[%s4 + $0x138] sm:$0xff]
  %v594 = vld [vmem:[%s4 + $0x140] sm:$0xff]
  %v595 = vld [vmem:[%s4 + $0x148] sm:$0xff]
  %v596 = vld [vmem:[%s4 + $0x150] sm:$0xff]
  %v597 = vld [vmem:[%s4 + $0x158] sm:$0xff]
  %v598 = vld [vmem:[%s4 + $0x160] sm:$0xff]
  %v599 = vld [vmem:[%s4 + $0x168] sm:$0xff]
  %v600 = vld [vmem:[%s4 + $0x170] sm:$0xff]
  %v601 = vld [vmem:[%s4 + $0x178] sm:$0xff]
  %v602 = vld [vmem:[%s4 + $0x180] sm:$0xff]
  %v603 = vld [vmem:[%s4 + $0x188] sm:$0xff]
  %v604 = vld [vmem:[%s4 + $0x190] sm:$0xff]
  %v605 = vld [vmem:[%s4 + $0x198] sm:$0xff]
  %v606 = vld [vmem:[%s4 + $0x1a0] sm:$0xff]
  %v607 = vld [vmem:[%s4 + $0x1a8] sm:$0xff]
  %v608 = vld [vmem:[%s4 + $0x1b0] sm:$0xff]
  %v609 = vld [vmem:[%s4 + $0x1b8] sm:$0xff]
  %v610 = vld [vmem:[%s4 + $0x1c0] sm:$0xff]
  %v611 = vld [vmem:[%s4 + $0x1c8] sm:$0xff]
  %v612 = vld [vmem:[%s4 + $0x1d0] sm:$0xff]
  %v613 = vld [vmem:[%s4 + $0x1d8] sm:$0xff]
  %v614 = vld [vmem:[%s4 + $0x1e0] sm:$0xff]
  %v615 = vld [vmem:[%s4 + $0x1e8] sm:$0xff]
  %v616 = vld [vmem:[%s4 + $0x1f0] sm:$0xff]
  %v617 = vld [vmem:[%s4 + $0x1f8] sm:$0xff]
  %v618 = vld [vmem:[%s4 + $0x200] sm:$0xff]
  %v619 = vld [vmem:[%s4 + $0x208] sm:$0xff]
  %v620 = vld [vmem:[%s4 + $0x210] sm:$0xff]
  %v621 = vld [vmem:[%s4 + $0x218] sm:$0xff]
  %v622 = vld [vmem:[%s4 + $0x220] sm:$0xff]
  %v623 = vld [vmem:[%s4 + $0x228] sm:$0xff]
  %v624 = vld [vmem:[%s4 + $0x230] sm:$0xff]
  %v625 = vld [vmem:[%s4 + $0x238] sm:$0xff]
  %v626 = vld [vmem:[%s4 + $0x240] sm:$0xff]
  %v627 = vld [vmem:[%s4 + $0x248] sm:$0xff]
  %v628 = vld [vmem:[%s4 + $0x250] sm:$0xff]
  %v629 = vld [vmem:[%s4 + $0x258] sm:$0xff]
  %v630 = vld [vmem:[%s4 + $0x260] sm:$0xff]
  %v631 = vld [vmem:[%s4 + $0x268] sm:$0xff]
  %v632 = vld [vmem:[%s4 + $0x270] sm:$0xff]
  %v633 = vld [vmem:[%s4 + $0x278] sm:$0xff]
  %v634 = vld [vmem:[%s4 + $0x280] sm:$0xff]
  %v635 = vld [vmem:[%s4 + $0x288] sm:$0xff]
  %v636 = vld [vmem:[%s4 + $0x290] sm:$0xff]
  %v637 = vld [vmem:[%s4 + $0x298] sm:$0xff]
  %v638 = vld [vmem:[%s4 + $0x2a0] sm:$0xff]
  %v639 = vld [vmem:[%s4 + $0x2a8] sm:$0xff]
  %v640 = vld [vmem:[%s4 + $0x2b0] sm:$0xff]
  %v641 = vld [vmem:[%s4 + $0x2b8] sm:$0xff]
  %v642 = vld [vmem:[%s4 + $0x2c0] sm:$0xff]
  %v643 = vld [vmem:[%s4 + $0x2c8] sm:$0xff]
  %v644 = vld [vmem:[%s4 + $0x2d0] sm:$0xff]
  %v645 = vld [vmem:[%s4 + $0x2d8] sm:$0xff]
  %v646 = vld [vmem:[%s4 + $0x2e0] sm:$0xff]
  %v647 = vld [vmem:[%s4 + $0x2e8] sm:$0xff]
  %v648 = vld [vmem:[%s4 + $0x2f0] sm:$0xff]
  %v649 = vld [vmem:[%s4 + $0x2f8] sm:$0xff]
  %v650 = vld [vmem:[%s4 + $0x300] sm:$0xff]
  %v651 = vld [vmem:[%s4 + $0x308] sm:$0xff]
  %v652 = vld [vmem:[%s4 + $0x310] sm:$0xff]
  %v653 = vld [vmem:[%s4 + $0x318] sm:$0xff]
  %v654 = vld [vmem:[%s4 + $0x320] sm:$0xff]
  %v655 = vld [vmem:[%s4 + $0x328] sm:$0xff]
  %v656 = vld [vmem:[%s4 + $0x330] sm:$0xff]
  %v657 = vld [vmem:[%s4 + $0x338] sm:$0xff]
  %v658 = vld [vmem:[%s4 + $0x340] sm:$0xff]
  %v659 = vld [vmem:[%s4 + $0x348] sm:$0xff]
  %v660 = vld [vmem:[%s4 + $0x350] sm:$0xff]
  %v661 = vld [vmem:[%s4 + $0x358] sm:$0xff]
  %v662 = vld [vmem:[%s4 + $0x360] sm:$0xff]
  %v663 = vld [vmem:[%s4 + $0x368] sm:$0xff]
  %v664 = vld [vmem:[%s4 + $0x370] sm:$0xff]
  %v665 = vld [vmem:[%s4 + $0x378] sm:$0xff]
  %v666 = vld [vmem:[%s5] sm:$0xff]
  %v667 = vld [vmem:[%s6] sm:$0x3]
  %v668 = vld [vmem:[#allocation2] sm:$0x1]
  %v669 = vld [vmem:[%s8] sm:$0xff]
  %v670 = vld [vmem:[%s8 + $0x8] sm:$0xff]
  %v671 = vld [vmem:[%s8 + $0x10] sm:$0xff]
  %v672 = vld [vmem:[%s8 + $0x18] sm:$0xff]
  %v673 = vld [vmem:[%s8 + $0x20] sm:$0xff]
  %v674 = vld [vmem:[%s8 + $0x28] sm:$0xff]
  %v675 = vld [vmem:[%s8 + $0x30] sm:$0xff]
  %v676 = vld [vmem:[%s8 + $0x38] sm:$0xff]
  %v677 = vld [vmem:[%s8 + $0x40] sm:$0xff]
  %v678 = vld [vmem:[%s8 + $0x48] sm:$0xff]
  %v679 = vld [vmem:[%s8 + $0x50] sm:$0xff]
  %v680 = vld [vmem:[%s8 + $0x58] sm:$0xff]
  %v681 = vld [vmem:[%s8 + $0x60] sm:$0xff]
  %v682 = vld [vmem:[%s8 + $0x68] sm:$0xff]
  %v683 = vld [vmem:[%s8 + $0x70] sm:$0xff]
  %v684 = vld [vmem:[%s8 + $0x78] sm:$0xff]
  %v685 = vld [vmem:[%s8 + $0x80] sm:$0xff]
  %v686 = vld [vmem:[%s8 + $0x88] sm:$0xff]
  %v687 = vld [vmem:[%s8 + $0x90] sm:$0xff]
  %v688 = vld [vmem:[%s8 + $0x98] sm:$0xff]
  %v689 = vld [vmem:[%s8 + $0xa0] sm:$0xff]
  %v690 = vld [vmem:[%s8 + $0xa8] sm:$0xff]
  %v691 = vld [vmem:[%s8 + $0xb0] sm:$0xff]
  %v692 = vld [vmem:[%s8 + $0xb8] sm:$0xff]
  %v693 = vld [vmem:[%s8 + $0xc0] sm:$0xff]
  %v694 = vld [vmem:[%s8 + $0xc8] sm:$0xff]
  %v695 = vld [vmem:[%s8 + $0xd0] sm:$0xff]
  %v696 = vld [vmem:[%s8 + $0xd8] sm:$0xff]
  %v697 = vld [vmem:[%s8 + $0xe0] sm:$0xff]
  %v698 = vld [vmem:[%s8 + $0xe8] sm:$0xff]
  %v699 = vld [vmem:[%s8 + $0xf0] sm:$0xff]
  %v700 = vld [vmem:[%s8 + $0xf8] sm:$0xff]
  %v701 = vld [vmem:[%s8 + $0x100] sm:$0xff]
  %v702 = vld [vmem:[%s8 + $0x108] sm:$0xff]
  %v703 = vld [vmem:[%s8 + $0x110] sm:$0xff]
  %v704 = vld [vmem:[%s8 + $0x118] sm:$0xff]
  %v705 = vld [vmem:[%s8 + $0x120] sm:$0xff]
  %v706 = vld [vmem:[%s8 + $0x128] sm:$0xff]
  %v707 = vld [vmem:[%s8 + $0x130] sm:$0xff]
  %v708 = vld [vmem:[%s8 + $0x138] sm:$0xff]
  %v709 = vld [vmem:[%s8 + $0x140] sm:$0xff]
  %v710 = vld [vmem:[%s8 + $0x148] sm:$0xff]
  %v711 = vld [vmem:[%s8 + $0x150] sm:$0xff]
  %v712 = vld [vmem:[%s8 + $0x158] sm:$0xff]
  %v713 = vld [vmem:[%s8 + $0x160] sm:$0xff]
  %v714 = vld [vmem:[%s8 + $0x168] sm:$0xff]
  %v715 = vld [vmem:[%s8 + $0x170] sm:$0xff]
  %v716 = vld [vmem:[%s8 + $0x178] sm:$0xff]
  %v717 = vld [vmem:[%s8 + $0x180] sm:$0xff]
  %v718 = vld [vmem:[%s8 + $0x188] sm:$0xff]
  %v719 = vld [vmem:[%s8 + $0x190] sm:$0xff]
  %v720 = vld [vmem:[%s8 + $0x198] sm:$0xff]
  %v721 = vld [vmem:[%s8 + $0x1a0] sm:$0xff]
  %v722 = vld [vmem:[%s8 + $0x1a8] sm:$0xff]
  %v723 = vld [vmem:[%s8 + $0x1b0] sm:$0xff]
  %v724 = vld [vmem:[%s8 + $0x1b8] sm:$0xff]
  %v725 = vld [vmem:[%s8 + $0x1c0] sm:$0xff]
  %v726 = vld [vmem:[%s8 + $0x1c8] sm:$0xff]
  %v727 = vld [vmem:[%s8 + $0x1d0] sm:$0xff]
  %v728 = vld [vmem:[%s8 + $0x1d8] sm:$0xff]
  %v729 = vld [vmem:[%s8 + $0x1e0] sm:$0xff]
  %v730 = vld [vmem:[%s8 + $0x1e8] sm:$0xff]
  %v731 = vld [vmem:[%s8 + $0x1f0] sm:$0xff]
  %v732 = vld [vmem:[%s8 + $0x1f8] sm:$0xff]
  %v733 = vld [vmem:[%s8 + $0x200] sm:$0xff]
  %v734 = vld [vmem:[%s8 + $0x208] sm:$0xff]
  %v735 = vld [vmem:[%s8 + $0x210] sm:$0xff]
  %v736 = vld [vmem:[%s8 + $0x218] sm:$0xff]
  %v737 = vld [vmem:[%s8 + $0x220] sm:$0xff]
  %v738 = vld [vmem:[%s8 + $0x228] sm:$0xff]
  %v739 = vld [vmem:[%s8 + $0x230] sm:$0xff]
  %v740 = vld [vmem:[%s8 + $0x238] sm:$0xff]
  %v741 = vld [vmem:[%s8 + $0x240] sm:$0xff]
  %v742 = vld [vmem:[%s8 + $0x248] sm:$0xff]
  %v743 = vld [vmem:[%s8 + $0x250] sm:$0xff]
  %v744 = vld [vmem:[%s8 + $0x258] sm:$0xff]
  %v745 = vld [vmem:[%s8 + $0x260] sm:$0xff]
  %v746 = vld [vmem:[%s8 + $0x268] sm:$0xff]
  %v747 = vld [vmem:[%s8 + $0x270] sm:$0xff]
  %v748 = vld [vmem:[%s8 + $0x278] sm:$0xff]
  %v749 = vld [vmem:[%s8 + $0x280] sm:$0xff]
  %v750 = vld [vmem:[%s8 + $0x288] sm:$0xff]
  %v751 = vld [vmem:[%s8 + $0x290] sm:$0xff]
  %v752 = vld [vmem:[%s8 + $0x298] sm:$0xff]
  %v753 = vld [vmem:[%s8 + $0x2a0] sm:$0xff]
  %v754 = vld [vmem:[%s8 + $0x2a8] sm:$0xff]
  %v755 = vld [vmem:[%s8 + $0x2b0] sm:$0xff]
  %v756 = vld [vmem:[%s8 + $0x2b8] sm:$0xff]
  %v757 = vld [vmem:[%s8 + $0x2c0] sm:$0xff]
  %v758 = vld [vmem:[%s8 + $0x2c8] sm:$0xff]
  %v759 = vld [vmem:[%s8 + $0x2d0] sm:$0xff]
  %v760 = vld [vmem:[%s8 + $0x2d8] sm:$0xff]
  %v761 = vld [vmem:[%s8 + $0x2e0] sm:$0xff]
  %v762 = vld [vmem:[%s8 + $0x2e8] sm:$0xff]
  %v763 = vld [vmem:[%s8 + $0x2f0] sm:$0xff]
  %v764 = vld [vmem:[%s8 + $0x2f8] sm:$0xff]
  %v765 = vld [vmem:[%s9] sm:$0xff]
  %v766 = vld [vmem:[%s9 + $0x8] sm:$0xff]
  %v767 = vld [vmem:[%s9 + $0x10] sm:$0xff]
  %v768 = vld [vmem:[%s9 + $0x18] sm:$0xff]
  %v769 = vld [vmem:[%s9 + $0x20] sm:$0xff]
  %v770 = vld [vmem:[%s9 + $0x28] sm:$0xff]
  %v771 = vld [vmem:[%s9 + $0x30] sm:$0xff]
  %v772 = vld [vmem:[%s9 + $0x38] sm:$0xff]
  %v773 = vld [vmem:[%s9 + $0x40] sm:$0xff]
  %v774 = vld [vmem:[%s9 + $0x48] sm:$0xff]
  %v775 = vld [vmem:[%s9 + $0x50] sm:$0xff]
  %v776 = vld [vmem:[%s9 + $0x58] sm:$0xff]
  %v777 = vld [vmem:[%s9 + $0x60] sm:$0xff]
  %v778 = vld [vmem:[%s9 + $0x68] sm:$0xff]
  %v779 = vld [vmem:[%s9 + $0x70] sm:$0xff]
  %v780 = vld [vmem:[%s9 + $0x78] sm:$0xff]
  %v781 = vld [vmem:[%s9 + $0x80] sm:$0xff]
  %v782 = vld [vmem:[%s9 + $0x88] sm:$0xff]
  %v783 = vld [vmem:[%s9 + $0x90] sm:$0xff]
  %v784 = vld [vmem:[%s9 + $0x98] sm:$0xff]
  %v785 = vld [vmem:[%s9 + $0xa0] sm:$0xff]
  %v786 = vld [vmem:[%s9 + $0xa8] sm:$0xff]
  %v787 = vld [vmem:[%s9 + $0xb0] sm:$0xff]
  %v788 = vld [vmem:[%s9 + $0xb8] sm:$0xff]
  %v789 = vld [vmem:[%s9 + $0xc0] sm:$0xff]
  %v790 = vld [vmem:[%s9 + $0xc8] sm:$0xff]
  %v791 = vld [vmem:[%s9 + $0xd0] sm:$0xff]
  %v792 = vld [vmem:[%s9 + $0xd8] sm:$0xff]
  %v793 = vld [vmem:[%s9 + $0xe0] sm:$0xff]
  %v794 = vld [vmem:[%s9 + $0xe8] sm:$0xff]
  %v795 = vld [vmem:[%s9 + $0xf0] sm:$0xff]
  %v796 = vld [vmem:[%s9 + $0xf8] sm:$0xff]
  %v797 = vld [vmem:[%s10] sm:$0x3]
  %v798 = vlaneseq
  %v799 = vand.u32 %v798, 127
  %v800 = vadd.s32 %v799, 128
  %vm801 = vcmp.lt.s32.totalorder %v799, 196
  %vm802 = vcmp.lt.s32.totalorder %v800, 196
  %v803 = vsel %vm801, 0.0, -1e+30
  %v804 = vsel %vm802, 0.0, -1e+30
  %v805 = vld [vmem:[%s0] sm:$0xf]
  loop: start=0, step=1, limit=7
  $region46: #{decoder_rnn_forward.1} parent=0 // loop_pre_header
    _
  $region47: #{decoder_rnn_forward.1} parent=0 // loop_header
    %s807 = sphi 0, %s811
    %p808 = scmp.ge.s32.totalorder %s807, 7
    %v812 = vphi %v805, %v6181
  $region48: #{decoder_rnn_forward.1} parent=0 // loop_header_branch
    %810 = sbr.rel (%p808) target = $region52
  $region49: #{decoder_rnn_forward.1} parent=0 // loop_body
    %v814 = vperm.slane %v666, 0
    %v815 = vperm.slane %v666, 1
    %v816 = vperm.slane %v666, 2
    %v817 = vperm.slane %v666, 3
    %v818 = vperm.slane %v666, 4
    %v819 = vperm.slane %v666, 5
    %v820 = vperm.slane %v666, 6
    %828 = vmatpush.msra.mxu0 %v659
    %829 = vmatpush.msra.mxu0 %v652
    %830 = vmatpush.msra.mxu0 %v645
    %831 = vmatpush.msra.mxu0 %v638
    %832 = vmatpush.msra.mxu0 %v631
    %833 = vmatpush.msra.mxu0 %v624
    %834 = vmatpush.msra.mxu0 %v617
    %835 = vmatpush.msra.mxu0 %v610
    %836 = vmatpush.msra.mxu0 %v603
    %837 = vmatpush.msra.mxu0 %v596
    %838 = vmatpush.msra.mxu0 %v589
    %839 = vmatpush.msra.mxu0 %v582
    %840 = vmatpush.msra.mxu0 %v575
    %841 = vmatpush.msra.mxu0 %v568
    %842 = vmatpush.msra.mxu0 %v561
    %843 = vmatpush.msra.mxu0 %v554
    %844 = vmatmul.f32.gmra.mxu0 %v812
    %v845 = vpop.f32.mrf.mxu0
    %v846 = vadd.f32 %v814, %v845
    %847 = vdwg.mxu0
    %848 = vmatpush.msra.mxu0 %v660
    %849 = vmatpush.msra.mxu0 %v653
    %850 = vmatpush.msra.mxu0 %v646
    %851 = vmatpush.msra.mxu0 %v639
    %852 = vmatpush.msra.mxu0 %v632
    %853 = vmatpush.msra.mxu0 %v625
    %854 = vmatpush.msra.mxu0 %v618
    %855 = vmatpush.msra.mxu0 %v611
    %856 = vmatpush.msra.mxu0 %v604
    %857 = vmatpush.msra.mxu0 %v597
    %858 = vmatpush.msra.mxu0 %v590
    %859 = vmatpush.msra.mxu0 %v583
    %860 = vmatpush.msra.mxu0 %v576
    %861 = vmatpush.msra.mxu0 %v569
    %862 = vmatpush.msra.mxu0 %v562
    %863 = vmatpush.msra.mxu0 %v555
    %864 = vmatmul.f32.gmra.mxu0 %v812
    %v865 = vpop.f32.mrf.mxu0
    %v866 = vadd.f32 %v815, %v865
    %867 = vdwg.mxu0
    %868 = vmatpush.msra.mxu0 %v661
    %869 = vmatpush.msra.mxu0 %v654
    %870 = vmatpush.msra.mxu0 %v647
    %871 = vmatpush.msra.mxu0 %v640
    %872 = vmatpush.msra.mxu0 %v633
    %873 = vmatpush.msra.mxu0 %v626
    %874 = vmatpush.msra.mxu0 %v619
    %875 = vmatpush.msra.mxu0 %v612
    %876 = vmatpush.msra.mxu0 %v605
    %877 = vmatpush.msra.mxu0 %v598
    %878 = vmatpush.msra.mxu0 %v591
    %879 = vmatpush.msra.mxu0 %v584
    %880 = vmatpush.msra.mxu0 %v577
    %881 = vmatpush.msra.mxu0 %v570
    %882 = vmatpush.msra.mxu0 %v563
    %883 = vmatpush.msra.mxu0 %v556
    %884 = vmatmul.f32.gmra.mxu0 %v812
    %v885 = vpop.f32.mrf.mxu0
    %v886 = vadd.f32 %v816, %v885
    %887 = vdwg.mxu0
    %888 = vmatpush.msra.mxu0 %v662
    %889 = vmatpush.msra.mxu0 %v655
    %890 = vmatpush.msra.mxu0 %v648
    %891 = vmatpush.msra.mxu0 %v641
    %892 = vmatpush.msra.mxu0 %v634
    %893 = vmatpush.msra.mxu0 %v627
    %894 = vmatpush.msra.mxu0 %v620
    %895 = vmatpush.msra.mxu0 %v613
    %896 = vmatpush.msra.mxu0 %v606
    %897 = vmatpush.msra.mxu0 %v599
    %898 = vmatpush.msra.mxu0 %v592
    %899 = vmatpush.msra.mxu0 %v585
    %900 = vmatpush.msra.mxu0 %v578
    %901 = vmatpush.msra.mxu0 %v571
    %902 = vmatpush.msra.mxu0 %v564
    %903 = vmatpush.msra.mxu0 %v557
    %904 = vmatmul.f32.gmra.mxu0 %v812
    %v905 = vpop.f32.mrf.mxu0
    %v906 = vadd.f32 %v817, %v905
    %907 = vdwg.mxu0
    %908 = vmatpush.msra.mxu0 %v663
    %909 = vmatpush.msra.mxu0 %v656
    %910 = vmatpush.msra.mxu0 %v649
    %911 = vmatpush.msra.mxu0 %v642
    %912 = vmatpush.msra.mxu0 %v635
    %913 = vmatpush.msra.mxu0 %v628
    %914 = vmatpush.msra.mxu0 %v621
    %915 = vmatpush.msra.mxu0 %v614
    %916 = vmatpush.msra.mxu0 %v607
    %917 = vmatpush.msra.mxu0 %v600
    %918 = vmatpush.msra.mxu0 %v593
    %919 = vmatpush.msra.mxu0 %v586
    %920 = vmatpush.msra.mxu0 %v579
    %921 = vmatpush.msra.mxu0 %v572
    %922 = vmatpush.msra.mxu0 %v565
    %923 = vmatpush.msra.mxu0 %v558
    %924 = vmatmul.f32.gmra.mxu0 %v812
    %v925 = vpop.f32.mrf.mxu0
    %v926 = vadd.f32 %v818, %v925
    %927 = vdwg.mxu0
    %928 = vmatpush.msra.mxu0 %v664
    %929 = vmatpush.msra.mxu0 %v657
    %930 = vmatpush.msra.mxu0 %v650
    %931 = vmatpush.msra.mxu0 %v643
    %932 = vmatpush.msra.mxu0 %v636
    %933 = vmatpush.msra.mxu0 %v629
    %934 = vmatpush.msra.mxu0 %v622
    %935 = vmatpush.msra.mxu0 %v615
    %936 = vmatpush.msra.mxu0 %v608
    %937 = vmatpush.msra.mxu0 %v601
    %938 = vmatpush.msra.mxu0 %v594
    %939 = vmatpush.msra.mxu0 %v587
    %940 = vmatpush.msra.mxu0 %v580
    %941 = vmatpush.msra.mxu0 %v573
    %942 = vmatpush.msra.mxu0 %v566
    %943 = vmatpush.msra.mxu0 %v559
    %944 = vmatmul.f32.gmra.mxu0 %v812
    %v945 = vpop.f32.mrf.mxu0
    %v946 = vadd.f32 %v819, %v945
    %947 = vdwg.mxu0
    %948 = vmatpush.msra.mxu0 %v665
    %949 = vmatpush.msra.mxu0 %v658
    %950 = vmatpush.msra.mxu0 %v651
    %951 = vmatpush.msra.mxu0 %v644
    %952 = vmatpush.msra.mxu0 %v637
    %953 = vmatpush.msra.mxu0 %v630
    %954 = vmatpush.msra.mxu0 %v623
    %955 = vmatpush.msra.mxu0 %v616
    %956 = vmatpush.msra.mxu0 %v609
    %957 = vmatpush.msra.mxu0 %v602
    %958 = vmatpush.msra.mxu0 %v595
    %959 = vmatpush.msra.mxu0 %v588
    %960 = vmatpush.msra.mxu0 %v581
    %961 = vmatpush.msra.mxu0 %v574
    %962 = vmatpush.msra.mxu0 %v567
    %963 = vmatpush.msra.mxu0 %v560
    %964 = vmatmul.f32.gmra.mxu0 %v812
    %v965 = vpop.f32.mrf.mxu0
    %v966 = vadd.f32 %v820, %v965
    %967 = vdwg.mxu0
    %v968 = vxor.u32 %v886, 2147483648
    %v969 = vxor.u32 %v906, 2147483648
    %v970 = vmul.f32 %v968, 1.442695
    %v971 = vpow.pop %v970
    %v972 = vmul.f32 %v969, 1.442695
    %v973 = vpow.pop %v972
    %v974 = vadd.f32 %v971, 1.0
    %v975 = vadd.f32 %v973, 1.0
    %v976 = vrcp.pop %v974
    %v977 = vmul.f32 %v974, %v976
    %v978 = vsub.f32 1.0, %v977
    %v979 = vmul.f32 %v976, %v978
    %v980 = vadd.f32 %v976, %v979
    %vm981 = vweird.f32 %v974
    %vm982 = vweird.f32 %v976
    %vm983 = vmor %vm981, %vm982
    %v984 = vsel %vm983, %v976, %v980
    %v985 = vand.u32 2147483647, %v974
    %vm986 = vcmp.eq.f32.partialorder %v985, 8.507059e+37
    %v987 = vand.u32 %v974, 2147483648
    %v988 = vor.u32 1.1754944e-38, %v987
    %v989 = vsel %vm986, %v988, %v984
    %v990 = vmul.f32 1.0, %v989
    %v991 = vrcp.pop %v975
    %v992 = vmul.f32 %v975, %v991
    %v993 = vsub.f32 1.0, %v992
    %v994 = vmul.f32 %v991, %v993
    %v995 = vadd.f32 %v991, %v994
    %vm996 = vweird.f32 %v975
    %vm997 = vweird.f32 %v991
    %vm998 = vmor %vm996, %vm997
    %v999 = vsel %vm998, %v991, %v995
    %v1000 = vand.u32 2147483647, %v975
    %vm1001 = vcmp.eq.f32.partialorder %v1000, 8.507059e+37
    %v1002 = vand.u32 %v975, 2147483648
    %v1003 = vor.u32 1.1754944e-38, %v1002
    %v1004 = vsel %vm1001, %v1003, %v999
    %v1005 = vmul.f32 1.0, %v1004
    %v1008 = vrot.slane %v866, 7
    %vm1009 = vcmask 1040384
    %v1010 = vsel %vm1009, %v846, %v1008
    %vm1011 = vcmask 1041409
    %v1012 = vsel %vm1011, %v846, %v1008
    %v1013 = vrot.slane %v1012, 1
    %vm1014 = vcmask 1042434
    %v1015 = vsel %vm1014, %v846, %v1008
    %v1016 = vrot.slane %v1015, 2
    %vm1017 = vcmask 1043459
    %v1018 = vsel %vm1017, %v846, %v1008
    %v1019 = vrot.slane %v1018, 3
    %v1020 = vperm.slane %v1010, 0
    %v1021 = vperm.slane %v1010, 1
    %v1022 = vperm.slane %v1013, 0
    %v1023 = vperm.slane %v1013, 1
    %v1024 = vperm.slane %v1016, 0
    %v1025 = vperm.slane %v1016, 1
    %v1026 = vperm.slane %v1019, 0
    %v1027 = vperm.slane %v1019, 1
    %v1036 = vadd.f32 %v298, %v1020
    %v1037 = vadd.f32 %v299, %v1021
    %v1038 = vadd.f32 %v300, %v1020
    %v1039 = vadd.f32 %v301, %v1021
    %v1040 = vadd.f32 %v302, %v1020
    %v1041 = vadd.f32 %v303, %v1021
    %v1042 = vadd.f32 %v304, %v1020
    %v1043 = vadd.f32 %v305, %v1021
    %v1044 = vadd.f32 %v306, %v1020
    %v1045 = vadd.f32 %v307, %v1021
    %v1046 = vadd.f32 %v308, %v1020
    %v1047 = vadd.f32 %v309, %v1021
    %v1048 = vadd.f32 %v310, %v1020
    %v1049 = vadd.f32 %v311, %v1021
    %v1050 = vadd.f32 %v312, %v1020
    %v1051 = vadd.f32 %v313, %v1021
    %v1052 = vadd.f32 %v314, %v1020
    %v1053 = vadd.f32 %v315, %v1021
    %v1054 = vadd.f32 %v316, %v1020
    %v1055 = vadd.f32 %v317, %v1021
    %v1056 = vadd.f32 %v318, %v1020
    %v1057 = vadd.f32 %v319, %v1021
    %v1058 = vadd.f32 %v320, %v1020
    %v1059 = vadd.f32 %v321, %v1021
    %v1060 = vadd.f32 %v322, %v1020
    %v1061 = vadd.f32 %v323, %v1021
    %v1062 = vadd.f32 %v324, %v1020
    %v1063 = vadd.f32 %v325, %v1021
    %v1064 = vadd.f32 %v326, %v1020
    %v1065 = vadd.f32 %v327, %v1021
    %v1066 = vadd.f32 %v328, %v1020
    %v1067 = vadd.f32 %v329, %v1021
    %v1068 = vadd.f32 %v330, %v1020
    %v1069 = vadd.f32 %v331, %v1021
    %v1070 = vadd.f32 %v332, %v1020
    %v1071 = vadd.f32 %v333, %v1021
    %v1072 = vadd.f32 %v334, %v1020
    %v1073 = vadd.f32 %v335, %v1021
    %v1074 = vadd.f32 %v336, %v1020
    %v1075 = vadd.f32 %v337, %v1021
    %v1076 = vadd.f32 %v338, %v1020
    %v1077 = vadd.f32 %v339, %v1021
    %v1078 = vadd.f32 %v340, %v1020
    %v1079 = vadd.f32 %v341, %v1021
    %v1080 = vadd.f32 %v342, %v1020
    %v1081 = vadd.f32 %v343, %v1021
    %v1082 = vadd.f32 %v344, %v1020
    %v1083 = vadd.f32 %v345, %v1021
    %v1084 = vadd.f32 %v346, %v1020
    %v1085 = vadd.f32 %v347, %v1021
    %v1086 = vadd.f32 %v348, %v1020
    %v1087 = vadd.f32 %v349, %v1021
    %v1088 = vadd.f32 %v350, %v1020
    %v1089 = vadd.f32 %v351, %v1021
    %v1090 = vadd.f32 %v352, %v1020
    %v1091 = vadd.f32 %v353, %v1021
    %v1092 = vadd.f32 %v354, %v1020
    %v1093 = vadd.f32 %v355, %v1021
    %v1094 = vadd.f32 %v356, %v1020
    %v1095 = vadd.f32 %v357, %v1021
    %v1096 = vadd.f32 %v358, %v1020
    %v1097 = vadd.f32 %v359, %v1021
    %v1098 = vadd.f32 %v360, %v1020
    %v1099 = vadd.f32 %v361, %v1021
    %v1100 = vadd.f32 %v362, %v1022
    %v1101 = vadd.f32 %v363, %v1023
    %v1102 = vadd.f32 %v364, %v1022
    %v1103 = vadd.f32 %v365, %v1023
    %v1104 = vadd.f32 %v366, %v1022
    %v1105 = vadd.f32 %v367, %v1023
    %v1106 = vadd.f32 %v368, %v1022
    %v1107 = vadd.f32 %v369, %v1023
    %v1108 = vadd.f32 %v370, %v1022
    %v1109 = vadd.f32 %v371, %v1023
    %v1110 = vadd.f32 %v372, %v1022
    %v1111 = vadd.f32 %v373, %v1023
    %v1112 = vadd.f32 %v374, %v1022
    %v1113 = vadd.f32 %v375, %v1023
    %v1114 = vadd.f32 %v376, %v1022
    %v1115 = vadd.f32 %v377, %v1023
    %v1116 = vadd.f32 %v378, %v1022
    %v1117 = vadd.f32 %v379, %v1023
    %v1118 = vadd.f32 %v380, %v1022
    %v1119 = vadd.f32 %v381, %v1023
    %v1120 = vadd.f32 %v382, %v1022
    %v1121 = vadd.f32 %v383, %v1023
    %v1122 = vadd.f32 %v384, %v1022
    %v1123 = vadd.f32 %v385, %v1023
    %v1124 = vadd.f32 %v386, %v1022
    %v1125 = vadd.f32 %v387, %v1023
    %v1126 = vadd.f32 %v388, %v1022
    %v1127 = vadd.f32 %v389, %v1023
    %v1128 = vadd.f32 %v390, %v1022
    %v1129 = vadd.f32 %v391, %v1023
    %v1130 = vadd.f32 %v392, %v1022
    %v1131 = vadd.f32 %v393, %v1023
    %v1132 = vadd.f32 %v394, %v1022
    %v1133 = vadd.f32 %v395, %v1023
    %v1134 = vadd.f32 %v396, %v1022
    %v1135 = vadd.f32 %v397, %v1023
    %v1136 = vadd.f32 %v398, %v1022
    %v1137 = vadd.f32 %v399, %v1023
    %v1138 = vadd.f32 %v400, %v1022
    %v1139 = vadd.f32 %v401, %v1023
    %v1140 = vadd.f32 %v402, %v1022
    %v1141 = vadd.f32 %v403, %v1023
    %v1142 = vadd.f32 %v404, %v1022
    %v1143 = vadd.f32 %v405, %v1023
    %v1144 = vadd.f32 %v406, %v1022
    %v1145 = vadd.f32 %v407, %v1023
    %v1146 = vadd.f32 %v408, %v1022
    %v1147 = vadd.f32 %v409, %v1023
    %v1148 = vadd.f32 %v410, %v1022
    %v1149 = vadd.f32 %v411, %v1023
    %v1150 = vadd.f32 %v412, %v1022
    %v1151 = vadd.f32 %v413, %v1023
    %v1152 = vadd.f32 %v414, %v1022
    %v1153 = vadd.f32 %v415, %v1023
    %v1154 = vadd.f32 %v416, %v1022
    %v1155 = vadd.f32 %v417, %v1023
    %v1156 = vadd.f32 %v418, %v1022
    %v1157 = vadd.f32 %v419, %v1023
    %v1158 = vadd.f32 %v420, %v1022
    %v1159 = vadd.f32 %v421, %v1023
    %v1160 = vadd.f32 %v422, %v1022
    %v1161 = vadd.f32 %v423, %v1023
    %v1162 = vadd.f32 %v424, %v1022
    %v1163 = vadd.f32 %v425, %v1023
    %v1164 = vadd.f32 %v426, %v1024
    %v1165 = vadd.f32 %v427, %v1025
    %v1166 = vadd.f32 %v428, %v1024
    %v1167 = vadd.f32 %v429, %v1025
    %v1168 = vadd.f32 %v430, %v1024
    %v1169 = vadd.f32 %v431, %v1025
    %v1170 = vadd.f32 %v432, %v1024
    %v1171 = vadd.f32 %v433, %v1025
    %v1172 = vadd.f32 %v434, %v1024
    %v1173 = vadd.f32 %v435, %v1025
    %v1174 = vadd.f32 %v436, %v1024
    %v1175 = vadd.f32 %v437, %v1025
    %v1176 = vadd.f32 %v438, %v1024
    %v1177 = vadd.f32 %v439, %v1025
    %v1178 = vadd.f32 %v440, %v1024
    %v1179 = vadd.f32 %v441, %v1025
    %v1180 = vadd.f32 %v442, %v1024
    %v1181 = vadd.f32 %v443, %v1025
    %v1182 = vadd.f32 %v444, %v1024
    %v1183 = vadd.f32 %v445, %v1025
    %v1184 = vadd.f32 %v446, %v1024
    %v1185 = vadd.f32 %v447, %v1025
    %v1186 = vadd.f32 %v448, %v1024
    %v1187 = vadd.f32 %v449, %v1025
    %v1188 = vadd.f32 %v450, %v1024
    %v1189 = vadd.f32 %v451, %v1025
    %v1190 = vadd.f32 %v452, %v1024
    %v1191 = vadd.f32 %v453, %v1025
    %v1192 = vadd.f32 %v454, %v1024
    %v1193 = vadd.f32 %v455, %v1025
    %v1194 = vadd.f32 %v456, %v1024
    %v1195 = vadd.f32 %v457, %v1025
    %v1196 = vadd.f32 %v458, %v1024
    %v1197 = vadd.f32 %v459, %v1025
    %v1198 = vadd.f32 %v460, %v1024
    %v1199 = vadd.f32 %v461, %v1025
    %v1200 = vadd.f32 %v462, %v1024
    %v1201 = vadd.f32 %v463, %v1025
    %v1202 = vadd.f32 %v464, %v1024
    %v1203 = vadd.f32 %v465, %v1025
    %v1204 = vadd.f32 %v466, %v1024
    %v1205 = vadd.f32 %v467, %v1025
    %v1206 = vadd.f32 %v468, %v1024
    %v1207 = vadd.f32 %v469, %v1025
    %v1208 = vadd.f32 %v470, %v1024
    %v1209 = vadd.f32 %v471, %v1025
    %v1210 = vadd.f32 %v472, %v1024
    %v1211 = vadd.f32 %v473, %v1025
    %v1212 = vadd.f32 %v474, %v1024
    %v1213 = vadd.f32 %v475, %v1025
    %v1214 = vadd.f32 %v476, %v1024
    %v1215 = vadd.f32 %v477, %v1025
    %v1216 = vadd.f32 %v478, %v1024
    %v1217 = vadd.f32 %v479, %v1025
    %v1218 = vadd.f32 %v480, %v1024
    %v1219 = vadd.f32 %v481, %v1025
    %v1220 = vadd.f32 %v482, %v1024
    %v1221 = vadd.f32 %v483, %v1025
    %v1222 = vadd.f32 %v484, %v1024
    %v1223 = vadd.f32 %v485, %v1025
    %v1224 = vadd.f32 %v486, %v1024
    %v1225 = vadd.f32 %v487, %v1025
    %v1226 = vadd.f32 %v488, %v1024
    %v1227 = vadd.f32 %v489, %v1025
    %v1228 = vadd.f32 %v490, %v1026
    %v1229 = vadd.f32 %v491, %v1027
    %v1230 = vadd.f32 %v492, %v1026
    %v1231 = vadd.f32 %v493, %v1027
    %v1232 = vadd.f32 %v494, %v1026
    %v1233 = vadd.f32 %v495, %v1027
    %v1234 = vadd.f32 %v496, %v1026
    %v1235 = vadd.f32 %v497, %v1027
    %v1236 = vadd.f32 %v498, %v1026
    %v1237 = vadd.f32 %v499, %v1027
    %v1238 = vadd.f32 %v500, %v1026
    %v1239 = vadd.f32 %v501, %v1027
    %v1240 = vadd.f32 %v502, %v1026
    %v1241 = vadd.f32 %v503, %v1027
    %v1242 = vadd.f32 %v504, %v1026
    %v1243 = vadd.f32 %v505, %v1027
    %v1244 = vadd.f32 %v506, %v1026
    %v1245 = vadd.f32 %v507, %v1027
    %v1246 = vadd.f32 %v508, %v1026
    %v1247 = vadd.f32 %v509, %v1027
    %v1248 = vadd.f32 %v510, %v1026
    %v1249 = vadd.f32 %v511, %v1027
    %v1250 = vadd.f32 %v512, %v1026
    %v1251 = vadd.f32 %v513, %v1027
    %v1252 = vadd.f32 %v514, %v1026
    %v1253 = vadd.f32 %v515, %v1027
    %v1254 = vadd.f32 %v516, %v1026
    %v1255 = vadd.f32 %v517, %v1027
    %v1256 = vadd.f32 %v518, %v1026
    %v1257 = vadd.f32 %v519, %v1027
    %v1258 = vadd.f32 %v520, %v1026
    %v1259 = vadd.f32 %v521, %v1027
    %v1260 = vadd.f32 %v522, %v1026
    %v1261 = vadd.f32 %v523, %v1027
    %v1262 = vadd.f32 %v524, %v1026
    %v1263 = vadd.f32 %v525, %v1027
    %v1264 = vadd.f32 %v526, %v1026
    %v1265 = vadd.f32 %v527, %v1027
    %v1266 = vadd.f32 %v528, %v1026
    %v1267 = vadd.f32 %v529, %v1027
    %v1268 = vadd.f32 %v530, %v1026
    %v1269 = vadd.f32 %v531, %v1027
    %v1270 = vadd.f32 %v532, %v1026
    %v1271 = vadd.f32 %v533, %v1027
    %v1272 = vadd.f32 %v534, %v1026
    %v1273 = vadd.f32 %v535, %v1027
    %v1274 = vadd.f32 %v536, %v1026
    %v1275 = vadd.f32 %v537, %v1027
    %v1276 = vadd.f32 %v538, %v1026
    %v1277 = vadd.f32 %v539, %v1027
    %v1278 = vadd.f32 %v540, %v1026
    %v1279 = vadd.f32 %v541, %v1027
    %v1280 = vadd.f32 %v542, %v1026
    %v1281 = vadd.f32 %v543, %v1027
    %v1282 = vadd.f32 %v544, %v1026
    %v1283 = vadd.f32 %v545, %v1027
    %v1284 = vadd.f32 %v546, %v1026
    %v1285 = vadd.f32 %v547, %v1027
    %v1286 = vadd.f32 %v548, %v1026
    %v1287 = vadd.f32 %v549, %v1027
    %v1288 = vadd.f32 %v550, %v1026
    %v1289 = vadd.f32 %v551, %v1027
    %v1290 = vadd.f32 %v552, %v1026
    %v1291 = vadd.f32 %v553, %v1027
    %v1292 = vtanh.pop %v1036
    %v1293 = vtanh.pop %v1037
    %v1294 = vtanh.pop %v1038
    %v1295 = vtanh.pop %v1039
    %v1296 = vtanh.pop %v1040
    %v1297 = vtanh.pop %v1041
    %v1298 = vtanh.pop %v1042
    %v1299 = vtanh.pop %v1043
    %v1300 = vtanh.pop %v1044
    %v1301 = vtanh.pop %v1045
    %v1302 = vtanh.pop %v1046
    %v1303 = vtanh.pop %v1047
    %v1304 = vtanh.pop %v1048
    %v1305 = vtanh.pop %v1049
    %v1306 = vtanh.pop %v1050
    %v1307 = vtanh.pop %v1051
    %v1308 = vtanh.pop %v1052
    %v1309 = vtanh.pop %v1053
    %v1310 = vtanh.pop %v1054
    %v1311 = vtanh.pop %v1055
    %v1312 = vtanh.pop %v1056
    %v1313 = vtanh.pop %v1057
    %v1314 = vtanh.pop %v1058
    %v1315 = vtanh.pop %v1059
    %v1316 = vtanh.pop %v1060
    %v1317 = vtanh.pop %v1061
    %v1318 = vtanh.pop %v1062
    %v1319 = vtanh.pop %v1063
    %v1320 = vtanh.pop %v1064
    %v1321 = vtanh.pop %v1065
    %v1322 = vtanh.pop %v1066
    %v1323 = vtanh.pop %v1067
    %v1324 = vtanh.pop %v1068
    %v1325 = vtanh.pop %v1069
    %v1326 = vtanh.pop %v1070
    %v1327 = vtanh.pop %v1071
    %v1328 = vtanh.pop %v1072
    %v1329 = vtanh.pop %v1073
    %v1330 = vtanh.pop %v1074
    %v1331 = vtanh.pop %v1075
    %v1332 = vtanh.pop %v1076
    %v1333 = vtanh.pop %v1077
    %v1334 = vtanh.pop %v1078
    %v1335 = vtanh.pop %v1079
    %v1336 = vtanh.pop %v1080
    %v1337 = vtanh.pop %v1081
    %v1338 = vtanh.pop %v1082
    %v1339 = vtanh.pop %v1083
    %v1340 = vtanh.pop %v1084
    %v1341 = vtanh.pop %v1085
    %v1342 = vtanh.pop %v1086
    %v1343 = vtanh.pop %v1087
    %v1344 = vtanh.pop %v1088
    %v1345 = vtanh.pop %v1089
    %v1346 = vtanh.pop %v1090
    %v1347 = vtanh.pop %v1091
    %v1348 = vtanh.pop %v1092
    %v1349 = vtanh.pop %v1093
    %v1350 = vtanh.pop %v1094
    %v1351 = vtanh.pop %v1095
    %v1352 = vtanh.pop %v1096
    %v1353 = vtanh.pop %v1097
    %v1354 = vtanh.pop %v1098
    %v1355 = vtanh.pop %v1099
    %v1356 = vtanh.pop %v1100
    %v1357 = vtanh.pop %v1101
    %v1358 = vtanh.pop %v1102
    %v1359 = vtanh.pop %v1103
    %v1360 = vtanh.pop %v1104
    %v1361 = vtanh.pop %v1105
    %v1362 = vtanh.pop %v1106
    %v1363 = vtanh.pop %v1107
    %v1364 = vtanh.pop %v1108
    %v1365 = vtanh.pop %v1109
    %v1366 = vtanh.pop %v1110
    %v1367 = vtanh.pop %v1111
    %v1368 = vtanh.pop %v1112
    %v1369 = vtanh.pop %v1113
    %v1370 = vtanh.pop %v1114
    %v1371 = vtanh.pop %v1115
    %v1372 = vtanh.pop %v1116
    %v1373 = vtanh.pop %v1117
    %v1374 = vtanh.pop %v1118
    %v1375 = vtanh.pop %v1119
    %v1376 = vtanh.pop %v1120
    %v1377 = vtanh.pop %v1121
    %v1378 = vtanh.pop %v1122
    %v1379 = vtanh.pop %v1123
    %v1380 = vtanh.pop %v1124
    %v1381 = vtanh.pop %v1125
    %v1382 = vtanh.pop %v1126
    %v1383 = vtanh.pop %v1127
    %v1384 = vtanh.pop %v1128
    %v1385 = vtanh.pop %v1129
    %v1386 = vtanh.pop %v1130
    %v1387 = vtanh.pop %v1131
    %v1388 = vtanh.pop %v1132
    %v1389 = vtanh.pop %v1133
    %v1390 = vtanh.pop %v1134
    %v1391 = vtanh.pop %v1135
    %v1392 = vtanh.pop %v1136
    %v1393 = vtanh.pop %v1137
    %v1394 = vtanh.pop %v1138
    %v1395 = vtanh.pop %v1139
    %v1396 = vtanh.pop %v1140
    %v1397 = vtanh.pop %v1141
    %v1398 = vtanh.pop %v1142
    %v1399 = vtanh.pop %v1143
    %v1400 = vtanh.pop %v1144
    %v1401 = vtanh.pop %v1145
    %v1402 = vtanh.pop %v1146
    %v1403 = vtanh.pop %v1147
    %v1404 = vtanh.pop %v1148
    %v1405 = vtanh.pop %v1149
    %v1406 = vtanh.pop %v1150
    %v1407 = vtanh.pop %v1151
    %v1408 = vtanh.pop %v1152
    %v1409 = vtanh.pop %v1153
    %v1410 = vtanh.pop %v1154
    %v1411 = vtanh.pop %v1155
    %v1412 = vtanh.pop %v1156
    %v1413 = vtanh.pop %v1157
    %v1414 = vtanh.pop %v1158
    %v1415 = vtanh.pop %v1159
    %v1416 = vtanh.pop %v1160
    %v1417 = vtanh.pop %v1161
    %v1418 = vtanh.pop %v1162
    %v1419 = vtanh.pop %v1163
    %v1420 = vtanh.pop %v1164
    %v1421 = vtanh.pop %v1165
    %v1422 = vtanh.pop %v1166
    %v1423 = vtanh.pop %v1167
    %v1424 = vtanh.pop %v1168
    %v1425 = vtanh.pop %v1169
    %v1426 = vtanh.pop %v1170
    %v1427 = vtanh.pop %v1171
    %v1428 = vtanh.pop %v1172
    %v1429 = vtanh.pop %v1173
    %v1430 = vtanh.pop %v1174
    %v1431 = vtanh.pop %v1175
    %v1432 = vtanh.pop %v1176
    %v1433 = vtanh.pop %v1177
    %v1434 = vtanh.pop %v1178
    %v1435 = vtanh.pop %v1179
    %v1436 = vtanh.pop %v1180
    %v1437 = vtanh.pop %v1181
    %v1438 = vtanh.pop %v1182
    %v1439 = vtanh.pop %v1183
    %v1440 = vtanh.pop %v1184
    %v1441 = vtanh.pop %v1185
    %v1442 = vtanh.pop %v1186
    %v1443 = vtanh.pop %v1187
    %v1444 = vtanh.pop %v1188
    %v1445 = vtanh.pop %v1189
    %v1446 = vtanh.pop %v1190
    %v1447 = vtanh.pop %v1191
    %v1448 = vtanh.pop %v1192
    %v1449 = vtanh.pop %v1193
    %v1450 = vtanh.pop %v1194
    %v1451 = vtanh.pop %v1195
    %v1452 = vtanh.pop %v1196
    %v1453 = vtanh.pop %v1197
    %v1454 = vtanh.pop %v1198
    %v1455 = vtanh.pop %v1199
    %v1456 = vtanh.pop %v1200
    %v1457 = vtanh.pop %v1201
    %v1458 = vtanh.pop %v1202
    %v1459 = vtanh.pop %v1203
    %v1460 = vtanh.pop %v1204
    %v1461 = vtanh.pop %v1205
    %v1462 = vtanh.pop %v1206
    %v1463 = vtanh.pop %v1207
    %v1464 = vtanh.pop %v1208
    %v1465 = vtanh.pop %v1209
    %v1466 = vtanh.pop %v1210
    %v1467 = vtanh.pop %v1211
    %v1468 = vtanh.pop %v1212
    %v1469 = vtanh.pop %v1213
    %v1470 = vtanh.pop %v1214
    %v1471 = vtanh.pop %v1215
    %v1472 = vtanh.pop %v1216
    %v1473 = vtanh.pop %v1217
    %v1474 = vtanh.pop %v1218
    %v1475 = vtanh.pop %v1219
    %v1476 = vtanh.pop %v1220
    %v1477 = vtanh.pop %v1221
    %v1478 = vtanh.pop %v1222
    %v1479 = vtanh.pop %v1223
    %v1480 = vtanh.pop %v1224
    %v1481 = vtanh.pop %v1225
    %v1482 = vtanh.pop %v1226
    %v1483 = vtanh.pop %v1227
    %v1484 = vtanh.pop %v1228
    %v1485 = vtanh.pop %v1229
    %v1486 = vtanh.pop %v1230
    %v1487 = vtanh.pop %v1231
    %v1488 = vtanh.pop %v1232
    %v1489 = vtanh.pop %v1233
    %v1490 = vtanh.pop %v1234
    %v1491 = vtanh.pop %v1235
    %v1492 = vtanh.pop %v1236
    %v1493 = vtanh.pop %v1237
    %v1494 = vtanh.pop %v1238
    %v1495 = vtanh.pop %v1239
    %v1496 = vtanh.pop %v1240
    %v1497 = vtanh.pop %v1241
    %v1498 = vtanh.pop %v1242
    %v1499 = vtanh.pop %v1243
    %v1500 = vtanh.pop %v1244
    %v1501 = vtanh.pop %v1245
    %v1502 = vtanh.pop %v1246
    %v1503 = vtanh.pop %v1247
    %v1504 = vtanh.pop %v1248
    %v1505 = vtanh.pop %v1249
    %v1506 = vtanh.pop %v1250
    %v1507 = vtanh.pop %v1251
    %v1508 = vtanh.pop %v1252
    %v1509 = vtanh.pop %v1253
    %v1510 = vtanh.pop %v1254
    %v1511 = vtanh.pop %v1255
    %v1512 = vtanh.pop %v1256
    %v1513 = vtanh.pop %v1257
    %v1514 = vtanh.pop %v1258
    %v1515 = vtanh.pop %v1259
    %v1516 = vtanh.pop %v1260
    %v1517 = vtanh.pop %v1261
    %v1518 = vtanh.pop %v1262
    %v1519 = vtanh.pop %v1263
    %v1520 = vtanh.pop %v1264
    %v1521 = vtanh.pop %v1265
    %v1522 = vtanh.pop %v1266
    %v1523 = vtanh.pop %v1267
    %v1524 = vtanh.pop %v1268
    %v1525 = vtanh.pop %v1269
    %v1526 = vtanh.pop %v1270
    %v1527 = vtanh.pop %v1271
    %v1528 = vtanh.pop %v1272
    %v1529 = vtanh.pop %v1273
    %v1530 = vtanh.pop %v1274
    %v1531 = vtanh.pop %v1275
    %v1532 = vtanh.pop %v1276
    %v1533 = vtanh.pop %v1277
    %v1534 = vtanh.pop %v1278
    %v1535 = vtanh.pop %v1279
    %v1536 = vtanh.pop %v1280
    %v1537 = vtanh.pop %v1281
    %v1538 = vtanh.pop %v1282
    %v1539 = vtanh.pop %v1283
    %v1540 = vtanh.pop %v1284
    %v1541 = vtanh.pop %v1285
    %v1542 = vtanh.pop %v1286
    %v1543 = vtanh.pop %v1287
    %v1544 = vtanh.pop %v1288
    %v1545 = vtanh.pop %v1289
    %v1546 = vtanh.pop %v1290
    %v1547 = vtanh.pop %v1291
    %v1549 = vperm.slane %v667, 0
    %v1550 = vperm.slane %v667, 1
    %v1553 = vmul.f32 %v1292, %v1549
    %v1554 = vmul.f32 %v1293, %v1550
    %v1555 = vmul.f32 %v1294, %v1549
    %v1556 = vmul.f32 %v1295, %v1550
    %v1557 = vmul.f32 %v1296, %v1549
    %v1558 = vmul.f32 %v1297, %v1550
    %v1559 = vmul.f32 %v1298, %v1549
    %v1560 = vmul.f32 %v1299, %v1550
    %v1561 = vmul.f32 %v1300, %v1549
    %v1562 = vmul.f32 %v1301, %v1550
    %v1563 = vmul.f32 %v1302, %v1549
    %v1564 = vmul.f32 %v1303, %v1550
    %v1565 = vmul.f32 %v1304, %v1549
    %v1566 = vmul.f32 %v1305, %v1550
    %v1567 = vmul.f32 %v1306, %v1549
    %v1568 = vmul.f32 %v1307, %v1550
    %v1569 = vmul.f32 %v1308, %v1549
    %v1570 = vmul.f32 %v1309, %v1550
    %v1571 = vmul.f32 %v1310, %v1549
    %v1572 = vmul.f32 %v1311, %v1550
    %v1573 = vmul.f32 %v1312, %v1549
    %v1574 = vmul.f32 %v1313, %v1550
    %v1575 = vmul.f32 %v1314, %v1549
    %v1576 = vmul.f32 %v1315, %v1550
    %v1577 = vmul.f32 %v1316, %v1549
    %v1578 = vmul.f32 %v1317, %v1550
    %v1579 = vmul.f32 %v1318, %v1549
    %v1580 = vmul.f32 %v1319, %v1550
    %v1581 = vmul.f32 %v1320, %v1549
    %v1582 = vmul.f32 %v1321, %v1550
    %v1583 = vmul.f32 %v1322, %v1549
    %v1584 = vmul.f32 %v1323, %v1550
    %v1585 = vmul.f32 %v1324, %v1549
    %v1586 = vmul.f32 %v1325, %v1550
    %v1587 = vmul.f32 %v1326, %v1549
    %v1588 = vmul.f32 %v1327, %v1550
    %v1589 = vmul.f32 %v1328, %v1549
    %v1590 = vmul.f32 %v1329, %v1550
    %v1591 = vmul.f32 %v1330, %v1549
    %v1592 = vmul.f32 %v1331, %v1550
    %v1593 = vmul.f32 %v1332, %v1549
    %v1594 = vmul.f32 %v1333, %v1550
    %v1595 = vmul.f32 %v1334, %v1549
    %v1596 = vmul.f32 %v1335, %v1550
    %v1597 = vmul.f32 %v1336, %v1549
    %v1598 = vmul.f32 %v1337, %v1550
    %v1599 = vmul.f32 %v1338, %v1549
    %v1600 = vmul.f32 %v1339, %v1550
    %v1601 = vmul.f32 %v1340, %v1549
    %v1602 = vmul.f32 %v1341, %v1550
    %v1603 = vmul.f32 %v1342, %v1549
    %v1604 = vmul.f32 %v1343, %v1550
    %v1605 = vmul.f32 %v1344, %v1549
    %v1606 = vmul.f32 %v1345, %v1550
    %v1607 = vmul.f32 %v1346, %v1549
    %v1608 = vmul.f32 %v1347, %v1550
    %v1609 = vmul.f32 %v1348, %v1549
    %v1610 = vmul.f32 %v1349, %v1550
    %v1611 = vmul.f32 %v1350, %v1549
    %v1612 = vmul.f32 %v1351, %v1550
    %v1613 = vmul.f32 %v1352, %v1549
    %v1614 = vmul.f32 %v1353, %v1550
    %v1615 = vmul.f32 %v1354, %v1549
    %v1616 = vmul.f32 %v1355, %v1550
    %v1617 = vmul.f32 %v1356, %v1549
    %v1618 = vmul.f32 %v1357, %v1550
    %v1619 = vmul.f32 %v1358, %v1549
    %v1620 = vmul.f32 %v1359, %v1550
    %v1621 = vmul.f32 %v1360, %v1549
    %v1622 = vmul.f32 %v1361, %v1550
    %v1623 = vmul.f32 %v1362, %v1549
    %v1624 = vmul.f32 %v1363, %v1550
    %v1625 = vmul.f32 %v1364, %v1549
    %v1626 = vmul.f32 %v1365, %v1550
    %v1627 = vmul.f32 %v1366, %v1549
    %v1628 = vmul.f32 %v1367, %v1550
    %v1629 = vmul.f32 %v1368, %v1549
    %v1630 = vmul.f32 %v1369, %v1550
    %v1631 = vmul.f32 %v1370, %v1549
    %v1632 = vmul.f32 %v1371, %v1550
    %v1633 = vmul.f32 %v1372, %v1549
    %v1634 = vmul.f32 %v1373, %v1550
    %v1635 = vmul.f32 %v1374, %v1549
    %v1636 = vmul.f32 %v1375, %v1550
    %v1637 = vmul.f32 %v1376, %v1549
    %v1638 = vmul.f32 %v1377, %v1550
    %v1639 = vmul.f32 %v1378, %v1549
    %v1640 = vmul.f32 %v1379, %v1550
    %v1641 = vmul.f32 %v1380, %v1549
    %v1642 = vmul.f32 %v1381, %v1550
    %v1643 = vmul.f32 %v1382, %v1549
    %v1644 = vmul.f32 %v1383, %v1550
    %v1645 = vmul.f32 %v1384, %v1549
    %v1646 = vmul.f32 %v1385, %v1550
    %v1647 = vmul.f32 %v1386, %v1549
    %v1648 = vmul.f32 %v1387, %v1550
    %v1649 = vmul.f32 %v1388, %v1549
    %v1650 = vmul.f32 %v1389, %v1550
    %v1651 = vmul.f32 %v1390, %v1549
    %v1652 = vmul.f32 %v1391, %v1550
    %v1653 = vmul.f32 %v1392, %v1549
    %v1654 = vmul.f32 %v1393, %v1550
    %v1655 = vmul.f32 %v1394, %v1549
    %v1656 = vmul.f32 %v1395, %v1550
    %v1657 = vmul.f32 %v1396, %v1549
    %v1658 = vmul.f32 %v1397, %v1550
    %v1659 = vmul.f32 %v1398, %v1549
    %v1660 = vmul.f32 %v1399, %v1550
    %v1661 = vmul.f32 %v1400, %v1549
    %v1662 = vmul.f32 %v1401, %v1550
    %v1663 = vmul.f32 %v1402, %v1549
    %v1664 = vmul.f32 %v1403, %v1550
    %v1665 = vmul.f32 %v1404, %v1549
    %v1666 = vmul.f32 %v1405, %v1550
    %v1667 = vmul.f32 %v1406, %v1549
    %v1668 = vmul.f32 %v1407, %v1550
    %v1669 = vmul.f32 %v1408, %v1549
    %v1670 = vmul.f32 %v1409, %v1550
    %v1671 = vmul.f32 %v1410, %v1549
    %v1672 = vmul.f32 %v1411, %v1550
    %v1673 = vmul.f32 %v1412, %v1549
    %v1674 = vmul.f32 %v1413, %v1550
    %v1675 = vmul.f32 %v1414, %v1549
    %v1676 = vmul.f32 %v1415, %v1550
    %v1677 = vmul.f32 %v1416, %v1549
    %v1678 = vmul.f32 %v1417, %v1550
    %v1679 = vmul.f32 %v1418, %v1549
    %v1680 = vmul.f32 %v1419, %v1550
    %v1681 = vmul.f32 %v1420, %v1549
    %v1682 = vmul.f32 %v1421, %v1550
    %v1683 = vmul.f32 %v1422, %v1549
    %v1684 = vmul.f32 %v1423, %v1550
    %v1685 = vmul.f32 %v1424, %v1549
    %v1686 = vmul.f32 %v1425, %v1550
    %v1687 = vmul.f32 %v1426, %v1549
    %v1688 = vmul.f32 %v1427, %v1550
    %v1689 = vmul.f32 %v1428, %v1549
    %v1690 = vmul.f32 %v1429, %v1550
    %v1691 = vmul.f32 %v1430, %v1549
    %v1692 = vmul.f32 %v1431, %v1550
    %v1693 = vmul.f32 %v1432, %v1549
    %v1694 = vmul.f32 %v1433, %v1550
    %v1695 = vmul.f32 %v1434, %v1549
    %v1696 = vmul.f32 %v1435, %v1550
    %v1697 = vmul.f32 %v1436, %v1549
    %v1698 = vmul.f32 %v1437, %v1550
    %v1699 = vmul.f32 %v1438, %v1549
    %v1700 = vmul.f32 %v1439, %v1550
    %v1701 = vmul.f32 %v1440, %v1549
    %v1702 = vmul.f32 %v1441, %v1550
    %v1703 = vmul.f32 %v1442, %v1549
    %v1704 = vmul.f32 %v1443, %v1550
    %v1705 = vmul.f32 %v1444, %v1549
    %v1706 = vmul.f32 %v1445, %v1550
    %v1707 = vmul.f32 %v1446, %v1549
    %v1708 = vmul.f32 %v1447, %v1550
    %v1709 = vmul.f32 %v1448, %v1549
    %v1710 = vmul.f32 %v1449, %v1550
    %v1711 = vmul.f32 %v1450, %v1549
    %v1712 = vmul.f32 %v1451, %v1550
    %v1713 = vmul.f32 %v1452, %v1549
    %v1714 = vmul.f32 %v1453, %v1550
    %v1715 = vmul.f32 %v1454, %v1549
    %v1716 = vmul.f32 %v1455, %v1550
    %v1717 = vmul.f32 %v1456, %v1549
    %v1718 = vmul.f32 %v1457, %v1550
    %v1719 = vmul.f32 %v1458, %v1549
    %v1720 = vmul.f32 %v1459, %v1550
    %v1721 = vmul.f32 %v1460, %v1549
    %v1722 = vmul.f32 %v1461, %v1550
    %v1723 = vmul.f32 %v1462, %v1549
    %v1724 = vmul.f32 %v1463, %v1550
    %v1725 = vmul.f32 %v1464, %v1549
    %v1726 = vmul.f32 %v1465, %v1550
    %v1727 = vmul.f32 %v1466, %v1549
    %v1728 = vmul.f32 %v1467, %v1550
    %v1729 = vmul.f32 %v1468, %v1549
    %v1730 = vmul.f32 %v1469, %v1550
    %v1731 = vmul.f32 %v1470, %v1549
    %v1732 = vmul.f32 %v1471, %v1550
    %v1733 = vmul.f32 %v1472, %v1549
    %v1734 = vmul.f32 %v1473, %v1550
    %v1735 = vmul.f32 %v1474, %v1549
    %v1736 = vmul.f32 %v1475, %v1550
    %v1737 = vmul.f32 %v1476, %v1549
    %v1738 = vmul.f32 %v1477, %v1550
    %v1739 = vmul.f32 %v1478, %v1549
    %v1740 = vmul.f32 %v1479, %v1550
    %v1741 = vmul.f32 %v1480, %v1549
    %v1742 = vmul.f32 %v1481, %v1550
    %v1743 = vmul.f32 %v1482, %v1549
    %v1744 = vmul.f32 %v1483, %v1550
    %v1745 = vmul.f32 %v1484, %v1549
    %v1746 = vmul.f32 %v1485, %v1550
    %v1747 = vmul.f32 %v1486, %v1549
    %v1748 = vmul.f32 %v1487, %v1550
    %v1749 = vmul.f32 %v1488, %v1549
    %v1750 = vmul.f32 %v1489, %v1550
    %v1751 = vmul.f32 %v1490, %v1549
    %v1752 = vmul.f32 %v1491, %v1550
    %v1753 = vmul.f32 %v1492, %v1549
    %v1754 = vmul.f32 %v1493, %v1550
    %v1755 = vmul.f32 %v1494, %v1549
    %v1756 = vmul.f32 %v1495, %v1550
    %v1757 = vmul.f32 %v1496, %v1549
    %v1758 = vmul.f32 %v1497, %v1550
    %v1759 = vmul.f32 %v1498, %v1549
    %v1760 = vmul.f32 %v1499, %v1550
    %v1761 = vmul.f32 %v1500, %v1549
    %v1762 = vmul.f32 %v1501, %v1550
    %v1763 = vmul.f32 %v1502, %v1549
    %v1764 = vmul.f32 %v1503, %v1550
    %v1765 = vmul.f32 %v1504, %v1549
    %v1766 = vmul.f32 %v1505, %v1550
    %v1767 = vmul.f32 %v1506, %v1549
    %v1768 = vmul.f32 %v1507, %v1550
    %v1769 = vmul.f32 %v1508, %v1549
    %v1770 = vmul.f32 %v1509, %v1550
    %v1771 = vmul.f32 %v1510, %v1549
    %v1772 = vmul.f32 %v1511, %v1550
    %v1773 = vmul.f32 %v1512, %v1549
    %v1774 = vmul.f32 %v1513, %v1550
    %v1775 = vmul.f32 %v1514, %v1549
    %v1776 = vmul.f32 %v1515, %v1550
    %v1777 = vmul.f32 %v1516, %v1549
    %v1778 = vmul.f32 %v1517, %v1550
    %v1779 = vmul.f32 %v1518, %v1549
    %v1780 = vmul.f32 %v1519, %v1550
    %v1781 = vmul.f32 %v1520, %v1549
    %v1782 = vmul.f32 %v1521, %v1550
    %v1783 = vmul.f32 %v1522, %v1549
    %v1784 = vmul.f32 %v1523, %v1550
    %v1785 = vmul.f32 %v1524, %v1549
    %v1786 = vmul.f32 %v1525, %v1550
    %v1787 = vmul.f32 %v1526, %v1549
    %v1788 = vmul.f32 %v1527, %v1550
    %v1789 = vmul.f32 %v1528, %v1549
    %v1790 = vmul.f32 %v1529, %v1550
    %v1791 = vmul.f32 %v1530, %v1549
    %v1792 = vmul.f32 %v1531, %v1550
    %v1793 = vmul.f32 %v1532, %v1549
    %v1794 = vmul.f32 %v1533, %v1550
    %v1795 = vmul.f32 %v1534, %v1549
    %v1796 = vmul.f32 %v1535, %v1550
    %v1797 = vmul.f32 %v1536, %v1549
    %v1798 = vmul.f32 %v1537, %v1550
    %v1799 = vmul.f32 %v1538, %v1549
    %v1800 = vmul.f32 %v1539, %v1550
    %v1801 = vmul.f32 %v1540, %v1549
    %v1802 = vmul.f32 %v1541, %v1550
    %v1803 = vmul.f32 %v1542, %v1549
    %v1804 = vmul.f32 %v1543, %v1550
    %v1805 = vmul.f32 %v1544, %v1549
    %v1806 = vmul.f32 %v1545, %v1550
    %v1807 = vmul.f32 %v1546, %v1549
    %v1808 = vmul.f32 %v1547, %v1550
    %v1809 = vadd.f32 %v1553, %v1554
    %1810 = vadd.xlane.f32.xlu0 %v1809
    %v1811 = vpop.xlane.xlu0 %1810
    %v1812 = vadd.f32 %v1555, %v1556
    %1813 = vadd.xlane.f32.xlu0 %v1812
    %v1814 = vpop.xlane.xlu0 %1813
    %v1815 = vadd.f32 %v1557, %v1558
    %1816 = vadd.xlane.f32.xlu0 %v1815
    %v1817 = vpop.xlane.xlu0 %1816
    %v1818 = vadd.f32 %v1559, %v1560
    %1819 = vadd.xlane.f32.xlu0 %v1818
    %v1820 = vpop.xlane.xlu0 %1819
    %v1821 = vadd.f32 %v1561, %v1562
    %1822 = vadd.xlane.f32.xlu0 %v1821
    %v1823 = vpop.xlane.xlu0 %1822
    %v1824 = vadd.f32 %v1563, %v1564
    %1825 = vadd.xlane.f32.xlu0 %v1824
    %v1826 = vpop.xlane.xlu0 %1825
    %v1827 = vadd.f32 %v1565, %v1566
    %1828 = vadd.xlane.f32.xlu0 %v1827
    %v1829 = vpop.xlane.xlu0 %1828
    %v1830 = vadd.f32 %v1567, %v1568
    %1831 = vadd.xlane.f32.xlu0 %v1830
    %v1832 = vpop.xlane.xlu0 %1831
    %v1833 = vadd.f32 %v1569, %v1570
    %1834 = vadd.xlane.f32.xlu0 %v1833
    %v1835 = vpop.xlane.xlu0 %1834
    %v1836 = vadd.f32 %v1571, %v1572
    %1837 = vadd.xlane.f32.xlu0 %v1836
    %v1838 = vpop.xlane.xlu0 %1837
    %v1839 = vadd.f32 %v1573, %v1574
    %1840 = vadd.xlane.f32.xlu0 %v1839
    %v1841 = vpop.xlane.xlu0 %1840
    %v1842 = vadd.f32 %v1575, %v1576
    %1843 = vadd.xlane.f32.xlu0 %v1842
    %v1844 = vpop.xlane.xlu0 %1843
    %v1845 = vadd.f32 %v1577, %v1578
    %1846 = vadd.xlane.f32.xlu0 %v1845
    %v1847 = vpop.xlane.xlu0 %1846
    %v1848 = vadd.f32 %v1579, %v1580
    %1849 = vadd.xlane.f32.xlu0 %v1848
    %v1850 = vpop.xlane.xlu0 %1849
    %v1851 = vadd.f32 %v1581, %v1582
    %1852 = vadd.xlane.f32.xlu0 %v1851
    %v1853 = vpop.xlane.xlu0 %1852
    %v1854 = vadd.f32 %v1583, %v1584
    %1855 = vadd.xlane.f32.xlu0 %v1854
    %v1856 = vpop.xlane.xlu0 %1855
    %v1857 = vadd.f32 %v1585, %v1586
    %1858 = vadd.xlane.f32.xlu0 %v1857
    %v1859 = vpop.xlane.xlu0 %1858
    %v1860 = vadd.f32 %v1587, %v1588
    %1861 = vadd.xlane.f32.xlu0 %v1860
    %v1862 = vpop.xlane.xlu0 %1861
    %v1863 = vadd.f32 %v1589, %v1590
    %1864 = vadd.xlane.f32.xlu0 %v1863
    %v1865 = vpop.xlane.xlu0 %1864
    %v1866 = vadd.f32 %v1591, %v1592
    %1867 = vadd.xlane.f32.xlu0 %v1866
    %v1868 = vpop.xlane.xlu0 %1867
    %v1869 = vadd.f32 %v1593, %v1594
    %1870 = vadd.xlane.f32.xlu0 %v1869
    %v1871 = vpop.xlane.xlu0 %1870
    %v1872 = vadd.f32 %v1595, %v1596
    %1873 = vadd.xlane.f32.xlu0 %v1872
    %v1874 = vpop.xlane.xlu0 %1873
    %v1875 = vadd.f32 %v1597, %v1598
    %1876 = vadd.xlane.f32.xlu0 %v1875
    %v1877 = vpop.xlane.xlu0 %1876
    %v1878 = vadd.f32 %v1599, %v1600
    %1879 = vadd.xlane.f32.xlu0 %v1878
    %v1880 = vpop.xlane.xlu0 %1879
    %v1881 = vadd.f32 %v1601, %v1602
    %1882 = vadd.xlane.f32.xlu0 %v1881
    %v1883 = vpop.xlane.xlu0 %1882
    %v1884 = vadd.f32 %v1603, %v1604
    %1885 = vadd.xlane.f32.xlu0 %v1884
    %v1886 = vpop.xlane.xlu0 %1885
    %v1887 = vadd.f32 %v1605, %v1606
    %1888 = vadd.xlane.f32.xlu0 %v1887
    %v1889 = vpop.xlane.xlu0 %1888
    %v1890 = vadd.f32 %v1607, %v1608
    %1891 = vadd.xlane.f32.xlu0 %v1890
    %v1892 = vpop.xlane.xlu0 %1891
    %v1893 = vadd.f32 %v1609, %v1610
    %1894 = vadd.xlane.f32.xlu0 %v1893
    %v1895 = vpop.xlane.xlu0 %1894
    %v1896 = vadd.f32 %v1611, %v1612
    %1897 = vadd.xlane.f32.xlu0 %v1896
    %v1898 = vpop.xlane.xlu0 %1897
    %v1899 = vadd.f32 %v1613, %v1614
    %1900 = vadd.xlane.f32.xlu0 %v1899
    %v1901 = vpop.xlane.xlu0 %1900
    %v1902 = vadd.f32 %v1615, %v1616
    %1903 = vadd.xlane.f32.xlu0 %v1902
    %v1904 = vpop.xlane.xlu0 %1903
    %v1905 = vadd.f32 %v1617, %v1618
    %1906 = vadd.xlane.f32.xlu0 %v1905
    %v1907 = vpop.xlane.xlu0 %1906
    %v1908 = vadd.f32 %v1619, %v1620
    %1909 = vadd.xlane.f32.xlu0 %v1908
    %v1910 = vpop.xlane.xlu0 %1909
    %v1911 = vadd.f32 %v1621, %v1622
    %1912 = vadd.xlane.f32.xlu0 %v1911
    %v1913 = vpop.xlane.xlu0 %1912
    %v1914 = vadd.f32 %v1623, %v1624
    %1915 = vadd.xlane.f32.xlu0 %v1914
    %v1916 = vpop.xlane.xlu0 %1915
    %v1917 = vadd.f32 %v1625, %v1626
    %1918 = vadd.xlane.f32.xlu0 %v1917
    %v1919 = vpop.xlane.xlu0 %1918
    %v1920 = vadd.f32 %v1627, %v1628
    %1921 = vadd.xlane.f32.xlu0 %v1920
    %v1922 = vpop.xlane.xlu0 %1921
    %v1923 = vadd.f32 %v1629, %v1630
    %1924 = vadd.xlane.f32.xlu0 %v1923
    %v1925 = vpop.xlane.xlu0 %1924
    %v1926 = vadd.f32 %v1631, %v1632
    %1927 = vadd.xlane.f32.xlu0 %v1926
    %v1928 = vpop.xlane.xlu0 %1927
    %v1929 = vadd.f32 %v1633, %v1634
    %1930 = vadd.xlane.f32.xlu0 %v1929
    %v1931 = vpop.xlane.xlu0 %1930
    %v1932 = vadd.f32 %v1635, %v1636
    %1933 = vadd.xlane.f32.xlu0 %v1932
    %v1934 = vpop.xlane.xlu0 %1933
    %v1935 = vadd.f32 %v1637, %v1638
    %1936 = vadd.xlane.f32.xlu0 %v1935
    %v1937 = vpop.xlane.xlu0 %1936
    %v1938 = vadd.f32 %v1639, %v1640
    %1939 = vadd.xlane.f32.xlu0 %v1938
    %v1940 = vpop.xlane.xlu0 %1939
    %v1941 = vadd.f32 %v1641, %v1642
    %1942 = vadd.xlane.f32.xlu0 %v1941
    %v1943 = vpop.xlane.xlu0 %1942
    %v1944 = vadd.f32 %v1643, %v1644
    %1945 = vadd.xlane.f32.xlu0 %v1944
    %v1946 = vpop.xlane.xlu0 %1945
    %v1947 = vadd.f32 %v1645, %v1646
    %1948 = vadd.xlane.f32.xlu0 %v1947
    %v1949 = vpop.xlane.xlu0 %1948
    %v1950 = vadd.f32 %v1647, %v1648
    %1951 = vadd.xlane.f32.xlu0 %v1950
    %v1952 = vpop.xlane.xlu0 %1951
    %v1953 = vadd.f32 %v1649, %v1650
    %1954 = vadd.xlane.f32.xlu0 %v1953
    %v1955 = vpop.xlane.xlu0 %1954
    %v1956 = vadd.f32 %v1651, %v1652
    %1957 = vadd.xlane.f32.xlu0 %v1956
    %v1958 = vpop.xlane.xlu0 %1957
    %v1959 = vadd.f32 %v1653, %v1654
    %1960 = vadd.xlane.f32.xlu0 %v1959
    %v1961 = vpop.xlane.xlu0 %1960
    %v1962 = vadd.f32 %v1655, %v1656
    %1963 = vadd.xlane.f32.xlu0 %v1962
    %v1964 = vpop.xlane.xlu0 %1963
    %v1965 = vadd.f32 %v1657, %v1658
    %1966 = vadd.xlane.f32.xlu0 %v1965
    %v1967 = vpop.xlane.xlu0 %1966
    %v1968 = vadd.f32 %v1659, %v1660
    %1969 = vadd.xlane.f32.xlu0 %v1968
    %v1970 = vpop.xlane.xlu0 %1969
    %v1971 = vadd.f32 %v1661, %v1662
    %1972 = vadd.xlane.f32.xlu0 %v1971
    %v1973 = vpop.xlane.xlu0 %1972
    %v1974 = vadd.f32 %v1663, %v1664
    %1975 = vadd.xlane.f32.xlu0 %v1974
    %v1976 = vpop.xlane.xlu0 %1975
    %v1977 = vadd.f32 %v1665, %v1666
    %1978 = vadd.xlane.f32.xlu0 %v1977
    %v1979 = vpop.xlane.xlu0 %1978
    %v1980 = vadd.f32 %v1667, %v1668
    %1981 = vadd.xlane.f32.xlu0 %v1980
    %v1982 = vpop.xlane.xlu0 %1981
    %v1983 = vadd.f32 %v1669, %v1670
    %1984 = vadd.xlane.f32.xlu0 %v1983
    %v1985 = vpop.xlane.xlu0 %1984
    %v1986 = vadd.f32 %v1671, %v1672
    %1987 = vadd.xlane.f32.xlu0 %v1986
    %v1988 = vpop.xlane.xlu0 %1987
    %v1989 = vadd.f32 %v1673, %v1674
    %1990 = vadd.xlane.f32.xlu0 %v1989
    %v1991 = vpop.xlane.xlu0 %1990
    %v1992 = vadd.f32 %v1675, %v1676
    %1993 = vadd.xlane.f32.xlu0 %v1992
    %v1994 = vpop.xlane.xlu0 %1993
    %v1995 = vadd.f32 %v1677, %v1678
    %1996 = vadd.xlane.f32.xlu0 %v1995
    %v1997 = vpop.xlane.xlu0 %1996
    %v1998 = vadd.f32 %v1679, %v1680
    %1999 = vadd.xlane.f32.xlu0 %v1998
    %v2000 = vpop.xlane.xlu0 %1999
    %v2001 = vadd.f32 %v1681, %v1682
    %2002 = vadd.xlane.f32.xlu0 %v2001
    %v2003 = vpop.xlane.xlu0 %2002
    %v2004 = vadd.f32 %v1683, %v1684
    %2005 = vadd.xlane.f32.xlu0 %v2004
    %v2006 = vpop.xlane.xlu0 %2005
    %v2007 = vadd.f32 %v1685, %v1686
    %2008 = vadd.xlane.f32.xlu0 %v2007
    %v2009 = vpop.xlane.xlu0 %2008
    %v2010 = vadd.f32 %v1687, %v1688
    %2011 = vadd.xlane.f32.xlu0 %v2010
    %v2012 = vpop.xlane.xlu0 %2011
    %v2013 = vadd.f32 %v1689, %v1690
    %2014 = vadd.xlane.f32.xlu0 %v2013
    %v2015 = vpop.xlane.xlu0 %2014
    %v2016 = vadd.f32 %v1691, %v1692
    %2017 = vadd.xlane.f32.xlu0 %v2016
    %v2018 = vpop.xlane.xlu0 %2017
    %v2019 = vadd.f32 %v1693, %v1694
    %2020 = vadd.xlane.f32.xlu0 %v2019
    %v2021 = vpop.xlane.xlu0 %2020
    %v2022 = vadd.f32 %v1695, %v1696
    %2023 = vadd.xlane.f32.xlu0 %v2022
    %v2024 = vpop.xlane.xlu0 %2023
    %v2025 = vadd.f32 %v1697, %v1698
    %2026 = vadd.xlane.f32.xlu0 %v2025
    %v2027 = vpop.xlane.xlu0 %2026
    %v2028 = vadd.f32 %v1699, %v1700
    %2029 = vadd.xlane.f32.xlu0 %v2028
    %v2030 = vpop.xlane.xlu0 %2029
    %v2031 = vadd.f32 %v1701, %v1702
    %2032 = vadd.xlane.f32.xlu0 %v2031
    %v2033 = vpop.xlane.xlu0 %2032
    %v2034 = vadd.f32 %v1703, %v1704
    %2035 = vadd.xlane.f32.xlu0 %v2034
    %v2036 = vpop.xlane.xlu0 %2035
    %v2037 = vadd.f32 %v1705, %v1706
    %2038 = vadd.xlane.f32.xlu0 %v2037
    %v2039 = vpop.xlane.xlu0 %2038
    %v2040 = vadd.f32 %v1707, %v1708
    %2041 = vadd.xlane.f32.xlu0 %v2040
    %v2042 = vpop.xlane.xlu0 %2041
    %v2043 = vadd.f32 %v1709, %v1710
    %2044 = vadd.xlane.f32.xlu0 %v2043
    %v2045 = vpop.xlane.xlu0 %2044
    %v2046 = vadd.f32 %v1711, %v1712
    %2047 = vadd.xlane.f32.xlu0 %v2046
    %v2048 = vpop.xlane.xlu0 %2047
    %v2049 = vadd.f32 %v1713, %v1714
    %2050 = vadd.xlane.f32.xlu0 %v2049
    %v2051 = vpop.xlane.xlu0 %2050
    %v2052 = vadd.f32 %v1715, %v1716
    %2053 = vadd.xlane.f32.xlu0 %v2052
    %v2054 = vpop.xlane.xlu0 %2053
    %v2055 = vadd.f32 %v1717, %v1718
    %2056 = vadd.xlane.f32.xlu0 %v2055
    %v2057 = vpop.xlane.xlu0 %2056
    %v2058 = vadd.f32 %v1719, %v1720
    %2059 = vadd.xlane.f32.xlu0 %v2058
    %v2060 = vpop.xlane.xlu0 %2059
    %v2061 = vadd.f32 %v1721, %v1722
    %2062 = vadd.xlane.f32.xlu0 %v2061
    %v2063 = vpop.xlane.xlu0 %2062
    %v2064 = vadd.f32 %v1723, %v1724
    %2065 = vadd.xlane.f32.xlu0 %v2064
    %v2066 = vpop.xlane.xlu0 %2065
    %v2067 = vadd.f32 %v1725, %v1726
    %2068 = vadd.xlane.f32.xlu0 %v2067
    %v2069 = vpop.xlane.xlu0 %2068
    %v2070 = vadd.f32 %v1727, %v1728
    %2071 = vadd.xlane.f32.xlu0 %v2070
    %v2072 = vpop.xlane.xlu0 %2071
    %v2073 = vadd.f32 %v1729, %v1730
    %2074 = vadd.xlane.f32.xlu0 %v2073
    %v2075 = vpop.xlane.xlu0 %2074
    %v2076 = vadd.f32 %v1731, %v1732
    %2077 = vadd.xlane.f32.xlu0 %v2076
    %v2078 = vpop.xlane.xlu0 %2077
    %v2079 = vadd.f32 %v1733, %v1734
    %2080 = vadd.xlane.f32.xlu0 %v2079
    %v2081 = vpop.xlane.xlu0 %2080
    %v2082 = vadd.f32 %v1735, %v1736
    %2083 = vadd.xlane.f32.xlu0 %v2082
    %v2084 = vpop.xlane.xlu0 %2083
    %v2085 = vadd.f32 %v1737, %v1738
    %2086 = vadd.xlane.f32.xlu0 %v2085
    %v2087 = vpop.xlane.xlu0 %2086
    %v2088 = vadd.f32 %v1739, %v1740
    %2089 = vadd.xlane.f32.xlu0 %v2088
    %v2090 = vpop.xlane.xlu0 %2089
    %v2091 = vadd.f32 %v1741, %v1742
    %2092 = vadd.xlane.f32.xlu0 %v2091
    %v2093 = vpop.xlane.xlu0 %2092
    %v2094 = vadd.f32 %v1743, %v1744
    %2095 = vadd.xlane.f32.xlu0 %v2094
    %v2096 = vpop.xlane.xlu0 %2095
    %v2097 = vadd.f32 %v1745, %v1746
    %2098 = vadd.xlane.f32.xlu0 %v2097
    %v2099 = vpop.xlane.xlu0 %2098
    %v2100 = vadd.f32 %v1747, %v1748
    %2101 = vadd.xlane.f32.xlu0 %v2100
    %v2102 = vpop.xlane.xlu0 %2101
    %v2103 = vadd.f32 %v1749, %v1750
    %2104 = vadd.xlane.f32.xlu0 %v2103
    %v2105 = vpop.xlane.xlu0 %2104
    %v2106 = vadd.f32 %v1751, %v1752
    %2107 = vadd.xlane.f32.xlu0 %v2106
    %v2108 = vpop.xlane.xlu0 %2107
    %v2109 = vadd.f32 %v1753, %v1754
    %2110 = vadd.xlane.f32.xlu0 %v2109
    %v2111 = vpop.xlane.xlu0 %2110
    %v2112 = vadd.f32 %v1755, %v1756
    %2113 = vadd.xlane.f32.xlu0 %v2112
    %v2114 = vpop.xlane.xlu0 %2113
    %v2115 = vadd.f32 %v1757, %v1758
    %2116 = vadd.xlane.f32.xlu0 %v2115
    %v2117 = vpop.xlane.xlu0 %2116
    %v2118 = vadd.f32 %v1759, %v1760
    %2119 = vadd.xlane.f32.xlu0 %v2118
    %v2120 = vpop.xlane.xlu0 %2119
    %v2121 = vadd.f32 %v1761, %v1762
    %2122 = vadd.xlane.f32.xlu0 %v2121
    %v2123 = vpop.xlane.xlu0 %2122
    %v2124 = vadd.f32 %v1763, %v1764
    %2125 = vadd.xlane.f32.xlu0 %v2124
    %v2126 = vpop.xlane.xlu0 %2125
    %v2127 = vadd.f32 %v1765, %v1766
    %2128 = vadd.xlane.f32.xlu0 %v2127
    %v2129 = vpop.xlane.xlu0 %2128
    %v2130 = vadd.f32 %v1767, %v1768
    %2131 = vadd.xlane.f32.xlu0 %v2130
    %v2132 = vpop.xlane.xlu0 %2131
    %v2133 = vadd.f32 %v1769, %v1770
    %2134 = vadd.xlane.f32.xlu0 %v2133
    %v2135 = vpop.xlane.xlu0 %2134
    %v2136 = vadd.f32 %v1771, %v1772
    %2137 = vadd.xlane.f32.xlu0 %v2136
    %v2138 = vpop.xlane.xlu0 %2137
    %v2139 = vadd.f32 %v1773, %v1774
    %2140 = vadd.xlane.f32.xlu0 %v2139
    %v2141 = vpop.xlane.xlu0 %2140
    %v2142 = vadd.f32 %v1775, %v1776
    %2143 = vadd.xlane.f32.xlu0 %v2142
    %v2144 = vpop.xlane.xlu0 %2143
    %v2145 = vadd.f32 %v1777, %v1778
    %2146 = vadd.xlane.f32.xlu0 %v2145
    %v2147 = vpop.xlane.xlu0 %2146
    %v2148 = vadd.f32 %v1779, %v1780
    %2149 = vadd.xlane.f32.xlu0 %v2148
    %v2150 = vpop.xlane.xlu0 %2149
    %v2151 = vadd.f32 %v1781, %v1782
    %2152 = vadd.xlane.f32.xlu0 %v2151
    %v2153 = vpop.xlane.xlu0 %2152
    %v2154 = vadd.f32 %v1783, %v1784
    %2155 = vadd.xlane.f32.xlu0 %v2154
    %v2156 = vpop.xlane.xlu0 %2155
    %v2157 = vadd.f32 %v1785, %v1786
    %2158 = vadd.xlane.f32.xlu0 %v2157
    %v2159 = vpop.xlane.xlu0 %2158
    %v2160 = vadd.f32 %v1787, %v1788
    %2161 = vadd.xlane.f32.xlu0 %v2160
    %v2162 = vpop.xlane.xlu0 %2161
    %v2163 = vadd.f32 %v1789, %v1790
    %2164 = vadd.xlane.f32.xlu0 %v2163
    %v2165 = vpop.xlane.xlu0 %2164
    %v2166 = vadd.f32 %v1791, %v1792
    %2167 = vadd.xlane.f32.xlu0 %v2166
    %v2168 = vpop.xlane.xlu0 %2167
    %v2169 = vadd.f32 %v1793, %v1794
    %2170 = vadd.xlane.f32.xlu0 %v2169
    %v2171 = vpop.xlane.xlu0 %2170
    %v2172 = vadd.f32 %v1795, %v1796
    %2173 = vadd.xlane.f32.xlu0 %v2172
    %v2174 = vpop.xlane.xlu0 %2173
    %v2175 = vadd.f32 %v1797, %v1798
    %2176 = vadd.xlane.f32.xlu0 %v2175
    %v2177 = vpop.xlane.xlu0 %2176
    %v2178 = vadd.f32 %v1799, %v1800
    %2179 = vadd.xlane.f32.xlu0 %v2178
    %v2180 = vpop.xlane.xlu0 %2179
    %v2181 = vadd.f32 %v1801, %v1802
    %2182 = vadd.xlane.f32.xlu0 %v2181
    %v2183 = vpop.xlane.xlu0 %2182
    %v2184 = vadd.f32 %v1803, %v1804
    %2185 = vadd.xlane.f32.xlu0 %v2184
    %v2186 = vpop.xlane.xlu0 %2185
    %v2187 = vadd.f32 %v1805, %v1806
    %2188 = vadd.xlane.f32.xlu0 %v2187
    %v2189 = vpop.xlane.xlu0 %2188
    %v2190 = vadd.f32 %v1807, %v1808
    %2191 = vadd.xlane.f32.xlu0 %v2190
    %v2192 = vpop.xlane.xlu0 %2191
    %v2194 = vperm.slane %v668, 0
    %2195 = vset.pattern.permute.xlu0 0
    %2196 = vperm.xlu0 %2195, %v2194
    %v2197 = vpop.permute.xlu0 %2196
    %v2199 = vadd.f32 %v1811, %v2197
    %v2200 = vadd.f32 %v1814, %v2197
    %v2201 = vadd.f32 %v1817, %v2197
    %v2202 = vadd.f32 %v1820, %v2197
    %v2203 = vadd.f32 %v1823, %v2197
    %v2204 = vadd.f32 %v1826, %v2197
    %v2205 = vadd.f32 %v1829, %v2197
    %v2206 = vadd.f32 %v1832, %v2197
    %v2207 = vadd.f32 %v1835, %v2197
    %v2208 = vadd.f32 %v1838, %v2197
    %v2209 = vadd.f32 %v1841, %v2197
    %v2210 = vadd.f32 %v1844, %v2197
    %v2211 = vadd.f32 %v1847, %v2197
    %v2212 = vadd.f32 %v1850, %v2197
    %v2213 = vadd.f32 %v1853, %v2197
    %v2214 = vadd.f32 %v1856, %v2197
    %v2215 = vadd.f32 %v1859, %v2197
    %v2216 = vadd.f32 %v1862, %v2197
    %v2217 = vadd.f32 %v1865, %v2197
    %v2218 = vadd.f32 %v1868, %v2197
    %v2219 = vadd.f32 %v1871, %v2197
    %v2220 = vadd.f32 %v1874, %v2197
    %v2221 = vadd.f32 %v1877, %v2197
    %v2222 = vadd.f32 %v1880, %v2197
    %v2223 = vadd.f32 %v1883, %v2197
    %v2224 = vadd.f32 %v1886, %v2197
    %v2225 = vadd.f32 %v1889, %v2197
    %v2226 = vadd.f32 %v1892, %v2197
    %v2227 = vadd.f32 %v1895, %v2197
    %v2228 = vadd.f32 %v1898, %v2197
    %v2229 = vadd.f32 %v1901, %v2197
    %v2230 = vadd.f32 %v1904, %v2197
    %v2231 = vadd.f32 %v1907, %v2197
    %v2232 = vadd.f32 %v1910, %v2197
    %v2233 = vadd.f32 %v1913, %v2197
    %v2234 = vadd.f32 %v1916, %v2197
    %v2235 = vadd.f32 %v1919, %v2197
    %v2236 = vadd.f32 %v1922, %v2197
    %v2237 = vadd.f32 %v1925, %v2197
    %v2238 = vadd.f32 %v1928, %v2197
    %v2239 = vadd.f32 %v1931, %v2197
    %v2240 = vadd.f32 %v1934, %v2197
    %v2241 = vadd.f32 %v1937, %v2197
    %v2242 = vadd.f32 %v1940, %v2197
    %v2243 = vadd.f32 %v1943, %v2197
    %v2244 = vadd.f32 %v1946, %v2197
    %v2245 = vadd.f32 %v1949, %v2197
    %v2246 = vadd.f32 %v1952, %v2197
    %v2247 = vadd.f32 %v1955, %v2197
    %v2248 = vadd.f32 %v1958, %v2197
    %v2249 = vadd.f32 %v1961, %v2197
    %v2250 = vadd.f32 %v1964, %v2197
    %v2251 = vadd.f32 %v1967, %v2197
    %v2252 = vadd.f32 %v1970, %v2197
    %v2253 = vadd.f32 %v1973, %v2197
    %v2254 = vadd.f32 %v1976, %v2197
    %v2255 = vadd.f32 %v1979, %v2197
    %v2256 = vadd.f32 %v1982, %v2197
    %v2257 = vadd.f32 %v1985, %v2197
    %v2258 = vadd.f32 %v1988, %v2197
    %v2259 = vadd.f32 %v1991, %v2197
    %v2260 = vadd.f32 %v1994, %v2197
    %v2261 = vadd.f32 %v1997, %v2197
    %v2262 = vadd.f32 %v2000, %v2197
    %v2263 = vadd.f32 %v2003, %v2197
    %v2264 = vadd.f32 %v2006, %v2197
    %v2265 = vadd.f32 %v2009, %v2197
    %v2266 = vadd.f32 %v2012, %v2197
    %v2267 = vadd.f32 %v2015, %v2197
    %v2268 = vadd.f32 %v2018, %v2197
    %v2269 = vadd.f32 %v2021, %v2197
    %v2270 = vadd.f32 %v2024, %v2197
    %v2271 = vadd.f32 %v2027, %v2197
    %v2272 = vadd.f32 %v2030, %v2197
    %v2273 = vadd.f32 %v2033, %v2197
    %v2274 = vadd.f32 %v2036, %v2197
    %v2275 = vadd.f32 %v2039, %v2197
    %v2276 = vadd.f32 %v2042, %v2197
    %v2277 = vadd.f32 %v2045, %v2197
    %v2278 = vadd.f32 %v2048, %v2197
    %v2279 = vadd.f32 %v2051, %v2197
    %v2280 = vadd.f32 %v2054, %v2197
    %v2281 = vadd.f32 %v2057, %v2197
    %v2282 = vadd.f32 %v2060, %v2197
    %v2283 = vadd.f32 %v2063, %v2197
    %v2284 = vadd.f32 %v2066, %v2197
    %v2285 = vadd.f32 %v2069, %v2197
    %v2286 = vadd.f32 %v2072, %v2197
    %v2287 = vadd.f32 %v2075, %v2197
    %v2288 = vadd.f32 %v2078, %v2197
    %v2289 = vadd.f32 %v2081, %v2197
    %v2290 = vadd.f32 %v2084, %v2197
    %v2291 = vadd.f32 %v2087, %v2197
    %v2292 = vadd.f32 %v2090, %v2197
    %v2293 = vadd.f32 %v2093, %v2197
    %v2294 = vadd.f32 %v2096, %v2197
    %v2295 = vadd.f32 %v2099, %v2197
    %v2296 = vadd.f32 %v2102, %v2197
    %v2297 = vadd.f32 %v2105, %v2197
    %v2298 = vadd.f32 %v2108, %v2197
    %v2299 = vadd.f32 %v2111, %v2197
    %v2300 = vadd.f32 %v2114, %v2197
    %v2301 = vadd.f32 %v2117, %v2197
    %v2302 = vadd.f32 %v2120, %v2197
    %v2303 = vadd.f32 %v2123, %v2197
    %v2304 = vadd.f32 %v2126, %v2197
    %v2305 = vadd.f32 %v2129, %v2197
    %v2306 = vadd.f32 %v2132, %v2197
    %v2307 = vadd.f32 %v2135, %v2197
    %v2308 = vadd.f32 %v2138, %v2197
    %v2309 = vadd.f32 %v2141, %v2197
    %v2310 = vadd.f32 %v2144, %v2197
    %v2311 = vadd.f32 %v2147, %v2197
    %v2312 = vadd.f32 %v2150, %v2197
    %v2313 = vadd.f32 %v2153, %v2197
    %v2314 = vadd.f32 %v2156, %v2197
    %v2315 = vadd.f32 %v2159, %v2197
    %v2316 = vadd.f32 %v2162, %v2197
    %v2317 = vadd.f32 %v2165, %v2197
    %v2318 = vadd.f32 %v2168, %v2197
    %v2319 = vadd.f32 %v2171, %v2197
    %v2320 = vadd.f32 %v2174, %v2197
    %v2321 = vadd.f32 %v2177, %v2197
    %v2322 = vadd.f32 %v2180, %v2197
    %v2323 = vadd.f32 %v2183, %v2197
    %v2324 = vadd.f32 %v2186, %v2197
    %v2325 = vadd.f32 %v2189, %v2197
    %v2326 = vadd.f32 %v2192, %v2197
    %v2329 = vlaneseq
    %v2330 = vshrl.u32 %v2329, 7
    %2332 = vset.pattern.permute.xlu0 %v2330
    %2333 = vperm.xlu0 %2332, %v803
    %v2334 = vpop.permute.xlu0 %2333
    %v2335 = vlaneseq
    %v2336 = vshrl.u32 %v2335, 7
    %v2337 = vadd.s32 %v2336, 8
    %2338 = vset.pattern.permute.xlu0 %v2337
    %2339 = vperm.xlu0 %2338, %v803
    %v2340 = vpop.permute.xlu0 %2339
    %v2341 = vlaneseq
    %v2342 = vshrl.u32 %v2341, 7
    %v2343 = vadd.s32 %v2342, 16
    %2344 = vset.pattern.permute.xlu0 %v2343
    %2345 = vperm.xlu0 %2344, %v803
    %v2346 = vpop.permute.xlu0 %2345
    %v2347 = vlaneseq
    %v2348 = vshrl.u32 %v2347, 7
    %v2349 = vadd.s32 %v2348, 24
    %2350 = vset.pattern.permute.xlu0 %v2349
    %2351 = vperm.xlu0 %2350, %v803
    %v2352 = vpop.permute.xlu0 %2351
    %v2353 = vlaneseq
    %v2354 = vshrl.u32 %v2353, 7
    %v2355 = vadd.s32 %v2354, 32
    %2356 = vset.pattern.permute.xlu0 %v2355
    %2357 = vperm.xlu0 %2356, %v803
    %v2358 = vpop.permute.xlu0 %2357
    %v2359 = vlaneseq
    %v2360 = vshrl.u32 %v2359, 7
    %v2361 = vadd.s32 %v2360, 40
    %2362 = vset.pattern.permute.xlu0 %v2361
    %2363 = vperm.xlu0 %2362, %v803
    %v2364 = vpop.permute.xlu0 %2363
    %v2365 = vlaneseq
    %v2366 = vshrl.u32 %v2365, 7
    %v2367 = vadd.s32 %v2366, 48
    %2368 = vset.pattern.permute.xlu0 %v2367
    %2369 = vperm.xlu0 %2368, %v803
    %v2370 = vpop.permute.xlu0 %2369
    %v2371 = vlaneseq
    %v2372 = vshrl.u32 %v2371, 7
    %v2373 = vadd.s32 %v2372, 56
    %2374 = vset.pattern.permute.xlu0 %v2373
    %2375 = vperm.xlu0 %2374, %v803
    %v2376 = vpop.permute.xlu0 %2375
    %v2377 = vlaneseq
    %v2378 = vshrl.u32 %v2377, 7
    %v2379 = vadd.s32 %v2378, 64
    %2380 = vset.pattern.permute.xlu0 %v2379
    %2381 = vperm.xlu0 %2380, %v803
    %v2382 = vpop.permute.xlu0 %2381
    %v2383 = vlaneseq
    %v2384 = vshrl.u32 %v2383, 7
    %v2385 = vadd.s32 %v2384, 72
    %2386 = vset.pattern.permute.xlu0 %v2385
    %2387 = vperm.xlu0 %2386, %v803
    %v2388 = vpop.permute.xlu0 %2387
    %v2389 = vlaneseq
    %v2390 = vshrl.u32 %v2389, 7
    %v2391 = vadd.s32 %v2390, 80
    %2392 = vset.pattern.permute.xlu0 %v2391
    %2393 = vperm.xlu0 %2392, %v803
    %v2394 = vpop.permute.xlu0 %2393
    %v2395 = vlaneseq
    %v2396 = vshrl.u32 %v2395, 7
    %v2397 = vadd.s32 %v2396, 88
    %2398 = vset.pattern.permute.xlu0 %v2397
    %2399 = vperm.xlu0 %2398, %v803
    %v2400 = vpop.permute.xlu0 %2399
    %v2401 = vlaneseq
    %v2402 = vshrl.u32 %v2401, 7
    %v2403 = vadd.s32 %v2402, 96
    %2404 = vset.pattern.permute.xlu0 %v2403
    %2405 = vperm.xlu0 %2404, %v803
    %v2406 = vpop.permute.xlu0 %2405
    %v2407 = vlaneseq
    %v2408 = vshrl.u32 %v2407, 7
    %v2409 = vadd.s32 %v2408, 104
    %2410 = vset.pattern.permute.xlu0 %v2409
    %2411 = vperm.xlu0 %2410, %v803
    %v2412 = vpop.permute.xlu0 %2411
    %v2413 = vlaneseq
    %v2414 = vshrl.u32 %v2413, 7
    %v2415 = vadd.s32 %v2414, 112
    %2416 = vset.pattern.permute.xlu0 %v2415
    %2417 = vperm.xlu0 %2416, %v803
    %v2418 = vpop.permute.xlu0 %2417
    %v2419 = vlaneseq
    %v2420 = vshrl.u32 %v2419, 7
    %v2421 = vadd.s32 %v2420, 120
    %2422 = vset.pattern.permute.xlu0 %v2421
    %2423 = vperm.xlu0 %2422, %v803
    %v2424 = vpop.permute.xlu0 %2423
    %v2425 = vlaneseq
    %v2426 = vshrl.u32 %v2425, 7
    %2428 = vset.pattern.permute.xlu0 %v2426
    %2429 = vperm.xlu0 %2428, %v804
    %v2430 = vpop.permute.xlu0 %2429
    %v2431 = vlaneseq
    %v2432 = vshrl.u32 %v2431, 7
    %v2433 = vadd.s32 %v2432, 8
    %2434 = vset.pattern.permute.xlu0 %v2433
    %2435 = vperm.xlu0 %2434, %v804
    %v2436 = vpop.permute.xlu0 %2435
    %v2437 = vlaneseq
    %v2438 = vshrl.u32 %v2437, 7
    %v2439 = vadd.s32 %v2438, 16
    %2440 = vset.pattern.permute.xlu0 %v2439
    %2441 = vperm.xlu0 %2440, %v804
    %v2442 = vpop.permute.xlu0 %2441
    %v2443 = vlaneseq
    %v2444 = vshrl.u32 %v2443, 7
    %v2445 = vadd.s32 %v2444, 24
    %2446 = vset.pattern.permute.xlu0 %v2445
    %2447 = vperm.xlu0 %2446, %v804
    %v2448 = vpop.permute.xlu0 %2447
    %v2449 = vlaneseq
    %v2450 = vshrl.u32 %v2449, 7
    %v2451 = vadd.s32 %v2450, 32
    %2452 = vset.pattern.permute.xlu0 %v2451
    %2453 = vperm.xlu0 %2452, %v804
    %v2454 = vpop.permute.xlu0 %2453
    %v2455 = vlaneseq
    %v2456 = vshrl.u32 %v2455, 7
    %v2457 = vadd.s32 %v2456, 40
    %2458 = vset.pattern.permute.xlu0 %v2457
    %2459 = vperm.xlu0 %2458, %v804
    %v2460 = vpop.permute.xlu0 %2459
    %v2461 = vlaneseq
    %v2462 = vshrl.u32 %v2461, 7
    %v2463 = vadd.s32 %v2462, 48
    %2464 = vset.pattern.permute.xlu0 %v2463
    %2465 = vperm.xlu0 %2464, %v804
    %v2466 = vpop.permute.xlu0 %2465
    %v2467 = vlaneseq
    %v2468 = vshrl.u32 %v2467, 7
    %v2469 = vadd.s32 %v2468, 56
    %2470 = vset.pattern.permute.xlu0 %v2469
    %2471 = vperm.xlu0 %2470, %v804
    %v2472 = vpop.permute.xlu0 %2471
    %v2473 = vlaneseq
    %v2474 = vshrl.u32 %v2473, 7
    %v2475 = vadd.s32 %v2474, 64
    %2476 = vset.pattern.permute.xlu0 %v2475
    %2477 = vperm.xlu0 %2476, %v804
    %v2478 = vpop.permute.xlu0 %2477
    %v2479 = vlaneseq
    %v2480 = vshrl.u32 %v2479, 7
    %v2481 = vadd.s32 %v2480, 72
    %2482 = vset.pattern.permute.xlu0 %v2481
    %2483 = vperm.xlu0 %2482, %v804
    %v2484 = vpop.permute.xlu0 %2483
    %v2485 = vlaneseq
    %v2486 = vshrl.u32 %v2485, 7
    %v2487 = vadd.s32 %v2486, 80
    %2488 = vset.pattern.permute.xlu0 %v2487
    %2489 = vperm.xlu0 %2488, %v804
    %v2490 = vpop.permute.xlu0 %2489
    %v2491 = vlaneseq
    %v2492 = vshrl.u32 %v2491, 7
    %v2493 = vadd.s32 %v2492, 88
    %2494 = vset.pattern.permute.xlu0 %v2493
    %2495 = vperm.xlu0 %2494, %v804
    %v2496 = vpop.permute.xlu0 %2495
    %v2497 = vlaneseq
    %v2498 = vshrl.u32 %v2497, 7
    %v2499 = vadd.s32 %v2498, 96
    %2500 = vset.pattern.permute.xlu0 %v2499
    %2501 = vperm.xlu0 %2500, %v804
    %v2502 = vpop.permute.xlu0 %2501
    %v2503 = vlaneseq
    %v2504 = vshrl.u32 %v2503, 7
    %v2505 = vadd.s32 %v2504, 104
    %2506 = vset.pattern.permute.xlu0 %v2505
    %2507 = vperm.xlu0 %2506, %v804
    %v2508 = vpop.permute.xlu0 %2507
    %v2509 = vlaneseq
    %v2510 = vshrl.u32 %v2509, 7
    %v2511 = vadd.s32 %v2510, 112
    %2512 = vset.pattern.permute.xlu0 %v2511
    %2513 = vperm.xlu0 %2512, %v804
    %v2514 = vpop.permute.xlu0 %2513
    %v2515 = vlaneseq
    %v2516 = vshrl.u32 %v2515, 7
    %v2517 = vadd.s32 %v2516, 120
    %2518 = vset.pattern.permute.xlu0 %v2517
    %2519 = vperm.xlu0 %2518, %v804
    %v2520 = vpop.permute.xlu0 %2519
    %v2553 = vadd.f32 %v2199, %v2334
    %v2554 = vadd.f32 %v2200, %v2340
    %v2555 = vadd.f32 %v2201, %v2346
    %v2556 = vadd.f32 %v2202, %v2352
    %v2557 = vadd.f32 %v2203, %v2358
    %v2558 = vadd.f32 %v2204, %v2364
    %v2559 = vadd.f32 %v2205, %v2370
    %v2560 = vadd.f32 %v2206, %v2376
    %v2561 = vadd.f32 %v2207, %v2382
    %v2562 = vadd.f32 %v2208, %v2388
    %v2563 = vadd.f32 %v2209, %v2394
    %v2564 = vadd.f32 %v2210, %v2400
    %v2565 = vadd.f32 %v2211, %v2406
    %v2566 = vadd.f32 %v2212, %v2412
    %v2567 = vadd.f32 %v2213, %v2418
    %v2568 = vadd.f32 %v2214, %v2424
    %v2569 = vadd.f32 %v2215, %v2430
    %v2570 = vadd.f32 %v2216, %v2436
    %v2571 = vadd.f32 %v2217, %v2442
    %v2572 = vadd.f32 %v2218, %v2448
    %v2573 = vadd.f32 %v2219, %v2454
    %v2574 = vadd.f32 %v2220, %v2460
    %v2575 = vadd.f32 %v2221, %v2466
    %v2576 = vadd.f32 %v2222, %v2472
    %v2577 = vadd.f32 %v2223, %v2478
    %v2578 = vadd.f32 %v2224, %v2484
    %v2579 = vadd.f32 %v2225, %v2490
    %v2580 = vadd.f32 %v2226, %v2496
    %v2581 = vadd.f32 %v2227, %v2502
    %v2582 = vadd.f32 %v2228, %v2508
    %v2583 = vadd.f32 %v2229, %v2514
    %v2584 = vadd.f32 %v2230, %v2520
    %v2585 = vadd.f32 %v2231, %v2334
    %v2586 = vadd.f32 %v2232, %v2340
    %v2587 = vadd.f32 %v2233, %v2346
    %v2588 = vadd.f32 %v2234, %v2352
    %v2589 = vadd.f32 %v2235, %v2358
    %v2590 = vadd.f32 %v2236, %v2364
    %v2591 = vadd.f32 %v2237, %v2370
    %v2592 = vadd.f32 %v2238, %v2376
    %v2593 = vadd.f32 %v2239, %v2382
    %v2594 = vadd.f32 %v2240, %v2388
    %v2595 = vadd.f32 %v2241, %v2394
    %v2596 = vadd.f32 %v2242, %v2400
    %v2597 = vadd.f32 %v2243, %v2406
    %v2598 = vadd.f32 %v2244, %v2412
    %v2599 = vadd.f32 %v2245, %v2418
    %v2600 = vadd.f32 %v2246, %v2424
    %v2601 = vadd.f32 %v2247, %v2430
    %v2602 = vadd.f32 %v2248, %v2436
    %v2603 = vadd.f32 %v2249, %v2442
    %v2604 = vadd.f32 %v2250, %v2448
    %v2605 = vadd.f32 %v2251, %v2454
    %v2606 = vadd.f32 %v2252, %v2460
    %v2607 = vadd.f32 %v2253, %v2466
    %v2608 = vadd.f32 %v2254, %v2472
    %v2609 = vadd.f32 %v2255, %v2478
    %v2610 = vadd.f32 %v2256, %v2484
    %v2611 = vadd.f32 %v2257, %v2490
    %v2612 = vadd.f32 %v2258, %v2496
    %v2613 = vadd.f32 %v2259, %v2502
    %v2614 = vadd.f32 %v2260, %v2508
    %v2615 = vadd.f32 %v2261, %v2514
    %v2616 = vadd.f32 %v2262, %v2520
    %v2617 = vadd.f32 %v2263, %v2334
    %v2618 = vadd.f32 %v2264, %v2340
    %v2619 = vadd.f32 %v2265, %v2346
    %v2620 = vadd.f32 %v2266, %v2352
    %v2621 = vadd.f32 %v2267, %v2358
    %v2622 = vadd.f32 %v2268, %v2364
    %v2623 = vadd.f32 %v2269, %v2370
    %v2624 = vadd.f32 %v2270, %v2376
    %v2625 = vadd.f32 %v2271, %v2382
    %v2626 = vadd.f32 %v2272, %v2388
    %v2627 = vadd.f32 %v2273, %v2394
    %v2628 = vadd.f32 %v2274, %v2400
    %v2629 = vadd.f32 %v2275, %v2406
    %v2630 = vadd.f32 %v2276, %v2412
    %v2631 = vadd.f32 %v2277, %v2418
    %v2632 = vadd.f32 %v2278, %v2424
    %v2633 = vadd.f32 %v2279, %v2430
    %v2634 = vadd.f32 %v2280, %v2436
    %v2635 = vadd.f32 %v2281, %v2442
    %v2636 = vadd.f32 %v2282, %v2448
    %v2637 = vadd.f32 %v2283, %v2454
    %v2638 = vadd.f32 %v2284, %v2460
    %v2639 = vadd.f32 %v2285, %v2466
    %v2640 = vadd.f32 %v2286, %v2472
    %v2641 = vadd.f32 %v2287, %v2478
    %v2642 = vadd.f32 %v2288, %v2484
    %v2643 = vadd.f32 %v2289, %v2490
    %v2644 = vadd.f32 %v2290, %v2496
    %v2645 = vadd.f32 %v2291, %v2502
    %v2646 = vadd.f32 %v2292, %v2508
    %v2647 = vadd.f32 %v2293, %v2514
    %v2648 = vadd.f32 %v2294, %v2520
    %v2649 = vadd.f32 %v2295, %v2334
    %v2650 = vadd.f32 %v2296, %v2340
    %v2651 = vadd.f32 %v2297, %v2346
    %v2652 = vadd.f32 %v2298, %v2352
    %v2653 = vadd.f32 %v2299, %v2358
    %v2654 = vadd.f32 %v2300, %v2364
    %v2655 = vadd.f32 %v2301, %v2370
    %v2656 = vadd.f32 %v2302, %v2376
    %v2657 = vadd.f32 %v2303, %v2382
    %v2658 = vadd.f32 %v2304, %v2388
    %v2659 = vadd.f32 %v2305, %v2394
    %v2660 = vadd.f32 %v2306, %v2400
    %v2661 = vadd.f32 %v2307, %v2406
    %v2662 = vadd.f32 %v2308, %v2412
    %v2663 = vadd.f32 %v2309, %v2418
    %v2664 = vadd.f32 %v2310, %v2424
    %v2665 = vadd.f32 %v2311, %v2430
    %v2666 = vadd.f32 %v2312, %v2436
    %v2667 = vadd.f32 %v2313, %v2442
    %v2668 = vadd.f32 %v2314, %v2448
    %v2669 = vadd.f32 %v2315, %v2454
    %v2670 = vadd.f32 %v2316, %v2460
    %v2671 = vadd.f32 %v2317, %v2466
    %v2672 = vadd.f32 %v2318, %v2472
    %v2673 = vadd.f32 %v2319, %v2478
    %v2674 = vadd.f32 %v2320, %v2484
    %v2675 = vadd.f32 %v2321, %v2490
    %v2676 = vadd.f32 %v2322, %v2496
    %v2677 = vadd.f32 %v2323, %v2502
    %v2678 = vadd.f32 %v2324, %v2508
    %v2679 = vadd.f32 %v2325, %v2514
    %v2680 = vadd.f32 %v2326, %v2520
    %2809 = vset.pattern.permute.xlu0 0
    %2810 = vperm.xlu0 %2809, %v2553
    %v2811 = vpop.permute.xlu0 %2810
    %2812 = vset.pattern.permute.xlu0 0
    %2813 = vperm.xlu0 %2812, %v2554
    %v2814 = vpop.permute.xlu0 %2813
    %2815 = vset.pattern.permute.xlu0 0
    %2816 = vperm.xlu0 %2815, %v2555
    %v2817 = vpop.permute.xlu0 %2816
    %2818 = vset.pattern.permute.xlu0 0
    %2819 = vperm.xlu0 %2818, %v2556
    %v2820 = vpop.permute.xlu0 %2819
    %2821 = vset.pattern.permute.xlu0 0
    %2822 = vperm.xlu0 %2821, %v2557
    %v2823 = vpop.permute.xlu0 %2822
    %2824 = vset.pattern.permute.xlu0 0
    %2825 = vperm.xlu0 %2824, %v2558
    %v2826 = vpop.permute.xlu0 %2825
    %2827 = vset.pattern.permute.xlu0 0
    %2828 = vperm.xlu0 %2827, %v2559
    %v2829 = vpop.permute.xlu0 %2828
    %2830 = vset.pattern.permute.xlu0 0
    %2831 = vperm.xlu0 %2830, %v2560
    %v2832 = vpop.permute.xlu0 %2831
    %2833 = vset.pattern.permute.xlu0 0
    %2834 = vperm.xlu0 %2833, %v2561
    %v2835 = vpop.permute.xlu0 %2834
    %2836 = vset.pattern.permute.xlu0 0
    %2837 = vperm.xlu0 %2836, %v2562
    %v2838 = vpop.permute.xlu0 %2837
    %2839 = vset.pattern.permute.xlu0 0
    %2840 = vperm.xlu0 %2839, %v2563
    %v2841 = vpop.permute.xlu0 %2840
    %2842 = vset.pattern.permute.xlu0 0
    %2843 = vperm.xlu0 %2842, %v2564
    %v2844 = vpop.permute.xlu0 %2843
    %2845 = vset.pattern.permute.xlu0 0
    %2846 = vperm.xlu0 %2845, %v2565
    %v2847 = vpop.permute.xlu0 %2846
    %2848 = vset.pattern.permute.xlu0 0
    %2849 = vperm.xlu0 %2848, %v2566
    %v2850 = vpop.permute.xlu0 %2849
    %2851 = vset.pattern.permute.xlu0 0
    %2852 = vperm.xlu0 %2851, %v2567
    %v2853 = vpop.permute.xlu0 %2852
    %2854 = vset.pattern.permute.xlu0 0
    %2855 = vperm.xlu0 %2854, %v2568
    %v2856 = vpop.permute.xlu0 %2855
    %2857 = vset.pattern.permute.xlu0 0
    %2858 = vperm.xlu0 %2857, %v2569
    %v2859 = vpop.permute.xlu0 %2858
    %2860 = vset.pattern.permute.xlu0 0
    %2861 = vperm.xlu0 %2860, %v2570
    %v2862 = vpop.permute.xlu0 %2861
    %2863 = vset.pattern.permute.xlu0 0
    %2864 = vperm.xlu0 %2863, %v2571
    %v2865 = vpop.permute.xlu0 %2864
    %2866 = vset.pattern.permute.xlu0 0
    %2867 = vperm.xlu0 %2866, %v2572
    %v2868 = vpop.permute.xlu0 %2867
    %2869 = vset.pattern.permute.xlu0 0
    %2870 = vperm.xlu0 %2869, %v2573
    %v2871 = vpop.permute.xlu0 %2870
    %2872 = vset.pattern.permute.xlu0 0
    %2873 = vperm.xlu0 %2872, %v2574
    %v2874 = vpop.permute.xlu0 %2873
    %2875 = vset.pattern.permute.xlu0 0
    %2876 = vperm.xlu0 %2875, %v2575
    %v2877 = vpop.permute.xlu0 %2876
    %2878 = vset.pattern.permute.xlu0 0
    %2879 = vperm.xlu0 %2878, %v2576
    %v2880 = vpop.permute.xlu0 %2879
    %2881 = vset.pattern.permute.xlu0 0
    %2882 = vperm.xlu0 %2881, %v2577
    %v2883 = vpop.permute.xlu0 %2882
    %2884 = vset.pattern.permute.xlu0 0
    %2885 = vperm.xlu0 %2884, %v2578
    %v2886 = vpop.permute.xlu0 %2885
    %2887 = vset.pattern.permute.xlu0 0
    %2888 = vperm.xlu0 %2887, %v2579
    %v2889 = vpop.permute.xlu0 %2888
    %2890 = vset.pattern.permute.xlu0 0
    %2891 = vperm.xlu0 %2890, %v2580
    %v2892 = vpop.permute.xlu0 %2891
    %2893 = vset.pattern.permute.xlu0 0
    %2894 = vperm.xlu0 %2893, %v2581
    %v2895 = vpop.permute.xlu0 %2894
    %2896 = vset.pattern.permute.xlu0 0
    %2897 = vperm.xlu0 %2896, %v2582
    %v2898 = vpop.permute.xlu0 %2897
    %2899 = vset.pattern.permute.xlu0 0
    %2900 = vperm.xlu0 %2899, %v2583
    %v2901 = vpop.permute.xlu0 %2900
    %2902 = vset.pattern.permute.xlu0 0
    %2903 = vperm.xlu0 %2902, %v2584
    %v2904 = vpop.permute.xlu0 %2903
    %2905 = vset.pattern.permute.xlu0 0
    %2906 = vperm.xlu0 %2905, %v2585
    %v2907 = vpop.permute.xlu0 %2906
    %2908 = vset.pattern.permute.xlu0 0
    %2909 = vperm.xlu0 %2908, %v2586
    %v2910 = vpop.permute.xlu0 %2909
    %2911 = vset.pattern.permute.xlu0 0
    %2912 = vperm.xlu0 %2911, %v2587
    %v2913 = vpop.permute.xlu0 %2912
    %2914 = vset.pattern.permute.xlu0 0
    %2915 = vperm.xlu0 %2914, %v2588
    %v2916 = vpop.permute.xlu0 %2915
    %2917 = vset.pattern.permute.xlu0 0
    %2918 = vperm.xlu0 %2917, %v2589
    %v2919 = vpop.permute.xlu0 %2918
    %2920 = vset.pattern.permute.xlu0 0
    %2921 = vperm.xlu0 %2920, %v2590
    %v2922 = vpop.permute.xlu0 %2921
    %2923 = vset.pattern.permute.xlu0 0
    %2924 = vperm.xlu0 %2923, %v2591
    %v2925 = vpop.permute.xlu0 %2924
    %2926 = vset.pattern.permute.xlu0 0
    %2927 = vperm.xlu0 %2926, %v2592
    %v2928 = vpop.permute.xlu0 %2927
    %2929 = vset.pattern.permute.xlu0 0
    %2930 = vperm.xlu0 %2929, %v2593
    %v2931 = vpop.permute.xlu0 %2930
    %2932 = vset.pattern.permute.xlu0 0
    %2933 = vperm.xlu0 %2932, %v2594
    %v2934 = vpop.permute.xlu0 %2933
    %2935 = vset.pattern.permute.xlu0 0
    %2936 = vperm.xlu0 %2935, %v2595
    %v2937 = vpop.permute.xlu0 %2936
    %2938 = vset.pattern.permute.xlu0 0
    %2939 = vperm.xlu0 %2938, %v2596
    %v2940 = vpop.permute.xlu0 %2939
    %2941 = vset.pattern.permute.xlu0 0
    %2942 = vperm.xlu0 %2941, %v2597
    %v2943 = vpop.permute.xlu0 %2942
    %2944 = vset.pattern.permute.xlu0 0
    %2945 = vperm.xlu0 %2944, %v2598
    %v2946 = vpop.permute.xlu0 %2945
    %2947 = vset.pattern.permute.xlu0 0
    %2948 = vperm.xlu0 %2947, %v2599
    %v2949 = vpop.permute.xlu0 %2948
    %2950 = vset.pattern.permute.xlu0 0
    %2951 = vperm.xlu0 %2950, %v2600
    %v2952 = vpop.permute.xlu0 %2951
    %2953 = vset.pattern.permute.xlu0 0
    %2954 = vperm.xlu0 %2953, %v2601
    %v2955 = vpop.permute.xlu0 %2954
    %2956 = vset.pattern.permute.xlu0 0
    %2957 = vperm.xlu0 %2956, %v2602
    %v2958 = vpop.permute.xlu0 %2957
    %2959 = vset.pattern.permute.xlu0 0
    %2960 = vperm.xlu0 %2959, %v2603
    %v2961 = vpop.permute.xlu0 %2960
    %2962 = vset.pattern.permute.xlu0 0
    %2963 = vperm.xlu0 %2962, %v2604
    %v2964 = vpop.permute.xlu0 %2963
    %2965 = vset.pattern.permute.xlu0 0
    %2966 = vperm.xlu0 %2965, %v2605
    %v2967 = vpop.permute.xlu0 %2966
    %2968 = vset.pattern.permute.xlu0 0
    %2969 = vperm.xlu0 %2968, %v2606
    %v2970 = vpop.permute.xlu0 %2969
    %2971 = vset.pattern.permute.xlu0 0
    %2972 = vperm.xlu0 %2971, %v2607
    %v2973 = vpop.permute.xlu0 %2972
    %2974 = vset.pattern.permute.xlu0 0
    %2975 = vperm.xlu0 %2974, %v2608
    %v2976 = vpop.permute.xlu0 %2975
    %2977 = vset.pattern.permute.xlu0 0
    %2978 = vperm.xlu0 %2977, %v2609
    %v2979 = vpop.permute.xlu0 %2978
    %2980 = vset.pattern.permute.xlu0 0
    %2981 = vperm.xlu0 %2980, %v2610
    %v2982 = vpop.permute.xlu0 %2981
    %2983 = vset.pattern.permute.xlu0 0
    %2984 = vperm.xlu0 %2983, %v2611
    %v2985 = vpop.permute.xlu0 %2984
    %2986 = vset.pattern.permute.xlu0 0
    %2987 = vperm.xlu0 %2986, %v2612
    %v2988 = vpop.permute.xlu0 %2987
    %2989 = vset.pattern.permute.xlu0 0
    %2990 = vperm.xlu0 %2989, %v2613
    %v2991 = vpop.permute.xlu0 %2990
    %2992 = vset.pattern.permute.xlu0 0
    %2993 = vperm.xlu0 %2992, %v2614
    %v2994 = vpop.permute.xlu0 %2993
    %2995 = vset.pattern.permute.xlu0 0
    %2996 = vperm.xlu0 %2995, %v2615
    %v2997 = vpop.permute.xlu0 %2996
    %2998 = vset.pattern.permute.xlu0 0
    %2999 = vperm.xlu0 %2998, %v2616
    %v3000 = vpop.permute.xlu0 %2999
    %3001 = vset.pattern.permute.xlu0 0
    %3002 = vperm.xlu0 %3001, %v2617
    %v3003 = vpop.permute.xlu0 %3002
    %3004 = vset.pattern.permute.xlu0 0
    %3005 = vperm.xlu0 %3004, %v2618
    %v3006 = vpop.permute.xlu0 %3005
    %3007 = vset.pattern.permute.xlu0 0
    %3008 = vperm.xlu0 %3007, %v2619
    %v3009 = vpop.permute.xlu0 %3008
    %3010 = vset.pattern.permute.xlu0 0
    %3011 = vperm.xlu0 %3010, %v2620
    %v3012 = vpop.permute.xlu0 %3011
    %3013 = vset.pattern.permute.xlu0 0
    %3014 = vperm.xlu0 %3013, %v2621
    %v3015 = vpop.permute.xlu0 %3014
    %3016 = vset.pattern.permute.xlu0 0
    %3017 = vperm.xlu0 %3016, %v2622
    %v3018 = vpop.permute.xlu0 %3017
    %3019 = vset.pattern.permute.xlu0 0
    %3020 = vperm.xlu0 %3019, %v2623
    %v3021 = vpop.permute.xlu0 %3020
    %3022 = vset.pattern.permute.xlu0 0
    %3023 = vperm.xlu0 %3022, %v2624
    %v3024 = vpop.permute.xlu0 %3023
    %3025 = vset.pattern.permute.xlu0 0
    %3026 = vperm.xlu0 %3025, %v2625
    %v3027 = vpop.permute.xlu0 %3026
    %3028 = vset.pattern.permute.xlu0 0
    %3029 = vperm.xlu0 %3028, %v2626
    %v3030 = vpop.permute.xlu0 %3029
    %3031 = vset.pattern.permute.xlu0 0
    %3032 = vperm.xlu0 %3031, %v2627
    %v3033 = vpop.permute.xlu0 %3032
    %3034 = vset.pattern.permute.xlu0 0
    %3035 = vperm.xlu0 %3034, %v2628
    %v3036 = vpop.permute.xlu0 %3035
    %3037 = vset.pattern.permute.xlu0 0
    %3038 = vperm.xlu0 %3037, %v2629
    %v3039 = vpop.permute.xlu0 %3038
    %3040 = vset.pattern.permute.xlu0 0
    %3041 = vperm.xlu0 %3040, %v2630
    %v3042 = vpop.permute.xlu0 %3041
    %3043 = vset.pattern.permute.xlu0 0
    %3044 = vperm.xlu0 %3043, %v2631
    %v3045 = vpop.permute.xlu0 %3044
    %3046 = vset.pattern.permute.xlu0 0
    %3047 = vperm.xlu0 %3046, %v2632
    %v3048 = vpop.permute.xlu0 %3047
    %3049 = vset.pattern.permute.xlu0 0
    %3050 = vperm.xlu0 %3049, %v2633
    %v3051 = vpop.permute.xlu0 %3050
    %3052 = vset.pattern.permute.xlu0 0
    %3053 = vperm.xlu0 %3052, %v2634
    %v3054 = vpop.permute.xlu0 %3053
    %3055 = vset.pattern.permute.xlu0 0
    %3056 = vperm.xlu0 %3055, %v2635
    %v3057 = vpop.permute.xlu0 %3056
    %3058 = vset.pattern.permute.xlu0 0
    %3059 = vperm.xlu0 %3058, %v2636
    %v3060 = vpop.permute.xlu0 %3059
    %3061 = vset.pattern.permute.xlu0 0
    %3062 = vperm.xlu0 %3061, %v2637
    %v3063 = vpop.permute.xlu0 %3062
    %3064 = vset.pattern.permute.xlu0 0
    %3065 = vperm.xlu0 %3064, %v2638
    %v3066 = vpop.permute.xlu0 %3065
    %3067 = vset.pattern.permute.xlu0 0
    %3068 = vperm.xlu0 %3067, %v2639
    %v3069 = vpop.permute.xlu0 %3068
    %3070 = vset.pattern.permute.xlu0 0
    %3071 = vperm.xlu0 %3070, %v2640
    %v3072 = vpop.permute.xlu0 %3071
    %3073 = vset.pattern.permute.xlu0 0
    %3074 = vperm.xlu0 %3073, %v2641
    %v3075 = vpop.permute.xlu0 %3074
    %3076 = vset.pattern.permute.xlu0 0
    %3077 = vperm.xlu0 %3076, %v2642
    %v3078 = vpop.permute.xlu0 %3077
    %3079 = vset.pattern.permute.xlu0 0
    %3080 = vperm.xlu0 %3079, %v2643
    %v3081 = vpop.permute.xlu0 %3080
    %3082 = vset.pattern.permute.xlu0 0
    %3083 = vperm.xlu0 %3082, %v2644
    %v3084 = vpop.permute.xlu0 %3083
    %3085 = vset.pattern.permute.xlu0 0
    %3086 = vperm.xlu0 %3085, %v2645
    %v3087 = vpop.permute.xlu0 %3086
    %3088 = vset.pattern.permute.xlu0 0
    %3089 = vperm.xlu0 %3088, %v2646
    %v3090 = vpop.permute.xlu0 %3089
    %3091 = vset.pattern.permute.xlu0 0
    %3092 = vperm.xlu0 %3091, %v2647
    %v3093 = vpop.permute.xlu0 %3092
    %3094 = vset.pattern.permute.xlu0 0
    %3095 = vperm.xlu0 %3094, %v2648
    %v3096 = vpop.permute.xlu0 %3095
    %3097 = vset.pattern.permute.xlu0 0
    %3098 = vperm.xlu0 %3097, %v2649
    %v3099 = vpop.permute.xlu0 %3098
    %3100 = vset.pattern.permute.xlu0 0
    %3101 = vperm.xlu0 %3100, %v2650
    %v3102 = vpop.permute.xlu0 %3101
    %3103 = vset.pattern.permute.xlu0 0
    %3104 = vperm.xlu0 %3103, %v2651
    %v3105 = vpop.permute.xlu0 %3104
    %3106 = vset.pattern.permute.xlu0 0
    %3107 = vperm.xlu0 %3106, %v2652
    %v3108 = vpop.permute.xlu0 %3107
    %3109 = vset.pattern.permute.xlu0 0
    %3110 = vperm.xlu0 %3109, %v2653
    %v3111 = vpop.permute.xlu0 %3110
    %3112 = vset.pattern.permute.xlu0 0
    %3113 = vperm.xlu0 %3112, %v2654
    %v3114 = vpop.permute.xlu0 %3113
    %3115 = vset.pattern.permute.xlu0 0
    %3116 = vperm.xlu0 %3115, %v2655
    %v3117 = vpop.permute.xlu0 %3116
    %3118 = vset.pattern.permute.xlu0 0
    %3119 = vperm.xlu0 %3118, %v2656
    %v3120 = vpop.permute.xlu0 %3119
    %3121 = vset.pattern.permute.xlu0 0
    %3122 = vperm.xlu0 %3121, %v2657
    %v3123 = vpop.permute.xlu0 %3122
    %3124 = vset.pattern.permute.xlu0 0
    %3125 = vperm.xlu0 %3124, %v2658
    %v3126 = vpop.permute.xlu0 %3125
    %3127 = vset.pattern.permute.xlu0 0
    %3128 = vperm.xlu0 %3127, %v2659
    %v3129 = vpop.permute.xlu0 %3128
    %3130 = vset.pattern.permute.xlu0 0
    %3131 = vperm.xlu0 %3130, %v2660
    %v3132 = vpop.permute.xlu0 %3131
    %3133 = vset.pattern.permute.xlu0 0
    %3134 = vperm.xlu0 %3133, %v2661
    %v3135 = vpop.permute.xlu0 %3134
    %3136 = vset.pattern.permute.xlu0 0
    %3137 = vperm.xlu0 %3136, %v2662
    %v3138 = vpop.permute.xlu0 %3137
    %3139 = vset.pattern.permute.xlu0 0
    %3140 = vperm.xlu0 %3139, %v2663
    %v3141 = vpop.permute.xlu0 %3140
    %3142 = vset.pattern.permute.xlu0 0
    %3143 = vperm.xlu0 %3142, %v2664
    %v3144 = vpop.permute.xlu0 %3143
    %3145 = vset.pattern.permute.xlu0 0
    %3146 = vperm.xlu0 %3145, %v2665
    %v3147 = vpop.permute.xlu0 %3146
    %3148 = vset.pattern.permute.xlu0 0
    %3149 = vperm.xlu0 %3148, %v2666
    %v3150 = vpop.permute.xlu0 %3149
    %3151 = vset.pattern.permute.xlu0 0
    %3152 = vperm.xlu0 %3151, %v2667
    %v3153 = vpop.permute.xlu0 %3152
    %3154 = vset.pattern.permute.xlu0 0
    %3155 = vperm.xlu0 %3154, %v2668
    %v3156 = vpop.permute.xlu0 %3155
    %3157 = vset.pattern.permute.xlu0 0
    %3158 = vperm.xlu0 %3157, %v2669
    %v3159 = vpop.permute.xlu0 %3158
    %3160 = vset.pattern.permute.xlu0 0
    %3161 = vperm.xlu0 %3160, %v2670
    %v3162 = vpop.permute.xlu0 %3161
    %3163 = vset.pattern.permute.xlu0 0
    %3164 = vperm.xlu0 %3163, %v2671
    %v3165 = vpop.permute.xlu0 %3164
    %3166 = vset.pattern.permute.xlu0 0
    %3167 = vperm.xlu0 %3166, %v2672
    %v3168 = vpop.permute.xlu0 %3167
    %3169 = vset.pattern.permute.xlu0 0
    %3170 = vperm.xlu0 %3169, %v2673
    %v3171 = vpop.permute.xlu0 %3170
    %3172 = vset.pattern.permute.xlu0 0
    %3173 = vperm.xlu0 %3172, %v2674
    %v3174 = vpop.permute.xlu0 %3173
    %3175 = vset.pattern.permute.xlu0 0
    %3176 = vperm.xlu0 %3175, %v2675
    %v3177 = vpop.permute.xlu0 %3176
    %3178 = vset.pattern.permute.xlu0 0
    %3179 = vperm.xlu0 %3178, %v2676
    %v3180 = vpop.permute.xlu0 %3179
    %3181 = vset.pattern.permute.xlu0 0
    %3182 = vperm.xlu0 %3181, %v2677
    %v3183 = vpop.permute.xlu0 %3182
    %3184 = vset.pattern.permute.xlu0 0
    %3185 = vperm.xlu0 %3184, %v2678
    %v3186 = vpop.permute.xlu0 %3185
    %3187 = vset.pattern.permute.xlu0 0
    %3188 = vperm.xlu0 %3187, %v2679
    %v3189 = vpop.permute.xlu0 %3188
    %3190 = vset.pattern.permute.xlu0 0
    %3191 = vperm.xlu0 %3190, %v2680
    %v3192 = vpop.permute.xlu0 %3191
    %v3193 = vperm.slane %v2811, %v799
    %v3194 = vadd.s32 %v799, 4294967288
    %v3195 = vperm.slane %v2814, %v3194
    %vm3196 = vcmask 130112
    %v3197 = vsel %vm3196, %v3195, %v3193
    %v3198 = vadd.s32 %v799, 4294967280
    %v3199 = vperm.slane %v2817, %v3198
    %vm3200 = vcmask 195712
    %v3201 = vsel %vm3200, %v3199, %v3197
    %v3202 = vadd.s32 %v799, 4294967272
    %v3203 = vperm.slane %v2820, %v3202
    %vm3204 = vcmask 261312
    %v3205 = vsel %vm3204, %v3203, %v3201
    %v3206 = vadd.s32 %v799, 4294967264
    %v3207 = vperm.slane %v2823, %v3206
    %vm3208 = vcmask 326912
    %v3209 = vsel %vm3208, %v3207, %v3205
    %v3210 = vadd.s32 %v799, 4294967256
    %v3211 = vperm.slane %v2826, %v3210
    %vm3212 = vcmask 392512
    %v3213 = vsel %vm3212, %v3211, %v3209
    %v3214 = vadd.s32 %v799, 4294967248
    %v3215 = vperm.slane %v2829, %v3214
    %vm3216 = vcmask 458112
    %v3217 = vsel %vm3216, %v3215, %v3213
    %v3218 = vadd.s32 %v799, 4294967240
    %v3219 = vperm.slane %v2832, %v3218
    %vm3220 = vcmask 523712
    %v3221 = vsel %vm3220, %v3219, %v3217
    %v3222 = vadd.s32 %v799, 4294967232
    %v3223 = vperm.slane %v2835, %v3222
    %vm3224 = vcmask 589312
    %v3225 = vsel %vm3224, %v3223, %v3221
    %v3226 = vadd.s32 %v799, 4294967224
    %v3227 = vperm.slane %v2838, %v3226
    %vm3228 = vcmask 654912
    %v3229 = vsel %vm3228, %v3227, %v3225
    %v3230 = vadd.s32 %v799, 4294967216
    %v3231 = vperm.slane %v2841, %v3230
    %vm3232 = vcmask 720512
    %v3233 = vsel %vm3232, %v3231, %v3229
    %v3234 = vadd.s32 %v799, 4294967208
    %v3235 = vperm.slane %v2844, %v3234
    %vm3236 = vcmask 786112
    %v3237 = vsel %vm3236, %v3235, %v3233
    %v3238 = vadd.s32 %v799, 4294967200
    %v3239 = vperm.slane %v2847, %v3238
    %vm3240 = vcmask 851712
    %v3241 = vsel %vm3240, %v3239, %v3237
    %v3242 = vadd.s32 %v799, 4294967192
    %v3243 = vperm.slane %v2850, %v3242
    %vm3244 = vcmask 917312
    %v3245 = vsel %vm3244, %v3243, %v3241
    %v3246 = vadd.s32 %v799, 4294967184
    %v3247 = vperm.slane %v2853, %v3246
    %vm3248 = vcmask 982912
    %v3249 = vsel %vm3248, %v3247, %v3245
    %v3250 = vadd.s32 %v799, 4294967176
    %v3251 = vperm.slane %v2856, %v3250
    %vm3252 = vcmask 1048512
    %v3253 = vsel %vm3252, %v3251, %v3249
    %v3254 = vperm.slane %v2859, %v799
    %v3255 = vperm.slane %v2862, %v3194
    %v3256 = vsel %vm3196, %v3255, %v3254
    %v3257 = vperm.slane %v2865, %v3198
    %v3258 = vsel %vm3200, %v3257, %v3256
    %v3259 = vperm.slane %v2868, %v3202
    %v3260 = vsel %vm3204, %v3259, %v3258
    %v3261 = vperm.slane %v2871, %v3206
    %v3262 = vsel %vm3208, %v3261, %v3260
    %v3263 = vperm.slane %v2874, %v3210
    %v3264 = vsel %vm3212, %v3263, %v3262
    %v3265 = vperm.slane %v2877, %v3214
    %v3266 = vsel %vm3216, %v3265, %v3264
    %v3267 = vperm.slane %v2880, %v3218
    %v3268 = vsel %vm3220, %v3267, %v3266
    %v3269 = vperm.slane %v2883, %v3222
    %v3270 = vsel %vm3224, %v3269, %v3268
    %v3271 = vperm.slane %v2886, %v3226
    %v3272 = vsel %vm3228, %v3271, %v3270
    %v3273 = vperm.slane %v2889, %v3230
    %v3274 = vsel %vm3232, %v3273, %v3272
    %v3275 = vperm.slane %v2892, %v3234
    %v3276 = vsel %vm3236, %v3275, %v3274
    %v3277 = vperm.slane %v2895, %v3238
    %v3278 = vsel %vm3240, %v3277, %v3276
    %v3279 = vperm.slane %v2898, %v3242
    %v3280 = vsel %vm3244, %v3279, %v3278
    %v3281 = vperm.slane %v2901, %v3246
    %v3282 = vsel %vm3248, %v3281, %v3280
    %v3283 = vperm.slane %v2904, %v3250
    %v3284 = vsel %vm3252, %v3283, %v3282
    %v3285 = vperm.slane %v2907, %v799
    %v3286 = vperm.slane %v2910, %v3194
    %v3287 = vsel %vm3196, %v3286, %v3285
    %v3288 = vperm.slane %v2913, %v3198
    %v3289 = vsel %vm3200, %v3288, %v3287
    %v3290 = vperm.slane %v2916, %v3202
    %v3291 = vsel %vm3204, %v3290, %v3289
    %v3292 = vperm.slane %v2919, %v3206
    %v3293 = vsel %vm3208, %v3292, %v3291
    %v3294 = vperm.slane %v2922, %v3210
    %v3295 = vsel %vm3212, %v3294, %v3293
    %v3296 = vperm.slane %v2925, %v3214
    %v3297 = vsel %vm3216, %v3296, %v3295
    %v3298 = vperm.slane %v2928, %v3218
    %v3299 = vsel %vm3220, %v3298, %v3297
    %v3300 = vperm.slane %v2931, %v3222
    %v3301 = vsel %vm3224, %v3300, %v3299
    %v3302 = vperm.slane %v2934, %v3226
    %v3303 = vsel %vm3228, %v3302, %v3301
    %v3304 = vperm.slane %v2937, %v3230
    %v3305 = vsel %vm3232, %v3304, %v3303
    %v3306 = vperm.slane %v2940, %v3234
    %v3307 = vsel %vm3236, %v3306, %v3305
    %v3308 = vperm.slane %v2943, %v3238
    %v3309 = vsel %vm3240, %v3308, %v3307
    %v3310 = vperm.slane %v2946, %v3242
    %v3311 = vsel %vm3244, %v3310, %v3309
    %v3312 = vperm.slane %v2949, %v3246
    %v3313 = vsel %vm3248, %v3312, %v3311
    %v3314 = vperm.slane %v2952, %v3250
    %v3315 = vsel %vm3252, %v3314, %v3313
    %v3316 = vperm.slane %v2955, %v799
    %v3317 = vperm.slane %v2958, %v3194
    %v3318 = vsel %vm3196, %v3317, %v3316
    %v3319 = vperm.slane %v2961, %v3198
    %v3320 = vsel %vm3200, %v3319, %v3318
    %v3321 = vperm.slane %v2964, %v3202
    %v3322 = vsel %vm3204, %v3321, %v3320
    %v3323 = vperm.slane %v2967, %v3206
    %v3324 = vsel %vm3208, %v3323, %v3322
    %v3325 = vperm.slane %v2970, %v3210
    %v3326 = vsel %vm3212, %v3325, %v3324
    %v3327 = vperm.slane %v2973, %v3214
    %v3328 = vsel %vm3216, %v3327, %v3326
    %v3329 = vperm.slane %v2976, %v3218
    %v3330 = vsel %vm3220, %v3329, %v3328
    %v3331 = vperm.slane %v2979, %v3222
    %v3332 = vsel %vm3224, %v3331, %v3330
    %v3333 = vperm.slane %v2982, %v3226
    %v3334 = vsel %vm3228, %v3333, %v3332
    %v3335 = vperm.slane %v2985, %v3230
    %v3336 = vsel %vm3232, %v3335, %v3334
    %v3337 = vperm.slane %v2988, %v3234
    %v3338 = vsel %vm3236, %v3337, %v3336
    %v3339 = vperm.slane %v2991, %v3238
    %v3340 = vsel %vm3240, %v3339, %v3338
    %v3341 = vperm.slane %v2994, %v3242
    %v3342 = vsel %vm3244, %v3341, %v3340
    %v3343 = vperm.slane %v2997, %v3246
    %v3344 = vsel %vm3248, %v3343, %v3342
    %v3345 = vperm.slane %v3000, %v3250
    %v3346 = vsel %vm3252, %v3345, %v3344
    %v3347 = vperm.slane %v3003, %v799
    %v3348 = vperm.slane %v3006, %v3194
    %v3349 = vsel %vm3196, %v3348, %v3347
    %v3350 = vperm.slane %v3009, %v3198
    %v3351 = vsel %vm3200, %v3350, %v3349
    %v3352 = vperm.slane %v3012, %v3202
    %v3353 = vsel %vm3204, %v3352, %v3351
    %v3354 = vperm.slane %v3015, %v3206
    %v3355 = vsel %vm3208, %v3354, %v3353
    %v3356 = vperm.slane %v3018, %v3210
    %v3357 = vsel %vm3212, %v3356, %v3355
    %v3358 = vperm.slane %v3021, %v3214
    %v3359 = vsel %vm3216, %v3358, %v3357
    %v3360 = vperm.slane %v3024, %v3218
    %v3361 = vsel %vm3220, %v3360, %v3359
    %v3362 = vperm.slane %v3027, %v3222
    %v3363 = vsel %vm3224, %v3362, %v3361
    %v3364 = vperm.slane %v3030, %v3226
    %v3365 = vsel %vm3228, %v3364, %v3363
    %v3366 = vperm.slane %v3033, %v3230
    %v3367 = vsel %vm3232, %v3366, %v3365
    %v3368 = vperm.slane %v3036, %v3234
    %v3369 = vsel %vm3236, %v3368, %v3367
    %v3370 = vperm.slane %v3039, %v3238
    %v3371 = vsel %vm3240, %v3370, %v3369
    %v3372 = vperm.slane %v3042, %v3242
    %v3373 = vsel %vm3244, %v3372, %v3371
    %v3374 = vperm.slane %v3045, %v3246
    %v3375 = vsel %vm3248, %v3374, %v3373
    %v3376 = vperm.slane %v3048, %v3250
    %v3377 = vsel %vm3252, %v3376, %v3375
    %v3378 = vperm.slane %v3051, %v799
    %v3379 = vperm.slane %v3054, %v3194
    %v3380 = vsel %vm3196, %v3379, %v3378
    %v3381 = vperm.slane %v3057, %v3198
    %v3382 = vsel %vm3200, %v3381, %v3380
    %v3383 = vperm.slane %v3060, %v3202
    %v3384 = vsel %vm3204, %v3383, %v3382
    %v3385 = vperm.slane %v3063, %v3206
    %v3386 = vsel %vm3208, %v3385, %v3384
    %v3387 = vperm.slane %v3066, %v3210
    %v3388 = vsel %vm3212, %v3387, %v3386
    %v3389 = vperm.slane %v3069, %v3214
    %v3390 = vsel %vm3216, %v3389, %v3388
    %v3391 = vperm.slane %v3072, %v3218
    %v3392 = vsel %vm3220, %v3391, %v3390
    %v3393 = vperm.slane %v3075, %v3222
    %v3394 = vsel %vm3224, %v3393, %v3392
    %v3395 = vperm.slane %v3078, %v3226
    %v3396 = vsel %vm3228, %v3395, %v3394
    %v3397 = vperm.slane %v3081, %v3230
    %v3398 = vsel %vm3232, %v3397, %v3396
    %v3399 = vperm.slane %v3084, %v3234
    %v3400 = vsel %vm3236, %v3399, %v3398
    %v3401 = vperm.slane %v3087, %v3238
    %v3402 = vsel %vm3240, %v3401, %v3400
    %v3403 = vperm.slane %v3090, %v3242
    %v3404 = vsel %vm3244, %v3403, %v3402
    %v3405 = vperm.slane %v3093, %v3246
    %v3406 = vsel %vm3248, %v3405, %v3404
    %v3407 = vperm.slane %v3096, %v3250
    %v3408 = vsel %vm3252, %v3407, %v3406
    %v3409 = vperm.slane %v3099, %v799
    %v3410 = vperm.slane %v3102, %v3194
    %v3411 = vsel %vm3196, %v3410, %v3409
    %v3412 = vperm.slane %v3105, %v3198
    %v3413 = vsel %vm3200, %v3412, %v3411
    %v3414 = vperm.slane %v3108, %v3202
    %v3415 = vsel %vm3204, %v3414, %v3413
    %v3416 = vperm.slane %v3111, %v3206
    %v3417 = vsel %vm3208, %v3416, %v3415
    %v3418 = vperm.slane %v3114, %v3210
    %v3419 = vsel %vm3212, %v3418, %v3417
    %v3420 = vperm.slane %v3117, %v3214
    %v3421 = vsel %vm3216, %v3420, %v3419
    %v3422 = vperm.slane %v3120, %v3218
    %v3423 = vsel %vm3220, %v3422, %v3421
    %v3424 = vperm.slane %v3123, %v3222
    %v3425 = vsel %vm3224, %v3424, %v3423
    %v3426 = vperm.slane %v3126, %v3226
    %v3427 = vsel %vm3228, %v3426, %v3425
    %v3428 = vperm.slane %v3129, %v3230
    %v3429 = vsel %vm3232, %v3428, %v3427
    %v3430 = vperm.slane %v3132, %v3234
    %v3431 = vsel %vm3236, %v3430, %v3429
    %v3432 = vperm.slane %v3135, %v3238
    %v3433 = vsel %vm3240, %v3432, %v3431
    %v3434 = vperm.slane %v3138, %v3242
    %v3435 = vsel %vm3244, %v3434, %v3433
    %v3436 = vperm.slane %v3141, %v3246
    %v3437 = vsel %vm3248, %v3436, %v3435
    %v3438 = vperm.slane %v3144, %v3250
    %v3439 = vsel %vm3252, %v3438, %v3437
    %v3440 = vperm.slane %v3147, %v799
    %v3441 = vperm.slane %v3150, %v3194
    %v3442 = vsel %vm3196, %v3441, %v3440
    %v3443 = vperm.slane %v3153, %v3198
    %v3444 = vsel %vm3200, %v3443, %v3442
    %v3445 = vperm.slane %v3156, %v3202
    %v3446 = vsel %vm3204, %v3445, %v3444
    %v3447 = vperm.slane %v3159, %v3206
    %v3448 = vsel %vm3208, %v3447, %v3446
    %v3449 = vperm.slane %v3162, %v3210
    %v3450 = vsel %vm3212, %v3449, %v3448
    %v3451 = vperm.slane %v3165, %v3214
    %v3452 = vsel %vm3216, %v3451, %v3450
    %v3453 = vperm.slane %v3168, %v3218
    %v3454 = vsel %vm3220, %v3453, %v3452
    %v3455 = vperm.slane %v3171, %v3222
    %v3456 = vsel %vm3224, %v3455, %v3454
    %v3457 = vperm.slane %v3174, %v3226
    %v3458 = vsel %vm3228, %v3457, %v3456
    %v3459 = vperm.slane %v3177, %v3230
    %v3460 = vsel %vm3232, %v3459, %v3458
    %v3461 = vperm.slane %v3180, %v3234
    %v3462 = vsel %vm3236, %v3461, %v3460
    %v3463 = vperm.slane %v3183, %v3238
    %v3464 = vsel %vm3240, %v3463, %v3462
    %v3465 = vperm.slane %v3186, %v3242
    %v3466 = vsel %vm3244, %v3465, %v3464
    %v3467 = vperm.slane %v3189, %v3246
    %v3468 = vsel %vm3248, %v3467, %v3466
    %v3469 = vperm.slane %v3192, %v3250
    %v3470 = vsel %vm3252, %v3469, %v3468
    %v3471 = vsel %vm1011, %v3315, %v3253
    %v3472 = vsel %vm1014, %v3377, %v3471
    %v3473 = vsel %vm1017, %v3439, %v3472
    %v3474 = vsel %vm1011, %v3346, %v3284
    %v3475 = vsel %vm1014, %v3408, %v3474
    %v3476 = vsel %vm1017, %v3470, %v3475
    %vm3479 = vcmask 1043456
    %v3480 = vsel %vm3479, %v3473, -inf
    %v3481 = vsel %vm3479, %v3476, -inf
    %v3482 = vmax.f32 %v3480, %v3481
    %3483 = vmax.xlane.f32.xlu0 %v3482
    %v3484 = vpop.xlane.xlu0 %3483
    %v3486 = vperm.slane %v3484, 0
    %v3487 = vperm.slane %v3484, 1
    %v3488 = vperm.slane %v3484, 2
    %v3489 = vperm.slane %v3484, 3
    %v3494 = vsub.f32 %v2553, %v3486
    %v3495 = vsub.f32 %v2554, %v3486
    %v3496 = vsub.f32 %v2555, %v3486
    %v3497 = vsub.f32 %v2556, %v3486
    %v3498 = vsub.f32 %v2557, %v3486
    %v3499 = vsub.f32 %v2558, %v3486
    %v3500 = vsub.f32 %v2559, %v3486
    %v3501 = vsub.f32 %v2560, %v3486
    %v3502 = vsub.f32 %v2561, %v3486
    %v3503 = vsub.f32 %v2562, %v3486
    %v3504 = vsub.f32 %v2563, %v3486
    %v3505 = vsub.f32 %v2564, %v3486
    %v3506 = vsub.f32 %v2565, %v3486
    %v3507 = vsub.f32 %v2566, %v3486
    %v3508 = vsub.f32 %v2567, %v3486
    %v3509 = vsub.f32 %v2568, %v3486
    %v3510 = vsub.f32 %v2569, %v3486
    %v3511 = vsub.f32 %v2570, %v3486
    %v3512 = vsub.f32 %v2571, %v3486
    %v3513 = vsub.f32 %v2572, %v3486
    %v3514 = vsub.f32 %v2573, %v3486
    %v3515 = vsub.f32 %v2574, %v3486
    %v3516 = vsub.f32 %v2575, %v3486
    %v3517 = vsub.f32 %v2576, %v3486
    %v3518 = vsub.f32 %v2577, %v3486
    %v3519 = vsub.f32 %v2578, %v3486
    %v3520 = vsub.f32 %v2579, %v3486
    %v3521 = vsub.f32 %v2580, %v3486
    %v3522 = vsub.f32 %v2581, %v3486
    %v3523 = vsub.f32 %v2582, %v3486
    %v3524 = vsub.f32 %v2583, %v3486
    %v3525 = vsub.f32 %v2584, %v3486
    %v3526 = vsub.f32 %v2585, %v3487
    %v3527 = vsub.f32 %v2586, %v3487
    %v3528 = vsub.f32 %v2587, %v3487
    %v3529 = vsub.f32 %v2588, %v3487
    %v3530 = vsub.f32 %v2589, %v3487
    %v3531 = vsub.f32 %v2590, %v3487
    %v3532 = vsub.f32 %v2591, %v3487
    %v3533 = vsub.f32 %v2592, %v3487
    %v3534 = vsub.f32 %v2593, %v3487
    %v3535 = vsub.f32 %v2594, %v3487
    %v3536 = vsub.f32 %v2595, %v3487
    %v3537 = vsub.f32 %v2596, %v3487
    %v3538 = vsub.f32 %v2597, %v3487
    %v3539 = vsub.f32 %v2598, %v3487
    %v3540 = vsub.f32 %v2599, %v3487
    %v3541 = vsub.f32 %v2600, %v3487
    %v3542 = vsub.f32 %v2601, %v3487
    %v3543 = vsub.f32 %v2602, %v3487
    %v3544 = vsub.f32 %v2603, %v3487
    %v3545 = vsub.f32 %v2604, %v3487
    %v3546 = vsub.f32 %v2605, %v3487
    %v3547 = vsub.f32 %v2606, %v3487
    %v3548 = vsub.f32 %v2607, %v3487
    %v3549 = vsub.f32 %v2608, %v3487
    %v3550 = vsub.f32 %v2609, %v3487
    %v3551 = vsub.f32 %v2610, %v3487
    %v3552 = vsub.f32 %v2611, %v3487
    %v3553 = vsub.f32 %v2612, %v3487
    %v3554 = vsub.f32 %v2613, %v3487
    %v3555 = vsub.f32 %v2614, %v3487
    %v3556 = vsub.f32 %v2615, %v3487
    %v3557 = vsub.f32 %v2616, %v3487
    %v3558 = vsub.f32 %v2617, %v3488
    %v3559 = vsub.f32 %v2618, %v3488
    %v3560 = vsub.f32 %v2619, %v3488
    %v3561 = vsub.f32 %v2620, %v3488
    %v3562 = vsub.f32 %v2621, %v3488
    %v3563 = vsub.f32 %v2622, %v3488
    %v3564 = vsub.f32 %v2623, %v3488
    %v3565 = vsub.f32 %v2624, %v3488
    %v3566 = vsub.f32 %v2625, %v3488
    %v3567 = vsub.f32 %v2626, %v3488
    %v3568 = vsub.f32 %v2627, %v3488
    %v3569 = vsub.f32 %v2628, %v3488
    %v3570 = vsub.f32 %v2629, %v3488
    %v3571 = vsub.f32 %v2630, %v3488
    %v3572 = vsub.f32 %v2631, %v3488
    %v3573 = vsub.f32 %v2632, %v3488
    %v3574 = vsub.f32 %v2633, %v3488
    %v3575 = vsub.f32 %v2634, %v3488
    %v3576 = vsub.f32 %v2635, %v3488
    %v3577 = vsub.f32 %v2636, %v3488
    %v3578 = vsub.f32 %v2637, %v3488
    %v3579 = vsub.f32 %v2638, %v3488
    %v3580 = vsub.f32 %v2639, %v3488
    %v3581 = vsub.f32 %v2640, %v3488
    %v3582 = vsub.f32 %v2641, %v3488
    %v3583 = vsub.f32 %v2642, %v3488
    %v3584 = vsub.f32 %v2643, %v3488
    %v3585 = vsub.f32 %v2644, %v3488
    %v3586 = vsub.f32 %v2645, %v3488
    %v3587 = vsub.f32 %v2646, %v3488
    %v3588 = vsub.f32 %v2647, %v3488
    %v3589 = vsub.f32 %v2648, %v3488
    %v3590 = vsub.f32 %v2649, %v3489
    %v3591 = vsub.f32 %v2650, %v3489
    %v3592 = vsub.f32 %v2651, %v3489
    %v3593 = vsub.f32 %v2652, %v3489
    %v3594 = vsub.f32 %v2653, %v3489
    %v3595 = vsub.f32 %v2654, %v3489
    %v3596 = vsub.f32 %v2655, %v3489
    %v3597 = vsub.f32 %v2656, %v3489
    %v3598 = vsub.f32 %v2657, %v3489
    %v3599 = vsub.f32 %v2658, %v3489
    %v3600 = vsub.f32 %v2659, %v3489
    %v3601 = vsub.f32 %v2660, %v3489
    %v3602 = vsub.f32 %v2661, %v3489
    %v3603 = vsub.f32 %v2662, %v3489
    %v3604 = vsub.f32 %v2663, %v3489
    %v3605 = vsub.f32 %v2664, %v3489
    %v3606 = vsub.f32 %v2665, %v3489
    %v3607 = vsub.f32 %v2666, %v3489
    %v3608 = vsub.f32 %v2667, %v3489
    %v3609 = vsub.f32 %v2668, %v3489
    %v3610 = vsub.f32 %v2669, %v3489
    %v3611 = vsub.f32 %v2670, %v3489
    %v3612 = vsub.f32 %v2671, %v3489
    %v3613 = vsub.f32 %v2672, %v3489
    %v3614 = vsub.f32 %v2673, %v3489
    %v3615 = vsub.f32 %v2674, %v3489
    %v3616 = vsub.f32 %v2675, %v3489
    %v3617 = vsub.f32 %v2676, %v3489
    %v3618 = vsub.f32 %v2677, %v3489
    %v3619 = vsub.f32 %v2678, %v3489
    %v3620 = vsub.f32 %v2679, %v3489
    %v3621 = vsub.f32 %v2680, %v3489
    %v3622 = vmul.f32 %v3494, 1.442695
    %v3623 = vpow.pop %v3622
    %v3624 = vmul.f32 %v3495, 1.442695
    %v3625 = vpow.pop %v3624
    %v3626 = vmul.f32 %v3496, 1.442695
    %v3627 = vpow.pop %v3626
    %v3628 = vmul.f32 %v3497, 1.442695
    %v3629 = vpow.pop %v3628
    %v3630 = vmul.f32 %v3498, 1.442695
    %v3631 = vpow.pop %v3630
    %v3632 = vmul.f32 %v3499, 1.442695
    %v3633 = vpow.pop %v3632
    %v3634 = vmul.f32 %v3500, 1.442695
    %v3635 = vpow.pop %v3634
    %v3636 = vmul.f32 %v3501, 1.442695
    %v3637 = vpow.pop %v3636
    %v3638 = vmul.f32 %v3502, 1.442695
    %v3639 = vpow.pop %v3638
    %v3640 = vmul.f32 %v3503, 1.442695
    %v3641 = vpow.pop %v3640
    %v3642 = vmul.f32 %v3504, 1.442695
    %v3643 = vpow.pop %v3642
    %v3644 = vmul.f32 %v3505, 1.442695
    %v3645 = vpow.pop %v3644
    %v3646 = vmul.f32 %v3506, 1.442695
    %v3647 = vpow.pop %v3646
    %v3648 = vmul.f32 %v3507, 1.442695
    %v3649 = vpow.pop %v3648
    %v3650 = vmul.f32 %v3508, 1.442695
    %v3651 = vpow.pop %v3650
    %v3652 = vmul.f32 %v3509, 1.442695
    %v3653 = vpow.pop %v3652
    %v3654 = vmul.f32 %v3510, 1.442695
    %v3655 = vpow.pop %v3654
    %v3656 = vmul.f32 %v3511, 1.442695
    %v3657 = vpow.pop %v3656
    %v3658 = vmul.f32 %v3512, 1.442695
    %v3659 = vpow.pop %v3658
    %v3660 = vmul.f32 %v3513, 1.442695
    %v3661 = vpow.pop %v3660
    %v3662 = vmul.f32 %v3514, 1.442695
    %v3663 = vpow.pop %v3662
    %v3664 = vmul.f32 %v3515, 1.442695
    %v3665 = vpow.pop %v3664
    %v3666 = vmul.f32 %v3516, 1.442695
    %v3667 = vpow.pop %v3666
    %v3668 = vmul.f32 %v3517, 1.442695
    %v3669 = vpow.pop %v3668
    %v3670 = vmul.f32 %v3518, 1.442695
    %v3671 = vpow.pop %v3670
    %v3672 = vmul.f32 %v3519, 1.442695
    %v3673 = vpow.pop %v3672
    %v3674 = vmul.f32 %v3520, 1.442695
    %v3675 = vpow.pop %v3674
    %v3676 = vmul.f32 %v3521, 1.442695
    %v3677 = vpow.pop %v3676
    %v3678 = vmul.f32 %v3522, 1.442695
    %v3679 = vpow.pop %v3678
    %v3680 = vmul.f32 %v3523, 1.442695
    %v3681 = vpow.pop %v3680
    %v3682 = vmul.f32 %v3524, 1.442695
    %v3683 = vpow.pop %v3682
    %v3684 = vmul.f32 %v3525, 1.442695
    %v3685 = vpow.pop %v3684
    %v3686 = vmul.f32 %v3526, 1.442695
    %v3687 = vpow.pop %v3686
    %v3688 = vmul.f32 %v3527, 1.442695
    %v3689 = vpow.pop %v3688
    %v3690 = vmul.f32 %v3528, 1.442695
    %v3691 = vpow.pop %v3690
    %v3692 = vmul.f32 %v3529, 1.442695
    %v3693 = vpow.pop %v3692
    %v3694 = vmul.f32 %v3530, 1.442695
    %v3695 = vpow.pop %v3694
    %v3696 = vmul.f32 %v3531, 1.442695
    %v3697 = vpow.pop %v3696
    %v3698 = vmul.f32 %v3532, 1.442695
    %v3699 = vpow.pop %v3698
    %v3700 = vmul.f32 %v3533, 1.442695
    %v3701 = vpow.pop %v3700
    %v3702 = vmul.f32 %v3534, 1.442695
    %v3703 = vpow.pop %v3702
    %v3704 = vmul.f32 %v3535, 1.442695
    %v3705 = vpow.pop %v3704
    %v3706 = vmul.f32 %v3536, 1.442695
    %v3707 = vpow.pop %v3706
    %v3708 = vmul.f32 %v3537, 1.442695
    %v3709 = vpow.pop %v3708
    %v3710 = vmul.f32 %v3538, 1.442695
    %v3711 = vpow.pop %v3710
    %v3712 = vmul.f32 %v3539, 1.442695
    %v3713 = vpow.pop %v3712
    %v3714 = vmul.f32 %v3540, 1.442695
    %v3715 = vpow.pop %v3714
    %v3716 = vmul.f32 %v3541, 1.442695
    %v3717 = vpow.pop %v3716
    %v3718 = vmul.f32 %v3542, 1.442695
    %v3719 = vpow.pop %v3718
    %v3720 = vmul.f32 %v3543, 1.442695
    %v3721 = vpow.pop %v3720
    %v3722 = vmul.f32 %v3544, 1.442695
    %v3723 = vpow.pop %v3722
    %v3724 = vmul.f32 %v3545, 1.442695
    %v3725 = vpow.pop %v3724
    %v3726 = vmul.f32 %v3546, 1.442695
    %v3727 = vpow.pop %v3726
    %v3728 = vmul.f32 %v3547, 1.442695
    %v3729 = vpow.pop %v3728
    %v3730 = vmul.f32 %v3548, 1.442695
    %v3731 = vpow.pop %v3730
    %v3732 = vmul.f32 %v3549, 1.442695
    %v3733 = vpow.pop %v3732
    %v3734 = vmul.f32 %v3550, 1.442695
    %v3735 = vpow.pop %v3734
    %v3736 = vmul.f32 %v3551, 1.442695
    %v3737 = vpow.pop %v3736
    %v3738 = vmul.f32 %v3552, 1.442695
    %v3739 = vpow.pop %v3738
    %v3740 = vmul.f32 %v3553, 1.442695
    %v3741 = vpow.pop %v3740
    %v3742 = vmul.f32 %v3554, 1.442695
    %v3743 = vpow.pop %v3742
    %v3744 = vmul.f32 %v3555, 1.442695
    %v3745 = vpow.pop %v3744
    %v3746 = vmul.f32 %v3556, 1.442695
    %v3747 = vpow.pop %v3746
    %v3748 = vmul.f32 %v3557, 1.442695
    %v3749 = vpow.pop %v3748
    %v3750 = vmul.f32 %v3558, 1.442695
    %v3751 = vpow.pop %v3750
    %v3752 = vmul.f32 %v3559, 1.442695
    %v3753 = vpow.pop %v3752
    %v3754 = vmul.f32 %v3560, 1.442695
    %v3755 = vpow.pop %v3754
    %v3756 = vmul.f32 %v3561, 1.442695
    %v3757 = vpow.pop %v3756
    %v3758 = vmul.f32 %v3562, 1.442695
    %v3759 = vpow.pop %v3758
    %v3760 = vmul.f32 %v3563, 1.442695
    %v3761 = vpow.pop %v3760
    %v3762 = vmul.f32 %v3564, 1.442695
    %v3763 = vpow.pop %v3762
    %v3764 = vmul.f32 %v3565, 1.442695
    %v3765 = vpow.pop %v3764
    %v3766 = vmul.f32 %v3566, 1.442695
    %v3767 = vpow.pop %v3766
    %v3768 = vmul.f32 %v3567, 1.442695
    %v3769 = vpow.pop %v3768
    %v3770 = vmul.f32 %v3568, 1.442695
    %v3771 = vpow.pop %v3770
    %v3772 = vmul.f32 %v3569, 1.442695
    %v3773 = vpow.pop %v3772
    %v3774 = vmul.f32 %v3570, 1.442695
    %v3775 = vpow.pop %v3774
    %v3776 = vmul.f32 %v3571, 1.442695
    %v3777 = vpow.pop %v3776
    %v3778 = vmul.f32 %v3572, 1.442695
    %v3779 = vpow.pop %v3778
    %v3780 = vmul.f32 %v3573, 1.442695
    %v3781 = vpow.pop %v3780
    %v3782 = vmul.f32 %v3574, 1.442695
    %v3783 = vpow.pop %v3782
    %v3784 = vmul.f32 %v3575, 1.442695
    %v3785 = vpow.pop %v3784
    %v3786 = vmul.f32 %v3576, 1.442695
    %v3787 = vpow.pop %v3786
    %v3788 = vmul.f32 %v3577, 1.442695
    %v3789 = vpow.pop %v3788
    %v3790 = vmul.f32 %v3578, 1.442695
    %v3791 = vpow.pop %v3790
    %v3792 = vmul.f32 %v3579, 1.442695
    %v3793 = vpow.pop %v3792
    %v3794 = vmul.f32 %v3580, 1.442695
    %v3795 = vpow.pop %v3794
    %v3796 = vmul.f32 %v3581, 1.442695
    %v3797 = vpow.pop %v3796
    %v3798 = vmul.f32 %v3582, 1.442695
    %v3799 = vpow.pop %v3798
    %v3800 = vmul.f32 %v3583, 1.442695
    %v3801 = vpow.pop %v3800
    %v3802 = vmul.f32 %v3584, 1.442695
    %v3803 = vpow.pop %v3802
    %v3804 = vmul.f32 %v3585, 1.442695
    %v3805 = vpow.pop %v3804
    %v3806 = vmul.f32 %v3586, 1.442695
    %v3807 = vpow.pop %v3806
    %v3808 = vmul.f32 %v3587, 1.442695
    %v3809 = vpow.pop %v3808
    %v3810 = vmul.f32 %v3588, 1.442695
    %v3811 = vpow.pop %v3810
    %v3812 = vmul.f32 %v3589, 1.442695
    %v3813 = vpow.pop %v3812
    %v3814 = vmul.f32 %v3590, 1.442695
    %v3815 = vpow.pop %v3814
    %v3816 = vmul.f32 %v3591, 1.442695
    %v3817 = vpow.pop %v3816
    %v3818 = vmul.f32 %v3592, 1.442695
    %v3819 = vpow.pop %v3818
    %v3820 = vmul.f32 %v3593, 1.442695
    %v3821 = vpow.pop %v3820
    %v3822 = vmul.f32 %v3594, 1.442695
    %v3823 = vpow.pop %v3822
    %v3824 = vmul.f32 %v3595, 1.442695
    %v3825 = vpow.pop %v3824
    %v3826 = vmul.f32 %v3596, 1.442695
    %v3827 = vpow.pop %v3826
    %v3828 = vmul.f32 %v3597, 1.442695
    %v3829 = vpow.pop %v3828
    %v3830 = vmul.f32 %v3598, 1.442695
    %v3831 = vpow.pop %v3830
    %v3832 = vmul.f32 %v3599, 1.442695
    %v3833 = vpow.pop %v3832
    %v3834 = vmul.f32 %v3600, 1.442695
    %v3835 = vpow.pop %v3834
    %v3836 = vmul.f32 %v3601, 1.442695
    %v3837 = vpow.pop %v3836
    %v3838 = vmul.f32 %v3602, 1.442695
    %v3839 = vpow.pop %v3838
    %v3840 = vmul.f32 %v3603, 1.442695
    %v3841 = vpow.pop %v3840
    %v3842 = vmul.f32 %v3604, 1.442695
    %v3843 = vpow.pop %v3842
    %v3844 = vmul.f32 %v3605, 1.442695
    %v3845 = vpow.pop %v3844
    %v3846 = vmul.f32 %v3606, 1.442695
    %v3847 = vpow.pop %v3846
    %v3848 = vmul.f32 %v3607, 1.442695
    %v3849 = vpow.pop %v3848
    %v3850 = vmul.f32 %v3608, 1.442695
    %v3851 = vpow.pop %v3850
    %v3852 = vmul.f32 %v3609, 1.442695
    %v3853 = vpow.pop %v3852
    %v3854 = vmul.f32 %v3610, 1.442695
    %v3855 = vpow.pop %v3854
    %v3856 = vmul.f32 %v3611, 1.442695
    %v3857 = vpow.pop %v3856
    %v3858 = vmul.f32 %v3612, 1.442695
    %v3859 = vpow.pop %v3858
    %v3860 = vmul.f32 %v3613, 1.442695
    %v3861 = vpow.pop %v3860
    %v3862 = vmul.f32 %v3614, 1.442695
    %v3863 = vpow.pop %v3862
    %v3864 = vmul.f32 %v3615, 1.442695
    %v3865 = vpow.pop %v3864
    %v3866 = vmul.f32 %v3616, 1.442695
    %v3867 = vpow.pop %v3866
    %v3868 = vmul.f32 %v3617, 1.442695
    %v3869 = vpow.pop %v3868
    %v3870 = vmul.f32 %v3618, 1.442695
    %v3871 = vpow.pop %v3870
    %v3872 = vmul.f32 %v3619, 1.442695
    %v3873 = vpow.pop %v3872
    %v3874 = vmul.f32 %v3620, 1.442695
    %v3875 = vpow.pop %v3874
    %v3876 = vmul.f32 %v3621, 1.442695
    %v3877 = vpow.pop %v3876
    %4006 = vset.pattern.permute.xlu0 0
    %4007 = vperm.xlu0 %4006, %v3623
    %v4008 = vpop.permute.xlu0 %4007
    %4009 = vset.pattern.permute.xlu0 0
    %4010 = vperm.xlu0 %4009, %v3625
    %v4011 = vpop.permute.xlu0 %4010
    %4012 = vset.pattern.permute.xlu0 0
    %4013 = vperm.xlu0 %4012, %v3627
    %v4014 = vpop.permute.xlu0 %4013
    %4015 = vset.pattern.permute.xlu0 0
    %4016 = vperm.xlu0 %4015, %v3629
    %v4017 = vpop.permute.xlu0 %4016
    %4018 = vset.pattern.permute.xlu0 0
    %4019 = vperm.xlu0 %4018, %v3631
    %v4020 = vpop.permute.xlu0 %4019
    %4021 = vset.pattern.permute.xlu0 0
    %4022 = vperm.xlu0 %4021, %v3633
    %v4023 = vpop.permute.xlu0 %4022
    %4024 = vset.pattern.permute.xlu0 0
    %4025 = vperm.xlu0 %4024, %v3635
    %v4026 = vpop.permute.xlu0 %4025
    %4027 = vset.pattern.permute.xlu0 0
    %4028 = vperm.xlu0 %4027, %v3637
    %v4029 = vpop.permute.xlu0 %4028
    %4030 = vset.pattern.permute.xlu0 0
    %4031 = vperm.xlu0 %4030, %v3639
    %v4032 = vpop.permute.xlu0 %4031
    %4033 = vset.pattern.permute.xlu0 0
    %4034 = vperm.xlu0 %4033, %v3641
    %v4035 = vpop.permute.xlu0 %4034
    %4036 = vset.pattern.permute.xlu0 0
    %4037 = vperm.xlu0 %4036, %v3643
    %v4038 = vpop.permute.xlu0 %4037
    %4039 = vset.pattern.permute.xlu0 0
    %4040 = vperm.xlu0 %4039, %v3645
    %v4041 = vpop.permute.xlu0 %4040
    %4042 = vset.pattern.permute.xlu0 0
    %4043 = vperm.xlu0 %4042, %v3647
    %v4044 = vpop.permute.xlu0 %4043
    %4045 = vset.pattern.permute.xlu0 0
    %4046 = vperm.xlu0 %4045, %v3649
    %v4047 = vpop.permute.xlu0 %4046
    %4048 = vset.pattern.permute.xlu0 0
    %4049 = vperm.xlu0 %4048, %v3651
    %v4050 = vpop.permute.xlu0 %4049
    %4051 = vset.pattern.permute.xlu0 0
    %4052 = vperm.xlu0 %4051, %v3653
    %v4053 = vpop.permute.xlu0 %4052
    %4054 = vset.pattern.permute.xlu0 0
    %4055 = vperm.xlu0 %4054, %v3655
    %v4056 = vpop.permute.xlu0 %4055
    %4057 = vset.pattern.permute.xlu0 0
    %4058 = vperm.xlu0 %4057, %v3657
    %v4059 = vpop.permute.xlu0 %4058
    %4060 = vset.pattern.permute.xlu0 0
    %4061 = vperm.xlu0 %4060, %v3659
    %v4062 = vpop.permute.xlu0 %4061
    %4063 = vset.pattern.permute.xlu0 0
    %4064 = vperm.xlu0 %4063, %v3661
    %v4065 = vpop.permute.xlu0 %4064
    %4066 = vset.pattern.permute.xlu0 0
    %4067 = vperm.xlu0 %4066, %v3663
    %v4068 = vpop.permute.xlu0 %4067
    %4069 = vset.pattern.permute.xlu0 0
    %4070 = vperm.xlu0 %4069, %v3665
    %v4071 = vpop.permute.xlu0 %4070
    %4072 = vset.pattern.permute.xlu0 0
    %4073 = vperm.xlu0 %4072, %v3667
    %v4074 = vpop.permute.xlu0 %4073
    %4075 = vset.pattern.permute.xlu0 0
    %4076 = vperm.xlu0 %4075, %v3669
    %v4077 = vpop.permute.xlu0 %4076
    %4078 = vset.pattern.permute.xlu0 0
    %4079 = vperm.xlu0 %4078, %v3671
    %v4080 = vpop.permute.xlu0 %4079
    %4081 = vset.pattern.permute.xlu0 0
    %4082 = vperm.xlu0 %4081, %v3673
    %v4083 = vpop.permute.xlu0 %4082
    %4084 = vset.pattern.permute.xlu0 0
    %4085 = vperm.xlu0 %4084, %v3675
    %v4086 = vpop.permute.xlu0 %4085
    %4087 = vset.pattern.permute.xlu0 0
    %4088 = vperm.xlu0 %4087, %v3677
    %v4089 = vpop.permute.xlu0 %4088
    %4090 = vset.pattern.permute.xlu0 0
    %4091 = vperm.xlu0 %4090, %v3679
    %v4092 = vpop.permute.xlu0 %4091
    %4093 = vset.pattern.permute.xlu0 0
    %4094 = vperm.xlu0 %4093, %v3681
    %v4095 = vpop.permute.xlu0 %4094
    %4096 = vset.pattern.permute.xlu0 0
    %4097 = vperm.xlu0 %4096, %v3683
    %v4098 = vpop.permute.xlu0 %4097
    %4099 = vset.pattern.permute.xlu0 0
    %4100 = vperm.xlu0 %4099, %v3685
    %v4101 = vpop.permute.xlu0 %4100
    %4102 = vset.pattern.permute.xlu0 0
    %4103 = vperm.xlu0 %4102, %v3687
    %v4104 = vpop.permute.xlu0 %4103
    %4105 = vset.pattern.permute.xlu0 0
    %4106 = vperm.xlu0 %4105, %v3689
    %v4107 = vpop.permute.xlu0 %4106
    %4108 = vset.pattern.permute.xlu0 0
    %4109 = vperm.xlu0 %4108, %v3691
    %v4110 = vpop.permute.xlu0 %4109
    %4111 = vset.pattern.permute.xlu0 0
    %4112 = vperm.xlu0 %4111, %v3693
    %v4113 = vpop.permute.xlu0 %4112
    %4114 = vset.pattern.permute.xlu0 0
    %4115 = vperm.xlu0 %4114, %v3695
    %v4116 = vpop.permute.xlu0 %4115
    %4117 = vset.pattern.permute.xlu0 0
    %4118 = vperm.xlu0 %4117, %v3697
    %v4119 = vpop.permute.xlu0 %4118
    %4120 = vset.pattern.permute.xlu0 0
    %4121 = vperm.xlu0 %4120, %v3699
    %v4122 = vpop.permute.xlu0 %4121
    %4123 = vset.pattern.permute.xlu0 0
    %4124 = vperm.xlu0 %4123, %v3701
    %v4125 = vpop.permute.xlu0 %4124
    %4126 = vset.pattern.permute.xlu0 0
    %4127 = vperm.xlu0 %4126, %v3703
    %v4128 = vpop.permute.xlu0 %4127
    %4129 = vset.pattern.permute.xlu0 0
    %4130 = vperm.xlu0 %4129, %v3705
    %v4131 = vpop.permute.xlu0 %4130
    %4132 = vset.pattern.permute.xlu0 0
    %4133 = vperm.xlu0 %4132, %v3707
    %v4134 = vpop.permute.xlu0 %4133
    %4135 = vset.pattern.permute.xlu0 0
    %4136 = vperm.xlu0 %4135, %v3709
    %v4137 = vpop.permute.xlu0 %4136
    %4138 = vset.pattern.permute.xlu0 0
    %4139 = vperm.xlu0 %4138, %v3711
    %v4140 = vpop.permute.xlu0 %4139
    %4141 = vset.pattern.permute.xlu0 0
    %4142 = vperm.xlu0 %4141, %v3713
    %v4143 = vpop.permute.xlu0 %4142
    %4144 = vset.pattern.permute.xlu0 0
    %4145 = vperm.xlu0 %4144, %v3715
    %v4146 = vpop.permute.xlu0 %4145
    %4147 = vset.pattern.permute.xlu0 0
    %4148 = vperm.xlu0 %4147, %v3717
    %v4149 = vpop.permute.xlu0 %4148
    %4150 = vset.pattern.permute.xlu0 0
    %4151 = vperm.xlu0 %4150, %v3719
    %v4152 = vpop.permute.xlu0 %4151
    %4153 = vset.pattern.permute.xlu0 0
    %4154 = vperm.xlu0 %4153, %v3721
    %v4155 = vpop.permute.xlu0 %4154
    %4156 = vset.pattern.permute.xlu0 0
    %4157 = vperm.xlu0 %4156, %v3723
    %v4158 = vpop.permute.xlu0 %4157
    %4159 = vset.pattern.permute.xlu0 0
    %4160 = vperm.xlu0 %4159, %v3725
    %v4161 = vpop.permute.xlu0 %4160
    %4162 = vset.pattern.permute.xlu0 0
    %4163 = vperm.xlu0 %4162, %v3727
    %v4164 = vpop.permute.xlu0 %4163
    %4165 = vset.pattern.permute.xlu0 0
    %4166 = vperm.xlu0 %4165, %v3729
    %v4167 = vpop.permute.xlu0 %4166
    %4168 = vset.pattern.permute.xlu0 0
    %4169 = vperm.xlu0 %4168, %v3731
    %v4170 = vpop.permute.xlu0 %4169
    %4171 = vset.pattern.permute.xlu0 0
    %4172 = vperm.xlu0 %4171, %v3733
    %v4173 = vpop.permute.xlu0 %4172
    %4174 = vset.pattern.permute.xlu0 0
    %4175 = vperm.xlu0 %4174, %v3735
    %v4176 = vpop.permute.xlu0 %4175
    %4177 = vset.pattern.permute.xlu0 0
    %4178 = vperm.xlu0 %4177, %v3737
    %v4179 = vpop.permute.xlu0 %4178
    %4180 = vset.pattern.permute.xlu0 0
    %4181 = vperm.xlu0 %4180, %v3739
    %v4182 = vpop.permute.xlu0 %4181
    %4183 = vset.pattern.permute.xlu0 0
    %4184 = vperm.xlu0 %4183, %v3741
    %v4185 = vpop.permute.xlu0 %4184
    %4186 = vset.pattern.permute.xlu0 0
    %4187 = vperm.xlu0 %4186, %v3743
    %v4188 = vpop.permute.xlu0 %4187
    %4189 = vset.pattern.permute.xlu0 0
    %4190 = vperm.xlu0 %4189, %v3745
    %v4191 = vpop.permute.xlu0 %4190
    %4192 = vset.pattern.permute.xlu0 0
    %4193 = vperm.xlu0 %4192, %v3747
    %v4194 = vpop.permute.xlu0 %4193
    %4195 = vset.pattern.permute.xlu0 0
    %4196 = vperm.xlu0 %4195, %v3749
    %v4197 = vpop.permute.xlu0 %4196
    %4198 = vset.pattern.permute.xlu0 0
    %4199 = vperm.xlu0 %4198, %v3751
    %v4200 = vpop.permute.xlu0 %4199
    %4201 = vset.pattern.permute.xlu0 0
    %4202 = vperm.xlu0 %4201, %v3753
    %v4203 = vpop.permute.xlu0 %4202
    %4204 = vset.pattern.permute.xlu0 0
    %4205 = vperm.xlu0 %4204, %v3755
    %v4206 = vpop.permute.xlu0 %4205
    %4207 = vset.pattern.permute.xlu0 0
    %4208 = vperm.xlu0 %4207, %v3757
    %v4209 = vpop.permute.xlu0 %4208
    %4210 = vset.pattern.permute.xlu0 0
    %4211 = vperm.xlu0 %4210, %v3759
    %v4212 = vpop.permute.xlu0 %4211
    %4213 = vset.pattern.permute.xlu0 0
    %4214 = vperm.xlu0 %4213, %v3761
    %v4215 = vpop.permute.xlu0 %4214
    %4216 = vset.pattern.permute.xlu0 0
    %4217 = vperm.xlu0 %4216, %v3763
    %v4218 = vpop.permute.xlu0 %4217
    %4219 = vset.pattern.permute.xlu0 0
    %4220 = vperm.xlu0 %4219, %v3765
    %v4221 = vpop.permute.xlu0 %4220
    %4222 = vset.pattern.permute.xlu0 0
    %4223 = vperm.xlu0 %4222, %v3767
    %v4224 = vpop.permute.xlu0 %4223
    %4225 = vset.pattern.permute.xlu0 0
    %4226 = vperm.xlu0 %4225, %v3769
    %v4227 = vpop.permute.xlu0 %4226
    %4228 = vset.pattern.permute.xlu0 0
    %4229 = vperm.xlu0 %4228, %v3771
    %v4230 = vpop.permute.xlu0 %4229
    %4231 = vset.pattern.permute.xlu0 0
    %4232 = vperm.xlu0 %4231, %v3773
    %v4233 = vpop.permute.xlu0 %4232
    %4234 = vset.pattern.permute.xlu0 0
    %4235 = vperm.xlu0 %4234, %v3775
    %v4236 = vpop.permute.xlu0 %4235
    %4237 = vset.pattern.permute.xlu0 0
    %4238 = vperm.xlu0 %4237, %v3777
    %v4239 = vpop.permute.xlu0 %4238
    %4240 = vset.pattern.permute.xlu0 0
    %4241 = vperm.xlu0 %4240, %v3779
    %v4242 = vpop.permute.xlu0 %4241
    %4243 = vset.pattern.permute.xlu0 0
    %4244 = vperm.xlu0 %4243, %v3781
    %v4245 = vpop.permute.xlu0 %4244
    %4246 = vset.pattern.permute.xlu0 0
    %4247 = vperm.xlu0 %4246, %v3783
    %v4248 = vpop.permute.xlu0 %4247
    %4249 = vset.pattern.permute.xlu0 0
    %4250 = vperm.xlu0 %4249, %v3785
    %v4251 = vpop.permute.xlu0 %4250
    %4252 = vset.pattern.permute.xlu0 0
    %4253 = vperm.xlu0 %4252, %v3787
    %v4254 = vpop.permute.xlu0 %4253
    %4255 = vset.pattern.permute.xlu0 0
    %4256 = vperm.xlu0 %4255, %v3789
    %v4257 = vpop.permute.xlu0 %4256
    %4258 = vset.pattern.permute.xlu0 0
    %4259 = vperm.xlu0 %4258, %v3791
    %v4260 = vpop.permute.xlu0 %4259
    %4261 = vset.pattern.permute.xlu0 0
    %4262 = vperm.xlu0 %4261, %v3793
    %v4263 = vpop.permute.xlu0 %4262
    %4264 = vset.pattern.permute.xlu0 0
    %4265 = vperm.xlu0 %4264, %v3795
    %v4266 = vpop.permute.xlu0 %4265
    %4267 = vset.pattern.permute.xlu0 0
    %4268 = vperm.xlu0 %4267, %v3797
    %v4269 = vpop.permute.xlu0 %4268
    %4270 = vset.pattern.permute.xlu0 0
    %4271 = vperm.xlu0 %4270, %v3799
    %v4272 = vpop.permute.xlu0 %4271
    %4273 = vset.pattern.permute.xlu0 0
    %4274 = vperm.xlu0 %4273, %v3801
    %v4275 = vpop.permute.xlu0 %4274
    %4276 = vset.pattern.permute.xlu0 0
    %4277 = vperm.xlu0 %4276, %v3803
    %v4278 = vpop.permute.xlu0 %4277
    %4279 = vset.pattern.permute.xlu0 0
    %4280 = vperm.xlu0 %4279, %v3805
    %v4281 = vpop.permute.xlu0 %4280
    %4282 = vset.pattern.permute.xlu0 0
    %4283 = vperm.xlu0 %4282, %v3807
    %v4284 = vpop.permute.xlu0 %4283
    %4285 = vset.pattern.permute.xlu0 0
    %4286 = vperm.xlu0 %4285, %v3809
    %v4287 = vpop.permute.xlu0 %4286
    %4288 = vset.pattern.permute.xlu0 0
    %4289 = vperm.xlu0 %4288, %v3811
    %v4290 = vpop.permute.xlu0 %4289
    %4291 = vset.pattern.permute.xlu0 0
    %4292 = vperm.xlu0 %4291, %v3813
    %v4293 = vpop.permute.xlu0 %4292
    %4294 = vset.pattern.permute.xlu0 0
    %4295 = vperm.xlu0 %4294, %v3815
    %v4296 = vpop.permute.xlu0 %4295
    %4297 = vset.pattern.permute.xlu0 0
    %4298 = vperm.xlu0 %4297, %v3817
    %v4299 = vpop.permute.xlu0 %4298
    %4300 = vset.pattern.permute.xlu0 0
    %4301 = vperm.xlu0 %4300, %v3819
    %v4302 = vpop.permute.xlu0 %4301
    %4303 = vset.pattern.permute.xlu0 0
    %4304 = vperm.xlu0 %4303, %v3821
    %v4305 = vpop.permute.xlu0 %4304
    %4306 = vset.pattern.permute.xlu0 0
    %4307 = vperm.xlu0 %4306, %v3823
    %v4308 = vpop.permute.xlu0 %4307
    %4309 = vset.pattern.permute.xlu0 0
    %4310 = vperm.xlu0 %4309, %v3825
    %v4311 = vpop.permute.xlu0 %4310
    %4312 = vset.pattern.permute.xlu0 0
    %4313 = vperm.xlu0 %4312, %v3827
    %v4314 = vpop.permute.xlu0 %4313
    %4315 = vset.pattern.permute.xlu0 0
    %4316 = vperm.xlu0 %4315, %v3829
    %v4317 = vpop.permute.xlu0 %4316
    %4318 = vset.pattern.permute.xlu0 0
    %4319 = vperm.xlu0 %4318, %v3831
    %v4320 = vpop.permute.xlu0 %4319
    %4321 = vset.pattern.permute.xlu0 0
    %4322 = vperm.xlu0 %4321, %v3833
    %v4323 = vpop.permute.xlu0 %4322
    %4324 = vset.pattern.permute.xlu0 0
    %4325 = vperm.xlu0 %4324, %v3835
    %v4326 = vpop.permute.xlu0 %4325
    %4327 = vset.pattern.permute.xlu0 0
    %4328 = vperm.xlu0 %4327, %v3837
    %v4329 = vpop.permute.xlu0 %4328
    %4330 = vset.pattern.permute.xlu0 0
    %4331 = vperm.xlu0 %4330, %v3839
    %v4332 = vpop.permute.xlu0 %4331
    %4333 = vset.pattern.permute.xlu0 0
    %4334 = vperm.xlu0 %4333, %v3841
    %v4335 = vpop.permute.xlu0 %4334
    %4336 = vset.pattern.permute.xlu0 0
    %4337 = vperm.xlu0 %4336, %v3843
    %v4338 = vpop.permute.xlu0 %4337
    %4339 = vset.pattern.permute.xlu0 0
    %4340 = vperm.xlu0 %4339, %v3845
    %v4341 = vpop.permute.xlu0 %4340
    %4342 = vset.pattern.permute.xlu0 0
    %4343 = vperm.xlu0 %4342, %v3847
    %v4344 = vpop.permute.xlu0 %4343
    %4345 = vset.pattern.permute.xlu0 0
    %4346 = vperm.xlu0 %4345, %v3849
    %v4347 = vpop.permute.xlu0 %4346
    %4348 = vset.pattern.permute.xlu0 0
    %4349 = vperm.xlu0 %4348, %v3851
    %v4350 = vpop.permute.xlu0 %4349
    %4351 = vset.pattern.permute.xlu0 0
    %4352 = vperm.xlu0 %4351, %v3853
    %v4353 = vpop.permute.xlu0 %4352
    %4354 = vset.pattern.permute.xlu0 0
    %4355 = vperm.xlu0 %4354, %v3855
    %v4356 = vpop.permute.xlu0 %4355
    %4357 = vset.pattern.permute.xlu0 0
    %4358 = vperm.xlu0 %4357, %v3857
    %v4359 = vpop.permute.xlu0 %4358
    %4360 = vset.pattern.permute.xlu0 0
    %4361 = vperm.xlu0 %4360, %v3859
    %v4362 = vpop.permute.xlu0 %4361
    %4363 = vset.pattern.permute.xlu0 0
    %4364 = vperm.xlu0 %4363, %v3861
    %v4365 = vpop.permute.xlu0 %4364
    %4366 = vset.pattern.permute.xlu0 0
    %4367 = vperm.xlu0 %4366, %v3863
    %v4368 = vpop.permute.xlu0 %4367
    %4369 = vset.pattern.permute.xlu0 0
    %4370 = vperm.xlu0 %4369, %v3865
    %v4371 = vpop.permute.xlu0 %4370
    %4372 = vset.pattern.permute.xlu0 0
    %4373 = vperm.xlu0 %4372, %v3867
    %v4374 = vpop.permute.xlu0 %4373
    %4375 = vset.pattern.permute.xlu0 0
    %4376 = vperm.xlu0 %4375, %v3869
    %v4377 = vpop.permute.xlu0 %4376
    %4378 = vset.pattern.permute.xlu0 0
    %4379 = vperm.xlu0 %4378, %v3871
    %v4380 = vpop.permute.xlu0 %4379
    %4381 = vset.pattern.permute.xlu0 0
    %4382 = vperm.xlu0 %4381, %v3873
    %v4383 = vpop.permute.xlu0 %4382
    %4384 = vset.pattern.permute.xlu0 0
    %4385 = vperm.xlu0 %4384, %v3875
    %v4386 = vpop.permute.xlu0 %4385
    %4387 = vset.pattern.permute.xlu0 0
    %4388 = vperm.xlu0 %4387, %v3877
    %v4389 = vpop.permute.xlu0 %4388
    %v4390 = vperm.slane %v4008, %v799
    %v4391 = vperm.slane %v4011, %v3194
    %v4392 = vsel %vm3196, %v4391, %v4390
    %v4393 = vperm.slane %v4014, %v3198
    %v4394 = vsel %vm3200, %v4393, %v4392
    %v4395 = vperm.slane %v4017, %v3202
    %v4396 = vsel %vm3204, %v4395, %v4394
    %v4397 = vperm.slane %v4020, %v3206
    %v4398 = vsel %vm3208, %v4397, %v4396
    %v4399 = vperm.slane %v4023, %v3210
    %v4400 = vsel %vm3212, %v4399, %v4398
    %v4401 = vperm.slane %v4026, %v3214
    %v4402 = vsel %vm3216, %v4401, %v4400
    %v4403 = vperm.slane %v4029, %v3218
    %v4404 = vsel %vm3220, %v4403, %v4402
    %v4405 = vperm.slane %v4032, %v3222
    %v4406 = vsel %vm3224, %v4405, %v4404
    %v4407 = vperm.slane %v4035, %v3226
    %v4408 = vsel %vm3228, %v4407, %v4406
    %v4409 = vperm.slane %v4038, %v3230
    %v4410 = vsel %vm3232, %v4409, %v4408
    %v4411 = vperm.slane %v4041, %v3234
    %v4412 = vsel %vm3236, %v4411, %v4410
    %v4413 = vperm.slane %v4044, %v3238
    %v4414 = vsel %vm3240, %v4413, %v4412
    %v4415 = vperm.slane %v4047, %v3242
    %v4416 = vsel %vm3244, %v4415, %v4414
    %v4417 = vperm.slane %v4050, %v3246
    %v4418 = vsel %vm3248, %v4417, %v4416
    %v4419 = vperm.slane %v4053, %v3250
    %v4420 = vsel %vm3252, %v4419, %v4418
    %v4421 = vperm.slane %v4056, %v799
    %v4422 = vperm.slane %v4059, %v3194
    %v4423 = vsel %vm3196, %v4422, %v4421
    %v4424 = vperm.slane %v4062, %v3198
    %v4425 = vsel %vm3200, %v4424, %v4423
    %v4426 = vperm.slane %v4065, %v3202
    %v4427 = vsel %vm3204, %v4426, %v4425
    %v4428 = vperm.slane %v4068, %v3206
    %v4429 = vsel %vm3208, %v4428, %v4427
    %v4430 = vperm.slane %v4071, %v3210
    %v4431 = vsel %vm3212, %v4430, %v4429
    %v4432 = vperm.slane %v4074, %v3214
    %v4433 = vsel %vm3216, %v4432, %v4431
    %v4434 = vperm.slane %v4077, %v3218
    %v4435 = vsel %vm3220, %v4434, %v4433
    %v4436 = vperm.slane %v4080, %v3222
    %v4437 = vsel %vm3224, %v4436, %v4435
    %v4438 = vperm.slane %v4083, %v3226
    %v4439 = vsel %vm3228, %v4438, %v4437
    %v4440 = vperm.slane %v4086, %v3230
    %v4441 = vsel %vm3232, %v4440, %v4439
    %v4442 = vperm.slane %v4089, %v3234
    %v4443 = vsel %vm3236, %v4442, %v4441
    %v4444 = vperm.slane %v4092, %v3238
    %v4445 = vsel %vm3240, %v4444, %v4443
    %v4446 = vperm.slane %v4095, %v3242
    %v4447 = vsel %vm3244, %v4446, %v4445
    %v4448 = vperm.slane %v4098, %v3246
    %v4449 = vsel %vm3248, %v4448, %v4447
    %v4450 = vperm.slane %v4101, %v3250
    %v4451 = vsel %vm3252, %v4450, %v4449
    %v4452 = vperm.slane %v4104, %v799
    %v4453 = vperm.slane %v4107, %v3194
    %v4454 = vsel %vm3196, %v4453, %v4452
    %v4455 = vperm.slane %v4110, %v3198
    %v4456 = vsel %vm3200, %v4455, %v4454
    %v4457 = vperm.slane %v4113, %v3202
    %v4458 = vsel %vm3204, %v4457, %v4456
    %v4459 = vperm.slane %v4116, %v3206
    %v4460 = vsel %vm3208, %v4459, %v4458
    %v4461 = vperm.slane %v4119, %v3210
    %v4462 = vsel %vm3212, %v4461, %v4460
    %v4463 = vperm.slane %v4122, %v3214
    %v4464 = vsel %vm3216, %v4463, %v4462
    %v4465 = vperm.slane %v4125, %v3218
    %v4466 = vsel %vm3220, %v4465, %v4464
    %v4467 = vperm.slane %v4128, %v3222
    %v4468 = vsel %vm3224, %v4467, %v4466
    %v4469 = vperm.slane %v4131, %v3226
    %v4470 = vsel %vm3228, %v4469, %v4468
    %v4471 = vperm.slane %v4134, %v3230
    %v4472 = vsel %vm3232, %v4471, %v4470
    %v4473 = vperm.slane %v4137, %v3234
    %v4474 = vsel %vm3236, %v4473, %v4472
    %v4475 = vperm.slane %v4140, %v3238
    %v4476 = vsel %vm3240, %v4475, %v4474
    %v4477 = vperm.slane %v4143, %v3242
    %v4478 = vsel %vm3244, %v4477, %v4476
    %v4479 = vperm.slane %v4146, %v3246
    %v4480 = vsel %vm3248, %v4479, %v4478
    %v4481 = vperm.slane %v4149, %v3250
    %v4482 = vsel %vm3252, %v4481, %v4480
    %v4483 = vperm.slane %v4152, %v799
    %v4484 = vperm.slane %v4155, %v3194
    %v4485 = vsel %vm3196, %v4484, %v4483
    %v4486 = vperm.slane %v4158, %v3198
    %v4487 = vsel %vm3200, %v4486, %v4485
    %v4488 = vperm.slane %v4161, %v3202
    %v4489 = vsel %vm3204, %v4488, %v4487
    %v4490 = vperm.slane %v4164, %v3206
    %v4491 = vsel %vm3208, %v4490, %v4489
    %v4492 = vperm.slane %v4167, %v3210
    %v4493 = vsel %vm3212, %v4492, %v4491
    %v4494 = vperm.slane %v4170, %v3214
    %v4495 = vsel %vm3216, %v4494, %v4493
    %v4496 = vperm.slane %v4173, %v3218
    %v4497 = vsel %vm3220, %v4496, %v4495
    %v4498 = vperm.slane %v4176, %v3222
    %v4499 = vsel %vm3224, %v4498, %v4497
    %v4500 = vperm.slane %v4179, %v3226
    %v4501 = vsel %vm3228, %v4500, %v4499
    %v4502 = vperm.slane %v4182, %v3230
    %v4503 = vsel %vm3232, %v4502, %v4501
    %v4504 = vperm.slane %v4185, %v3234
    %v4505 = vsel %vm3236, %v4504, %v4503
    %v4506 = vperm.slane %v4188, %v3238
    %v4507 = vsel %vm3240, %v4506, %v4505
    %v4508 = vperm.slane %v4191, %v3242
    %v4509 = vsel %vm3244, %v4508, %v4507
    %v4510 = vperm.slane %v4194, %v3246
    %v4511 = vsel %vm3248, %v4510, %v4509
    %v4512 = vperm.slane %v4197, %v3250
    %v4513 = vsel %vm3252, %v4512, %v4511
    %v4514 = vperm.slane %v4200, %v799
    %v4515 = vperm.slane %v4203, %v3194
    %v4516 = vsel %vm3196, %v4515, %v4514
    %v4517 = vperm.slane %v4206, %v3198
    %v4518 = vsel %vm3200, %v4517, %v4516
    %v4519 = vperm.slane %v4209, %v3202
    %v4520 = vsel %vm3204, %v4519, %v4518
    %v4521 = vperm.slane %v4212, %v3206
    %v4522 = vsel %vm3208, %v4521, %v4520
    %v4523 = vperm.slane %v4215, %v3210
    %v4524 = vsel %vm3212, %v4523, %v4522
    %v4525 = vperm.slane %v4218, %v3214
    %v4526 = vsel %vm3216, %v4525, %v4524
    %v4527 = vperm.slane %v4221, %v3218
    %v4528 = vsel %vm3220, %v4527, %v4526
    %v4529 = vperm.slane %v4224, %v3222
    %v4530 = vsel %vm3224, %v4529, %v4528
    %v4531 = vperm.slane %v4227, %v3226
    %v4532 = vsel %vm3228, %v4531, %v4530
    %v4533 = vperm.slane %v4230, %v3230
    %v4534 = vsel %vm3232, %v4533, %v4532
    %v4535 = vperm.slane %v4233, %v3234
    %v4536 = vsel %vm3236, %v4535, %v4534
    %v4537 = vperm.slane %v4236, %v3238
    %v4538 = vsel %vm3240, %v4537, %v4536
    %v4539 = vperm.slane %v4239, %v3242
    %v4540 = vsel %vm3244, %v4539, %v4538
    %v4541 = vperm.slane %v4242, %v3246
    %v4542 = vsel %vm3248, %v4541, %v4540
    %v4543 = vperm.slane %v4245, %v3250
    %v4544 = vsel %vm3252, %v4543, %v4542
    %v4545 = vperm.slane %v4248, %v799
    %v4546 = vperm.slane %v4251, %v3194
    %v4547 = vsel %vm3196, %v4546, %v4545
    %v4548 = vperm.slane %v4254, %v3198
    %v4549 = vsel %vm3200, %v4548, %v4547
    %v4550 = vperm.slane %v4257, %v3202
    %v4551 = vsel %vm3204, %v4550, %v4549
    %v4552 = vperm.slane %v4260, %v3206
    %v4553 = vsel %vm3208, %v4552, %v4551
    %v4554 = vperm.slane %v4263, %v3210
    %v4555 = vsel %vm3212, %v4554, %v4553
    %v4556 = vperm.slane %v4266, %v3214
    %v4557 = vsel %vm3216, %v4556, %v4555
    %v4558 = vperm.slane %v4269, %v3218
    %v4559 = vsel %vm3220, %v4558, %v4557
    %v4560 = vperm.slane %v4272, %v3222
    %v4561 = vsel %vm3224, %v4560, %v4559
    %v4562 = vperm.slane %v4275, %v3226
    %v4563 = vsel %vm3228, %v4562, %v4561
    %v4564 = vperm.slane %v4278, %v3230
    %v4565 = vsel %vm3232, %v4564, %v4563
    %v4566 = vperm.slane %v4281, %v3234
    %v4567 = vsel %vm3236, %v4566, %v4565
    %v4568 = vperm.slane %v4284, %v3238
    %v4569 = vsel %vm3240, %v4568, %v4567
    %v4570 = vperm.slane %v4287, %v3242
    %v4571 = vsel %vm3244, %v4570, %v4569
    %v4572 = vperm.slane %v4290, %v3246
    %v4573 = vsel %vm3248, %v4572, %v4571
    %v4574 = vperm.slane %v4293, %v3250
    %v4575 = vsel %vm3252, %v4574, %v4573
    %v4576 = vperm.slane %v4296, %v799
    %v4577 = vperm.slane %v4299, %v3194
    %v4578 = vsel %vm3196, %v4577, %v4576
    %v4579 = vperm.slane %v4302, %v3198
    %v4580 = vsel %vm3200, %v4579, %v4578
    %v4581 = vperm.slane %v4305, %v3202
    %v4582 = vsel %vm3204, %v4581, %v4580
    %v4583 = vperm.slane %v4308, %v3206
    %v4584 = vsel %vm3208, %v4583, %v4582
    %v4585 = vperm.slane %v4311, %v3210
    %v4586 = vsel %vm3212, %v4585, %v4584
    %v4587 = vperm.slane %v4314, %v3214
    %v4588 = vsel %vm3216, %v4587, %v4586
    %v4589 = vperm.slane %v4317, %v3218
    %v4590 = vsel %vm3220, %v4589, %v4588
    %v4591 = vperm.slane %v4320, %v3222
    %v4592 = vsel %vm3224, %v4591, %v4590
    %v4593 = vperm.slane %v4323, %v3226
    %v4594 = vsel %vm3228, %v4593, %v4592
    %v4595 = vperm.slane %v4326, %v3230
    %v4596 = vsel %vm3232, %v4595, %v4594
    %v4597 = vperm.slane %v4329, %v3234
    %v4598 = vsel %vm3236, %v4597, %v4596
    %v4599 = vperm.slane %v4332, %v3238
    %v4600 = vsel %vm3240, %v4599, %v4598
    %v4601 = vperm.slane %v4335, %v3242
    %v4602 = vsel %vm3244, %v4601, %v4600
    %v4603 = vperm.slane %v4338, %v3246
    %v4604 = vsel %vm3248, %v4603, %v4602
    %v4605 = vperm.slane %v4341, %v3250
    %v4606 = vsel %vm3252, %v4605, %v4604
    %v4607 = vperm.slane %v4344, %v799
    %v4608 = vperm.slane %v4347, %v3194
    %v4609 = vsel %vm3196, %v4608, %v4607
    %v4610 = vperm.slane %v4350, %v3198
    %v4611 = vsel %vm3200, %v4610, %v4609
    %v4612 = vperm.slane %v4353, %v3202
    %v4613 = vsel %vm3204, %v4612, %v4611
    %v4614 = vperm.slane %v4356, %v3206
    %v4615 = vsel %vm3208, %v4614, %v4613
    %v4616 = vperm.slane %v4359, %v3210
    %v4617 = vsel %vm3212, %v4616, %v4615
    %v4618 = vperm.slane %v4362, %v3214
    %v4619 = vsel %vm3216, %v4618, %v4617
    %v4620 = vperm.slane %v4365, %v3218
    %v4621 = vsel %vm3220, %v4620, %v4619
    %v4622 = vperm.slane %v4368, %v3222
    %v4623 = vsel %vm3224, %v4622, %v4621
    %v4624 = vperm.slane %v4371, %v3226
    %v4625 = vsel %vm3228, %v4624, %v4623
    %v4626 = vperm.slane %v4374, %v3230
    %v4627 = vsel %vm3232, %v4626, %v4625
    %v4628 = vperm.slane %v4377, %v3234
    %v4629 = vsel %vm3236, %v4628, %v4627
    %v4630 = vperm.slane %v4380, %v3238
    %v4631 = vsel %vm3240, %v4630, %v4629
    %v4632 = vperm.slane %v4383, %v3242
    %v4633 = vsel %vm3244, %v4632, %v4631
    %v4634 = vperm.slane %v4386, %v3246
    %v4635 = vsel %vm3248, %v4634, %v4633
    %v4636 = vperm.slane %v4389, %v3250
    %v4637 = vsel %vm3252, %v4636, %v4635
    %v4638 = vsel %vm1011, %v4482, %v4420
    %v4639 = vsel %vm1014, %v4544, %v4638
    %v4640 = vsel %vm1017, %v4606, %v4639
    %v4641 = vsel %vm1011, %v4513, %v4451
    %v4642 = vsel %vm1014, %v4575, %v4641
    %v4643 = vsel %vm1017, %v4637, %v4642
    %v4646 = vsel %vm3479, %v4640, 0.0
    %v4647 = vsel %vm3479, %v4643, 0.0
    %v4648 = vadd.f32 %v4646, %v4647
    %4649 = vadd.xlane.f32.xlu0 %v4648
    %v4650 = vpop.xlane.xlu0 %4649
    %v4651 = vrcp.pop %v4650
    %v4653 = vperm.slane %v4651, 0
    %v4654 = vperm.slane %v4651, 1
    %v4655 = vperm.slane %v4651, 2
    %v4656 = vperm.slane %v4651, 3
    %v4661 = vmul.f32 %v3623, %v4653
    %v4662 = vmul.f32 %v3625, %v4653
    %v4663 = vmul.f32 %v3627, %v4653
    %v4664 = vmul.f32 %v3629, %v4653
    %v4665 = vmul.f32 %v3631, %v4653
    %v4666 = vmul.f32 %v3633, %v4653
    %v4667 = vmul.f32 %v3635, %v4653
    %v4668 = vmul.f32 %v3637, %v4653
    %v4669 = vmul.f32 %v3639, %v4653
    %v4670 = vmul.f32 %v3641, %v4653
    %v4671 = vmul.f32 %v3643, %v4653
    %v4672 = vmul.f32 %v3645, %v4653
    %v4673 = vmul.f32 %v3647, %v4653
    %v4674 = vmul.f32 %v3649, %v4653
    %v4675 = vmul.f32 %v3651, %v4653
    %v4676 = vmul.f32 %v3653, %v4653
    %v4677 = vmul.f32 %v3655, %v4653
    %v4678 = vmul.f32 %v3657, %v4653
    %v4679 = vmul.f32 %v3659, %v4653
    %v4680 = vmul.f32 %v3661, %v4653
    %v4681 = vmul.f32 %v3663, %v4653
    %v4682 = vmul.f32 %v3665, %v4653
    %v4683 = vmul.f32 %v3667, %v4653
    %v4684 = vmul.f32 %v3669, %v4653
    %v4685 = vmul.f32 %v3671, %v4653
    %v4686 = vmul.f32 %v3673, %v4653
    %v4687 = vmul.f32 %v3675, %v4653
    %v4688 = vmul.f32 %v3677, %v4653
    %v4689 = vmul.f32 %v3679, %v4653
    %v4690 = vmul.f32 %v3681, %v4653
    %v4691 = vmul.f32 %v3683, %v4653
    %v4692 = vmul.f32 %v3685, %v4653
    %v4693 = vmul.f32 %v3687, %v4654
    %v4694 = vmul.f32 %v3689, %v4654
    %v4695 = vmul.f32 %v3691, %v4654
    %v4696 = vmul.f32 %v3693, %v4654
    %v4697 = vmul.f32 %v3695, %v4654
    %v4698 = vmul.f32 %v3697, %v4654
    %v4699 = vmul.f32 %v3699, %v4654
    %v4700 = vmul.f32 %v3701, %v4654
    %v4701 = vmul.f32 %v3703, %v4654
    %v4702 = vmul.f32 %v3705, %v4654
    %v4703 = vmul.f32 %v3707, %v4654
    %v4704 = vmul.f32 %v3709, %v4654
    %v4705 = vmul.f32 %v3711, %v4654
    %v4706 = vmul.f32 %v3713, %v4654
    %v4707 = vmul.f32 %v3715, %v4654
    %v4708 = vmul.f32 %v3717, %v4654
    %v4709 = vmul.f32 %v3719, %v4654
    %v4710 = vmul.f32 %v3721, %v4654
    %v4711 = vmul.f32 %v3723, %v4654
    %v4712 = vmul.f32 %v3725, %v4654
    %v4713 = vmul.f32 %v3727, %v4654
    %v4714 = vmul.f32 %v3729, %v4654
    %v4715 = vmul.f32 %v3731, %v4654
    %v4716 = vmul.f32 %v3733, %v4654
    %v4717 = vmul.f32 %v3735, %v4654
    %v4718 = vmul.f32 %v3737, %v4654
    %v4719 = vmul.f32 %v3739, %v4654
    %v4720 = vmul.f32 %v3741, %v4654
    %v4721 = vmul.f32 %v3743, %v4654
    %v4722 = vmul.f32 %v3745, %v4654
    %v4723 = vmul.f32 %v3747, %v4654
    %v4724 = vmul.f32 %v3749, %v4654
    %v4725 = vmul.f32 %v3751, %v4655
    %v4726 = vmul.f32 %v3753, %v4655
    %v4727 = vmul.f32 %v3755, %v4655
    %v4728 = vmul.f32 %v3757, %v4655
    %v4729 = vmul.f32 %v3759, %v4655
    %v4730 = vmul.f32 %v3761, %v4655
    %v4731 = vmul.f32 %v3763, %v4655
    %v4732 = vmul.f32 %v3765, %v4655
    %v4733 = vmul.f32 %v3767, %v4655
    %v4734 = vmul.f32 %v3769, %v4655
    %v4735 = vmul.f32 %v3771, %v4655
    %v4736 = vmul.f32 %v3773, %v4655
    %v4737 = vmul.f32 %v3775, %v4655
    %v4738 = vmul.f32 %v3777, %v4655
    %v4739 = vmul.f32 %v3779, %v4655
    %v4740 = vmul.f32 %v3781, %v4655
    %v4741 = vmul.f32 %v3783, %v4655
    %v4742 = vmul.f32 %v3785, %v4655
    %v4743 = vmul.f32 %v3787, %v4655
    %v4744 = vmul.f32 %v3789, %v4655
    %v4745 = vmul.f32 %v3791, %v4655
    %v4746 = vmul.f32 %v3793, %v4655
    %v4747 = vmul.f32 %v3795, %v4655
    %v4748 = vmul.f32 %v3797, %v4655
    %v4749 = vmul.f32 %v3799, %v4655
    %v4750 = vmul.f32 %v3801, %v4655
    %v4751 = vmul.f32 %v3803, %v4655
    %v4752 = vmul.f32 %v3805, %v4655
    %v4753 = vmul.f32 %v3807, %v4655
    %v4754 = vmul.f32 %v3809, %v4655
    %v4755 = vmul.f32 %v3811, %v4655
    %v4756 = vmul.f32 %v3813, %v4655
    %v4757 = vmul.f32 %v3815, %v4656
    %v4758 = vmul.f32 %v3817, %v4656
    %v4759 = vmul.f32 %v3819, %v4656
    %v4760 = vmul.f32 %v3821, %v4656
    %v4761 = vmul.f32 %v3823, %v4656
    %v4762 = vmul.f32 %v3825, %v4656
    %v4763 = vmul.f32 %v3827, %v4656
    %v4764 = vmul.f32 %v3829, %v4656
    %v4765 = vmul.f32 %v3831, %v4656
    %v4766 = vmul.f32 %v3833, %v4656
    %v4767 = vmul.f32 %v3835, %v4656
    %v4768 = vmul.f32 %v3837, %v4656
    %v4769 = vmul.f32 %v3839, %v4656
    %v4770 = vmul.f32 %v3841, %v4656
    %v4771 = vmul.f32 %v3843, %v4656
    %v4772 = vmul.f32 %v3845, %v4656
    %v4773 = vmul.f32 %v3847, %v4656
    %v4774 = vmul.f32 %v3849, %v4656
    %v4775 = vmul.f32 %v3851, %v4656
    %v4776 = vmul.f32 %v3853, %v4656
    %v4777 = vmul.f32 %v3855, %v4656
    %v4778 = vmul.f32 %v3857, %v4656
    %v4779 = vmul.f32 %v3859, %v4656
    %v4780 = vmul.f32 %v3861, %v4656
    %v4781 = vmul.f32 %v3863, %v4656
    %v4782 = vmul.f32 %v3865, %v4656
    %v4783 = vmul.f32 %v3867, %v4656
    %v4784 = vmul.f32 %v3869, %v4656
    %v4785 = vmul.f32 %v3871, %v4656
    %v4786 = vmul.f32 %v3873, %v4656
    %v4787 = vmul.f32 %v3875, %v4656
    %v4788 = vmul.f32 %v3877, %v4656
    %4790 = vset.pattern.permute.xlu0 0
    %4791 = vperm.xlu0 %4790, %v4661
    %v4792 = vpop.permute.xlu0 %4791
    %4795 = vset.pattern.permute.xlu0 0
    %4796 = vperm.xlu0 %4795, %v4662
    %v4797 = vpop.permute.xlu0 %4796
    %4800 = vset.pattern.permute.xlu0 0
    %4801 = vperm.xlu0 %4800, %v4663
    %v4802 = vpop.permute.xlu0 %4801
    %4805 = vset.pattern.permute.xlu0 0
    %4806 = vperm.xlu0 %4805, %v4664
    %v4807 = vpop.permute.xlu0 %4806
    %4810 = vset.pattern.permute.xlu0 0
    %4811 = vperm.xlu0 %4810, %v4665
    %v4812 = vpop.permute.xlu0 %4811
    %4815 = vset.pattern.permute.xlu0 0
    %4816 = vperm.xlu0 %4815, %v4666
    %v4817 = vpop.permute.xlu0 %4816
    %4820 = vset.pattern.permute.xlu0 0
    %4821 = vperm.xlu0 %4820, %v4667
    %v4822 = vpop.permute.xlu0 %4821
    %4825 = vset.pattern.permute.xlu0 0
    %4826 = vperm.xlu0 %4825, %v4668
    %v4827 = vpop.permute.xlu0 %4826
    %4830 = vset.pattern.permute.xlu0 0
    %4831 = vperm.xlu0 %4830, %v4669
    %v4832 = vpop.permute.xlu0 %4831
    %4835 = vset.pattern.permute.xlu0 0
    %4836 = vperm.xlu0 %4835, %v4670
    %v4837 = vpop.permute.xlu0 %4836
    %4840 = vset.pattern.permute.xlu0 0
    %4841 = vperm.xlu0 %4840, %v4671
    %v4842 = vpop.permute.xlu0 %4841
    %4845 = vset.pattern.permute.xlu0 0
    %4846 = vperm.xlu0 %4845, %v4672
    %v4847 = vpop.permute.xlu0 %4846
    %4850 = vset.pattern.permute.xlu0 0
    %4851 = vperm.xlu0 %4850, %v4673
    %v4852 = vpop.permute.xlu0 %4851
    %4855 = vset.pattern.permute.xlu0 0
    %4856 = vperm.xlu0 %4855, %v4674
    %v4857 = vpop.permute.xlu0 %4856
    %4860 = vset.pattern.permute.xlu0 0
    %4861 = vperm.xlu0 %4860, %v4675
    %v4862 = vpop.permute.xlu0 %4861
    %4865 = vset.pattern.permute.xlu0 0
    %4866 = vperm.xlu0 %4865, %v4676
    %v4867 = vpop.permute.xlu0 %4866
    %4870 = vset.pattern.permute.xlu0 0
    %4871 = vperm.xlu0 %4870, %v4677
    %v4872 = vpop.permute.xlu0 %4871
    %4875 = vset.pattern.permute.xlu0 0
    %4876 = vperm.xlu0 %4875, %v4678
    %v4877 = vpop.permute.xlu0 %4876
    %4880 = vset.pattern.permute.xlu0 0
    %4881 = vperm.xlu0 %4880, %v4679
    %v4882 = vpop.permute.xlu0 %4881
    %4885 = vset.pattern.permute.xlu0 0
    %4886 = vperm.xlu0 %4885, %v4680
    %v4887 = vpop.permute.xlu0 %4886
    %4890 = vset.pattern.permute.xlu0 0
    %4891 = vperm.xlu0 %4890, %v4681
    %v4892 = vpop.permute.xlu0 %4891
    %4895 = vset.pattern.permute.xlu0 0
    %4896 = vperm.xlu0 %4895, %v4682
    %v4897 = vpop.permute.xlu0 %4896
    %4900 = vset.pattern.permute.xlu0 0
    %4901 = vperm.xlu0 %4900, %v4683
    %v4902 = vpop.permute.xlu0 %4901
    %4905 = vset.pattern.permute.xlu0 0
    %4906 = vperm.xlu0 %4905, %v4684
    %v4907 = vpop.permute.xlu0 %4906
    %4910 = vset.pattern.permute.xlu0 0
    %4911 = vperm.xlu0 %4910, %v4685
    %v4912 = vpop.permute.xlu0 %4911
    %4915 = vset.pattern.permute.xlu0 0
    %4916 = vperm.xlu0 %4915, %v4686
    %v4917 = vpop.permute.xlu0 %4916
    %4920 = vset.pattern.permute.xlu0 0
    %4921 = vperm.xlu0 %4920, %v4687
    %v4922 = vpop.permute.xlu0 %4921
    %4925 = vset.pattern.permute.xlu0 0
    %4926 = vperm.xlu0 %4925, %v4688
    %v4927 = vpop.permute.xlu0 %4926
    %4930 = vset.pattern.permute.xlu0 0
    %4931 = vperm.xlu0 %4930, %v4689
    %v4932 = vpop.permute.xlu0 %4931
    %4935 = vset.pattern.permute.xlu0 0
    %4936 = vperm.xlu0 %4935, %v4690
    %v4937 = vpop.permute.xlu0 %4936
    %4940 = vset.pattern.permute.xlu0 0
    %4941 = vperm.xlu0 %4940, %v4691
    %v4942 = vpop.permute.xlu0 %4941
    %4945 = vset.pattern.permute.xlu0 0
    %4946 = vperm.xlu0 %4945, %v4692
    %v4947 = vpop.permute.xlu0 %4946
    %4950 = vset.pattern.permute.xlu0 0
    %4951 = vperm.xlu0 %4950, %v4693
    %v4952 = vpop.permute.xlu0 %4951
    %4955 = vset.pattern.permute.xlu0 0
    %4956 = vperm.xlu0 %4955, %v4694
    %v4957 = vpop.permute.xlu0 %4956
    %4960 = vset.pattern.permute.xlu0 0
    %4961 = vperm.xlu0 %4960, %v4695
    %v4962 = vpop.permute.xlu0 %4961
    %4965 = vset.pattern.permute.xlu0 0
    %4966 = vperm.xlu0 %4965, %v4696
    %v4967 = vpop.permute.xlu0 %4966
    %4970 = vset.pattern.permute.xlu0 0
    %4971 = vperm.xlu0 %4970, %v4697
    %v4972 = vpop.permute.xlu0 %4971
    %4975 = vset.pattern.permute.xlu0 0
    %4976 = vperm.xlu0 %4975, %v4698
    %v4977 = vpop.permute.xlu0 %4976
    %4980 = vset.pattern.permute.xlu0 0
    %4981 = vperm.xlu0 %4980, %v4699
    %v4982 = vpop.permute.xlu0 %4981
    %4985 = vset.pattern.permute.xlu0 0
    %4986 = vperm.xlu0 %4985, %v4700
    %v4987 = vpop.permute.xlu0 %4986
    %4990 = vset.pattern.permute.xlu0 0
    %4991 = vperm.xlu0 %4990, %v4701
    %v4992 = vpop.permute.xlu0 %4991
    %4995 = vset.pattern.permute.xlu0 0
    %4996 = vperm.xlu0 %4995, %v4702
    %v4997 = vpop.permute.xlu0 %4996
    %5000 = vset.pattern.permute.xlu0 0
    %5001 = vperm.xlu0 %5000, %v4703
    %v5002 = vpop.permute.xlu0 %5001
    %5005 = vset.pattern.permute.xlu0 0
    %5006 = vperm.xlu0 %5005, %v4704
    %v5007 = vpop.permute.xlu0 %5006
    %5010 = vset.pattern.permute.xlu0 0
    %5011 = vperm.xlu0 %5010, %v4705
    %v5012 = vpop.permute.xlu0 %5011
    %5015 = vset.pattern.permute.xlu0 0
    %5016 = vperm.xlu0 %5015, %v4706
    %v5017 = vpop.permute.xlu0 %5016
    %5020 = vset.pattern.permute.xlu0 0
    %5021 = vperm.xlu0 %5020, %v4707
    %v5022 = vpop.permute.xlu0 %5021
    %5025 = vset.pattern.permute.xlu0 0
    %5026 = vperm.xlu0 %5025, %v4708
    %v5027 = vpop.permute.xlu0 %5026
    %5030 = vset.pattern.permute.xlu0 0
    %5031 = vperm.xlu0 %5030, %v4709
    %v5032 = vpop.permute.xlu0 %5031
    %5035 = vset.pattern.permute.xlu0 0
    %5036 = vperm.xlu0 %5035, %v4710
    %v5037 = vpop.permute.xlu0 %5036
    %5040 = vset.pattern.permute.xlu0 0
    %5041 = vperm.xlu0 %5040, %v4711
    %v5042 = vpop.permute.xlu0 %5041
    %5045 = vset.pattern.permute.xlu0 0
    %5046 = vperm.xlu0 %5045, %v4712
    %v5047 = vpop.permute.xlu0 %5046
    %5050 = vset.pattern.permute.xlu0 0
    %5051 = vperm.xlu0 %5050, %v4713
    %v5052 = vpop.permute.xlu0 %5051
    %5055 = vset.pattern.permute.xlu0 0
    %5056 = vperm.xlu0 %5055, %v4714
    %v5057 = vpop.permute.xlu0 %5056
    %5060 = vset.pattern.permute.xlu0 0
    %5061 = vperm.xlu0 %5060, %v4715
    %v5062 = vpop.permute.xlu0 %5061
    %5065 = vset.pattern.permute.xlu0 0
    %5066 = vperm.xlu0 %5065, %v4716
    %v5067 = vpop.permute.xlu0 %5066
    %5070 = vset.pattern.permute.xlu0 0
    %5071 = vperm.xlu0 %5070, %v4717
    %v5072 = vpop.permute.xlu0 %5071
    %5075 = vset.pattern.permute.xlu0 0
    %5076 = vperm.xlu0 %5075, %v4718
    %v5077 = vpop.permute.xlu0 %5076
    %5080 = vset.pattern.permute.xlu0 0
    %5081 = vperm.xlu0 %5080, %v4719
    %v5082 = vpop.permute.xlu0 %5081
    %5085 = vset.pattern.permute.xlu0 0
    %5086 = vperm.xlu0 %5085, %v4720
    %v5087 = vpop.permute.xlu0 %5086
    %5090 = vset.pattern.permute.xlu0 0
    %5091 = vperm.xlu0 %5090, %v4721
    %v5092 = vpop.permute.xlu0 %5091
    %5095 = vset.pattern.permute.xlu0 0
    %5096 = vperm.xlu0 %5095, %v4722
    %v5097 = vpop.permute.xlu0 %5096
    %5100 = vset.pattern.permute.xlu0 0
    %5101 = vperm.xlu0 %5100, %v4723
    %v5102 = vpop.permute.xlu0 %5101
    %5105 = vset.pattern.permute.xlu0 0
    %5106 = vperm.xlu0 %5105, %v4724
    %v5107 = vpop.permute.xlu0 %5106
    %5110 = vset.pattern.permute.xlu0 0
    %5111 = vperm.xlu0 %5110, %v4725
    %v5112 = vpop.permute.xlu0 %5111
    %5115 = vset.pattern.permute.xlu0 0
    %5116 = vperm.xlu0 %5115, %v4726
    %v5117 = vpop.permute.xlu0 %5116
    %5120 = vset.pattern.permute.xlu0 0
    %5121 = vperm.xlu0 %5120, %v4727
    %v5122 = vpop.permute.xlu0 %5121
    %5125 = vset.pattern.permute.xlu0 0
    %5126 = vperm.xlu0 %5125, %v4728
    %v5127 = vpop.permute.xlu0 %5126
    %5130 = vset.pattern.permute.xlu0 0
    %5131 = vperm.xlu0 %5130, %v4729
    %v5132 = vpop.permute.xlu0 %5131
    %5135 = vset.pattern.permute.xlu0 0
    %5136 = vperm.xlu0 %5135, %v4730
    %v5137 = vpop.permute.xlu0 %5136
    %5140 = vset.pattern.permute.xlu0 0
    %5141 = vperm.xlu0 %5140, %v4731
    %v5142 = vpop.permute.xlu0 %5141
    %5145 = vset.pattern.permute.xlu0 0
    %5146 = vperm.xlu0 %5145, %v4732
    %v5147 = vpop.permute.xlu0 %5146
    %5150 = vset.pattern.permute.xlu0 0
    %5151 = vperm.xlu0 %5150, %v4733
    %v5152 = vpop.permute.xlu0 %5151
    %5155 = vset.pattern.permute.xlu0 0
    %5156 = vperm.xlu0 %5155, %v4734
    %v5157 = vpop.permute.xlu0 %5156
    %5160 = vset.pattern.permute.xlu0 0
    %5161 = vperm.xlu0 %5160, %v4735
    %v5162 = vpop.permute.xlu0 %5161
    %5165 = vset.pattern.permute.xlu0 0
    %5166 = vperm.xlu0 %5165, %v4736
    %v5167 = vpop.permute.xlu0 %5166
    %5170 = vset.pattern.permute.xlu0 0
    %5171 = vperm.xlu0 %5170, %v4737
    %v5172 = vpop.permute.xlu0 %5171
    %5175 = vset.pattern.permute.xlu0 0
    %5176 = vperm.xlu0 %5175, %v4738
    %v5177 = vpop.permute.xlu0 %5176
    %5180 = vset.pattern.permute.xlu0 0
    %5181 = vperm.xlu0 %5180, %v4739
    %v5182 = vpop.permute.xlu0 %5181
    %5185 = vset.pattern.permute.xlu0 0
    %5186 = vperm.xlu0 %5185, %v4740
    %v5187 = vpop.permute.xlu0 %5186
    %5190 = vset.pattern.permute.xlu0 0
    %5191 = vperm.xlu0 %5190, %v4741
    %v5192 = vpop.permute.xlu0 %5191
    %5195 = vset.pattern.permute.xlu0 0
    %5196 = vperm.xlu0 %5195, %v4742
    %v5197 = vpop.permute.xlu0 %5196
    %5200 = vset.pattern.permute.xlu0 0
    %5201 = vperm.xlu0 %5200, %v4743
    %v5202 = vpop.permute.xlu0 %5201
    %5205 = vset.pattern.permute.xlu0 0
    %5206 = vperm.xlu0 %5205, %v4744
    %v5207 = vpop.permute.xlu0 %5206
    %5210 = vset.pattern.permute.xlu0 0
    %5211 = vperm.xlu0 %5210, %v4745
    %v5212 = vpop.permute.xlu0 %5211
    %5215 = vset.pattern.permute.xlu0 0
    %5216 = vperm.xlu0 %5215, %v4746
    %v5217 = vpop.permute.xlu0 %5216
    %5220 = vset.pattern.permute.xlu0 0
    %5221 = vperm.xlu0 %5220, %v4747
    %v5222 = vpop.permute.xlu0 %5221
    %5225 = vset.pattern.permute.xlu0 0
    %5226 = vperm.xlu0 %5225, %v4748
    %v5227 = vpop.permute.xlu0 %5226
    %5230 = vset.pattern.permute.xlu0 0
    %5231 = vperm.xlu0 %5230, %v4749
    %v5232 = vpop.permute.xlu0 %5231
    %5235 = vset.pattern.permute.xlu0 0
    %5236 = vperm.xlu0 %5235, %v4750
    %v5237 = vpop.permute.xlu0 %5236
    %5240 = vset.pattern.permute.xlu0 0
    %5241 = vperm.xlu0 %5240, %v4751
    %v5242 = vpop.permute.xlu0 %5241
    %5245 = vset.pattern.permute.xlu0 0
    %5246 = vperm.xlu0 %5245, %v4752
    %v5247 = vpop.permute.xlu0 %5246
    %5250 = vset.pattern.permute.xlu0 0
    %5251 = vperm.xlu0 %5250, %v4753
    %v5252 = vpop.permute.xlu0 %5251
    %5255 = vset.pattern.permute.xlu0 0
    %5256 = vperm.xlu0 %5255, %v4754
    %v5257 = vpop.permute.xlu0 %5256
    %5260 = vset.pattern.permute.xlu0 0
    %5261 = vperm.xlu0 %5260, %v4755
    %v5262 = vpop.permute.xlu0 %5261
    %5265 = vset.pattern.permute.xlu0 0
    %5266 = vperm.xlu0 %5265, %v4756
    %v5267 = vpop.permute.xlu0 %5266
    %5270 = vset.pattern.permute.xlu0 0
    %5271 = vperm.xlu0 %5270, %v4757
    %v5272 = vpop.permute.xlu0 %5271
    %5275 = vset.pattern.permute.xlu0 0
    %5276 = vperm.xlu0 %5275, %v4758
    %v5277 = vpop.permute.xlu0 %5276
    %5280 = vset.pattern.permute.xlu0 0
    %5281 = vperm.xlu0 %5280, %v4759
    %v5282 = vpop.permute.xlu0 %5281
    %5285 = vset.pattern.permute.xlu0 0
    %5286 = vperm.xlu0 %5285, %v4760
    %v5287 = vpop.permute.xlu0 %5286
    %5290 = vset.pattern.permute.xlu0 0
    %5291 = vperm.xlu0 %5290, %v4761
    %v5292 = vpop.permute.xlu0 %5291
    %5295 = vset.pattern.permute.xlu0 0
    %5296 = vperm.xlu0 %5295, %v4762
    %v5297 = vpop.permute.xlu0 %5296
    %5300 = vset.pattern.permute.xlu0 0
    %5301 = vperm.xlu0 %5300, %v4763
    %v5302 = vpop.permute.xlu0 %5301
    %5305 = vset.pattern.permute.xlu0 0
    %5306 = vperm.xlu0 %5305, %v4764
    %v5307 = vpop.permute.xlu0 %5306
    %5310 = vset.pattern.permute.xlu0 0
    %5311 = vperm.xlu0 %5310, %v4765
    %v5312 = vpop.permute.xlu0 %5311
    %5315 = vset.pattern.permute.xlu0 0
    %5316 = vperm.xlu0 %5315, %v4766
    %v5317 = vpop.permute.xlu0 %5316
    %5320 = vset.pattern.permute.xlu0 0
    %5321 = vperm.xlu0 %5320, %v4767
    %v5322 = vpop.permute.xlu0 %5321
    %5325 = vset.pattern.permute.xlu0 0
    %5326 = vperm.xlu0 %5325, %v4768
    %v5327 = vpop.permute.xlu0 %5326
    %5330 = vset.pattern.permute.xlu0 0
    %5331 = vperm.xlu0 %5330, %v4769
    %v5332 = vpop.permute.xlu0 %5331
    %5335 = vset.pattern.permute.xlu0 0
    %5336 = vperm.xlu0 %5335, %v4770
    %v5337 = vpop.permute.xlu0 %5336
    %5340 = vset.pattern.permute.xlu0 0
    %5341 = vperm.xlu0 %5340, %v4771
    %v5342 = vpop.permute.xlu0 %5341
    %5345 = vset.pattern.permute.xlu0 0
    %5346 = vperm.xlu0 %5345, %v4772
    %v5347 = vpop.permute.xlu0 %5346
    %5350 = vset.pattern.permute.xlu0 0
    %5351 = vperm.xlu0 %5350, %v4773
    %v5352 = vpop.permute.xlu0 %5351
    %5355 = vset.pattern.permute.xlu0 0
    %5356 = vperm.xlu0 %5355, %v4774
    %v5357 = vpop.permute.xlu0 %5356
    %5360 = vset.pattern.permute.xlu0 0
    %5361 = vperm.xlu0 %5360, %v4775
    %v5362 = vpop.permute.xlu0 %5361
    %5365 = vset.pattern.permute.xlu0 0
    %5366 = vperm.xlu0 %5365, %v4776
    %v5367 = vpop.permute.xlu0 %5366
    %5370 = vset.pattern.permute.xlu0 0
    %5371 = vperm.xlu0 %5370, %v4777
    %v5372 = vpop.permute.xlu0 %5371
    %5375 = vset.pattern.permute.xlu0 0
    %5376 = vperm.xlu0 %5375, %v4778
    %v5377 = vpop.permute.xlu0 %5376
    %5380 = vset.pattern.permute.xlu0 0
    %5381 = vperm.xlu0 %5380, %v4779
    %v5382 = vpop.permute.xlu0 %5381
    %5385 = vset.pattern.permute.xlu0 0
    %5386 = vperm.xlu0 %5385, %v4780
    %v5387 = vpop.permute.xlu0 %5386
    %5390 = vset.pattern.permute.xlu0 0
    %5391 = vperm.xlu0 %5390, %v4781
    %v5392 = vpop.permute.xlu0 %5391
    %5395 = vset.pattern.permute.xlu0 0
    %5396 = vperm.xlu0 %5395, %v4782
    %v5397 = vpop.permute.xlu0 %5396
    %5400 = vset.pattern.permute.xlu0 0
    %5401 = vperm.xlu0 %5400, %v4783
    %v5402 = vpop.permute.xlu0 %5401
    %5405 = vset.pattern.permute.xlu0 0
    %5406 = vperm.xlu0 %5405, %v4784
    %v5407 = vpop.permute.xlu0 %5406
    %5410 = vset.pattern.permute.xlu0 0
    %5411 = vperm.xlu0 %5410, %v4785
    %v5412 = vpop.permute.xlu0 %5411
    %5415 = vset.pattern.permute.xlu0 0
    %5416 = vperm.xlu0 %5415, %v4786
    %v5417 = vpop.permute.xlu0 %5416
    %5420 = vset.pattern.permute.xlu0 0
    %5421 = vperm.xlu0 %5420, %v4787
    %v5422 = vpop.permute.xlu0 %5421
    %5425 = vset.pattern.permute.xlu0 0
    %5426 = vperm.xlu0 %5425, %v4788
    %v5427 = vpop.permute.xlu0 %5426
    %v5429 = vmul.f32 %v4792, %v42
    %v5430 = vmul.f32 %v4792, %v43
    %v5431 = vmul.f32 %v4797, %v44
    %v5432 = vmul.f32 %v4797, %v45
    %v5433 = vmul.f32 %v4802, %v46
    %v5434 = vmul.f32 %v4802, %v47
    %v5435 = vmul.f32 %v4807, %v48
    %v5436 = vmul.f32 %v4807, %v49
    %v5437 = vmul.f32 %v4812, %v50
    %v5438 = vmul.f32 %v4812, %v51
    %v5439 = vmul.f32 %v4817, %v52
    %v5440 = vmul.f32 %v4817, %v53
    %v5441 = vmul.f32 %v4822, %v54
    %v5442 = vmul.f32 %v4822, %v55
    %v5443 = vmul.f32 %v4827, %v56
    %v5444 = vmul.f32 %v4827, %v57
    %v5445 = vmul.f32 %v4832, %v58
    %v5446 = vmul.f32 %v4832, %v59
    %v5447 = vmul.f32 %v4837, %v60
    %v5448 = vmul.f32 %v4837, %v61
    %v5449 = vmul.f32 %v4842, %v62
    %v5450 = vmul.f32 %v4842, %v63
    %v5451 = vmul.f32 %v4847, %v64
    %v5452 = vmul.f32 %v4847, %v65
    %v5453 = vmul.f32 %v4852, %v66
    %v5454 = vmul.f32 %v4852, %v67
    %v5455 = vmul.f32 %v4857, %v68
    %v5456 = vmul.f32 %v4857, %v69
    %v5457 = vmul.f32 %v4862, %v70
    %v5458 = vmul.f32 %v4862, %v71
    %v5459 = vmul.f32 %v4867, %v72
    %v5460 = vmul.f32 %v4867, %v73
    %v5461 = vmul.f32 %v4872, %v74
    %v5462 = vmul.f32 %v4872, %v75
    %v5463 = vmul.f32 %v4877, %v76
    %v5464 = vmul.f32 %v4877, %v77
    %v5465 = vmul.f32 %v4882, %v78
    %v5466 = vmul.f32 %v4882, %v79
    %v5467 = vmul.f32 %v4887, %v80
    %v5468 = vmul.f32 %v4887, %v81
    %v5469 = vmul.f32 %v4892, %v82
    %v5470 = vmul.f32 %v4892, %v83
    %v5471 = vmul.f32 %v4897, %v84
    %v5472 = vmul.f32 %v4897, %v85
    %v5473 = vmul.f32 %v4902, %v86
    %v5474 = vmul.f32 %v4902, %v87
    %v5475 = vmul.f32 %v4907, %v88
    %v5476 = vmul.f32 %v4907, %v89
    %v5477 = vmul.f32 %v4912, %v90
    %v5478 = vmul.f32 %v4912, %v91
    %v5479 = vmul.f32 %v4917, %v92
    %v5480 = vmul.f32 %v4917, %v93
    %v5481 = vmul.f32 %v4922, %v94
    %v5482 = vmul.f32 %v4922, %v95
    %v5483 = vmul.f32 %v4927, %v96
    %v5484 = vmul.f32 %v4927, %v97
    %v5485 = vmul.f32 %v4932, %v98
    %v5486 = vmul.f32 %v4932, %v99
    %v5487 = vmul.f32 %v4937, %v100
    %v5488 = vmul.f32 %v4937, %v101
    %v5489 = vmul.f32 %v4942, %v102
    %v5490 = vmul.f32 %v4942, %v103
    %v5491 = vmul.f32 %v4947, %v104
    %v5492 = vmul.f32 %v4947, %v105
    %v5493 = vmul.f32 %v4952, %v106
    %v5494 = vmul.f32 %v4952, %v107
    %v5495 = vmul.f32 %v4957, %v108
    %v5496 = vmul.f32 %v4957, %v109
    %v5497 = vmul.f32 %v4962, %v110
    %v5498 = vmul.f32 %v4962, %v111
    %v5499 = vmul.f32 %v4967, %v112
    %v5500 = vmul.f32 %v4967, %v113
    %v5501 = vmul.f32 %v4972, %v114
    %v5502 = vmul.f32 %v4972, %v115
    %v5503 = vmul.f32 %v4977, %v116
    %v5504 = vmul.f32 %v4977, %v117
    %v5505 = vmul.f32 %v4982, %v118
    %v5506 = vmul.f32 %v4982, %v119
    %v5507 = vmul.f32 %v4987, %v120
    %v5508 = vmul.f32 %v4987, %v121
    %v5509 = vmul.f32 %v4992, %v122
    %v5510 = vmul.f32 %v4992, %v123
    %v5511 = vmul.f32 %v4997, %v124
    %v5512 = vmul.f32 %v4997, %v125
    %v5513 = vmul.f32 %v5002, %v126
    %v5514 = vmul.f32 %v5002, %v127
    %v5515 = vmul.f32 %v5007, %v128
    %v5516 = vmul.f32 %v5007, %v129
    %v5517 = vmul.f32 %v5012, %v130
    %v5518 = vmul.f32 %v5012, %v131
    %v5519 = vmul.f32 %v5017, %v132
    %v5520 = vmul.f32 %v5017, %v133
    %v5521 = vmul.f32 %v5022, %v134
    %v5522 = vmul.f32 %v5022, %v135
    %v5523 = vmul.f32 %v5027, %v136
    %v5524 = vmul.f32 %v5027, %v137
    %v5525 = vmul.f32 %v5032, %v138
    %v5526 = vmul.f32 %v5032, %v139
    %v5527 = vmul.f32 %v5037, %v140
    %v5528 = vmul.f32 %v5037, %v141
    %v5529 = vmul.f32 %v5042, %v142
    %v5530 = vmul.f32 %v5042, %v143
    %v5531 = vmul.f32 %v5047, %v144
    %v5532 = vmul.f32 %v5047, %v145
    %v5533 = vmul.f32 %v5052, %v146
    %v5534 = vmul.f32 %v5052, %v147
    %v5535 = vmul.f32 %v5057, %v148
    %v5536 = vmul.f32 %v5057, %v149
    %v5537 = vmul.f32 %v5062, %v150
    %v5538 = vmul.f32 %v5062, %v151
    %v5539 = vmul.f32 %v5067, %v152
    %v5540 = vmul.f32 %v5067, %v153
    %v5541 = vmul.f32 %v5072, %v154
    %v5542 = vmul.f32 %v5072, %v155
    %v5543 = vmul.f32 %v5077, %v156
    %v5544 = vmul.f32 %v5077, %v157
    %v5545 = vmul.f32 %v5082, %v158
    %v5546 = vmul.f32 %v5082, %v159
    %v5547 = vmul.f32 %v5087, %v160
    %v5548 = vmul.f32 %v5087, %v161
    %v5549 = vmul.f32 %v5092, %v162
    %v5550 = vmul.f32 %v5092, %v163
    %v5551 = vmul.f32 %v5097, %v164
    %v5552 = vmul.f32 %v5097, %v165
    %v5553 = vmul.f32 %v5102, %v166
    %v5554 = vmul.f32 %v5102, %v167
    %v5555 = vmul.f32 %v5107, %v168
    %v5556 = vmul.f32 %v5107, %v169
    %v5557 = vmul.f32 %v5112, %v170
    %v5558 = vmul.f32 %v5112, %v171
    %v5559 = vmul.f32 %v5117, %v172
    %v5560 = vmul.f32 %v5117, %v173
    %v5561 = vmul.f32 %v5122, %v174
    %v5562 = vmul.f32 %v5122, %v175
    %v5563 = vmul.f32 %v5127, %v176
    %v5564 = vmul.f32 %v5127, %v177
    %v5565 = vmul.f32 %v5132, %v178
    %v5566 = vmul.f32 %v5132, %v179
    %v5567 = vmul.f32 %v5137, %v180
    %v5568 = vmul.f32 %v5137, %v181
    %v5569 = vmul.f32 %v5142, %v182
    %v5570 = vmul.f32 %v5142, %v183
    %v5571 = vmul.f32 %v5147, %v184
    %v5572 = vmul.f32 %v5147, %v185
    %v5573 = vmul.f32 %v5152, %v186
    %v5574 = vmul.f32 %v5152, %v187
    %v5575 = vmul.f32 %v5157, %v188
    %v5576 = vmul.f32 %v5157, %v189
    %v5577 = vmul.f32 %v5162, %v190
    %v5578 = vmul.f32 %v5162, %v191
    %v5579 = vmul.f32 %v5167, %v192
    %v5580 = vmul.f32 %v5167, %v193
    %v5581 = vmul.f32 %v5172, %v194
    %v5582 = vmul.f32 %v5172, %v195
    %v5583 = vmul.f32 %v5177, %v196
    %v5584 = vmul.f32 %v5177, %v197
    %v5585 = vmul.f32 %v5182, %v198
    %v5586 = vmul.f32 %v5182, %v199
    %v5587 = vmul.f32 %v5187, %v200
    %v5588 = vmul.f32 %v5187, %v201
    %v5589 = vmul.f32 %v5192, %v202
    %v5590 = vmul.f32 %v5192, %v203
    %v5591 = vmul.f32 %v5197, %v204
    %v5592 = vmul.f32 %v5197, %v205
    %v5593 = vmul.f32 %v5202, %v206
    %v5594 = vmul.f32 %v5202, %v207
    %v5595 = vmul.f32 %v5207, %v208
    %v5596 = vmul.f32 %v5207, %v209
    %v5597 = vmul.f32 %v5212, %v210
    %v5598 = vmul.f32 %v5212, %v211
    %v5599 = vmul.f32 %v5217, %v212
    %v5600 = vmul.f32 %v5217, %v213
    %v5601 = vmul.f32 %v5222, %v214
    %v5602 = vmul.f32 %v5222, %v215
    %v5603 = vmul.f32 %v5227, %v216
    %v5604 = vmul.f32 %v5227, %v217
    %v5605 = vmul.f32 %v5232, %v218
    %v5606 = vmul.f32 %v5232, %v219
    %v5607 = vmul.f32 %v5237, %v220
    %v5608 = vmul.f32 %v5237, %v221
    %v5609 = vmul.f32 %v5242, %v222
    %v5610 = vmul.f32 %v5242, %v223
    %v5611 = vmul.f32 %v5247, %v224
    %v5612 = vmul.f32 %v5247, %v225
    %v5613 = vmul.f32 %v5252, %v226
    %v5614 = vmul.f32 %v5252, %v227
    %v5615 = vmul.f32 %v5257, %v228
    %v5616 = vmul.f32 %v5257, %v229
    %v5617 = vmul.f32 %v5262, %v230
    %v5618 = vmul.f32 %v5262, %v231
    %v5619 = vmul.f32 %v5267, %v232
    %v5620 = vmul.f32 %v5267, %v233
    %v5621 = vmul.f32 %v5272, %v234
    %v5622 = vmul.f32 %v5272, %v235
    %v5623 = vmul.f32 %v5277, %v236
    %v5624 = vmul.f32 %v5277, %v237
    %v5625 = vmul.f32 %v5282, %v238
    %v5626 = vmul.f32 %v5282, %v239
    %v5627 = vmul.f32 %v5287, %v240
    %v5628 = vmul.f32 %v5287, %v241
    %v5629 = vmul.f32 %v5292, %v242
    %v5630 = vmul.f32 %v5292, %v243
    %v5631 = vmul.f32 %v5297, %v244
    %v5632 = vmul.f32 %v5297, %v245
    %v5633 = vmul.f32 %v5302, %v246
    %v5634 = vmul.f32 %v5302, %v247
    %v5635 = vmul.f32 %v5307, %v248
    %v5636 = vmul.f32 %v5307, %v249
    %v5637 = vmul.f32 %v5312, %v250
    %v5638 = vmul.f32 %v5312, %v251
    %v5639 = vmul.f32 %v5317, %v252
    %v5640 = vmul.f32 %v5317, %v253
    %v5641 = vmul.f32 %v5322, %v254
    %v5642 = vmul.f32 %v5322, %v255
    %v5643 = vmul.f32 %v5327, %v256
    %v5644 = vmul.f32 %v5327, %v257
    %v5645 = vmul.f32 %v5332, %v258
    %v5646 = vmul.f32 %v5332, %v259
    %v5647 = vmul.f32 %v5337, %v260
    %v5648 = vmul.f32 %v5337, %v261
    %v5649 = vmul.f32 %v5342, %v262
    %v5650 = vmul.f32 %v5342, %v263
    %v5651 = vmul.f32 %v5347, %v264
    %v5652 = vmul.f32 %v5347, %v265
    %v5653 = vmul.f32 %v5352, %v266
    %v5654 = vmul.f32 %v5352, %v267
    %v5655 = vmul.f32 %v5357, %v268
    %v5656 = vmul.f32 %v5357, %v269
    %v5657 = vmul.f32 %v5362, %v270
    %v5658 = vmul.f32 %v5362, %v271
    %v5659 = vmul.f32 %v5367, %v272
    %v5660 = vmul.f32 %v5367, %v273
    %v5661 = vmul.f32 %v5372, %v274
    %v5662 = vmul.f32 %v5372, %v275
    %v5663 = vmul.f32 %v5377, %v276
    %v5664 = vmul.f32 %v5377, %v277
    %v5665 = vmul.f32 %v5382, %v278
    %v5666 = vmul.f32 %v5382, %v279
    %v5667 = vmul.f32 %v5387, %v280
    %v5668 = vmul.f32 %v5387, %v281
    %v5669 = vmul.f32 %v5392, %v282
    %v5670 = vmul.f32 %v5392, %v283
    %v5671 = vmul.f32 %v5397, %v284
    %v5672 = vmul.f32 %v5397, %v285
    %v5673 = vmul.f32 %v5402, %v286
    %v5674 = vmul.f32 %v5402, %v287
    %v5675 = vmul.f32 %v5407, %v288
    %v5676 = vmul.f32 %v5407, %v289
    %v5677 = vmul.f32 %v5412, %v290
    %v5678 = vmul.f32 %v5412, %v291
    %v5679 = vmul.f32 %v5417, %v292
    %v5680 = vmul.f32 %v5417, %v293
    %v5681 = vmul.f32 %v5422, %v294
    %v5682 = vmul.f32 %v5422, %v295
    %v5683 = vmul.f32 %v5427, %v296
    %v5684 = vmul.f32 %v5427, %v297
    %v5685 = vadd.f32 %v5429, %v5431
    %v5686 = vadd.f32 %v5685, %v5433
    %v5687 = vadd.f32 %v5686, %v5435
    %v5688 = vadd.f32 %v5687, %v5437
    %v5689 = vadd.f32 %v5688, %v5439
    %v5690 = vadd.f32 %v5689, %v5441
    %v5691 = vadd.f32 %v5690, %v5443
    %v5692 = vadd.f32 %v5691, %v5445
    %v5693 = vadd.f32 %v5692, %v5447
    %v5694 = vadd.f32 %v5693, %v5449
    %v5695 = vadd.f32 %v5694, %v5451
    %v5696 = vadd.f32 %v5695, %v5453
    %v5697 = vadd.f32 %v5696, %v5455
    %v5698 = vadd.f32 %v5697, %v5457
    %v5699 = vadd.f32 %v5698, %v5459
    %v5700 = vadd.f32 %v5699, %v5461
    %v5701 = vadd.f32 %v5700, %v5463
    %v5702 = vadd.f32 %v5701, %v5465
    %v5703 = vadd.f32 %v5702, %v5467
    %v5704 = vadd.f32 %v5703, %v5469
    %v5705 = vadd.f32 %v5704, %v5471
    %v5706 = vadd.f32 %v5705, %v5473
    %v5707 = vadd.f32 %v5706, %v5475
    %v5708 = vadd.f32 %v5707, %v5477
    %v5709 = vadd.f32 %v5708, %v5479
    %v5710 = vadd.f32 %v5709, %v5481
    %v5711 = vadd.f32 %v5710, %v5483
    %v5712 = vadd.f32 %v5711, %v5485
    %v5713 = vadd.f32 %v5712, %v5487
    %v5714 = vadd.f32 %v5713, %v5489
    %v5715 = vadd.f32 %v5714, %v5491
    %v5716 = vrot.slane %v5715, 4
    %v5717 = vadd.f32 %v5715, %v5716
    %v5718 = vrot.slane %v5717, 2
    %v5719 = vadd.f32 %v5717, %v5718
    %v5720 = vrot.slane %v5719, 1
    %v5721 = vadd.f32 %v5719, %v5720
    %v5722 = vadd.f32 %v5430, %v5432
    %v5723 = vadd.f32 %v5722, %v5434
    %v5724 = vadd.f32 %v5723, %v5436
    %v5725 = vadd.f32 %v5724, %v5438
    %v5726 = vadd.f32 %v5725, %v5440
    %v5727 = vadd.f32 %v5726, %v5442
    %v5728 = vadd.f32 %v5727, %v5444
    %v5729 = vadd.f32 %v5728, %v5446
    %v5730 = vadd.f32 %v5729, %v5448
    %v5731 = vadd.f32 %v5730, %v5450
    %v5732 = vadd.f32 %v5731, %v5452
    %v5733 = vadd.f32 %v5732, %v5454
    %v5734 = vadd.f32 %v5733, %v5456
    %v5735 = vadd.f32 %v5734, %v5458
    %v5736 = vadd.f32 %v5735, %v5460
    %v5737 = vadd.f32 %v5736, %v5462
    %v5738 = vadd.f32 %v5737, %v5464
    %v5739 = vadd.f32 %v5738, %v5466
    %v5740 = vadd.f32 %v5739, %v5468
    %v5741 = vadd.f32 %v5740, %v5470
    %v5742 = vadd.f32 %v5741, %v5472
    %v5743 = vadd.f32 %v5742, %v5474
    %v5744 = vadd.f32 %v5743, %v5476
    %v5745 = vadd.f32 %v5744, %v5478
    %v5746 = vadd.f32 %v5745, %v5480
    %v5747 = vadd.f32 %v5746, %v5482
    %v5748 = vadd.f32 %v5747, %v5484
    %v5749 = vadd.f32 %v5748, %v5486
    %v5750 = vadd.f32 %v5749, %v5488
    %v5751 = vadd.f32 %v5750, %v5490
    %v5752 = vadd.f32 %v5751, %v5492
    %v5753 = vrot.slane %v5752, 4
    %v5754 = vadd.f32 %v5752, %v5753
    %v5755 = vrot.slane %v5754, 2
    %v5756 = vadd.f32 %v5754, %v5755
    %v5757 = vrot.slane %v5756, 1
    %v5758 = vadd.f32 %v5756, %v5757
    %v5759 = vadd.f32 %v5493, %v5495
    %v5760 = vadd.f32 %v5759, %v5497
    %v5761 = vadd.f32 %v5760, %v5499
    %v5762 = vadd.f32 %v5761, %v5501
    %v5763 = vadd.f32 %v5762, %v5503
    %v5764 = vadd.f32 %v5763, %v5505
    %v5765 = vadd.f32 %v5764, %v5507
    %v5766 = vadd.f32 %v5765, %v5509
    %v5767 = vadd.f32 %v5766, %v5511
    %v5768 = vadd.f32 %v5767, %v5513
    %v5769 = vadd.f32 %v5768, %v5515
    %v5770 = vadd.f32 %v5769, %v5517
    %v5771 = vadd.f32 %v5770, %v5519
    %v5772 = vadd.f32 %v5771, %v5521
    %v5773 = vadd.f32 %v5772, %v5523
    %v5774 = vadd.f32 %v5773, %v5525
    %v5775 = vadd.f32 %v5774, %v5527
    %v5776 = vadd.f32 %v5775, %v5529
    %v5777 = vadd.f32 %v5776, %v5531
    %v5778 = vadd.f32 %v5777, %v5533
    %v5779 = vadd.f32 %v5778, %v5535
    %v5780 = vadd.f32 %v5779, %v5537
    %v5781 = vadd.f32 %v5780, %v5539
    %v5782 = vadd.f32 %v5781, %v5541
    %v5783 = vadd.f32 %v5782, %v5543
    %v5784 = vadd.f32 %v5783, %v5545
    %v5785 = vadd.f32 %v5784, %v5547
    %v5786 = vadd.f32 %v5785, %v5549
    %v5787 = vadd.f32 %v5786, %v5551
    %v5788 = vadd.f32 %v5787, %v5553
    %v5789 = vadd.f32 %v5788, %v5555
    %v5790 = vrot.slane %v5789, 4
    %v5791 = vadd.f32 %v5789, %v5790
    %v5792 = vrot.slane %v5791, 2
    %v5793 = vadd.f32 %v5791, %v5792
    %v5794 = vrot.slane %v5793, 1
    %v5795 = vadd.f32 %v5793, %v5794
    %v5796 = vadd.f32 %v5494, %v5496
    %v5797 = vadd.f32 %v5796, %v5498
    %v5798 = vadd.f32 %v5797, %v5500
    %v5799 = vadd.f32 %v5798, %v5502
    %v5800 = vadd.f32 %v5799, %v5504
    %v5801 = vadd.f32 %v5800, %v5506
    %v5802 = vadd.f32 %v5801, %v5508
    %v5803 = vadd.f32 %v5802, %v5510
    %v5804 = vadd.f32 %v5803, %v5512
    %v5805 = vadd.f32 %v5804, %v5514
    %v5806 = vadd.f32 %v5805, %v5516
    %v5807 = vadd.f32 %v5806, %v5518
    %v5808 = vadd.f32 %v5807, %v5520
    %v5809 = vadd.f32 %v5808, %v5522
    %v5810 = vadd.f32 %v5809, %v5524
    %v5811 = vadd.f32 %v5810, %v5526
    %v5812 = vadd.f32 %v5811, %v5528
    %v5813 = vadd.f32 %v5812, %v5530
    %v5814 = vadd.f32 %v5813, %v5532
    %v5815 = vadd.f32 %v5814, %v5534
    %v5816 = vadd.f32 %v5815, %v5536
    %v5817 = vadd.f32 %v5816, %v5538
    %v5818 = vadd.f32 %v5817, %v5540
    %v5819 = vadd.f32 %v5818, %v5542
    %v5820 = vadd.f32 %v5819, %v5544
    %v5821 = vadd.f32 %v5820, %v5546
    %v5822 = vadd.f32 %v5821, %v5548
    %v5823 = vadd.f32 %v5822, %v5550
    %v5824 = vadd.f32 %v5823, %v5552
    %v5825 = vadd.f32 %v5824, %v5554
    %v5826 = vadd.f32 %v5825, %v5556
    %v5827 = vrot.slane %v5826, 4
    %v5828 = vadd.f32 %v5826, %v5827
    %v5829 = vrot.slane %v5828, 2
    %v5830 = vadd.f32 %v5828, %v5829
    %v5831 = vrot.slane %v5830, 1
    %v5832 = vadd.f32 %v5830, %v5831
    %v5833 = vadd.f32 %v5557, %v5559
    %v5834 = vadd.f32 %v5833, %v5561
    %v5835 = vadd.f32 %v5834, %v5563
    %v5836 = vadd.f32 %v5835, %v5565
    %v5837 = vadd.f32 %v5836, %v5567
    %v5838 = vadd.f32 %v5837, %v5569
    %v5839 = vadd.f32 %v5838, %v5571
    %v5840 = vadd.f32 %v5839, %v5573
    %v5841 = vadd.f32 %v5840, %v5575
    %v5842 = vadd.f32 %v5841, %v5577
    %v5843 = vadd.f32 %v5842, %v5579
    %v5844 = vadd.f32 %v5843, %v5581
    %v5845 = vadd.f32 %v5844, %v5583
    %v5846 = vadd.f32 %v5845, %v5585
    %v5847 = vadd.f32 %v5846, %v5587
    %v5848 = vadd.f32 %v5847, %v5589
    %v5849 = vadd.f32 %v5848, %v5591
    %v5850 = vadd.f32 %v5849, %v5593
    %v5851 = vadd.f32 %v5850, %v5595
    %v5852 = vadd.f32 %v5851, %v5597
    %v5853 = vadd.f32 %v5852, %v5599
    %v5854 = vadd.f32 %v5853, %v5601
    %v5855 = vadd.f32 %v5854, %v5603
    %v5856 = vadd.f32 %v5855, %v5605
    %v5857 = vadd.f32 %v5856, %v5607
    %v5858 = vadd.f32 %v5857, %v5609
    %v5859 = vadd.f32 %v5858, %v5611
    %v5860 = vadd.f32 %v5859, %v5613
    %v5861 = vadd.f32 %v5860, %v5615
    %v5862 = vadd.f32 %v5861, %v5617
    %v5863 = vadd.f32 %v5862, %v5619
    %v5864 = vrot.slane %v5863, 4
    %v5865 = vadd.f32 %v5863, %v5864
    %v5866 = vrot.slane %v5865, 2
    %v5867 = vadd.f32 %v5865, %v5866
    %v5868 = vrot.slane %v5867, 1
    %v5869 = vadd.f32 %v5867, %v5868
    %v5870 = vadd.f32 %v5558, %v5560
    %v5871 = vadd.f32 %v5870, %v5562
    %v5872 = vadd.f32 %v5871, %v5564
    %v5873 = vadd.f32 %v5872, %v5566
    %v5874 = vadd.f32 %v5873, %v5568
    %v5875 = vadd.f32 %v5874, %v5570
    %v5876 = vadd.f32 %v5875, %v5572
    %v5877 = vadd.f32 %v5876, %v5574
    %v5878 = vadd.f32 %v5877, %v5576
    %v5879 = vadd.f32 %v5878, %v5578
    %v5880 = vadd.f32 %v5879, %v5580
    %v5881 = vadd.f32 %v5880, %v5582
    %v5882 = vadd.f32 %v5881, %v5584
    %v5883 = vadd.f32 %v5882, %v5586
    %v5884 = vadd.f32 %v5883, %v5588
    %v5885 = vadd.f32 %v5884, %v5590
    %v5886 = vadd.f32 %v5885, %v5592
    %v5887 = vadd.f32 %v5886, %v5594
    %v5888 = vadd.f32 %v5887, %v5596
    %v5889 = vadd.f32 %v5888, %v5598
    %v5890 = vadd.f32 %v5889, %v5600
    %v5891 = vadd.f32 %v5890, %v5602
    %v5892 = vadd.f32 %v5891, %v5604
    %v5893 = vadd.f32 %v5892, %v5606
    %v5894 = vadd.f32 %v5893, %v5608
    %v5895 = vadd.f32 %v5894, %v5610
    %v5896 = vadd.f32 %v5895, %v5612
    %v5897 = vadd.f32 %v5896, %v5614
    %v5898 = vadd.f32 %v5897, %v5616
    %v5899 = vadd.f32 %v5898, %v5618
    %v5900 = vadd.f32 %v5899, %v5620
    %v5901 = vrot.slane %v5900, 4
    %v5902 = vadd.f32 %v5900, %v5901
    %v5903 = vrot.slane %v5902, 2
    %v5904 = vadd.f32 %v5902, %v5903
    %v5905 = vrot.slane %v5904, 1
    %v5906 = vadd.f32 %v5904, %v5905
    %v5907 = vadd.f32 %v5621, %v5623
    %v5908 = vadd.f32 %v5907, %v5625
    %v5909 = vadd.f32 %v5908, %v5627
    %v5910 = vadd.f32 %v5909, %v5629
    %v5911 = vadd.f32 %v5910, %v5631
    %v5912 = vadd.f32 %v5911, %v5633
    %v5913 = vadd.f32 %v5912, %v5635
    %v5914 = vadd.f32 %v5913, %v5637
    %v5915 = vadd.f32 %v5914, %v5639
    %v5916 = vadd.f32 %v5915, %v5641
    %v5917 = vadd.f32 %v5916, %v5643
    %v5918 = vadd.f32 %v5917, %v5645
    %v5919 = vadd.f32 %v5918, %v5647
    %v5920 = vadd.f32 %v5919, %v5649
    %v5921 = vadd.f32 %v5920, %v5651
    %v5922 = vadd.f32 %v5921, %v5653
    %v5923 = vadd.f32 %v5922, %v5655
    %v5924 = vadd.f32 %v5923, %v5657
    %v5925 = vadd.f32 %v5924, %v5659
    %v5926 = vadd.f32 %v5925, %v5661
    %v5927 = vadd.f32 %v5926, %v5663
    %v5928 = vadd.f32 %v5927, %v5665
    %v5929 = vadd.f32 %v5928, %v5667
    %v5930 = vadd.f32 %v5929, %v5669
    %v5931 = vadd.f32 %v5930, %v5671
    %v5932 = vadd.f32 %v5931, %v5673
    %v5933 = vadd.f32 %v5932, %v5675
    %v5934 = vadd.f32 %v5933, %v5677
    %v5935 = vadd.f32 %v5934, %v5679
    %v5936 = vadd.f32 %v5935, %v5681
    %v5937 = vadd.f32 %v5936, %v5683
    %v5938 = vrot.slane %v5937, 4
    %v5939 = vadd.f32 %v5937, %v5938
    %v5940 = vrot.slane %v5939, 2
    %v5941 = vadd.f32 %v5939, %v5940
    %v5942 = vrot.slane %v5941, 1
    %v5943 = vadd.f32 %v5941, %v5942
    %v5944 = vadd.f32 %v5622, %v5624
    %v5945 = vadd.f32 %v5944, %v5626
    %v5946 = vadd.f32 %v5945, %v5628
    %v5947 = vadd.f32 %v5946, %v5630
    %v5948 = vadd.f32 %v5947, %v5632
    %v5949 = vadd.f32 %v5948, %v5634
    %v5950 = vadd.f32 %v5949, %v5636
    %v5951 = vadd.f32 %v5950, %v5638
    %v5952 = vadd.f32 %v5951, %v5640
    %v5953 = vadd.f32 %v5952, %v5642
    %v5954 = vadd.f32 %v5953, %v5644
    %v5955 = vadd.f32 %v5954, %v5646
    %v5956 = vadd.f32 %v5955, %v5648
    %v5957 = vadd.f32 %v5956, %v5650
    %v5958 = vadd.f32 %v5957, %v5652
    %v5959 = vadd.f32 %v5958, %v5654
    %v5960 = vadd.f32 %v5959, %v5656
    %v5961 = vadd.f32 %v5960, %v5658
    %v5962 = vadd.f32 %v5961, %v5660
    %v5963 = vadd.f32 %v5962, %v5662
    %v5964 = vadd.f32 %v5963, %v5664
    %v5965 = vadd.f32 %v5964, %v5666
    %v5966 = vadd.f32 %v5965, %v5668
    %v5967 = vadd.f32 %v5966, %v5670
    %v5968 = vadd.f32 %v5967, %v5672
    %v5969 = vadd.f32 %v5968, %v5674
    %v5970 = vadd.f32 %v5969, %v5676
    %v5971 = vadd.f32 %v5970, %v5678
    %v5972 = vadd.f32 %v5971, %v5680
    %v5973 = vadd.f32 %v5972, %v5682
    %v5974 = vadd.f32 %v5973, %v5684
    %v5975 = vrot.slane %v5974, 4
    %v5976 = vadd.f32 %v5974, %v5975
    %v5977 = vrot.slane %v5976, 2
    %v5978 = vadd.f32 %v5976, %v5977
    %v5979 = vrot.slane %v5978, 1
    %v5980 = vadd.f32 %v5978, %v5979
    %v5989 = vsel %vm1011, %v5795, %v5721
    %v5990 = vsel %vm1014, %v5869, %v5989
    %v5991 = vsel %vm1017, %v5943, %v5990
    %v5992 = vsel %vm1011, %v5832, %v5758
    %v5993 = vsel %vm1014, %v5906, %v5992
    %v5994 = vsel %vm1017, %v5980, %v5993
    %v5997 = vmul.f32 %v990, %v5991
    %v5998 = vmul.f32 %v1005, %v5994
    %s5999 = smul.u32 %s807, 3
    %s6000 = smul.addr %s5999, 4
    %s6001 = scalar_lea.vmem %s3, %s6000
    %v6002 = vld [vmem:[%s6001] sm:$0xff]
    %v6003 = vld [vmem:[%s6001 + $0x8] sm:$0xf]
    %6006 = vst [vmem:[#allocation1] ss:$2 sm:$0xff] %v6002
    %s6007 = scalar_lea.vmem [#allocation1], 16
    %6008 = vst [vmem:[%s6007] ss:$2 sm:$0xff] %v6003
    %v6009 = vld.sshfl [vmem:[#allocation1] sm:$0xff pattern:$0x75316420]
    %v6010 = vld.sshfl [vmem:[#allocation1 + $0x8] sm:$0xff pattern:$0x75316420]
    %v6011 = vld.sshfl [vmem:[#allocation1 + $0x10] sm:$0xff pattern:$0x75316420]
    %6015 = vmatpush.msra.mxu0 %v714
    %6016 = vmatpush.msra.mxu0 %v711
    %6017 = vmatpush.msra.mxu0 %v708
    %6018 = vmatpush.msra.mxu0 %v705
    %6019 = vmatpush.msra.mxu0 %v702
    %6020 = vmatpush.msra.mxu0 %v699
    %6021 = vmatpush.msra.mxu0 %v696
    %6022 = vmatpush.msra.mxu0 %v693
    %6023 = vmatpush.msra.mxu0 %v690
    %6024 = vmatpush.msra.mxu0 %v687
    %6025 = vmatpush.msra.mxu0 %v684
    %6026 = vmatpush.msra.mxu0 %v681
    %6027 = vmatpush.msra.mxu0 %v678
    %6028 = vmatpush.msra.mxu0 %v675
    %6029 = vmatpush.msra.mxu0 %v672
    %6030 = vmatpush.msra.mxu0 %v669
    %6031 = vmatmul.f32.gmra.mxu0 %v5997
    %v6032 = vpop.f32.mrf.mxu0
    %v6033 = vadd.f32 %v6009, %v6032
    %6034 = vdwg.mxu0
    %6035 = vmatpush.msra.mxu0 %v762
    %6036 = vmatpush.msra.mxu0 %v759
    %6037 = vmatpush.msra.mxu0 %v756
    %6038 = vmatpush.msra.mxu0 %v753
    %6039 = vmatpush.msra.mxu0 %v750
    %6040 = vmatpush.msra.mxu0 %v747
    %6041 = vmatpush.msra.mxu0 %v744
    %6042 = vmatpush.msra.mxu0 %v741
    %6043 = vmatpush.msra.mxu0 %v738
    %6044 = vmatpush.msra.mxu0 %v735
    %6045 = vmatpush.msra.mxu0 %v732
    %6046 = vmatpush.msra.mxu0 %v729
    %6047 = vmatpush.msra.mxu0 %v726
    %6048 = vmatpush.msra.mxu0 %v723
    %6049 = vmatpush.msra.mxu0 %v720
    %6050 = vmatpush.msra.mxu0 %v717
    %6051 = vmatmul.f32.gmra.mxu0 %v5998
    %v6052 = vpop.f32.mrf.mxu0
    %v6053 = vadd.f32 %v6033, %v6052
    %6054 = vdwg.mxu0
    %6055 = vmatpush.msra.mxu0 %v715
    %6056 = vmatpush.msra.mxu0 %v712
    %6057 = vmatpush.msra.mxu0 %v709
    %6058 = vmatpush.msra.mxu0 %v706
    %6059 = vmatpush.msra.mxu0 %v703
    %6060 = vmatpush.msra.mxu0 %v700
    %6061 = vmatpush.msra.mxu0 %v697
    %6062 = vmatpush.msra.mxu0 %v694
    %6063 = vmatpush.msra.mxu0 %v691
    %6064 = vmatpush.msra.mxu0 %v688
    %6065 = vmatpush.msra.mxu0 %v685
    %6066 = vmatpush.msra.mxu0 %v682
    %6067 = vmatpush.msra.mxu0 %v679
    %6068 = vmatpush.msra.mxu0 %v676
    %6069 = vmatpush.msra.mxu0 %v673
    %6070 = vmatpush.msra.mxu0 %v670
    %6071 = vmatmul.f32.gmra.mxu0 %v5997
    %v6072 = vpop.f32.mrf.mxu0
    %v6073 = vadd.f32 %v6010, %v6072
    %6074 = vdwg.mxu0
    %6075 = vmatpush.msra.mxu0 %v763
    %6076 = vmatpush.msra.mxu0 %v760
    %6077 = vmatpush.msra.mxu0 %v757
    %6078 = vmatpush.msra.mxu0 %v754
    %6079 = vmatpush.msra.mxu0 %v751
    %6080 = vmatpush.msra.mxu0 %v748
    %6081 = vmatpush.msra.mxu0 %v745
    %6082 = vmatpush.msra.mxu0 %v742
    %6083 = vmatpush.msra.mxu0 %v739
    %6084 = vmatpush.msra.mxu0 %v736
    %6085 = vmatpush.msra.mxu0 %v733
    %6086 = vmatpush.msra.mxu0 %v730
    %6087 = vmatpush.msra.mxu0 %v727
    %6088 = vmatpush.msra.mxu0 %v724
    %6089 = vmatpush.msra.mxu0 %v721
    %6090 = vmatpush.msra.mxu0 %v718
    %6091 = vmatmul.f32.gmra.mxu0 %v5998
    %v6092 = vpop.f32.mrf.mxu0
    %v6093 = vadd.f32 %v6073, %v6092
    %6094 = vdwg.mxu0
    %6095 = vmatpush.msra.mxu0 %v716
    %6096 = vmatpush.msra.mxu0 %v713
    %6097 = vmatpush.msra.mxu0 %v710
    %6098 = vmatpush.msra.mxu0 %v707
    %6099 = vmatpush.msra.mxu0 %v704
    %6100 = vmatpush.msra.mxu0 %v701
    %6101 = vmatpush.msra.mxu0 %v698
    %6102 = vmatpush.msra.mxu0 %v695
    %6103 = vmatpush.msra.mxu0 %v692
    %6104 = vmatpush.msra.mxu0 %v689
    %6105 = vmatpush.msra.mxu0 %v686
    %6106 = vmatpush.msra.mxu0 %v683
    %6107 = vmatpush.msra.mxu0 %v680
    %6108 = vmatpush.msra.mxu0 %v677
    %6109 = vmatpush.msra.mxu0 %v674
    %6110 = vmatpush.msra.mxu0 %v671
    %6111 = vmatmul.f32.gmra.mxu0 %v5997
    %v6112 = vpop.f32.mrf.mxu0
    %v6113 = vadd.f32 %v6011, %v6112
    %6114 = vdwg.mxu0
    %6115 = vmatpush.msra.mxu0 %v764
    %6116 = vmatpush.msra.mxu0 %v761
    %6117 = vmatpush.msra.mxu0 %v758
    %6118 = vmatpush.msra.mxu0 %v755
    %6119 = vmatpush.msra.mxu0 %v752
    %6120 = vmatpush.msra.mxu0 %v749
    %6121 = vmatpush.msra.mxu0 %v746
    %6122 = vmatpush.msra.mxu0 %v743
    %6123 = vmatpush.msra.mxu0 %v740
    %6124 = vmatpush.msra.mxu0 %v737
    %6125 = vmatpush.msra.mxu0 %v734
    %6126 = vmatpush.msra.mxu0 %v731
    %6127 = vmatpush.msra.mxu0 %v728
    %6128 = vmatpush.msra.mxu0 %v725
    %6129 = vmatpush.msra.mxu0 %v722
    %6130 = vmatpush.msra.mxu0 %v719
    %6131 = vmatmul.f32.gmra.mxu0 %v5998
    %v6132 = vpop.f32.mrf.mxu0
    %v6133 = vadd.f32 %v6113, %v6132
    %6134 = vdwg.mxu0
    %v6135 = vadd.f32 %v6053, %v926
    %v6136 = vxor.u32 %v6135, 2147483648
    %v6137 = vmul.f32 %v6136, 1.442695
    %v6138 = vpow.pop %v6137
    %v6139 = vadd.f32 %v6138, 1.0
    %v6140 = vrcp.pop %v6139
    %v6141 = vmul.f32 %v6139, %v6140
    %v6142 = vsub.f32 1.0, %v6141
    %v6143 = vmul.f32 %v6140, %v6142
    %v6144 = vadd.f32 %v6140, %v6143
    %vm6145 = vweird.f32 %v6139
    %vm6146 = vweird.f32 %v6140
    %vm6147 = vmor %vm6145, %vm6146
    %v6148 = vsel %vm6147, %v6140, %v6144
    %v6149 = vand.u32 2147483647, %v6139
    %vm6150 = vcmp.eq.f32.partialorder %v6149, 8.507059e+37
    %v6151 = vand.u32 %v6139, 2147483648
    %v6152 = vor.u32 1.1754944e-38, %v6151
    %v6153 = vsel %vm6150, %v6152, %v6148
    %v6154 = vmul.f32 1.0, %v6153
    %v6155 = vadd.f32 %v6093, %v946
    %v6156 = vxor.u32 %v6155, 2147483648
    %v6157 = vmul.f32 %v6156, 1.442695
    %v6158 = vpow.pop %v6157
    %v6159 = vadd.f32 %v6158, 1.0
    %v6160 = vrcp.pop %v6159
    %v6161 = vmul.f32 %v6159, %v6160
    %v6162 = vsub.f32 1.0, %v6161
    %v6163 = vmul.f32 %v6160, %v6162
    %v6164 = vadd.f32 %v6160, %v6163
    %vm6165 = vweird.f32 %v6159
    %vm6166 = vweird.f32 %v6160
    %vm6167 = vmor %vm6165, %vm6166
    %v6168 = vsel %vm6167, %v6160, %v6164
    %v6169 = vand.u32 2147483647, %v6159
    %vm6170 = vcmp.eq.f32.partialorder %v6169, 8.507059e+37
    %v6171 = vand.u32 %v6159, 2147483648
    %v6172 = vor.u32 1.1754944e-38, %v6171
    %v6173 = vsel %vm6170, %v6172, %v6168
    %v6174 = vmul.f32 1.0, %v6173
    %v6175 = vmul.f32 %v6154, %v966
    %v6176 = vadd.f32 %v6133, %v6175
    %v6177 = vtanh.pop %v6176
    %v6178 = vsub.f32 1.0, %v6174
    %v6179 = vmul.f32 %v6178, %v6177
    %v6180 = vmul.f32 %v6174, %v812
    %v6181 = vadd.f32 %v6179, %v6180
    %v6183 = vperm.slane %v797, 0
    %v6184 = vperm.slane %v797, 1
    %6187 = vmatpush.msra.mxu0 %v795
    %6188 = vmatpush.msra.mxu0 %v793
    %6189 = vmatpush.msra.mxu0 %v791
    %6190 = vmatpush.msra.mxu0 %v789
    %6191 = vmatpush.msra.mxu0 %v787
    %6192 = vmatpush.msra.mxu0 %v785
    %6193 = vmatpush.msra.mxu0 %v783
    %6194 = vmatpush.msra.mxu0 %v781
    %6195 = vmatpush.msra.mxu0 %v779
    %6196 = vmatpush.msra.mxu0 %v777
    %6197 = vmatpush.msra.mxu0 %v775
    %6198 = vmatpush.msra.mxu0 %v773
    %6199 = vmatpush.msra.mxu0 %v771
    %6200 = vmatpush.msra.mxu0 %v769
    %6201 = vmatpush.msra.mxu0 %v767
    %6202 = vmatpush.msra.mxu0 %v765
    %6203 = vmatmul.f32.gmra.mxu0 %v6181
    %v6204 = vpop.f32.mrf.mxu0
    %v6205 = vadd.f32 %v6183, %v6204
    %6206 = vdwg.mxu0
    %6207 = vmatpush.msra.mxu0 %v796
    %6208 = vmatpush.msra.mxu0 %v794
    %6209 = vmatpush.msra.mxu0 %v792
    %6210 = vmatpush.msra.mxu0 %v790
    %6211 = vmatpush.msra.mxu0 %v788
    %6212 = vmatpush.msra.mxu0 %v786
    %6213 = vmatpush.msra.mxu0 %v784
    %6214 = vmatpush.msra.mxu0 %v782
    %6215 = vmatpush.msra.mxu0 %v780
    %6216 = vmatpush.msra.mxu0 %v778
    %6217 = vmatpush.msra.mxu0 %v776
    %6218 = vmatpush.msra.mxu0 %v774
    %6219 = vmatpush.msra.mxu0 %v772
    %6220 = vmatpush.msra.mxu0 %v770
    %6221 = vmatpush.msra.mxu0 %v768
    %6222 = vmatpush.msra.mxu0 %v766
    %6223 = vmatmul.f32.gmra.mxu0 %v6181
    %v6224 = vpop.f32.mrf.mxu0
    %v6225 = vadd.f32 %v6184, %v6224
    %6226 = vdwg.mxu0
    %v6229 = vrot.slane %v6225, 4
    %v6230 = vsel %vm3479, %v6205, %v6229
    %s6232 = smul.u32 %s807, 2
    %s6233 = smul.addr %s6232, 4
    %s6234 = scalar_lea.vmem %s11, %s6233
    %6235 = vst [vmem:[%s6234] sm:$0xff] %v6230
    %v6236 = vrot.slane %v4661, 4
    %v6237 = vrot.slane %v4662, 4
    %v6238 = vrot.slane %v4663, 4
    %v6239 = vrot.slane %v4664, 4
    %v6240 = vrot.slane %v4665, 4
    %v6241 = vrot.slane %v4666, 4
    %v6242 = vrot.slane %v4667, 4
    %v6243 = vrot.slane %v4668, 4
    %v6244 = vrot.slane %v4669, 4
    %v6245 = vrot.slane %v4670, 4
    %v6246 = vrot.slane %v4671, 4
    %v6247 = vrot.slane %v4672, 4
    %v6248 = vrot.slane %v4673, 4
    %v6249 = vrot.slane %v4674, 4
    %v6250 = vrot.slane %v4675, 4
    %v6251 = vrot.slane %v4676, 4
    %v6252 = vrot.slane %v4677, 4
    %v6253 = vrot.slane %v4678, 4
    %v6254 = vrot.slane %v4679, 4
    %v6255 = vrot.slane %v4680, 4
    %v6256 = vrot.slane %v4681, 4
    %v6257 = vrot.slane %v4682, 4
    %v6258 = vrot.slane %v4683, 4
    %v6259 = vrot.slane %v4684, 4
    %v6260 = vrot.slane %v4685, 4
    %v6261 = vrot.slane %v4686, 4
    %v6262 = vrot.slane %v4687, 4
    %v6263 = vrot.slane %v4688, 4
    %v6264 = vrot.slane %v4689, 4
    %v6265 = vrot.slane %v4690, 4
    %v6266 = vrot.slane %v4691, 4
    %v6267 = vrot.slane %v4692, 4
    %v6268 = vrot.slane %v4693, 4
    %v6269 = vrot.slane %v4694, 4
    %v6270 = vrot.slane %v4695, 4
    %v6271 = vrot.slane %v4696, 4
    %v6272 = vrot.slane %v4697, 4
    %v6273 = vrot.slane %v4698, 4
    %v6274 = vrot.slane %v4699, 4
    %v6275 = vrot.slane %v4700, 4
    %v6276 = vrot.slane %v4701, 4
    %v6277 = vrot.slane %v4702, 4
    %v6278 = vrot.slane %v4703, 4
    %v6279 = vrot.slane %v4704, 4
    %v6280 = vrot.slane %v4705, 4
    %v6281 = vrot.slane %v4706, 4
    %v6282 = vrot.slane %v4707, 4
    %v6283 = vrot.slane %v4708, 4
    %v6284 = vrot.slane %v4709, 4
    %v6285 = vrot.slane %v4710, 4
    %v6286 = vrot.slane %v4711, 4
    %v6287 = vrot.slane %v4712, 4
    %v6288 = vrot.slane %v4713, 4
    %v6289 = vrot.slane %v4714, 4
    %v6290 = vrot.slane %v4715, 4
    %v6291 = vrot.slane %v4716, 4
    %v6292 = vrot.slane %v4717, 4
    %v6293 = vrot.slane %v4718, 4
    %v6294 = vrot.slane %v4719, 4
    %v6295 = vrot.slane %v4720, 4
    %v6296 = vrot.slane %v4721, 4
    %v6297 = vrot.slane %v4722, 4
    %v6298 = vrot.slane %v4723, 4
    %v6299 = vrot.slane %v4724, 4
    %v6300 = vrot.slane %v4725, 4
    %v6301 = vrot.slane %v4726, 4
    %v6302 = vrot.slane %v4727, 4
    %v6303 = vrot.slane %v4728, 4
    %v6304 = vrot.slane %v4729, 4
    %v6305 = vrot.slane %v4730, 4
    %v6306 = vrot.slane %v4731, 4
    %v6307 = vrot.slane %v4732, 4
    %v6308 = vrot.slane %v4733, 4
    %v6309 = vrot.slane %v4734, 4
    %v6310 = vrot.slane %v4735, 4
    %v6311 = vrot.slane %v4736, 4
    %v6312 = vrot.slane %v4737, 4
    %v6313 = vrot.slane %v4738, 4
    %v6314 = vrot.slane %v4739, 4
    %v6315 = vrot.slane %v4740, 4
    %v6316 = vrot.slane %v4741, 4
    %v6317 = vrot.slane %v4742, 4
    %v6318 = vrot.slane %v4743, 4
    %v6319 = vrot.slane %v4744, 4
    %v6320 = vrot.slane %v4745, 4
    %v6321 = vrot.slane %v4746, 4
    %v6322 = vrot.slane %v4747, 4
    %v6323 = vrot.slane %v4748, 4
    %v6324 = vrot.slane %v4749, 4
    %v6325 = vrot.slane %v4750, 4
    %v6326 = vrot.slane %v4751, 4
    %v6327 = vrot.slane %v4752, 4
    %v6328 = vrot.slane %v4753, 4
    %v6329 = vrot.slane %v4754, 4
    %v6330 = vrot.slane %v4755, 4
    %v6331 = vrot.slane %v4756, 4
    %v6332 = vrot.slane %v4757, 4
    %v6333 = vrot.slane %v4758, 4
    %v6334 = vrot.slane %v4759, 4
    %v6335 = vrot.slane %v4760, 4
    %v6336 = vrot.slane %v4761, 4
    %v6337 = vrot.slane %v4762, 4
    %v6338 = vrot.slane %v4763, 4
    %v6339 = vrot.slane %v4764, 4
    %v6340 = vrot.slane %v4765, 4
    %v6341 = vrot.slane %v4766, 4
    %v6342 = vrot.slane %v4767, 4
    %v6343 = vrot.slane %v4768, 4
    %v6344 = vrot.slane %v4769, 4
    %v6345 = vrot.slane %v4770, 4
    %v6346 = vrot.slane %v4771, 4
    %v6347 = vrot.slane %v4772, 4
    %v6348 = vrot.slane %v4773, 4
    %v6349 = vrot.slane %v4774, 4
    %v6350 = vrot.slane %v4775, 4
    %v6351 = vrot.slane %v4776, 4
    %v6352 = vrot.slane %v4777, 4
    %v6353 = vrot.slane %v4778, 4
    %v6354 = vrot.slane %v4779, 4
    %v6355 = vrot.slane %v4780, 4
    %v6356 = vrot.slane %v4781, 4
    %v6357 = vrot.slane %v4782, 4
    %v6358 = vrot.slane %v4783, 4
    %v6359 = vrot.slane %v4784, 4
    %v6360 = vrot.slane %v4785, 4
    %v6361 = vrot.slane %v4786, 4
    %v6362 = vrot.slane %v4787, 4
    %v6363 = vrot.slane %v4788, 4
    %6364 = vst [vmem:[#allocation1] ss:$2 sm:$0xff] %v4661
    %s6365 = scalar_lea.vmem [#allocation1], 1
    %6366 = vst [vmem:[%s6365] ss:$2 sm:$0xff] %v6236
    %s6367 = scalar_lea.vmem [#allocation1], 16
    %6368 = vst [vmem:[%s6367] ss:$2 sm:$0xff] %v4662
    %s6369 = scalar_lea.vmem [#allocation1], 17
    %6370 = vst [vmem:[%s6369] ss:$2 sm:$0xff] %v6237
    %s6371 = scalar_lea.vmem [#allocation1], 32
    %6372 = vst [vmem:[%s6371] ss:$2 sm:$0xff] %v4663
    %s6373 = scalar_lea.vmem [#allocation1], 33
    %6374 = vst [vmem:[%s6373] ss:$2 sm:$0xff] %v6238
    %s6375 = scalar_lea.vmem [#allocation1], 48
    %6376 = vst [vmem:[%s6375] ss:$2 sm:$0xff] %v4664
    %s6377 = scalar_lea.vmem [#allocation1], 49
    %6378 = vst [vmem:[%s6377] ss:$2 sm:$0xff] %v6239
    %v6379 = vld.sshfl [vmem:[#allocation1] sm:$0xff pattern:$0x75316420]
    %v6380 = vld.sshfl [vmem:[#allocation1 + $0x10] sm:$0xff pattern:$0x75316420]
    %v6381 = vld.sshfl [vmem:[#allocation1 + $0x20] sm:$0xff pattern:$0x75316420]
    %v6382 = vld.sshfl [vmem:[#allocation1 + $0x30] sm:$0xff pattern:$0x75316420]
    %6383 = vst [vmem:[#allocation1] ss:$2 sm:$0xff] %v4665
    %6384 = vst [vmem:[%s6365] ss:$2 sm:$0xff] %v6240
    %6385 = vst [vmem:[%s6367] ss:$2 sm:$0xff] %v4666
    %6386 = vst [vmem:[%s6369] ss:$2 sm:$0xff] %v6241
    %6387 = vst [vmem:[%s6371] ss:$2 sm:$0xff] %v4667
    %6388 = vst [vmem:[%s6373] ss:$2 sm:$0xff] %v6242
    %6389 = vst [vmem:[%s6375] ss:$2 sm:$0xff] %v4668
    %6390 = vst [vmem:[%s6377] ss:$2 sm:$0xff] %v6243
    %v6391 = vld.sshfl [vmem:[#allocation1] sm:$0xff pattern:$0x75316420]
    %v6392 = vld.sshfl [vmem:[#allocation1 + $0x10] sm:$0xff pattern:$0x75316420]
    %v6393 = vld.sshfl [vmem:[#allocation1 + $0x20] sm:$0xff pattern:$0x75316420]
    %v6394 = vld.sshfl [vmem:[#allocation1 + $0x30] sm:$0xff pattern:$0x75316420]
    %6395 = vst [vmem:[#allocation1] ss:$2 sm:$0xff] %v4669
    %6396 = vst [vmem:[%s6365] ss:$2 sm:$0xff] %v6244
    %6397 = vst [vmem:[%s6367] ss:$2 sm:$0xff] %v4670
    %6398 = vst [vmem:[%s6369] ss:$2 sm:$0xff] %v6245
    %6399 = vst [vmem:[%s6371] ss:$2 sm:$0xff] %v4671
    %6400 = vst [vmem:[%s6373] ss:$2 sm:$0xff] %v6246
    %6401 = vst [vmem:[%s6375] ss:$2 sm:$0xff] %v4672
    %6402 = vst [vmem:[%s6377] ss:$2 sm:$0xff] %v6247
    %v6403 = vld.sshfl [vmem:[#allocation1] sm:$0xff pattern:$0x75316420]
    %v6404 = vld.sshfl [vmem:[#allocation1 + $0x10] sm:$0xff pattern:$0x75316420]
    %v6405 = vld.sshfl [vmem:[#allocation1 + $0x20] sm:$0xff pattern:$0x75316420]
    %v6406 = vld.sshfl [vmem:[#allocation1 + $0x30] sm:$0xff pattern:$0x75316420]
    %6407 = vst [vmem:[#allocation1] ss:$2 sm:$0xff] %v4673
    %6408 = vst [vmem:[%s6365] ss:$2 sm:$0xff] %v6248
    %6409 = vst [vmem:[%s6367] ss:$2 sm:$0xff] %v4674
    %6410 = vst [vmem:[%s6369] ss:$2 sm:$0xff] %v6249
    %6411 = vst [vmem:[%s6371] ss:$2 sm:$0xff] %v4675
    %6412 = vst [vmem:[%s6373] ss:$2 sm:$0xff] %v6250
    %6413 = vst [vmem:[%s6375] ss:$2 sm:$0xff] %v4676
    %6414 = vst [vmem:[%s6377] ss:$2 sm:$0xff] %v6251
    %v6415 = vld.sshfl [vmem:[#allocation1] sm:$0xff pattern:$0x75316420]
    %v6416 = vld.sshfl [vmem:[#allocation1 + $0x10] sm:$0xff pattern:$0x75316420]
    %v6417 = vld.sshfl [vmem:[#allocation1 + $0x20] sm:$0xff pattern:$0x75316420]
    %v6418 = vld.sshfl [vmem:[#allocation1 + $0x30] sm:$0xff pattern:$0x75316420]
    %6419 = vst [vmem:[#allocation1] ss:$2 sm:$0xff] %v4677
    %6420 = vst [vmem:[%s6365] ss:$2 sm:$0xff] %v6252
    %6421 = vst [vmem:[%s6367] ss:$2 sm:$0xff] %v4678
    %6422 = vst [vmem:[%s6369] ss:$2 sm:$0xff] %v6253
    %6423 = vst [vmem:[%s6371] ss:$2 sm:$0xff] %v4679
    %6424 = vst [vmem:[%s6373] ss:$2 sm:$0xff] %v6254
    %6425 = vst [vmem:[%s6375] ss:$2 sm:$0xff] %v4680
    %6426 = vst [vmem:[%s6377] ss:$2 sm:$0xff] %v6255
    %v6427 = vld.sshfl [vmem:[#allocation1] sm:$0xff pattern:$0x75316420]
    %v6428 = vld.sshfl [vmem:[#allocation1 + $0x10] sm:$0xff pattern:$0x75316420]
    %v6429 = vld.sshfl [vmem:[#allocation1 + $0x20] sm:$0xff pattern:$0x75316420]
    %v6430 = vld.sshfl [vmem:[#allocation1 + $0x30] sm:$0xff pattern:$0x75316420]
    %6431 = vst [vmem:[#allocation1] ss:$2 sm:$0xff] %v4681
    %6432 = vst [vmem:[%s6365] ss:$2 sm:$0xff] %v6256
    %6433 = vst [vmem:[%s6367] ss:$2 sm:$0xff] %v4682
    %6434 = vst [vmem:[%s6369] ss:$2 sm:$0xff] %v6257
    %6435 = vst [vmem:[%s6371] ss:$2 sm:$0xff] %v4683
    %6436 = vst [vmem:[%s6373] ss:$2 sm:$0xff] %v6258
    %6437 = vst [vmem:[%s6375] ss:$2 sm:$0xff] %v4684
    %6438 = vst [vmem:[%s6377] ss:$2 sm:$0xff] %v6259
    %v6439 = vld.sshfl [vmem:[#allocation1] sm:$0xff pattern:$0x75316420]
    %v6440 = vld.sshfl [vmem:[#allocation1 + $0x10] sm:$0xff pattern:$0x75316420]
    %v6441 = vld.sshfl [vmem:[#allocation1 + $0x20] sm:$0xff pattern:$0x75316420]
    %v6442 = vld.sshfl [vmem:[#allocation1 + $0x30] sm:$0xff pattern:$0x75316420]
    %6443 = vst [vmem:[#allocation1] ss:$2 sm:$0xff] %v4685
    %6444 = vst [vmem:[%s6365] ss:$2 sm:$0xff] %v6260
    %6445 = vst [vmem:[%s6367] ss:$2 sm:$0xff] %v4686
    %6446 = vst [vmem:[%s6369] ss:$2 sm:$0xff] %v6261
    %6447 = vst [vmem:[%s6371] ss:$2 sm:$0xff] %v4687
    %6448 = vst [vmem:[%s6373] ss:$2 sm:$0xff] %v6262
    %6449 = vst [vmem:[%s6375] ss:$2 sm:$0xff] %v4688
    %6450 = vst [vmem:[%s6377] ss:$2 sm:$0xff] %v6263
    %v6451 = vld.sshfl [vmem:[#allocation1] sm:$0xff pattern:$0x75316420]
    %v6452 = vld.sshfl [vmem:[#allocation1 + $0x10] sm:$0xff pattern:$0x75316420]
    %v6453 = vld.sshfl [vmem:[#allocation1 + $0x20] sm:$0xff pattern:$0x75316420]
    %v6454 = vld.sshfl [vmem:[#allocation1 + $0x30] sm:$0xff pattern:$0x75316420]
    %6455 = vst [vmem:[#allocation1] ss:$2 sm:$0xff] %v4689
    %6456 = vst [vmem:[%s6365] ss:$2 sm:$0xff] %v6264
    %6457 = vst [vmem:[%s6367] ss:$2 sm:$0xff] %v4690
    %6458 = vst [vmem:[%s6369] ss:$2 sm:$0xff] %v6265
    %6459 = vst [vmem:[%s6371] ss:$2 sm:$0xff] %v4691
    %6460 = vst [vmem:[%s6373] ss:$2 sm:$0xff] %v6266
    %6461 = vst [vmem:[%s6375] ss:$2 sm:$0xff] %v4692
    %6462 = vst [vmem:[%s6377] ss:$2 sm:$0xff] %v6267
    %v6463 = vld.sshfl [vmem:[#allocation1] sm:$0xff pattern:$0x75316420]
    %v6464 = vld.sshfl [vmem:[#allocation1 + $0x10] sm:$0xff pattern:$0x75316420]
    %v6465 = vld.sshfl [vmem:[#allocation1 + $0x20] sm:$0xff pattern:$0x75316420]
    %v6466 = vld.sshfl [vmem:[#allocation1 + $0x30] sm:$0xff pattern:$0x75316420]
    %6467 = vst [vmem:[#allocation1] ss:$2 sm:$0xff] %v4693
    %6468 = vst [vmem:[%s6365] ss:$2 sm:$0xff] %v6268
    %6469 = vst [vmem:[%s6367] ss:$2 sm:$0xff] %v4694
    %6470 = vst [vmem:[%s6369] ss:$2 sm:$0xff] %v6269
    %6471 = vst [vmem:[%s6371] ss:$2 sm:$0xff] %v4695
    %6472 = vst [vmem:[%s6373] ss:$2 sm:$0xff] %v6270
    %6473 = vst [vmem:[%s6375] ss:$2 sm:$0xff] %v4696
    %6474 = vst [vmem:[%s6377] ss:$2 sm:$0xff] %v6271
    %v6475 = vld.sshfl [vmem:[#allocation1] sm:$0xff pattern:$0x75316420]
    %v6476 = vld.sshfl [vmem:[#allocation1 + $0x10] sm:$0xff pattern:$0x75316420]
    %v6477 = vld.sshfl [vmem:[#allocation1 + $0x20] sm:$0xff pattern:$0x75316420]
    %v6478 = vld.sshfl [vmem:[#allocation1 + $0x30] sm:$0xff pattern:$0x75316420]
    %6479 = vst [vmem:[#allocation1] ss:$2 sm:$0xff] %v4697
    %6480 = vst [vmem:[%s6365] ss:$2 sm:$0xff] %v6272
    %6481 = vst [vmem:[%s6367] ss:$2 sm:$0xff] %v4698
    %6482 = vst [vmem:[%s6369] ss:$2 sm:$0xff] %v6273
    %6483 = vst [vmem:[%s6371] ss:$2 sm:$0xff] %v4699
    %6484 = vst [vmem:[%s6373] ss:$2 sm:$0xff] %v6274
    %6485 = vst [vmem:[%s6375] ss:$2 sm:$0xff] %v4700
    %6486 = vst [vmem:[%s6377] ss:$2 sm:$0xff] %v6275
    %v6487 = vld.sshfl [vmem:[#allocation1] sm:$0xff pattern:$0x75316420]
    %v6488 = vld.sshfl [vmem:[#allocation1 + $0x10] sm:$0xff pattern:$0x75316420]
    %v6489 = vld.sshfl [vmem:[#allocation1 + $0x20] sm:$0xff pattern:$0x75316420]
    %v6490 = vld.sshfl [vmem:[#allocation1 + $0x30] sm:$0xff pattern:$0x75316420]
    %6491 = vst [vmem:[#allocation1] ss:$2 sm:$0xff] %v4701
    %6492 = vst [vmem:[%s6365] ss:$2 sm:$0xff] %v6276
    %6493 = vst [vmem:[%s6367] ss:$2 sm:$0xff] %v4702
    %6494 = vst [vmem:[%s6369] ss:$2 sm:$0xff] %v6277
    %6495 = vst [vmem:[%s6371] ss:$2 sm:$0xff] %v4703
    %6496 = vst [vmem:[%s6373] ss:$2 sm:$0xff] %v6278
    %6497 = vst [vmem:[%s6375] ss:$2 sm:$0xff] %v4704
    %6498 = vst [vmem:[%s6377] ss:$2 sm:$0xff] %v6279
    %v6499 = vld.sshfl [vmem:[#allocation1] sm:$0xff pattern:$0x75316420]
    %v6500 = vld.sshfl [vmem:[#allocation1 + $0x10] sm:$0xff pattern:$0x75316420]
    %v6501 = vld.sshfl [vmem:[#allocation1 + $0x20] sm:$0xff pattern:$0x75316420]
    %v6502 = vld.sshfl [vmem:[#allocation1 + $0x30] sm:$0xff pattern:$0x75316420]
    %6503 = vst [vmem:[#allocation1] ss:$2 sm:$0xff] %v4705
    %6504 = vst [vmem:[%s6365] ss:$2 sm:$0xff] %v6280
    %6505 = vst [vmem:[%s6367] ss:$2 sm:$0xff] %v4706
    %6506 = vst [vmem:[%s6369] ss:$2 sm:$0xff] %v6281
    %6507 = vst [vmem:[%s6371] ss:$2 sm:$0xff] %v4707
    %6508 = vst [vmem:[%s6373] ss:$2 sm:$0xff] %v6282
    %6509 = vst [vmem:[%s6375] ss:$2 sm:$0xff] %v4708
    %6510 = vst [vmem:[%s6377] ss:$2 sm:$0xff] %v6283
    %v6511 = vld.sshfl [vmem:[#allocation1] sm:$0xff pattern:$0x75316420]
    %v6512 = vld.sshfl [vmem:[#allocation1 + $0x10] sm:$0xff pattern:$0x75316420]
    %v6513 = vld.sshfl [vmem:[#allocation1 + $0x20] sm:$0xff pattern:$0x75316420]
    %v6514 = vld.sshfl [vmem:[#allocation1 + $0x30] sm:$0xff pattern:$0x75316420]
    %6515 = vst [vmem:[#allocation1] ss:$2 sm:$0xff] %v4709
    %6516 = vst [vmem:[%s6365] ss:$2 sm:$0xff] %v6284
    %6517 = vst [vmem:[%s6367] ss:$2 sm:$0xff] %v4710
    %6518 = vst [vmem:[%s6369] ss:$2 sm:$0xff] %v6285
    %6519 = vst [vmem:[%s6371] ss:$2 sm:$0xff] %v4711
    %6520 = vst [vmem:[%s6373] ss:$2 sm:$0xff] %v6286
    %6521 = vst [vmem:[%s6375] ss:$2 sm:$0xff] %v4712
    %6522 = vst [vmem:[%s6377] ss:$2 sm:$0xff] %v6287
    %v6523 = vld.sshfl [vmem:[#allocation1] sm:$0xff pattern:$0x75316420]
    %v6524 = vld.sshfl [vmem:[#allocation1 + $0x10] sm:$0xff pattern:$0x75316420]
    %v6525 = vld.sshfl [vmem:[#allocation1 + $0x20] sm:$0xff pattern:$0x75316420]
    %v6526 = vld.sshfl [vmem:[#allocation1 + $0x30] sm:$0xff pattern:$0x75316420]
    %6527 = vst [vmem:[#allocation1] ss:$2 sm:$0xff] %v4713
    %6528 = vst [vmem:[%s6365] ss:$2 sm:$0xff] %v6288
    %6529 = vst [vmem:[%s6367] ss:$2 sm:$0xff] %v4714
    %6530 = vst [vmem:[%s6369] ss:$2 sm:$0xff] %v6289
    %6531 = vst [vmem:[%s6371] ss:$2 sm:$0xff] %v4715
    %6532 = vst [vmem:[%s6373] ss:$2 sm:$0xff] %v6290
    %6533 = vst [vmem:[%s6375] ss:$2 sm:$0xff] %v4716
    %6534 = vst [vmem:[%s6377] ss:$2 sm:$0xff] %v6291
    %v6535 = vld.sshfl [vmem:[#allocation1] sm:$0xff pattern:$0x75316420]
    %v6536 = vld.sshfl [vmem:[#allocation1 + $0x10] sm:$0xff pattern:$0x75316420]
    %v6537 = vld.sshfl [vmem:[#allocation1 + $0x20] sm:$0xff pattern:$0x75316420]
    %v6538 = vld.sshfl [vmem:[#allocation1 + $0x30] sm:$0xff pattern:$0x75316420]
    %6539 = vst [vmem:[#allocation1] ss:$2 sm:$0xff] %v4717
    %6540 = vst [vmem:[%s6365] ss:$2 sm:$0xff] %v6292
    %6541 = vst [vmem:[%s6367] ss:$2 sm:$0xff] %v4718
    %6542 = vst [vmem:[%s6369] ss:$2 sm:$0xff] %v6293
    %6543 = vst [vmem:[%s6371] ss:$2 sm:$0xff] %v4719
    %6544 = vst [vmem:[%s6373] ss:$2 sm:$0xff] %v6294
    %6545 = vst [vmem:[%s6375] ss:$2 sm:$0xff] %v4720
    %6546 = vst [vmem:[%s6377] ss:$2 sm:$0xff] %v6295
    %v6547 = vld.sshfl [vmem:[#allocation1] sm:$0xff pattern:$0x75316420]
    %v6548 = vld.sshfl [vmem:[#allocation1 + $0x10] sm:$0xff pattern:$0x75316420]
    %v6549 = vld.sshfl [vmem:[#allocation1 + $0x20] sm:$0xff pattern:$0x75316420]
    %v6550 = vld.sshfl [vmem:[#allocation1 + $0x30] sm:$0xff pattern:$0x75316420]
    %6551 = vst [vmem:[#allocation1] ss:$2 sm:$0xff] %v4721
    %6552 = vst [vmem:[%s6365] ss:$2 sm:$0xff] %v6296
    %6553 = vst [vmem:[%s6367] ss:$2 sm:$0xff] %v4722
    %6554 = vst [vmem:[%s6369] ss:$2 sm:$0xff] %v6297
    %6555 = vst [vmem:[%s6371] ss:$2 sm:$0xff] %v4723
    %6556 = vst [vmem:[%s6373] ss:$2 sm:$0xff] %v6298
    %6557 = vst [vmem:[%s6375] ss:$2 sm:$0xff] %v4724
    %6558 = vst [vmem:[%s6377] ss:$2 sm:$0xff] %v6299
    %v6559 = vld.sshfl [vmem:[#allocation1] sm:$0xff pattern:$0x75316420]
    %v6560 = vld.sshfl [vmem:[#allocation1 + $0x10] sm:$0xff pattern:$0x75316420]
    %v6561 = vld.sshfl [vmem:[#allocation1 + $0x20] sm:$0xff pattern:$0x75316420]
    %v6562 = vld.sshfl [vmem:[#allocation1 + $0x30] sm:$0xff pattern:$0x75316420]
    %6563 = vst [vmem:[#allocation1] ss:$2 sm:$0xff] %v4725
    %6564 = vst [vmem:[%s6365] ss:$2 sm:$0xff] %v6300
    %6565 = vst [vmem:[%s6367] ss:$2 sm:$0xff] %v4726
    %6566 = vst [vmem:[%s6369] ss:$2 sm:$0xff] %v6301
    %6567 = vst [vmem:[%s6371] ss:$2 sm:$0xff] %v4727
    %6568 = vst [vmem:[%s6373] ss:$2 sm:$0xff] %v6302
    %6569 = vst [vmem:[%s6375] ss:$2 sm:$0xff] %v4728
    %6570 = vst [vmem:[%s6377] ss:$2 sm:$0xff] %v6303
    %v6571 = vld.sshfl [vmem:[#allocation1] sm:$0xff pattern:$0x75316420]
    %v6572 = vld.sshfl [vmem:[#allocation1 + $0x10] sm:$0xff pattern:$0x75316420]
    %v6573 = vld.sshfl [vmem:[#allocation1 + $0x20] sm:$0xff pattern:$0x75316420]
    %v6574 = vld.sshfl [vmem:[#allocation1 + $0x30] sm:$0xff pattern:$0x75316420]
    %6575 = vst [vmem:[#allocation1] ss:$2 sm:$0xff] %v4729
    %6576 = vst [vmem:[%s6365] ss:$2 sm:$0xff] %v6304
    %6577 = vst [vmem:[%s6367] ss:$2 sm:$0xff] %v4730
    %6578 = vst [vmem:[%s6369] ss:$2 sm:$0xff] %v6305
    %6579 = vst [vmem:[%s6371] ss:$2 sm:$0xff] %v4731
    %6580 = vst [vmem:[%s6373] ss:$2 sm:$0xff] %v6306
    %6581 = vst [vmem:[%s6375] ss:$2 sm:$0xff] %v4732
    %6582 = vst [vmem:[%s6377] ss:$2 sm:$0xff] %v6307
    %v6583 = vld.sshfl [vmem:[#allocation1] sm:$0xff pattern:$0x75316420]
    %v6584 = vld.sshfl [vmem:[#allocation1 + $0x10] sm:$0xff pattern:$0x75316420]
    %v6585 = vld.sshfl [vmem:[#allocation1 + $0x20] sm:$0xff pattern:$0x75316420]
    %v6586 = vld.sshfl [vmem:[#allocation1 + $0x30] sm:$0xff pattern:$0x75316420]
    %6587 = vst [vmem:[#allocation1] ss:$2 sm:$0xff] %v4733
    %6588 = vst [vmem:[%s6365] ss:$2 sm:$0xff] %v6308
    %6589 = vst [vmem:[%s6367] ss:$2 sm:$0xff] %v4734
    %6590 = vst [vmem:[%s6369] ss:$2 sm:$0xff] %v6309
    %6591 = vst [vmem:[%s6371] ss:$2 sm:$0xff] %v4735
    %6592 = vst [vmem:[%s6373] ss:$2 sm:$0xff] %v6310
    %6593 = vst [vmem:[%s6375] ss:$2 sm:$0xff] %v4736
    %6594 = vst [vmem:[%s6377] ss:$2 sm:$0xff] %v6311
    %v6595 = vld.sshfl [vmem:[#allocation1] sm:$0xff pattern:$0x75316420]
    %v6596 = vld.sshfl [vmem:[#allocation1 + $0x10] sm:$0xff pattern:$0x75316420]
    %v6597 = vld.sshfl [vmem:[#allocation1 + $0x20] sm:$0xff pattern:$0x75316420]
    %v6598 = vld.sshfl [vmem:[#allocation1 + $0x30] sm:$0xff pattern:$0x75316420]
    %6599 = vst [vmem:[#allocation1] ss:$2 sm:$0xff] %v4737
    %6600 = vst [vmem:[%s6365] ss:$2 sm:$0xff] %v6312
    %6601 = vst [vmem:[%s6367] ss:$2 sm:$0xff] %v4738
    %6602 = vst [vmem:[%s6369] ss:$2 sm:$0xff] %v6313
    %6603 = vst [vmem:[%s6371] ss:$2 sm:$0xff] %v4739
    %6604 = vst [vmem:[%s6373] ss:$2 sm:$0xff] %v6314
    %6605 = vst [vmem:[%s6375] ss:$2 sm:$0xff] %v4740
    %6606 = vst [vmem:[%s6377] ss:$2 sm:$0xff] %v6315
    %v6607 = vld.sshfl [vmem:[#allocation1] sm:$0xff pattern:$0x75316420]
    %v6608 = vld.sshfl [vmem:[#allocation1 + $0x10] sm:$0xff pattern:$0x75316420]
    %v6609 = vld.sshfl [vmem:[#allocation1 + $0x20] sm:$0xff pattern:$0x75316420]
    %v6610 = vld.sshfl [vmem:[#allocation1 + $0x30] sm:$0xff pattern:$0x75316420]
    %6611 = vst [vmem:[#allocation1] ss:$2 sm:$0xff] %v4741
    %6612 = vst [vmem:[%s6365] ss:$2 sm:$0xff] %v6316
    %6613 = vst [vmem:[%s6367] ss:$2 sm:$0xff] %v4742
    %6614 = vst [vmem:[%s6369] ss:$2 sm:$0xff] %v6317
    %6615 = vst [vmem:[%s6371] ss:$2 sm:$0xff] %v4743
    %6616 = vst [vmem:[%s6373] ss:$2 sm:$0xff] %v6318
    %6617 = vst [vmem:[%s6375] ss:$2 sm:$0xff] %v4744
    %6618 = vst [vmem:[%s6377] ss:$2 sm:$0xff] %v6319
    %v6619 = vld.sshfl [vmem:[#allocation1] sm:$0xff pattern:$0x75316420]
    %v6620 = vld.sshfl [vmem:[#allocation1 + $0x10] sm:$0xff pattern:$0x75316420]
    %v6621 = vld.sshfl [vmem:[#allocation1 + $0x20] sm:$0xff pattern:$0x75316420]
    %v6622 = vld.sshfl [vmem:[#allocation1 + $0x30] sm:$0xff pattern:$0x75316420]
    %6623 = vst [vmem:[#allocation1] ss:$2 sm:$0xff] %v4745
    %6624 = vst [vmem:[%s6365] ss:$2 sm:$0xff] %v6320
    %6625 = vst [vmem:[%s6367] ss:$2 sm:$0xff] %v4746
    %6626 = vst [vmem:[%s6369] ss:$2 sm:$0xff] %v6321
    %6627 = vst [vmem:[%s6371] ss:$2 sm:$0xff] %v4747
    %6628 = vst [vmem:[%s6373] ss:$2 sm:$0xff] %v6322
    %6629 = vst [vmem:[%s6375] ss:$2 sm:$0xff] %v4748
    %6630 = vst [vmem:[%s6377] ss:$2 sm:$0xff] %v6323
    %v6631 = vld.sshfl [vmem:[#allocation1] sm:$0xff pattern:$0x75316420]
    %v6632 = vld.sshfl [vmem:[#allocation1 + $0x10] sm:$0xff pattern:$0x75316420]
    %v6633 = vld.sshfl [vmem:[#allocation1 + $0x20] sm:$0xff pattern:$0x75316420]
    %v6634 = vld.sshfl [vmem:[#allocation1 + $0x30] sm:$0xff pattern:$0x75316420]
    %6635 = vst [vmem:[#allocation1] ss:$2 sm:$0xff] %v4749
    %6636 = vst [vmem:[%s6365] ss:$2 sm:$0xff] %v6324
    %6637 = vst [vmem:[%s6367] ss:$2 sm:$0xff] %v4750
    %6638 = vst [vmem:[%s6369] ss:$2 sm:$0xff] %v6325
    %6639 = vst [vmem:[%s6371] ss:$2 sm:$0xff] %v4751
    %6640 = vst [vmem:[%s6373] ss:$2 sm:$0xff] %v6326
    %6641 = vst [vmem:[%s6375] ss:$2 sm:$0xff] %v4752
    %6642 = vst [vmem:[%s6377] ss:$2 sm:$0xff] %v6327
    %v6643 = vld.sshfl [vmem:[#allocation1] sm:$0xff pattern:$0x75316420]
    %v6644 = vld.sshfl [vmem:[#allocation1 + $0x10] sm:$0xff pattern:$0x75316420]
    %v6645 = vld.sshfl [vmem:[#allocation1 + $0x20] sm:$0xff pattern:$0x75316420]
    %v6646 = vld.sshfl [vmem:[#allocation1 + $0x30] sm:$0xff pattern:$0x75316420]
    %6647 = vst [vmem:[#allocation1] ss:$2 sm:$0xff] %v4753
    %6648 = vst [vmem:[%s6365] ss:$2 sm:$0xff] %v6328
    %6649 = vst [vmem:[%s6367] ss:$2 sm:$0xff] %v4754
    %6650 = vst [vmem:[%s6369] ss:$2 sm:$0xff] %v6329
    %6651 = vst [vmem:[%s6371] ss:$2 sm:$0xff] %v4755
    %6652 = vst [vmem:[%s6373] ss:$2 sm:$0xff] %v6330
    %6653 = vst [vmem:[%s6375] ss:$2 sm:$0xff] %v4756
    %6654 = vst [vmem:[%s6377] ss:$2 sm:$0xff] %v6331
    %v6655 = vld.sshfl [vmem:[#allocation1] sm:$0xff pattern:$0x75316420]
    %v6656 = vld.sshfl [vmem:[#allocation1 + $0x10] sm:$0xff pattern:$0x75316420]
    %v6657 = vld.sshfl [vmem:[#allocation1 + $0x20] sm:$0xff pattern:$0x75316420]
    %v6658 = vld.sshfl [vmem:[#allocation1 + $0x30] sm:$0xff pattern:$0x75316420]
    %6659 = vst [vmem:[#allocation1] ss:$2 sm:$0xff] %v4757
    %6660 = vst [vmem:[%s6365] ss:$2 sm:$0xff] %v6332
    %6661 = vst [vmem:[%s6367] ss:$2 sm:$0xff] %v4758
    %6662 = vst [vmem:[%s6369] ss:$2 sm:$0xff] %v6333
    %6663 = vst [vmem:[%s6371] ss:$2 sm:$0xff] %v4759
    %6664 = vst [vmem:[%s6373] ss:$2 sm:$0xff] %v6334
    %6665 = vst [vmem:[%s6375] ss:$2 sm:$0xff] %v4760
    %6666 = vst [vmem:[%s6377] ss:$2 sm:$0xff] %v6335
    %v6667 = vld.sshfl [vmem:[#allocation1] sm:$0xff pattern:$0x75316420]
    %v6668 = vld.sshfl [vmem:[#allocation1 + $0x10] sm:$0xff pattern:$0x75316420]
    %v6669 = vld.sshfl [vmem:[#allocation1 + $0x20] sm:$0xff pattern:$0x75316420]
    %v6670 = vld.sshfl [vmem:[#allocation1 + $0x30] sm:$0xff pattern:$0x75316420]
    %6671 = vst [vmem:[#allocation1] ss:$2 sm:$0xff] %v4761
    %6672 = vst [vmem:[%s6365] ss:$2 sm:$0xff] %v6336
    %6673 = vst [vmem:[%s6367] ss:$2 sm:$0xff] %v4762
    %6674 = vst [vmem:[%s6369] ss:$2 sm:$0xff] %v6337
    %6675 = vst [vmem:[%s6371] ss:$2 sm:$0xff] %v4763
    %6676 = vst [vmem:[%s6373] ss:$2 sm:$0xff] %v6338
    %6677 = vst [vmem:[%s6375] ss:$2 sm:$0xff] %v4764
    %6678 = vst [vmem:[%s6377] ss:$2 sm:$0xff] %v6339
    %v6679 = vld.sshfl [vmem:[#allocation1] sm:$0xff pattern:$0x75316420]
    %v6680 = vld.sshfl [vmem:[#allocation1 + $0x10] sm:$0xff pattern:$0x75316420]
    %v6681 = vld.sshfl [vmem:[#allocation1 + $0x20] sm:$0xff pattern:$0x75316420]
    %v6682 = vld.sshfl [vmem:[#allocation1 + $0x30] sm:$0xff pattern:$0x75316420]
    %6683 = vst [vmem:[#allocation1] ss:$2 sm:$0xff] %v4765
    %6684 = vst [vmem:[%s6365] ss:$2 sm:$0xff] %v6340
    %6685 = vst [vmem:[%s6367] ss:$2 sm:$0xff] %v4766
    %6686 = vst [vmem:[%s6369] ss:$2 sm:$0xff] %v6341
    %6687 = vst [vmem:[%s6371] ss:$2 sm:$0xff] %v4767
    %6688 = vst [vmem:[%s6373] ss:$2 sm:$0xff] %v6342
    %6689 = vst [vmem:[%s6375] ss:$2 sm:$0xff] %v4768
    %6690 = vst [vmem:[%s6377] ss:$2 sm:$0xff] %v6343
    %v6691 = vld.sshfl [vmem:[#allocation1] sm:$0xff pattern:$0x75316420]
    %v6692 = vld.sshfl [vmem:[#allocation1 + $0x10] sm:$0xff pattern:$0x75316420]
    %v6693 = vld.sshfl [vmem:[#allocation1 + $0x20] sm:$0xff pattern:$0x75316420]
    %v6694 = vld.sshfl [vmem:[#allocation1 + $0x30] sm:$0xff pattern:$0x75316420]
    %6695 = vst [vmem:[#allocation1] ss:$2 sm:$0xff] %v4769
    %6696 = vst [vmem:[%s6365] ss:$2 sm:$0xff] %v6344
    %6697 = vst [vmem:[%s6367] ss:$2 sm:$0xff] %v4770
    %6698 = vst [vmem:[%s6369] ss:$2 sm:$0xff] %v6345
    %6699 = vst [vmem:[%s6371] ss:$2 sm:$0xff] %v4771
    %6700 = vst [vmem:[%s6373] ss:$2 sm:$0xff] %v6346
    %6701 = vst [vmem:[%s6375] ss:$2 sm:$0xff] %v4772
    %6702 = vst [vmem:[%s6377] ss:$2 sm:$0xff] %v6347
    %v6703 = vld.sshfl [vmem:[#allocation1] sm:$0xff pattern:$0x75316420]
    %v6704 = vld.sshfl [vmem:[#allocation1 + $0x10] sm:$0xff pattern:$0x75316420]
    %v6705 = vld.sshfl [vmem:[#allocation1 + $0x20] sm:$0xff pattern:$0x75316420]
    %v6706 = vld.sshfl [vmem:[#allocation1 + $0x30] sm:$0xff pattern:$0x75316420]
    %6707 = vst [vmem:[#allocation1] ss:$2 sm:$0xff] %v4773
    %6708 = vst [vmem:[%s6365] ss:$2 sm:$0xff] %v6348
    %6709 = vst [vmem:[%s6367] ss:$2 sm:$0xff] %v4774
    %6710 = vst [vmem:[%s6369] ss:$2 sm:$0xff] %v6349
    %6711 = vst [vmem:[%s6371] ss:$2 sm:$0xff] %v4775
    %6712 = vst [vmem:[%s6373] ss:$2 sm:$0xff] %v6350
    %6713 = vst [vmem:[%s6375] ss:$2 sm:$0xff] %v4776
    %6714 = vst [vmem:[%s6377] ss:$2 sm:$0xff] %v6351
    %v6715 = vld.sshfl [vmem:[#allocation1] sm:$0xff pattern:$0x75316420]
    %v6716 = vld.sshfl [vmem:[#allocation1 + $0x10] sm:$0xff pattern:$0x75316420]
    %v6717 = vld.sshfl [vmem:[#allocation1 + $0x20] sm:$0xff pattern:$0x75316420]
    %v6718 = vld.sshfl [vmem:[#allocation1 + $0x30] sm:$0xff pattern:$0x75316420]
    %6719 = vst [vmem:[#allocation1] ss:$2 sm:$0xff] %v4777
    %6720 = vst [vmem:[%s6365] ss:$2 sm:$0xff] %v6352
    %6721 = vst [vmem:[%s6367] ss:$2 sm:$0xff] %v4778
    %6722 = vst [vmem:[%s6369] ss:$2 sm:$0xff] %v6353
    %6723 = vst [vmem:[%s6371] ss:$2 sm:$0xff] %v4779
    %6724 = vst [vmem:[%s6373] ss:$2 sm:$0xff] %v6354
    %6725 = vst [vmem:[%s6375] ss:$2 sm:$0xff] %v4780
    %6726 = vst [vmem:[%s6377] ss:$2 sm:$0xff] %v6355
    %v6727 = vld.sshfl [vmem:[#allocation1] sm:$0xff pattern:$0x75316420]
    %v6728 = vld.sshfl [vmem:[#allocation1 + $0x10] sm:$0xff pattern:$0x75316420]
    %v6729 = vld.sshfl [vmem:[#allocation1 + $0x20] sm:$0xff pattern:$0x75316420]
    %v6730 = vld.sshfl [vmem:[#allocation1 + $0x30] sm:$0xff pattern:$0x75316420]
    %6731 = vst [vmem:[#allocation1] ss:$2 sm:$0xff] %v4781
    %6732 = vst [vmem:[%s6365] ss:$2 sm:$0xff] %v6356
    %6733 = vst [vmem:[%s6367] ss:$2 sm:$0xff] %v4782
    %6734 = vst [vmem:[%s6369] ss:$2 sm:$0xff] %v6357
    %6735 = vst [vmem:[%s6371] ss:$2 sm:$0xff] %v4783
    %6736 = vst [vmem:[%s6373] ss:$2 sm:$0xff] %v6358
    %6737 = vst [vmem:[%s6375] ss:$2 sm:$0xff] %v4784
    %6738 = vst [vmem:[%s6377] ss:$2 sm:$0xff] %v6359
    %v6739 = vld.sshfl [vmem:[#allocation1] sm:$0xff pattern:$0x75316420]
    %v6740 = vld.sshfl [vmem:[#allocation1 + $0x10] sm:$0xff pattern:$0x75316420]
    %v6741 = vld.sshfl [vmem:[#allocation1 + $0x20] sm:$0xff pattern:$0x75316420]
    %v6742 = vld.sshfl [vmem:[#allocation1 + $0x30] sm:$0xff pattern:$0x75316420]
    %6743 = vst [vmem:[#allocation1] ss:$2 sm:$0xff] %v4785
    %6744 = vst [vmem:[%s6365] ss:$2 sm:$0xff] %v6360
    %6745 = vst [vmem:[%s6367] ss:$2 sm:$0xff] %v4786
    %6746 = vst [vmem:[%s6369] ss:$2 sm:$0xff] %v6361
    %6747 = vst [vmem:[%s6371] ss:$2 sm:$0xff] %v4787
    %6748 = vst [vmem:[%s6373] ss:$2 sm:$0xff] %v6362
    %6749 = vst [vmem:[%s6375] ss:$2 sm:$0xff] %v4788
    %6750 = vst [vmem:[%s6377] ss:$2 sm:$0xff] %v6363
    %v6751 = vld.sshfl [vmem:[#allocation1] sm:$0xff pattern:$0x75316420]
    %v6752 = vld.sshfl [vmem:[#allocation1 + $0x10] sm:$0xff pattern:$0x75316420]
    %v6753 = vld.sshfl [vmem:[#allocation1 + $0x20] sm:$0xff pattern:$0x75316420]
    %v6754 = vld.sshfl [vmem:[#allocation1 + $0x30] sm:$0xff pattern:$0x75316420]
    %6755 = vset.pattern.permute.xlu0 0
    %6756 = vperm.xlu0 %6755, %v6379
    %v6757 = vpop.permute.xlu0 %6756
    %6758 = vset.pattern.permute.xlu0 0
    %6759 = vperm.xlu0 %6758, %v6380
    %v6760 = vpop.permute.xlu0 %6759
    %6761 = vset.pattern.permute.xlu0 0
    %6762 = vperm.xlu0 %6761, %v6381
    %v6763 = vpop.permute.xlu0 %6762
    %6764 = vset.pattern.permute.xlu0 0
    %6765 = vperm.xlu0 %6764, %v6382
    %v6766 = vpop.permute.xlu0 %6765
    %6767 = vset.pattern.permute.xlu0 0
    %6768 = vperm.xlu0 %6767, %v6391
    %v6769 = vpop.permute.xlu0 %6768
    %6770 = vset.pattern.permute.xlu0 0
    %6771 = vperm.xlu0 %6770, %v6392
    %v6772 = vpop.permute.xlu0 %6771
    %6773 = vset.pattern.permute.xlu0 0
    %6774 = vperm.xlu0 %6773, %v6393
    %v6775 = vpop.permute.xlu0 %6774
    %6776 = vset.pattern.permute.xlu0 0
    %6777 = vperm.xlu0 %6776, %v6394
    %v6778 = vpop.permute.xlu0 %6777
    %6779 = vset.pattern.permute.xlu0 0
    %6780 = vperm.xlu0 %6779, %v6403
    %v6781 = vpop.permute.xlu0 %6780
    %6782 = vset.pattern.permute.xlu0 0
    %6783 = vperm.xlu0 %6782, %v6404
    %v6784 = vpop.permute.xlu0 %6783
    %6785 = vset.pattern.permute.xlu0 0
    %6786 = vperm.xlu0 %6785, %v6405
    %v6787 = vpop.permute.xlu0 %6786
    %6788 = vset.pattern.permute.xlu0 0
    %6789 = vperm.xlu0 %6788, %v6406
    %v6790 = vpop.permute.xlu0 %6789
    %6791 = vset.pattern.permute.xlu0 0
    %6792 = vperm.xlu0 %6791, %v6415
    %v6793 = vpop.permute.xlu0 %6792
    %6794 = vset.pattern.permute.xlu0 0
    %6795 = vperm.xlu0 %6794, %v6416
    %v6796 = vpop.permute.xlu0 %6795
    %6797 = vset.pattern.permute.xlu0 0
    %6798 = vperm.xlu0 %6797, %v6417
    %v6799 = vpop.permute.xlu0 %6798
    %6800 = vset.pattern.permute.xlu0 0
    %6801 = vperm.xlu0 %6800, %v6418
    %v6802 = vpop.permute.xlu0 %6801
    %6803 = vset.pattern.permute.xlu0 0
    %6804 = vperm.xlu0 %6803, %v6427
    %v6805 = vpop.permute.xlu0 %6804
    %6806 = vset.pattern.permute.xlu0 0
    %6807 = vperm.xlu0 %6806, %v6428
    %v6808 = vpop.permute.xlu0 %6807
    %6809 = vset.pattern.permute.xlu0 0
    %6810 = vperm.xlu0 %6809, %v6429
    %v6811 = vpop.permute.xlu0 %6810
    %6812 = vset.pattern.permute.xlu0 0
    %6813 = vperm.xlu0 %6812, %v6430
    %v6814 = vpop.permute.xlu0 %6813
    %6815 = vset.pattern.permute.xlu0 0
    %6816 = vperm.xlu0 %6815, %v6439
    %v6817 = vpop.permute.xlu0 %6816
    %6818 = vset.pattern.permute.xlu0 0
    %6819 = vperm.xlu0 %6818, %v6440
    %v6820 = vpop.permute.xlu0 %6819
    %6821 = vset.pattern.permute.xlu0 0
    %6822 = vperm.xlu0 %6821, %v6441
    %v6823 = vpop.permute.xlu0 %6822
    %6824 = vset.pattern.permute.xlu0 0
    %6825 = vperm.xlu0 %6824, %v6442
    %v6826 = vpop.permute.xlu0 %6825
    %6827 = vset.pattern.permute.xlu0 0
    %6828 = vperm.xlu0 %6827, %v6451
    %v6829 = vpop.permute.xlu0 %6828
    %6830 = vset.pattern.permute.xlu0 0
    %6831 = vperm.xlu0 %6830, %v6452
    %v6832 = vpop.permute.xlu0 %6831
    %6833 = vset.pattern.permute.xlu0 0
    %6834 = vperm.xlu0 %6833, %v6453
    %v6835 = vpop.permute.xlu0 %6834
    %6836 = vset.pattern.permute.xlu0 0
    %6837 = vperm.xlu0 %6836, %v6454
    %v6838 = vpop.permute.xlu0 %6837
    %6839 = vset.pattern.permute.xlu0 0
    %6840 = vperm.xlu0 %6839, %v6463
    %v6841 = vpop.permute.xlu0 %6840
    %6842 = vset.pattern.permute.xlu0 0
    %6843 = vperm.xlu0 %6842, %v6464
    %v6844 = vpop.permute.xlu0 %6843
    %6845 = vset.pattern.permute.xlu0 0
    %6846 = vperm.xlu0 %6845, %v6465
    %v6847 = vpop.permute.xlu0 %6846
    %6848 = vset.pattern.permute.xlu0 0
    %6849 = vperm.xlu0 %6848, %v6466
    %v6850 = vpop.permute.xlu0 %6849
    %6851 = vset.pattern.permute.xlu0 0
    %6852 = vperm.xlu0 %6851, %v6475
    %v6853 = vpop.permute.xlu0 %6852
    %6854 = vset.pattern.permute.xlu0 0
    %6855 = vperm.xlu0 %6854, %v6476
    %v6856 = vpop.permute.xlu0 %6855
    %6857 = vset.pattern.permute.xlu0 0
    %6858 = vperm.xlu0 %6857, %v6477
    %v6859 = vpop.permute.xlu0 %6858
    %6860 = vset.pattern.permute.xlu0 0
    %6861 = vperm.xlu0 %6860, %v6478
    %v6862 = vpop.permute.xlu0 %6861
    %6863 = vset.pattern.permute.xlu0 0
    %6864 = vperm.xlu0 %6863, %v6487
    %v6865 = vpop.permute.xlu0 %6864
    %6866 = vset.pattern.permute.xlu0 0
    %6867 = vperm.xlu0 %6866, %v6488
    %v6868 = vpop.permute.xlu0 %6867
    %6869 = vset.pattern.permute.xlu0 0
    %6870 = vperm.xlu0 %6869, %v6489
    %v6871 = vpop.permute.xlu0 %6870
    %6872 = vset.pattern.permute.xlu0 0
    %6873 = vperm.xlu0 %6872, %v6490
    %v6874 = vpop.permute.xlu0 %6873
    %6875 = vset.pattern.permute.xlu0 0
    %6876 = vperm.xlu0 %6875, %v6499
    %v6877 = vpop.permute.xlu0 %6876
    %6878 = vset.pattern.permute.xlu0 0
    %6879 = vperm.xlu0 %6878, %v6500
    %v6880 = vpop.permute.xlu0 %6879
    %6881 = vset.pattern.permute.xlu0 0
    %6882 = vperm.xlu0 %6881, %v6501
    %v6883 = vpop.permute.xlu0 %6882
    %6884 = vset.pattern.permute.xlu0 0
    %6885 = vperm.xlu0 %6884, %v6502
    %v6886 = vpop.permute.xlu0 %6885
    %6887 = vset.pattern.permute.xlu0 0
    %6888 = vperm.xlu0 %6887, %v6511
    %v6889 = vpop.permute.xlu0 %6888
    %6890 = vset.pattern.permute.xlu0 0
    %6891 = vperm.xlu0 %6890, %v6512
    %v6892 = vpop.permute.xlu0 %6891
    %6893 = vset.pattern.permute.xlu0 0
    %6894 = vperm.xlu0 %6893, %v6513
    %v6895 = vpop.permute.xlu0 %6894
    %6896 = vset.pattern.permute.xlu0 0
    %6897 = vperm.xlu0 %6896, %v6514
    %v6898 = vpop.permute.xlu0 %6897
    %6899 = vset.pattern.permute.xlu0 0
    %6900 = vperm.xlu0 %6899, %v6523
    %v6901 = vpop.permute.xlu0 %6900
    %6902 = vset.pattern.permute.xlu0 0
    %6903 = vperm.xlu0 %6902, %v6524
    %v6904 = vpop.permute.xlu0 %6903
    %6905 = vset.pattern.permute.xlu0 0
    %6906 = vperm.xlu0 %6905, %v6525
    %v6907 = vpop.permute.xlu0 %6906
    %6908 = vset.pattern.permute.xlu0 0
    %6909 = vperm.xlu0 %6908, %v6526
    %v6910 = vpop.permute.xlu0 %6909
    %6911 = vset.pattern.permute.xlu0 0
    %6912 = vperm.xlu0 %6911, %v6535
    %v6913 = vpop.permute.xlu0 %6912
    %6914 = vset.pattern.permute.xlu0 0
    %6915 = vperm.xlu0 %6914, %v6536
    %v6916 = vpop.permute.xlu0 %6915
    %6917 = vset.pattern.permute.xlu0 0
    %6918 = vperm.xlu0 %6917, %v6537
    %v6919 = vpop.permute.xlu0 %6918
    %6920 = vset.pattern.permute.xlu0 0
    %6921 = vperm.xlu0 %6920, %v6538
    %v6922 = vpop.permute.xlu0 %6921
    %6923 = vset.pattern.permute.xlu0 0
    %6924 = vperm.xlu0 %6923, %v6547
    %v6925 = vpop.permute.xlu0 %6924
    %6926 = vset.pattern.permute.xlu0 0
    %6927 = vperm.xlu0 %6926, %v6548
    %v6928 = vpop.permute.xlu0 %6927
    %6929 = vset.pattern.permute.xlu0 0
    %6930 = vperm.xlu0 %6929, %v6549
    %v6931 = vpop.permute.xlu0 %6930
    %6932 = vset.pattern.permute.xlu0 0
    %6933 = vperm.xlu0 %6932, %v6550
    %v6934 = vpop.permute.xlu0 %6933
    %6935 = vset.pattern.permute.xlu0 0
    %6936 = vperm.xlu0 %6935, %v6559
    %v6937 = vpop.permute.xlu0 %6936
    %6938 = vset.pattern.permute.xlu0 0
    %6939 = vperm.xlu0 %6938, %v6560
    %v6940 = vpop.permute.xlu0 %6939
    %6941 = vset.pattern.permute.xlu0 0
    %6942 = vperm.xlu0 %6941, %v6561
    %v6943 = vpop.permute.xlu0 %6942
    %6944 = vset.pattern.permute.xlu0 0
    %6945 = vperm.xlu0 %6944, %v6562
    %v6946 = vpop.permute.xlu0 %6945
    %6947 = vset.pattern.permute.xlu0 0
    %6948 = vperm.xlu0 %6947, %v6571
    %v6949 = vpop.permute.xlu0 %6948
    %6950 = vset.pattern.permute.xlu0 0
    %6951 = vperm.xlu0 %6950, %v6572
    %v6952 = vpop.permute.xlu0 %6951
    %6953 = vset.pattern.permute.xlu0 0
    %6954 = vperm.xlu0 %6953, %v6573
    %v6955 = vpop.permute.xlu0 %6954
    %6956 = vset.pattern.permute.xlu0 0
    %6957 = vperm.xlu0 %6956, %v6574
    %v6958 = vpop.permute.xlu0 %6957
    %6959 = vset.pattern.permute.xlu0 0
    %6960 = vperm.xlu0 %6959, %v6583
    %v6961 = vpop.permute.xlu0 %6960
    %6962 = vset.pattern.permute.xlu0 0
    %6963 = vperm.xlu0 %6962, %v6584
    %v6964 = vpop.permute.xlu0 %6963
    %6965 = vset.pattern.permute.xlu0 0
    %6966 = vperm.xlu0 %6965, %v6585
    %v6967 = vpop.permute.xlu0 %6966
    %6968 = vset.pattern.permute.xlu0 0
    %6969 = vperm.xlu0 %6968, %v6586
    %v6970 = vpop.permute.xlu0 %6969
    %6971 = vset.pattern.permute.xlu0 0
    %6972 = vperm.xlu0 %6971, %v6595
    %v6973 = vpop.permute.xlu0 %6972
    %6974 = vset.pattern.permute.xlu0 0
    %6975 = vperm.xlu0 %6974, %v6596
    %v6976 = vpop.permute.xlu0 %6975
    %6977 = vset.pattern.permute.xlu0 0
    %6978 = vperm.xlu0 %6977, %v6597
    %v6979 = vpop.permute.xlu0 %6978
    %6980 = vset.pattern.permute.xlu0 0
    %6981 = vperm.xlu0 %6980, %v6598
    %v6982 = vpop.permute.xlu0 %6981
    %6983 = vset.pattern.permute.xlu0 0
    %6984 = vperm.xlu0 %6983, %v6607
    %v6985 = vpop.permute.xlu0 %6984
    %6986 = vset.pattern.permute.xlu0 0
    %6987 = vperm.xlu0 %6986, %v6608
    %v6988 = vpop.permute.xlu0 %6987
    %6989 = vset.pattern.permute.xlu0 0
    %6990 = vperm.xlu0 %6989, %v6609
    %v6991 = vpop.permute.xlu0 %6990
    %6992 = vset.pattern.permute.xlu0 0
    %6993 = vperm.xlu0 %6992, %v6610
    %v6994 = vpop.permute.xlu0 %6993
    %6995 = vset.pattern.permute.xlu0 0
    %6996 = vperm.xlu0 %6995, %v6619
    %v6997 = vpop.permute.xlu0 %6996
    %6998 = vset.pattern.permute.xlu0 0
    %6999 = vperm.xlu0 %6998, %v6620
    %v7000 = vpop.permute.xlu0 %6999
    %7001 = vset.pattern.permute.xlu0 0
    %7002 = vperm.xlu0 %7001, %v6621
    %v7003 = vpop.permute.xlu0 %7002
    %7004 = vset.pattern.permute.xlu0 0
    %7005 = vperm.xlu0 %7004, %v6622
    %v7006 = vpop.permute.xlu0 %7005
    %7007 = vset.pattern.permute.xlu0 0
    %7008 = vperm.xlu0 %7007, %v6631
    %v7009 = vpop.permute.xlu0 %7008
    %7010 = vset.pattern.permute.xlu0 0
    %7011 = vperm.xlu0 %7010, %v6632
    %v7012 = vpop.permute.xlu0 %7011
    %7013 = vset.pattern.permute.xlu0 0
    %7014 = vperm.xlu0 %7013, %v6633
    %v7015 = vpop.permute.xlu0 %7014
    %7016 = vset.pattern.permute.xlu0 0
    %7017 = vperm.xlu0 %7016, %v6634
    %v7018 = vpop.permute.xlu0 %7017
    %7019 = vset.pattern.permute.xlu0 0
    %7020 = vperm.xlu0 %7019, %v6643
    %v7021 = vpop.permute.xlu0 %7020
    %7022 = vset.pattern.permute.xlu0 0
    %7023 = vperm.xlu0 %7022, %v6644
    %v7024 = vpop.permute.xlu0 %7023
    %7025 = vset.pattern.permute.xlu0 0
    %7026 = vperm.xlu0 %7025, %v6645
    %v7027 = vpop.permute.xlu0 %7026
    %7028 = vset.pattern.permute.xlu0 0
    %7029 = vperm.xlu0 %7028, %v6646
    %v7030 = vpop.permute.xlu0 %7029
    %7031 = vset.pattern.permute.xlu0 0
    %7032 = vperm.xlu0 %7031, %v6655
    %v7033 = vpop.permute.xlu0 %7032
    %7034 = vset.pattern.permute.xlu0 0
    %7035 = vperm.xlu0 %7034, %v6656
    %v7036 = vpop.permute.xlu0 %7035
    %7037 = vset.pattern.permute.xlu0 0
    %7038 = vperm.xlu0 %7037, %v6657
    %v7039 = vpop.permute.xlu0 %7038
    %7040 = vset.pattern.permute.xlu0 0
    %7041 = vperm.xlu0 %7040, %v6658
    %v7042 = vpop.permute.xlu0 %7041
    %7043 = vset.pattern.permute.xlu0 0
    %7044 = vperm.xlu0 %7043, %v6667
    %v7045 = vpop.permute.xlu0 %7044
    %7046 = vset.pattern.permute.xlu0 0
    %7047 = vperm.xlu0 %7046, %v6668
    %v7048 = vpop.permute.xlu0 %7047
    %7049 = vset.pattern.permute.xlu0 0
    %7050 = vperm.xlu0 %7049, %v6669
    %v7051 = vpop.permute.xlu0 %7050
    %7052 = vset.pattern.permute.xlu0 0
    %7053 = vperm.xlu0 %7052, %v6670
    %v7054 = vpop.permute.xlu0 %7053
    %7055 = vset.pattern.permute.xlu0 0
    %7056 = vperm.xlu0 %7055, %v6679
    %v7057 = vpop.permute.xlu0 %7056
    %7058 = vset.pattern.permute.xlu0 0
    %7059 = vperm.xlu0 %7058, %v6680
    %v7060 = vpop.permute.xlu0 %7059
    %7061 = vset.pattern.permute.xlu0 0
    %7062 = vperm.xlu0 %7061, %v6681
    %v7063 = vpop.permute.xlu0 %7062
    %7064 = vset.pattern.permute.xlu0 0
    %7065 = vperm.xlu0 %7064, %v6682
    %v7066 = vpop.permute.xlu0 %7065
    %7067 = vset.pattern.permute.xlu0 0
    %7068 = vperm.xlu0 %7067, %v6691
    %v7069 = vpop.permute.xlu0 %7068
    %7070 = vset.pattern.permute.xlu0 0
    %7071 = vperm.xlu0 %7070, %v6692
    %v7072 = vpop.permute.xlu0 %7071
    %7073 = vset.pattern.permute.xlu0 0
    %7074 = vperm.xlu0 %7073, %v6693
    %v7075 = vpop.permute.xlu0 %7074
    %7076 = vset.pattern.permute.xlu0 0
    %7077 = vperm.xlu0 %7076, %v6694
    %v7078 = vpop.permute.xlu0 %7077
    %7079 = vset.pattern.permute.xlu0 0
    %7080 = vperm.xlu0 %7079, %v6703
    %v7081 = vpop.permute.xlu0 %7080
    %7082 = vset.pattern.permute.xlu0 0
    %7083 = vperm.xlu0 %7082, %v6704
    %v7084 = vpop.permute.xlu0 %7083
    %7085 = vset.pattern.permute.xlu0 0
    %7086 = vperm.xlu0 %7085, %v6705
    %v7087 = vpop.permute.xlu0 %7086
    %7088 = vset.pattern.permute.xlu0 0
    %7089 = vperm.xlu0 %7088, %v6706
    %v7090 = vpop.permute.xlu0 %7089
    %7091 = vset.pattern.permute.xlu0 0
    %7092 = vperm.xlu0 %7091, %v6715
    %v7093 = vpop.permute.xlu0 %7092
    %7094 = vset.pattern.permute.xlu0 0
    %7095 = vperm.xlu0 %7094, %v6716
    %v7096 = vpop.permute.xlu0 %7095
    %7097 = vset.pattern.permute.xlu0 0
    %7098 = vperm.xlu0 %7097, %v6717
    %v7099 = vpop.permute.xlu0 %7098
    %7100 = vset.pattern.permute.xlu0 0
    %7101 = vperm.xlu0 %7100, %v6718
    %v7102 = vpop.permute.xlu0 %7101
    %7103 = vset.pattern.permute.xlu0 0
    %7104 = vperm.xlu0 %7103, %v6727
    %v7105 = vpop.permute.xlu0 %7104
    %7106 = vset.pattern.permute.xlu0 0
    %7107 = vperm.xlu0 %7106, %v6728
    %v7108 = vpop.permute.xlu0 %7107
    %7109 = vset.pattern.permute.xlu0 0
    %7110 = vperm.xlu0 %7109, %v6729
    %v7111 = vpop.permute.xlu0 %7110
    %7112 = vset.pattern.permute.xlu0 0
    %7113 = vperm.xlu0 %7112, %v6730
    %v7114 = vpop.permute.xlu0 %7113
    %7115 = vset.pattern.permute.xlu0 0
    %7116 = vperm.xlu0 %7115, %v6739
    %v7117 = vpop.permute.xlu0 %7116
    %7118 = vset.pattern.permute.xlu0 0
    %7119 = vperm.xlu0 %7118, %v6740
    %v7120 = vpop.permute.xlu0 %7119
    %7121 = vset.pattern.permute.xlu0 0
    %7122 = vperm.xlu0 %7121, %v6741
    %v7123 = vpop.permute.xlu0 %7122
    %7124 = vset.pattern.permute.xlu0 0
    %7125 = vperm.xlu0 %7124, %v6742
    %v7126 = vpop.permute.xlu0 %7125
    %7127 = vset.pattern.permute.xlu0 0
    %7128 = vperm.xlu0 %7127, %v6751
    %v7129 = vpop.permute.xlu0 %7128
    %7130 = vset.pattern.permute.xlu0 0
    %7131 = vperm.xlu0 %7130, %v6752
    %v7132 = vpop.permute.xlu0 %7131
    %7133 = vset.pattern.permute.xlu0 0
    %7134 = vperm.xlu0 %7133, %v6753
    %v7135 = vpop.permute.xlu0 %7134
    %7136 = vset.pattern.permute.xlu0 0
    %7137 = vperm.xlu0 %7136, %v6754
    %v7138 = vpop.permute.xlu0 %7137
    %v7139 = vperm.slane %v6757, %v799
    %v7140 = vperm.slane %v6760, %v3194
    %v7141 = vsel %vm3196, %v7140, %v7139
    %v7142 = vperm.slane %v6763, %v3198
    %v7143 = vsel %vm3200, %v7142, %v7141
    %v7144 = vperm.slane %v6766, %v3202
    %v7145 = vsel %vm3204, %v7144, %v7143
    %v7146 = vperm.slane %v6769, %v3206
    %v7147 = vsel %vm3208, %v7146, %v7145
    %v7148 = vperm.slane %v6772, %v3210
    %v7149 = vsel %vm3212, %v7148, %v7147
    %v7150 = vperm.slane %v6775, %v3214
    %v7151 = vsel %vm3216, %v7150, %v7149
    %v7152 = vperm.slane %v6778, %v3218
    %v7153 = vsel %vm3220, %v7152, %v7151
    %v7154 = vperm.slane %v6781, %v3222
    %v7155 = vsel %vm3224, %v7154, %v7153
    %v7156 = vperm.slane %v6784, %v3226
    %v7157 = vsel %vm3228, %v7156, %v7155
    %v7158 = vperm.slane %v6787, %v3230
    %v7159 = vsel %vm3232, %v7158, %v7157
    %v7160 = vperm.slane %v6790, %v3234
    %v7161 = vsel %vm3236, %v7160, %v7159
    %v7162 = vperm.slane %v6793, %v3238
    %v7163 = vsel %vm3240, %v7162, %v7161
    %v7164 = vperm.slane %v6796, %v3242
    %v7165 = vsel %vm3244, %v7164, %v7163
    %v7166 = vperm.slane %v6799, %v3246
    %v7167 = vsel %vm3248, %v7166, %v7165
    %v7168 = vperm.slane %v6802, %v3250
    %v7169 = vsel %vm3252, %v7168, %v7167
    %v7170 = vperm.slane %v6805, %v799
    %v7171 = vperm.slane %v6808, %v3194
    %v7172 = vsel %vm3196, %v7171, %v7170
    %v7173 = vperm.slane %v6811, %v3198
    %v7174 = vsel %vm3200, %v7173, %v7172
    %v7175 = vperm.slane %v6814, %v3202
    %v7176 = vsel %vm3204, %v7175, %v7174
    %v7177 = vperm.slane %v6817, %v3206
    %v7178 = vsel %vm3208, %v7177, %v7176
    %v7179 = vperm.slane %v6820, %v3210
    %v7180 = vsel %vm3212, %v7179, %v7178
    %v7181 = vperm.slane %v6823, %v3214
    %v7182 = vsel %vm3216, %v7181, %v7180
    %v7183 = vperm.slane %v6826, %v3218
    %v7184 = vsel %vm3220, %v7183, %v7182
    %v7185 = vperm.slane %v6829, %v3222
    %v7186 = vsel %vm3224, %v7185, %v7184
    %v7187 = vperm.slane %v6832, %v3226
    %v7188 = vsel %vm3228, %v7187, %v7186
    %v7189 = vperm.slane %v6835, %v3230
    %v7190 = vsel %vm3232, %v7189, %v7188
    %v7191 = vperm.slane %v6838, %v3234
    %v7192 = vsel %vm3236, %v7191, %v7190
    %v7193 = vperm.slane %v6841, %v3238
    %v7194 = vsel %vm3240, %v7193, %v7192
    %v7195 = vperm.slane %v6844, %v3242
    %v7196 = vsel %vm3244, %v7195, %v7194
    %v7197 = vperm.slane %v6847, %v3246
    %v7198 = vsel %vm3248, %v7197, %v7196
    %v7199 = vperm.slane %v6850, %v3250
    %v7200 = vsel %vm3252, %v7199, %v7198
    %v7201 = vperm.slane %v6853, %v799
    %v7202 = vperm.slane %v6856, %v3194
    %v7203 = vsel %vm3196, %v7202, %v7201
    %v7204 = vperm.slane %v6859, %v3198
    %v7205 = vsel %vm3200, %v7204, %v7203
    %v7206 = vperm.slane %v6862, %v3202
    %v7207 = vsel %vm3204, %v7206, %v7205
    %v7208 = vperm.slane %v6865, %v3206
    %v7209 = vsel %vm3208, %v7208, %v7207
    %v7210 = vperm.slane %v6868, %v3210
    %v7211 = vsel %vm3212, %v7210, %v7209
    %v7212 = vperm.slane %v6871, %v3214
    %v7213 = vsel %vm3216, %v7212, %v7211
    %v7214 = vperm.slane %v6874, %v3218
    %v7215 = vsel %vm3220, %v7214, %v7213
    %v7216 = vperm.slane %v6877, %v3222
    %v7217 = vsel %vm3224, %v7216, %v7215
    %v7218 = vperm.slane %v6880, %v3226
    %v7219 = vsel %vm3228, %v7218, %v7217
    %v7220 = vperm.slane %v6883, %v3230
    %v7221 = vsel %vm3232, %v7220, %v7219
    %v7222 = vperm.slane %v6886, %v3234
    %v7223 = vsel %vm3236, %v7222, %v7221
    %v7224 = vperm.slane %v6889, %v3238
    %v7225 = vsel %vm3240, %v7224, %v7223
    %v7226 = vperm.slane %v6892, %v3242
    %v7227 = vsel %vm3244, %v7226, %v7225
    %v7228 = vperm.slane %v6895, %v3246
    %v7229 = vsel %vm3248, %v7228, %v7227
    %v7230 = vperm.slane %v6898, %v3250
    %v7231 = vsel %vm3252, %v7230, %v7229
    %v7232 = vperm.slane %v6901, %v799
    %v7233 = vperm.slane %v6904, %v3194
    %v7234 = vsel %vm3196, %v7233, %v7232
    %v7235 = vperm.slane %v6907, %v3198
    %v7236 = vsel %vm3200, %v7235, %v7234
    %v7237 = vperm.slane %v6910, %v3202
    %v7238 = vsel %vm3204, %v7237, %v7236
    %v7239 = vperm.slane %v6913, %v3206
    %v7240 = vsel %vm3208, %v7239, %v7238
    %v7241 = vperm.slane %v6916, %v3210
    %v7242 = vsel %vm3212, %v7241, %v7240
    %v7243 = vperm.slane %v6919, %v3214
    %v7244 = vsel %vm3216, %v7243, %v7242
    %v7245 = vperm.slane %v6922, %v3218
    %v7246 = vsel %vm3220, %v7245, %v7244
    %v7247 = vperm.slane %v6925, %v3222
    %v7248 = vsel %vm3224, %v7247, %v7246
    %v7249 = vperm.slane %v6928, %v3226
    %v7250 = vsel %vm3228, %v7249, %v7248
    %v7251 = vperm.slane %v6931, %v3230
    %v7252 = vsel %vm3232, %v7251, %v7250
    %v7253 = vperm.slane %v6934, %v3234
    %v7254 = vsel %vm3236, %v7253, %v7252
    %v7255 = vperm.slane %v6937, %v3238
    %v7256 = vsel %vm3240, %v7255, %v7254
    %v7257 = vperm.slane %v6940, %v3242
    %v7258 = vsel %vm3244, %v7257, %v7256
    %v7259 = vperm.slane %v6943, %v3246
    %v7260 = vsel %vm3248, %v7259, %v7258
    %v7261 = vperm.slane %v6946, %v3250
    %v7262 = vsel %vm3252, %v7261, %v7260
    %v7263 = vperm.slane %v6949, %v799
    %v7264 = vperm.slane %v6952, %v3194
    %v7265 = vsel %vm3196, %v7264, %v7263
    %v7266 = vperm.slane %v6955, %v3198
    %v7267 = vsel %vm3200, %v7266, %v7265
    %v7268 = vperm.slane %v6958, %v3202
    %v7269 = vsel %vm3204, %v7268, %v7267
    %v7270 = vperm.slane %v6961, %v3206
    %v7271 = vsel %vm3208, %v7270, %v7269
    %v7272 = vperm.slane %v6964, %v3210
    %v7273 = vsel %vm3212, %v7272, %v7271
    %v7274 = vperm.slane %v6967, %v3214
    %v7275 = vsel %vm3216, %v7274, %v7273
    %v7276 = vperm.slane %v6970, %v3218
    %v7277 = vsel %vm3220, %v7276, %v7275
    %v7278 = vperm.slane %v6973, %v3222
    %v7279 = vsel %vm3224, %v7278, %v7277
    %v7280 = vperm.slane %v6976, %v3226
    %v7281 = vsel %vm3228, %v7280, %v7279
    %v7282 = vperm.slane %v6979, %v3230
    %v7283 = vsel %vm3232, %v7282, %v7281
    %v7284 = vperm.slane %v6982, %v3234
    %v7285 = vsel %vm3236, %v7284, %v7283
    %v7286 = vperm.slane %v6985, %v3238
    %v7287 = vsel %vm3240, %v7286, %v7285
    %v7288 = vperm.slane %v6988, %v3242
    %v7289 = vsel %vm3244, %v7288, %v7287
    %v7290 = vperm.slane %v6991, %v3246
    %v7291 = vsel %vm3248, %v7290, %v7289
    %v7292 = vperm.slane %v6994, %v3250
    %v7293 = vsel %vm3252, %v7292, %v7291
    %v7294 = vperm.slane %v6997, %v799
    %v7295 = vperm.slane %v7000, %v3194
    %v7296 = vsel %vm3196, %v7295, %v7294
    %v7297 = vperm.slane %v7003, %v3198
    %v7298 = vsel %vm3200, %v7297, %v7296
    %v7299 = vperm.slane %v7006, %v3202
    %v7300 = vsel %vm3204, %v7299, %v7298
    %v7301 = vperm.slane %v7009, %v3206
    %v7302 = vsel %vm3208, %v7301, %v7300
    %v7303 = vperm.slane %v7012, %v3210
    %v7304 = vsel %vm3212, %v7303, %v7302
    %v7305 = vperm.slane %v7015, %v3214
    %v7306 = vsel %vm3216, %v7305, %v7304
    %v7307 = vperm.slane %v7018, %v3218
    %v7308 = vsel %vm3220, %v7307, %v7306
    %v7309 = vperm.slane %v7021, %v3222
    %v7310 = vsel %vm3224, %v7309, %v7308
    %v7311 = vperm.slane %v7024, %v3226
    %v7312 = vsel %vm3228, %v7311, %v7310
    %v7313 = vperm.slane %v7027, %v3230
    %v7314 = vsel %vm3232, %v7313, %v7312
    %v7315 = vperm.slane %v7030, %v3234
    %v7316 = vsel %vm3236, %v7315, %v7314
    %v7317 = vperm.slane %v7033, %v3238
    %v7318 = vsel %vm3240, %v7317, %v7316
    %v7319 = vperm.slane %v7036, %v3242
    %v7320 = vsel %vm3244, %v7319, %v7318
    %v7321 = vperm.slane %v7039, %v3246
    %v7322 = vsel %vm3248, %v7321, %v7320
    %v7323 = vperm.slane %v7042, %v3250
    %v7324 = vsel %vm3252, %v7323, %v7322
    %v7325 = vperm.slane %v7045, %v799
    %v7326 = vperm.slane %v7048, %v3194
    %v7327 = vsel %vm3196, %v7326, %v7325
    %v7328 = vperm.slane %v7051, %v3198
    %v7329 = vsel %vm3200, %v7328, %v7327
    %v7330 = vperm.slane %v7054, %v3202
    %v7331 = vsel %vm3204, %v7330, %v7329
    %v7332 = vperm.slane %v7057, %v3206
    %v7333 = vsel %vm3208, %v7332, %v7331
    %v7334 = vperm.slane %v7060, %v3210
    %v7335 = vsel %vm3212, %v7334, %v7333
    %v7336 = vperm.slane %v7063, %v3214
    %v7337 = vsel %vm3216, %v7336, %v7335
    %v7338 = vperm.slane %v7066, %v3218
    %v7339 = vsel %vm3220, %v7338, %v7337
    %v7340 = vperm.slane %v7069, %v3222
    %v7341 = vsel %vm3224, %v7340, %v7339
    %v7342 = vperm.slane %v7072, %v3226
    %v7343 = vsel %vm3228, %v7342, %v7341
    %v7344 = vperm.slane %v7075, %v3230
    %v7345 = vsel %vm3232, %v7344, %v7343
    %v7346 = vperm.slane %v7078, %v3234
    %v7347 = vsel %vm3236, %v7346, %v7345
    %v7348 = vperm.slane %v7081, %v3238
    %v7349 = vsel %vm3240, %v7348, %v7347
    %v7350 = vperm.slane %v7084, %v3242
    %v7351 = vsel %vm3244, %v7350, %v7349
    %v7352 = vperm.slane %v7087, %v3246
    %v7353 = vsel %vm3248, %v7352, %v7351
    %v7354 = vperm.slane %v7090, %v3250
    %v7355 = vsel %vm3252, %v7354, %v7353
    %v7356 = vperm.slane %v7093, %v799
    %v7357 = vperm.slane %v7096, %v3194
    %v7358 = vsel %vm3196, %v7357, %v7356
    %v7359 = vperm.slane %v7099, %v3198
    %v7360 = vsel %vm3200, %v7359, %v7358
    %v7361 = vperm.slane %v7102, %v3202
    %v7362 = vsel %vm3204, %v7361, %v7360
    %v7363 = vperm.slane %v7105, %v3206
    %v7364 = vsel %vm3208, %v7363, %v7362
    %v7365 = vperm.slane %v7108, %v3210
    %v7366 = vsel %vm3212, %v7365, %v7364
    %v7367 = vperm.slane %v7111, %v3214
    %v7368 = vsel %vm3216, %v7367, %v7366
    %v7369 = vperm.slane %v7114, %v3218
    %v7370 = vsel %vm3220, %v7369, %v7368
    %v7371 = vperm.slane %v7117, %v3222
    %v7372 = vsel %vm3224, %v7371, %v7370
    %v7373 = vperm.slane %v7120, %v3226
    %v7374 = vsel %vm3228, %v7373, %v7372
    %v7375 = vperm.slane %v7123, %v3230
    %v7376 = vsel %vm3232, %v7375, %v7374
    %v7377 = vperm.slane %v7126, %v3234
    %v7378 = vsel %vm3236, %v7377, %v7376
    %v7379 = vperm.slane %v7129, %v3238
    %v7380 = vsel %vm3240, %v7379, %v7378
    %v7381 = vperm.slane %v7132, %v3242
    %v7382 = vsel %vm3244, %v7381, %v7380
    %v7383 = vperm.slane %v7135, %v3246
    %v7384 = vsel %vm3248, %v7383, %v7382
    %v7385 = vperm.slane %v7138, %v3250
    %v7386 = vsel %vm3252, %v7385, %v7384
    %v7387 = vsel %vm1011, %v7231, %v7169
    %v7388 = vsel %vm1014, %v7293, %v7387
    %v7389 = vsel %vm1017, %v7355, %v7388
    %v7390 = vsel %vm1011, %v7262, %v7200
    %v7391 = vsel %vm1014, %v7324, %v7390
    %v7392 = vsel %vm1017, %v7386, %v7391
    %v7393 = vrot.slane %v7392, 4
    %v7394 = vsel %vm3479, %v7389, %v7393
    %s7396 = smul.addr %s6232, 4
    %s7397 = scalar_lea.vmem %s12, %s7396
    %7398 = vst [vmem:[%s7397] sm:$0xff] %v7394
  $region50: #{decoder_rnn_forward.1} parent=0 // loop_footer
    %s811 = sadd.s32 1, %s807
  $region51: #{decoder_rnn_forward.1} parent=0 // loop_footer_branch
    %806 = sbr.rel target = $region47
  $region52: #{decoder_rnn_forward.1} parent=0 // loop_exit
    _
  // Predicated region
  $region53: #{decoder_rnn_forward.1} parent=0 // pred_check
    _
  $region54: #{decoder_rnn_forward.1} parent=0 // pred_check_branch
    %7400 = sbr.rel (0) target = $region56
  $region55: #{decoder_rnn_forward.1} parent=0 // pred_region
    _
  $region56: #{decoder_rnn_forward.1} parent=0 // pred_fallthru
    _
  // Predicated region
  $region57: #{decoder_rnn_forward.1} parent=0 // pred_check
    _
  $region58: #{decoder_rnn_forward.1} parent=0 // pred_check_branch
    %7402 = sbr.rel (0) target = $region60
  $region59: #{decoder_rnn_forward.1} parent=0 // pred_region
    _
  $region60: #{decoder_rnn_forward.1} parent=0 // pred_fallthru
    _
  // Predicated region
  $region61: #{decoder_rnn_forward.1} parent=0 // pred_check
    _
  $region62: #{decoder_rnn_forward.1} parent=0 // pred_check_branch
    %7404 = sbr.rel (0) target = $region64
  $region63: #{decoder_rnn_forward.1} parent=0 // pred_region
    _
  $region64: #{decoder_rnn_forward.1} parent=0 // pred_fallthru
    _
  // Predicated region
  $region65: #{decoder_rnn_forward.1} parent=0 // pred_check
    _
  $region66: #{decoder_rnn_forward.1} parent=0 // pred_check_branch
    %7406 = sbr.rel (0) target = $region68
  $region67: #{decoder_rnn_forward.1} parent=0 // pred_region
    _
  $region68: #{decoder_rnn_forward.1} parent=0 // pred_fallthru
    _

</llo_original>
